<compile_context>
chip_gen: v7x
topology: tpu7x:2x2x1
jax: 0.10.0
libtpu: 0.0.40
codegen_flags: <defaults>
</compile_context>

<pallas_src>
import functools

import jax
import jax.numpy as jnp
from jax.experimental import pallas as pl
from jax.experimental.pallas import tpu as pltpu

PRELU_ALPHA = 0.25   # nn.PReLU() built inside forward() -> fixed init slope


def _round_up(x, m):
    return (x + m - 1) // m * m


def _cdiv(a, b):
    return (a + b - 1) // b


@functools.lru_cache(maxsize=1)
def _vmem_capacity_bytes():
    try:
        return int(pltpu.get_tpu_info().vmem_capacity_bytes)
    except Exception:
        return 128 * 1024 * 1024


def _pick_tq(p_out, hb, cin, cout):
    """Pixels-per-grid-step for the direct conv, sized to this generation's VMEM."""
    cap = _vmem_capacity_bytes()
    vmem_limit = min(int(cap * 0.7), 100 * 1024 * 1024)
    budget = int(vmem_limit * 0.65)
    # weights dbuf + halo dbuf + concat-scratch halo + bias/acc slack
    fixed = 2 * 9 * cin * cout * 2 + 4 * hb * cin * 2 + 8 * cout * 4
    # per pixel: bf16 body dbuf (4*cin) + bf16 concat scratch (2*cin)
    #            + bf16 out dbuf (4*cout) + f32 acc temp (4*cout)
    per_pixel = 6 * cin + 8 * cout + 2
    tq = max(hb, (budget - fixed) // per_pixel)
    hard_cap = 8192 if cap >= (96 << 20) else 4096   # 128 MiB parts vs 64 MiB/TC (v7x)
    tq = min(tq, hard_cap, _round_up(p_out, hb))
    tq = max(hb, (tq // hb) * hb)                     # halo block must divide tq
    return tq, vmem_limit


# ----------------------------------------------------------------------------
# Pallas kernels
# ----------------------------------------------------------------------------
def _accumulate_taps(body_ref, halo_ref, w_ref, xbuf, taps, tq):
    """xbuf <- [body ; halo]; return sum_t xbuf[off_t:off_t+tq] @ w[t]  (f32)."""
    hb = xbuf.shape[0] - tq
    xbuf[pl.ds(0, tq), :] = body_ref[0, 0]
    xbuf[pl.ds(tq, hb), :] = halo_ref[0, 0]
    acc = None
    for t, off in enumerate(taps):                    # 9 static tap offsets
        part = jnp.dot(xbuf[pl.ds(off, tq), :], w_ref[0, t],
                       preferred_element_type=jnp.float32)
        acc = part if acc is None else acc + part
    return acc


def _dconv_kernel(body_ref, halo_ref, w_ref, b_ref, o_ref, xbuf, *,
                  taps, tq, activation, alpha):
    acc = _accumulate_taps(body_ref, halo_ref, w_ref, xbuf, taps, tq) + b_ref[0]
    if activation == "prelu":
        acc = jnp.where(acc >= 0, acc, alpha * acc)
    elif activation == "tanh_half":
        acc = jnp.tanh(acc) * 0.5 + 0.5
    o_ref[0, 0] = acc.astype(o_ref.dtype)


def _dconv_head_kernel(body_ref, halo_ref, w_ref, b_ref, w5_ref, b5_ref, o_ref,
                       xbuf, *, taps, tq, alpha):
    """d_conv4 (3x3 reflect, PReLU) fused with d_conv5 (1x1, Cout=1, tanh/2 + 0.5)."""
    y = _accumulate_taps(body_ref, halo_ref, w_ref, xbuf, taps, tq) + b_ref[0]
    y = jnp.where(y >= 0, y, alpha * y)
    z = jnp.sum(y * w5_ref[...], axis=-1, keepdims=True) + b5_ref[0, 0]
    o_ref[0, 0] = (jnp.tanh(z) * 0.5 + 0.5).astype(o_ref.dtype)


def _cmdaf_kernel(vi_ref, ir_ref, svi_ref, sir_ref, vo_ref, io_ref):
    """Lane-dense elementwise CMDAF apply; sigmoid(GAP(..)) weights precomputed."""
    v = vi_ref[0, 0].astype(jnp.float32)
    r = ir_ref[0, 0].astype(jnp.float32)
    d = r - v                                                    # (ir - vi)
    vo_ref[0, 0] = (v + d * svi_ref[0, 0]).astype(vo_ref.dtype)  # vi + (ir-vi)*sig(GAP(ir-vi))
    io_ref[0, 0] = (r - d * sir_ref[0, 0]).astype(io_ref.dtype)  # ir + (vi-ir)*sig(GAP(vi-ir))


# ----------------------------------------------------------------------------
# Direct conv wrapper (padding / flattening stays in plain JAX, fuses into one pass)
# ----------------------------------------------------------------------------
def _direct_conv(x_g, w_g, b_g, *, pad_mode, activation, head=None,
                 out_dtype=jnp.bfloat16):
    """Direct 3x3 stride-1 conv (+bias+activation), grouped on a leading axis.

    x_g: (G, N, H, W, Cin)   w_g: (G, 3, 3, Cin, Cout)   b_g: (G, Cout)
    Returns (G, N, H, W, Cout)  (or (..., 1) when `head` fuses the 1x1 d_conv5).
    """
    G, N, H, W, Cin = x_g.shape
    Cout = w_g.shape[-1]

    # Pad tiny channel counts (vi/ir_conv1: Cin=1) up to 8 so the MXU K-dim is sane.
    cin_p = _round_up(max(Cin, 8), 8)
    if cin_p != Cin:
        x_g = jnp.pad(x_g, ((0, 0),) * 4 + ((0, cin_p - Cin),))
        w_g = jnp.pad(w_g, ((0, 0),) * 3 + ((0, cin_p - Cin), (0, 0)))
        Cin = cin_p

    # Spatial pad (zero | reflect) + bf16 cast, then flatten pixels per image.
    mode = "reflect" if pad_mode == "reflect" else "constant"
    xp = jnp.pad(x_g.astype(jnp.bfloat16),
                 ((0, 0), (0, 0), (1, 1), (1, 1), (0, 0)), mode=mode)
    Wp = W + 2
    p_out = H * Wp                       # outputs computed on the padded-width grid
    hh = 2 * Wp + 2                      # max tap offset -> halo size (pixels)
    hb = _round_up(hh, 8)
    tq, vmem_limit = _pick_tq(p_out, hb, Cin, Cout)
    nb = _cdiv(p_out, tq)
    lpad = (nb + 1) * tq                 # zero-pad only the raw (1x) input, never patches

    xf = xp.reshape(G, N, (H + 2) * Wp, Cin)
    xf = jnp.pad(xf, ((0, 0), (0, 0), (0, lpad - (H + 2) * Wp), (0, 0)))

    wf = w_g.reshape(G, 9, Cin, Cout).astype(jnp.bfloat16)
    bf = b_g.reshape(G, 1, Cout).astype(jnp.float32)
    taps = tuple(kh * Wp + kw for kh in range(3) for kw in range(3))
    ratio = tq // hb                      # halo block index stride (hb | tq)

    in_specs = [
        pl.BlockSpec((1, 1, tq, Cin), lambda g, n, m: (g, n, m, 0)),
        pl.BlockSpec((1, 1, hb, Cin), lambda g, n, m: (g, n, (m + 1) * ratio, 0)),
        pl.BlockSpec((1, 9, Cin, Cout), lambda g, n, m: (g, 0, 0, 0)),
        pl.BlockSpec((1, 1, Cout), lambda g, n, m: (g, 0, 0)),
    ]
    args = [xf, xf, wf, bf]               # same array feeds body + halo specs

    if head is None:
        out_c = Cout
        kernel = functools.partial(_dconv_kernel, taps=taps, tq=tq,
                                   activation=activation, alpha=PRELU_ALPHA)
        trans = 0
    else:
        out_c = 1
        w5, b5 = head                      # (1, Cout) / (1, 1)
        in_specs += [pl.BlockSpec((1, Cout), lambda g, n, m: (0, 0)),
                     pl.BlockSpec((1, 1), lambda g, n, m: (0, 0))]
        args += [w5.astype(jnp.float32), b5.astype(jnp.float32)]
        kernel = functools.partial(_dconv_head_kernel, taps=taps, tq=tq,
                                   alpha=PRELU_ALPHA)
        trans = G * N * nb * tq

    out_bytes = 2 if out_dtype == jnp.bfloat16 else 4
    flops = 2 * G * N * nb * tq * 9 * Cin * Cout
    bytes_accessed = (xf.size * 2 + xf.size * 2 // max(ratio, 1) + wf.size * 2
                      + G * N * nb * tq * out_c * out_bytes)

    out = pl.pallas_call(
        kernel,
        out_shape=jax.ShapeDtypeStruct((G, N, nb * tq, out_c), out_dtype),
        grid=(G, N, nb),
        in_specs=in_specs,
        out_specs=pl.BlockSpec((1, 1, tq, out_c), lambda g, n, m: (g, n, m, 0)),
        scratch_shapes=[pltpu.VMEM((tq + hb, Cin), jnp.bfloat16)],
        compiler_params=pltpu.CompilerParams(
            dimension_semantics=("parallel", "parallel", "parallel"),
            vmem_limit_bytes=vmem_limit),
        cost_estimate=pl.CostEstimate(flops=int(flops), transcendentals=int(trans),
                                      bytes_accessed=int(bytes_accessed)),
    )(*args)

    # strip the (W+2)-grid junk columns / tail padding -> (G, N, H, W, out_c)
    out = out[:, :, :p_out, :].reshape(G, N, H, Wp, out_c)[:, :, :, :W, :]
    return out


def conv_pair(x_vi, x_ir, p_vi, p_ir, *, pad_mode):
    """Sibling vi/ir convs fused into a single pallas_call via a group axis of size 2."""
    x = jnp.stack([x_vi, x_ir], axis=0)
    w = jnp.stack([p_vi["w"], p_ir["w"]], axis=0)
    b = jnp.stack([p_vi["b"], p_ir["b"]], axis=0)
    out = _direct_conv(x, w, b, pad_mode=pad_mode, activation="prelu")
    return out[0], out[1]


def conv_single(x, p, *, pad_mode):
    out = _direct_conv(x[None], p["w"][None], p["b"][None],
                       pad_mode=pad_mode, activation="prelu")
    return out[0]


def conv_head(x, p4, p5):
    """d_conv4 (3x3 reflect, PReLU) fused with d_conv5 (1x1, tanh/2 + 0.5)."""
    cout4 = p4["w"].shape[-1]
    w5 = p5["w"].reshape(cout4, 1).T                  # (1, 16)
    b5 = p5["b"].reshape(1, 1)
    out = _direct_conv(x[None], p4["w"][None], p4["b"][None], pad_mode="reflect",
                       activation="prelu", head=(w5, b5), out_dtype=jnp.float32)
    return out[0]


# ----------------------------------------------------------------------------
# CMDAF
# ----------------------------------------------------------------------------
def _cmdaf_chunk_pixels(hw, c, max_elems=1 << 19):
    """Largest tp | hw such that tp*c is a multiple of 8*128 (lane-dense (8,128) tiles)."""
    if c <= 0 or 128 % c != 0:
        return None
    f = (8 * 128) // c
    if hw % f != 0:
        return None
    tp = min(hw, max(f, (max_elems // c) // f * f))
    while tp >= f and hw % tp:
        tp -= f
    return tp if tp >= f else None


def cmdaf(vi, ir):
    """CMDAF: tiny GAP + sigmoid in plain JAX; elementwise apply as a lane-dense Pallas kernel."""
    N, H, W, C = vi.shape
    HW = H * W
    g = jnp.mean(vi.astype(jnp.float32) - ir.astype(jnp.float32), axis=(1, 2))  # (N, C)
    s_vi = jax.nn.sigmoid(-g)      # sigmoid(GAP(ir - vi))
    s_ir = jax.nn.sigmoid(g)       # sigmoid(GAP(vi - ir))

    tp = _cmdaf_chunk_pixels(HW, C)
    if tp is None:
        # TODO(synk): shapes whose H*W*C doesn't tile into (8,128) vregs fall back to plain JAX.
        d = ir.astype(jnp.float32) - vi.astype(jnp.float32)
        vo = vi.astype(jnp.float32) + d * s_vi[:, None, None, :]
        io = ir.astype(jnp.float32) - d * s_ir[:, None, None, :]
        return vo.astype(jnp.bfloat16), io.astype(jnp.bfloat16)

    n_chunks = HW // tp
    rows = (tp * C) // 128
    vi4 = vi.reshape(N, n_chunks, rows, 128)                        # free, contiguous
    ir4 = ir.reshape(N, n_chunks, rows, 128)
    svi4 = jnp.tile(s_vi, (1, tp)).reshape(N, 1, rows, 128)         # channel pattern, period C
    sir4 = jnp.tile(s_ir, (1, tp)).reshape(N, 1, rows, 128)

    blk = pl.BlockSpec((1, 1, rows, 128), lambda n, t: (n, t, 0, 0))
    gap_blk = pl.BlockSpec((1, 1, rows, 128), lambda n, t: (n, 0, 0, 0))

    vo, io = pl.pallas_call(
        _cmdaf_kernel,
        out_shape=(jax.ShapeDtypeStruct((N, n_chunks, rows, 128), jnp.bfloat16),
                   jax.ShapeDtypeStruct((N, n_chunks, rows, 128), jnp.bfloat16)),
        grid=(N, n_chunks),
        in_specs=[blk, blk, gap_blk, gap_blk],
        out_specs=(blk, blk),
        compiler_params=pltpu.CompilerParams(
            dimension_semantics=("parallel", "parallel")),
        cost_estimate=pl.CostEstimate(flops=int(6 * N * HW * C), transcendentals=0,
                                      bytes_accessed=int(6 * N * HW * C * 2)),
    )(vi4, ir4, svi4, sir4)
    return vo.reshape(N, H, W, C), io.reshape(N, H, W, C)


# ----------------------------------------------------------------------------
# Parameters (deterministic synthetic init)
# ----------------------------------------------------------------------------
def _init_conv(key, K, cin, cout):
    kw, kb = jax.random.split(key)
    fan_in = float(cin * K * K)
    w = jax.random.normal(kw, (K, K, cin, cout), jnp.float32) / jnp.sqrt(fan_in)
    b = 0.01 * jax.random.normal(kb, (cout,), jnp.float32)
    return {"w": w, "b": b}


def init_params(key):
    names = [
        # Encoder
        ("vi_conv1", 3, 1, 16), ("ir_conv1", 3, 1, 16),
        ("vi_conv2", 3, 16, 16), ("ir_conv2", 3, 16, 16),
        ("vi_conv3", 3, 16, 32), ("ir_conv3", 3, 16, 32),
        ("vi_conv4", 3, 32, 64), ("ir_conv4", 3, 32, 64),
        ("vi_conv5", 3, 64, 128), ("ir_conv5", 3, 64, 128),
        # Discriminator
        ("d_conv1", 3, 256, 128), ("d_conv2", 3, 128, 64),
        ("d_conv3", 3, 64, 32), ("d_conv4", 3, 32, 16),
        ("d_conv5", 1, 16, 1),
    ]
    keys = jax.random.split(key, len(names))
    return {name: _init_conv(k, K, cin, cout)
            for k, (name, K, cin, cout) in zip(keys, names)}


# ----------------------------------------------------------------------------
# Forward pass (matches HAIAFusion.forward)
# ----------------------------------------------------------------------------
def haia_fusion_forward(params, y_vi_image, ir_image):
    """Inputs/outputs are NCHW float32: (N,1,H,W) -> (N,1,H,W)."""
    p = params
    vi = jnp.transpose(y_vi_image, (0, 2, 3, 1))   # -> NHWC
    ir = jnp.transpose(ir_image, (0, 2, 3, 1))

    # ---- Encoder (sibling vi/ir convs share one call each; activations bf16) ----
    v, r = conv_pair(vi, ir, p["vi_conv1"], p["ir_conv1"], pad_mode="zero")
    v, r = conv_pair(v, r, p["vi_conv2"], p["ir_conv2"], pad_mode="reflect")
    v, r = cmdaf(v, r)
    v, r = conv_pair(v, r, p["vi_conv3"], p["ir_conv3"], pad_mode="reflect")
    v, r = cmdaf(v, r)
    v, r = conv_pair(v, r, p["vi_conv4"], p["ir_conv4"], pad_mode="reflect")
    v, r = cmdaf(v, r)
    v, r = conv_pair(v, r, p["vi_conv5"], p["ir_conv5"], pad_mode="reflect")

    # ---- Fusion (channel concat; fuses into d_conv1's pad/flatten producer) ----
    x = jnp.concatenate([v, r], axis=-1)           # (N, H, W, 256) bf16

    # ---- Discriminator ----
    x = conv_single(x, p["d_conv1"], pad_mode="reflect")
    x = conv_single(x, p["d_conv2"], pad_mode="reflect")
    x = conv_single(x, p["d_conv3"], pad_mode="reflect")
    x = conv_head(x, p["d_conv4"], p["d_conv5"])   # conv4+PReLU+conv5+tanh/2+0.5 fused (f32)

    return jnp.transpose(x, (0, 3, 1, 2))          # back to NCHW (N,1,H,W)


# ----------------------------------------------------------------------------
if __name__ == "__main__":
    key = jax.random.PRNGKey(0)
    kp, kvi, kir = jax.random.split(key, 3)
    params = init_params(kp)

    N, H, W = 2, 16, 16
    y_vi_image = jax.random.uniform(kvi, (N, 1, H, W), jnp.float32)
    ir_image = jax.random.uniform(kir, (N, 1, H, W), jnp.float32)

    fused = jax.jit(haia_fusion_forward)(params, y_vi_image, ir_image)
    fused = jax.block_until_ready(fused)

    assert fused.shape == (N, 1, H, W), fused.shape
    assert bool(jnp.all(jnp.isfinite(fused)))
    print("KERNEL_OK")
</pallas_src>

<mosaic_0001>
module attributes {stable_mosaic.version = 11 : i64} {
  func.func @_dconv_kernel(%arg0: i32, %arg1: i32, %arg2: i32, %arg3: memref<1x1x320x8xbf16, #tpu.memory_space<vmem>>, %arg4: memref<1x1x40x8xbf16, #tpu.memory_space<vmem>>, %arg5: memref<1x9x8x16xbf16, #tpu.memory_space<vmem>>, %arg6: memref<1x1x16xf32, #tpu.memory_space<vmem>>, %arg7: memref<1x1x320x16xbf16, #tpu.memory_space<vmem>>, %arg8: memref<360x8xbf16, #tpu.memory_space<vmem>>) attributes {dimension_semantics = [#tpu.dimension_semantics<parallel>, #tpu.dimension_semantics<parallel>, #tpu.dimension_semantics<parallel>], iteration_bounds = array<i64: 2, 2, 1>, scalar_prefetch = 0 : i64, scratch_operands = 1 : i64, tpu.core_type = #tpu.core_type<tc>, window_params = [{transform_indices = @transform_0, window_bounds = array<i64: 1, 1, 320, 8>}, {transform_indices = @transform_1, window_bounds = array<i64: 1, 1, 40, 8>}, {transform_indices = @transform_2, window_bounds = array<i64: 1, 9, 8, 16>}, {transform_indices = @transform_3, window_bounds = array<i64: 1, 1, 16>}, {transform_indices = @transform_4, window_bounds = array<i64: 1, 1, 320, 16>}]} {
    %c0 = arith.constant 0 : index
    %c0_0 = arith.constant 0 : index
    %c0_1 = arith.constant 0 : index
    %c0_2 = arith.constant 0 : index
    %0 = vector.load %arg3[%c0, %c0_0, %c0_1, %c0_2] : memref<1x1x320x8xbf16, #tpu.memory_space<vmem>>, vector<1x1x320x8xbf16>
    %1 = vector.shape_cast %0 : vector<1x1x320x8xbf16> to vector<320x8xbf16>
    %c0_3 = arith.constant 0 : index
    %c0_4 = arith.constant 0 : index
    %2 = vector.load %arg8[%c0_3, %c0_4] : memref<360x8xbf16, #tpu.memory_space<vmem>>, vector<320x8xbf16>
    tpu.vector_store %arg8[%c0_3, %c0_4], %1 {strides = array<i32>} : memref<360x8xbf16, #tpu.memory_space<vmem>>, vector<320x8xbf16>,
    %c0_5 = arith.constant 0 : index
    %c0_6 = arith.constant 0 : index
    %c0_7 = arith.constant 0 : index
    %c0_8 = arith.constant 0 : index
    %3 = vector.load %arg4[%c0_5, %c0_6, %c0_7, %c0_8] : memref<1x1x40x8xbf16, #tpu.memory_space<vmem>>, vector<1x1x40x8xbf16>
    %4 = vector.shape_cast %3 : vector<1x1x40x8xbf16> to vector<40x8xbf16>
    %c320 = arith.constant 320 : index
    %c0_9 = arith.constant 0 : index
    %5 = vector.load %arg8[%c320, %c0_9] : memref<360x8xbf16, #tpu.memory_space<vmem>>, vector<40x8xbf16>
    tpu.vector_store %arg8[%c320, %c0_9], %4 {strides = array<i32>} : memref<360x8xbf16, #tpu.memory_space<vmem>>, vector<40x8xbf16>,
    %c0_10 = arith.constant 0 : index
    %c0_11 = arith.constant 0 : index
    %6 = vector.load %arg8[%c0_10, %c0_11] : memref<360x8xbf16, #tpu.memory_space<vmem>>, vector<320x8xbf16>
    %c0_12 = arith.constant 0 : index
    %c0_13 = arith.constant 0 : index
    %c0_14 = arith.constant 0 : index
    %c0_15 = arith.constant 0 : index
    %7 = vector.load %arg5[%c0_12, %c0_13, %c0_14, %c0_15] : memref<1x9x8x16xbf16, #tpu.memory_space<vmem>>, vector<1x1x8x16xbf16>
    %8 = vector.shape_cast %7 : vector<1x1x8x16xbf16> to vector<8x16xbf16>
    %cst = arith.constant dense<0.000000e+00> : vector<320x16xf32>
    %9 = tpu.matmul %6, %8, %cst {dimension_numbers = #tpu.dot_dimension_numbers<[1], [0], [0], [1], [0, 0, 1, 1], [], []>} : vector<320x8xbf16>, vector<8x16xbf16>, vector<320x16xf32> -> vector<320x16xf32>
    %c1 = arith.constant 1 : index
    %c0_16 = arith.constant 0 : index
    %10 = vector.load %arg8[%c1, %c0_16] : memref<360x8xbf16, #tpu.memory_space<vmem>>, vector<320x8xbf16>
    %c0_17 = arith.constant 0 : index
    %c1_18 = arith.constant 1 : index
    %c0_19 = arith.constant 0 : index
    %c0_20 = arith.constant 0 : index
    %11 = vector.load %arg5[%c0_17, %c1_18, %c0_19, %c0_20] : memref<1x9x8x16xbf16, #tpu.memory_space<vmem>>, vector<1x1x8x16xbf16>
    %12 = vector.shape_cast %11 : vector<1x1x8x16xbf16> to vector<8x16xbf16>
    %cst_21 = arith.constant dense<0.000000e+00> : vector<320x16xf32>
    %13 = tpu.matmul %10, %12, %cst_21 {dimension_numbers = #tpu.dot_dimension_numbers<[1], [0], [0], [1], [0, 0, 1, 1], [], []>} : vector<320x8xbf16>, vector<8x16xbf16>, vector<320x16xf32> -> vector<320x16xf32>
    %14 = arith.addf %9, %13 : vector<320x16xf32>
    %c2 = arith.constant 2 : index
    %c0_22 = arith.constant 0 : index
    %15 = vector.load %arg8[%c2, %c0_22] : memref<360x8xbf16, #tpu.memory_space<vmem>>, vector<320x8xbf16>
    %c0_23 = arith.constant 0 : index
    %c2_24 = arith.constant 2 : index
    %c0_25 = arith.constant 0 : index
    %c0_26 = arith.constant 0 : index
    %16 = vector.load %arg5[%c0_23, %c2_24, %c0_25, %c0_26] : memref<1x9x8x16xbf16, #tpu.memory_space<vmem>>, vector<1x1x8x16xbf16>
    %17 = vector.shape_cast %16 : vector<1x1x8x16xbf16> to vector<8x16xbf16>
    %cst_27 = arith.constant dense<0.000000e+00> : vector<320x16xf32>
    %18 = tpu.matmul %15, %17, %cst_27 {dimension_numbers = #tpu.dot_dimension_numbers<[1], [0], [0], [1], [0, 0, 1, 1], [], []>} : vector<320x8xbf16>, vector<8x16xbf16>, vector<320x16xf32> -> vector<320x16xf32>
    %19 = arith.addf %14, %18 : vector<320x16xf32>
    %c18 = arith.constant 18 : index
    %c0_28 = arith.constant 0 : index
    %20 = vector.load %arg8[%c18, %c0_28] : memref<360x8xbf16, #tpu.memory_space<vmem>>, vector<320x8xbf16>
    %c0_29 = arith.constant 0 : index
    %c3 = arith.constant 3 : index
    %c0_30 = arith.constant 0 : index
    %c0_31 = arith.constant 0 : index
    %21 = vector.load %arg5[%c0_29, %c3, %c0_30, %c0_31] : memref<1x9x8x16xbf16, #tpu.memory_space<vmem>>, vector<1x1x8x16xbf16>
    %22 = vector.shape_cast %21 : vector<1x1x8x16xbf16> to vector<8x16xbf16>
    %cst_32 = arith.constant dense<0.000000e+00> : vector<320x16xf32>
    %23 = tpu.matmul %20, %22, %cst_32 {dimension_numbers = #tpu.dot_dimension_numbers<[1], [0], [0], [1], [0, 0, 1, 1], [], []>} : vector<320x8xbf16>, vector<8x16xbf16>, vector<320x16xf32> -> vector<320x16xf32>
    %24 = arith.addf %19, %23 : vector<320x16xf32>
    %c19 = arith.constant 19 : index
    %c0_33 = arith.constant 0 : index
    %25 = vector.load %arg8[%c19, %c0_33] : memref<360x8xbf16, #tpu.memory_space<vmem>>, vector<320x8xbf16>
    %c0_34 = arith.constant 0 : index
    %c4 = arith.constant 4 : index
    %c0_35 = arith.constant 0 : index
    %c0_36 = arith.constant 0 : index
    %26 = vector.load %arg5[%c0_34, %c4, %c0_35, %c0_36] : memref<1x9x8x16xbf16, #tpu.memory_space<vmem>>, vector<1x1x8x16xbf16>
    %27 = vector.shape_cast %26 : vector<1x1x8x16xbf16> to vector<8x16xbf16>
    %cst_37 = arith.constant dense<0.000000e+00> : vector<320x16xf32>
    %28 = tpu.matmul %25, %27, %cst_37 {dimension_numbers = #tpu.dot_dimension_numbers<[1], [0], [0], [1], [0, 0, 1, 1], [], []>} : vector<320x8xbf16>, vector<8x16xbf16>, vector<320x16xf32> -> vector<320x16xf32>
    %29 = arith.addf %24, %28 : vector<320x16xf32>
    %c20 = arith.constant 20 : index
    %c0_38 = arith.constant 0 : index
    %30 = vector.load %arg8[%c20, %c0_38] : memref<360x8xbf16, #tpu.memory_space<vmem>>, vector<320x8xbf16>
    %c0_39 = arith.constant 0 : index
    %c5 = arith.constant 5 : index
    %c0_40 = arith.constant 0 : index
    %c0_41 = arith.constant 0 : index
    %31 = vector.load %arg5[%c0_39, %c5, %c0_40, %c0_41] : memref<1x9x8x16xbf16, #tpu.memory_space<vmem>>, vector<1x1x8x16xbf16>
    %32 = vector.shape_cast %31 : vector<1x1x8x16xbf16> to vector<8x16xbf16>
    %cst_42 = arith.constant dense<0.000000e+00> : vector<320x16xf32>
    %33 = tpu.matmul %30, %32, %cst_42 {dimension_numbers = #tpu.dot_dimension_numbers<[1], [0], [0], [1], [0, 0, 1, 1], [], []>} : vector<320x8xbf16>, vector<8x16xbf16>, vector<320x16xf32> -> vector<320x16xf32>
    %34 = arith.addf %29, %33 : vector<320x16xf32>
    %c36 = arith.constant 36 : index
    %c0_43 = arith.constant 0 : index
    %35 = vector.load %arg8[%c36, %c0_43] : memref<360x8xbf16, #tpu.memory_space<vmem>>, vector<320x8xbf16>
    %c0_44 = arith.constant 0 : index
    %c6 = arith.constant 6 : index
    %c0_45 = arith.constant 0 : index
    %c0_46 = arith.constant 0 : index
    %36 = vector.load %arg5[%c0_44, %c6, %c0_45, %c0_46] : memref<1x9x8x16xbf16, #tpu.memory_space<vmem>>, vector<1x1x8x16xbf16>
    %37 = vector.shape_cast %36 : vector<1x1x8x16xbf16> to vector<8x16xbf16>
    %cst_47 = arith.constant dense<0.000000e+00> : vector<320x16xf32>
    %38 = tpu.matmul %35, %37, %cst_47 {dimension_numbers = #tpu.dot_dimension_numbers<[1], [0], [0], [1], [0, 0, 1, 1], [], []>} : vector<320x8xbf16>, vector<8x16xbf16>, vector<320x16xf32> -> vector<320x16xf32>
    %39 = arith.addf %34, %38 : vector<320x16xf32>
    %c37 = arith.constant 37 : index
    %c0_48 = arith.constant 0 : index
    %40 = vector.load %arg8[%c37, %c0_48] : memref<360x8xbf16, #tpu.memory_space<vmem>>, vector<320x8xbf16>
    %c0_49 = arith.constant 0 : index
    %c7 = arith.constant 7 : index
    %c0_50 = arith.constant 0 : index
    %c0_51 = arith.constant 0 : index
    %41 = vector.load %arg5[%c0_49, %c7, %c0_50, %c0_51] : memref<1x9x8x16xbf16, #tpu.memory_space<vmem>>, vector<1x1x8x16xbf16>
    %42 = vector.shape_cast %41 : vector<1x1x8x16xbf16> to vector<8x16xbf16>
    %cst_52 = arith.constant dense<0.000000e+00> : vector<320x16xf32>
    %43 = tpu.matmul %40, %42, %cst_52 {dimension_numbers = #tpu.dot_dimension_numbers<[1], [0], [0], [1], [0, 0, 1, 1], [], []>} : vector<320x8xbf16>, vector<8x16xbf16>, vector<320x16xf32> -> vector<320x16xf32>
    %44 = arith.addf %39, %43 : vector<320x16xf32>
    %c38 = arith.constant 38 : index
    %c0_53 = arith.constant 0 : index
    %45 = vector.load %arg8[%c38, %c0_53] : memref<360x8xbf16, #tpu.memory_space<vmem>>, vector<320x8xbf16>
    %c0_54 = arith.constant 0 : index
    %c8 = arith.constant 8 : index
    %c0_55 = arith.constant 0 : index
    %c0_56 = arith.constant 0 : index
    %46 = vector.load %arg5[%c0_54, %c8, %c0_55, %c0_56] : memref<1x9x8x16xbf16, #tpu.memory_space<vmem>>, vector<1x1x8x16xbf16>
    %47 = vector.shape_cast %46 : vector<1x1x8x16xbf16> to vector<8x16xbf16>
    %cst_57 = arith.constant dense<0.000000e+00> : vector<320x16xf32>
    %48 = tpu.matmul %45, %47, %cst_57 {dimension_numbers = #tpu.dot_dimension_numbers<[1], [0], [0], [1], [0, 0, 1, 1], [], []>} : vector<320x8xbf16>, vector<8x16xbf16>, vector<320x16xf32> -> vector<320x16xf32>
    %49 = arith.addf %44, %48 : vector<320x16xf32>
    %c0_58 = arith.constant 0 : index
    %c0_59 = arith.constant 0 : index
    %c0_60 = arith.constant 0 : index
    %50 = vector.load %arg6[%c0_58, %c0_59, %c0_60] : memref<1x1x16xf32, #tpu.memory_space<vmem>>, vector<1x1x16xf32>
    %51 = vector.shape_cast %50 : vector<1x1x16xf32> to vector<1x16xf32>
    %52 = vector.broadcast %51 : vector<1x16xf32> to vector<320x16xf32>
    %53 = arith.addf %49, %52 : vector<320x16xf32>
    %cst_61 = arith.constant 0.000000e+00 : f32
    %54 = vector.broadcast %cst_61 : f32 to vector<320x16xf32>
    %55 = arith.cmpf oge, %53, %54 : vector<320x16xf32>
    %cst_62 = arith.constant 2.500000e-01 : f32
    %56 = vector.broadcast %cst_62 : f32 to vector<320x16xf32>
    %57 = arith.mulf %56, %53 : vector<320x16xf32>
    %58 = arith.select %55, %53, %57 : vector<320x16xi1>, vector<320x16xf32>
    %59 = arith.truncf %58 : vector<320x16xf32> to vector<320x16xbf16>
    %c0_63 = arith.constant 0 : index
    %c0_64 = arith.constant 0 : index
    %c0_65 = arith.constant 0 : index
    %c0_66 = arith.constant 0 : index
    %60 = vector.load %arg7[%c0_63, %c0_64, %c0_65, %c0_66] : memref<1x1x320x16xbf16, #tpu.memory_space<vmem>>, vector<1x1x320x16xbf16>
    %61 = vector.shape_cast %60 : vector<1x1x320x16xbf16> to vector<320x16xbf16>
    %62 = vector.shape_cast %59 : vector<320x16xbf16> to vector<1x1x320x16xbf16>
    tpu.vector_store %arg7[%c0_63, %c0_64, %c0_65, %c0_66], %62 {strides = array<i32>} : memref<1x1x320x16xbf16, #tpu.memory_space<vmem>>, vector<1x1x320x16xbf16>,
    return
  }
  func.func @transform_0(%arg0: i32, %arg1: i32, %arg2: i32) -> (i32, i32, i32, i32) {
    %c0_i32 = arith.constant 0 : i32
    %c0_i32_0 = arith.constant 0 : i32
    return %arg0, %arg1, %arg2, %c0_i32 : i32, i32, i32, i32
  }
  func.func @transform_1(%arg0: i32, %arg1: i32, %arg2: i32) -> (i32, i32, i32, i32) {
    %c1_i32 = arith.constant 1 : i32
    %0 = arith.addi %arg2, %c1_i32 : i32
    %c8_i32 = arith.constant 8 : i32
    %1 = arith.muli %0, %c8_i32 : i32
    %c0_i32 = arith.constant 0 : i32
    %c0_i32_0 = arith.constant 0 : i32
    return %arg0, %arg1, %1, %c0_i32 : i32, i32, i32, i32
  }
  func.func @transform_2(%arg0: i32, %arg1: i32, %arg2: i32) -> (i32, i32, i32, i32) {
    %c0_i32 = arith.constant 0 : i32
    %c0_i32_0 = arith.constant 0 : i32
    %c0_i32_1 = arith.constant 0 : i32
    %c0_i32_2 = arith.constant 0 : i32
    return %arg0, %c0_i32, %c0_i32_0, %c0_i32_1 : i32, i32, i32, i32
  }
  func.func @transform_3(%arg0: i32, %arg1: i32, %arg2: i32) -> (i32, i32, i32) {
    %c0_i32 = arith.constant 0 : i32
    %c0_i32_0 = arith.constant 0 : i32
    %c0_i32_1 = arith.constant 0 : i32
    return %arg0, %c0_i32, %c0_i32_0 : i32, i32, i32
  }
  func.func @transform_4(%arg0: i32, %arg1: i32, %arg2: i32) -> (i32, i32, i32, i32) {
    %c0_i32 = arith.constant 0 : i32
    %c0_i32_0 = arith.constant 0 : i32
    return %arg0, %arg1, %arg2, %c0_i32 : i32, i32, i32, i32
  }
}

module attributes {stable_mosaic.version = 11 : i64} {
  func.func @_dconv_kernel(%arg0: i32, %arg1: i32, %arg2: i32, %arg3: memref<1x1x320x16xbf16, #tpu.memory_space<vmem>>, %arg4: memref<1x1x40x16xbf16, #tpu.memory_space<vmem>>, %arg5: memref<1x9x16x16xbf16, #tpu.memory_space<vmem>>, %arg6: memref<1x1x16xf32, #tpu.memory_space<vmem>>, %arg7: memref<1x1x320x16xbf16, #tpu.memory_space<vmem>>, %arg8: memref<360x16xbf16, #tpu.memory_space<vmem>>) attributes {dimension_semantics = [#tpu.dimension_semantics<parallel>, #tpu.dimension_semantics<parallel>, #tpu.dimension_semantics<parallel>], iteration_bounds = array<i64: 2, 2, 1>, scalar_prefetch = 0 : i64, scratch_operands = 1 : i64, tpu.core_type = #tpu.core_type<tc>, window_params = [{transform_indices = @transform_0, window_bounds = array<i64: 1, 1, 320, 16>}, {transform_indices = @transform_1, window_bounds = array<i64: 1, 1, 40, 16>}, {transform_indices = @transform_2, window_bounds = array<i64: 1, 9, 16, 16>}, {transform_indices = @transform_3, window_bounds = array<i64: 1, 1, 16>}, {transform_indices = @transform_4, window_bounds = array<i64: 1, 1, 320, 16>}]} {
    %c0 = arith.constant 0 : index
    %c0_0 = arith.constant 0 : index
    %c0_1 = arith.constant 0 : index
    %c0_2 = arith.constant 0 : index
    %0 = vector.load %arg3[%c0, %c0_0, %c0_1, %c0_2] : memref<1x1x320x16xbf16, #tpu.memory_space<vmem>>, vector<1x1x320x16xbf16>
    %1 = vector.shape_cast %0 : vector<1x1x320x16xbf16> to vector<320x16xbf16>
    %c0_3 = arith.constant 0 : index
    %c0_4 = arith.constant 0 : index
    %2 = vector.load %arg8[%c0_3, %c0_4] : memref<360x16xbf16, #tpu.memory_space<vmem>>, vector<320x16xbf16>
    tpu.vector_store %arg8[%c0_3, %c0_4], %1 {strides = array<i32>} : memref<360x16xbf16, #tpu.memory_space<vmem>>, vector<320x16xbf16>,
    %c0_5 = arith.constant 0 : index
    %c0_6 = arith.constant 0 : index
    %c0_7 = arith.constant 0 : index
    %c0_8 = arith.constant 0 : index
    %3 = vector.load %arg4[%c0_5, %c0_6, %c0_7, %c0_8] : memref<1x1x40x16xbf16, #tpu.memory_space<vmem>>, vector<1x1x40x16xbf16>
    %4 = vector.shape_cast %3 : vector<1x1x40x16xbf16> to vector<40x16xbf16>
    %c320 = arith.constant 320 : index
    %c0_9 = arith.constant 0 : index
    %5 = vector.load %arg8[%c320, %c0_9] : memref<360x16xbf16, #tpu.memory_space<vmem>>, vector<40x16xbf16>
    tpu.vector_store %arg8[%c320, %c0_9], %4 {strides = array<i32>} : memref<360x16xbf16, #tpu.memory_space<vmem>>, vector<40x16xbf16>,
    %c0_10 = arith.constant 0 : index
    %c0_11 = arith.constant 0 : index
    %6 = vector.load %arg8[%c0_10, %c0_11] : memref<360x16xbf16, #tpu.memory_space<vmem>>, vector<320x16xbf16>
    %c0_12 = arith.constant 0 : index
    %c0_13 = arith.constant 0 : index
    %c0_14 = arith.constant 0 : index
    %c0_15 = arith.constant 0 : index
    %7 = vector.load %arg5[%c0_12, %c0_13, %c0_14, %c0_15] : memref<1x9x16x16xbf16, #tpu.memory_space<vmem>>, vector<1x1x16x16xbf16>
    %8 = vector.shape_cast %7 : vector<1x1x16x16xbf16> to vector<16x16xbf16>
    %cst = arith.constant dense<0.000000e+00> : vector<320x16xf32>
    %9 = tpu.matmul %6, %8, %cst {dimension_numbers = #tpu.dot_dimension_numbers<[1], [0], [0], [1], [0, 0, 1, 1], [], []>} : vector<320x16xbf16>, vector<16x16xbf16>, vector<320x16xf32> -> vector<320x16xf32>
    %c1 = arith.constant 1 : index
    %c0_16 = arith.constant 0 : index
    %10 = vector.load %arg8[%c1, %c0_16] : memref<360x16xbf16, #tpu.memory_space<vmem>>, vector<320x16xbf16>
    %c0_17 = arith.constant 0 : index
    %c1_18 = arith.constant 1 : index
    %c0_19 = arith.constant 0 : index
    %c0_20 = arith.constant 0 : index
    %11 = vector.load %arg5[%c0_17, %c1_18, %c0_19, %c0_20] : memref<1x9x16x16xbf16, #tpu.memory_space<vmem>>, vector<1x1x16x16xbf16>
    %12 = vector.shape_cast %11 : vector<1x1x16x16xbf16> to vector<16x16xbf16>
    %cst_21 = arith.constant dense<0.000000e+00> : vector<320x16xf32>
    %13 = tpu.matmul %10, %12, %cst_21 {dimension_numbers = #tpu.dot_dimension_numbers<[1], [0], [0], [1], [0, 0, 1, 1], [], []>} : vector<320x16xbf16>, vector<16x16xbf16>, vector<320x16xf32> -> vector<320x16xf32>
    %14 = arith.addf %9, %13 : vector<320x16xf32>
    %c2 = arith.constant 2 : index
    %c0_22 = arith.constant 0 : index
    %15 = vector.load %arg8[%c2, %c0_22] : memref<360x16xbf16, #tpu.memory_space<vmem>>, vector<320x16xbf16>
    %c0_23 = arith.constant 0 : index
    %c2_24 = arith.constant 2 : index
    %c0_25 = arith.constant 0 : index
    %c0_26 = arith.constant 0 : index
    %16 = vector.load %arg5[%c0_23, %c2_24, %c0_25, %c0_26] : memref<1x9x16x16xbf16, #tpu.memory_space<vmem>>, vector<1x1x16x16xbf16>
    %17 = vector.shape_cast %16 : vector<1x1x16x16xbf16> to vector<16x16xbf16>
    %cst_27 = arith.constant dense<0.000000e+00> : vector<320x16xf32>
    %18 = tpu.matmul %15, %17, %cst_27 {dimension_numbers = #tpu.dot_dimension_numbers<[1], [0], [0], [1], [0, 0, 1, 1], [], []>} : vector<320x16xbf16>, vector<16x16xbf16>, vector<320x16xf32> -> vector<320x16xf32>
    %19 = arith.addf %14, %18 : vector<320x16xf32>
    %c18 = arith.constant 18 : index
    %c0_28 = arith.constant 0 : index
    %20 = vector.load %arg8[%c18, %c0_28] : memref<360x16xbf16, #tpu.memory_space<vmem>>, vector<320x16xbf16>
    %c0_29 = arith.constant 0 : index
    %c3 = arith.constant 3 : index
    %c0_30 = arith.constant 0 : index
    %c0_31 = arith.constant 0 : index
    %21 = vector.load %arg5[%c0_29, %c3, %c0_30, %c0_31] : memref<1x9x16x16xbf16, #tpu.memory_space<vmem>>, vector<1x1x16x16xbf16>
    %22 = vector.shape_cast %21 : vector<1x1x16x16xbf16> to vector<16x16xbf16>
    %cst_32 = arith.constant dense<0.000000e+00> : vector<320x16xf32>
    %23 = tpu.matmul %20, %22, %cst_32 {dimension_numbers = #tpu.dot_dimension_numbers<[1], [0], [0], [1], [0, 0, 1, 1], [], []>} : vector<320x16xbf16>, vector<16x16xbf16>, vector<320x16xf32> -> vector<320x16xf32>
    %24 = arith.addf %19, %23 : vector<320x16xf32>
    %c19 = arith.constant 19 : index
    %c0_33 = arith.constant 0 : index
    %25 = vector.load %arg8[%c19, %c0_33] : memref<360x16xbf16, #tpu.memory_space<vmem>>, vector<320x16xbf16>
    %c0_34 = arith.constant 0 : index
    %c4 = arith.constant 4 : index
    %c0_35 = arith.constant 0 : index
    %c0_36 = arith.constant 0 : index
    %26 = vector.load %arg5[%c0_34, %c4, %c0_35, %c0_36] : memref<1x9x16x16xbf16, #tpu.memory_space<vmem>>, vector<1x1x16x16xbf16>
    %27 = vector.shape_cast %26 : vector<1x1x16x16xbf16> to vector<16x16xbf16>
    %cst_37 = arith.constant dense<0.000000e+00> : vector<320x16xf32>
    %28 = tpu.matmul %25, %27, %cst_37 {dimension_numbers = #tpu.dot_dimension_numbers<[1], [0], [0], [1], [0, 0, 1, 1], [], []>} : vector<320x16xbf16>, vector<16x16xbf16>, vector<320x16xf32> -> vector<320x16xf32>
    %29 = arith.addf %24, %28 : vector<320x16xf32>
    %c20 = arith.constant 20 : index
    %c0_38 = arith.constant 0 : index
    %30 = vector.load %arg8[%c20, %c0_38] : memref<360x16xbf16, #tpu.memory_space<vmem>>, vector<320x16xbf16>
    %c0_39 = arith.constant 0 : index
    %c5 = arith.constant 5 : index
    %c0_40 = arith.constant 0 : index
    %c0_41 = arith.constant 0 : index
    %31 = vector.load %arg5[%c0_39, %c5, %c0_40, %c0_41] : memref<1x9x16x16xbf16, #tpu.memory_space<vmem>>, vector<1x1x16x16xbf16>
    %32 = vector.shape_cast %31 : vector<1x1x16x16xbf16> to vector<16x16xbf16>
    %cst_42 = arith.constant dense<0.000000e+00> : vector<320x16xf32>
    %33 = tpu.matmul %30, %32, %cst_42 {dimension_numbers = #tpu.dot_dimension_numbers<[1], [0], [0], [1], [0, 0, 1, 1], [], []>} : vector<320x16xbf16>, vector<16x16xbf16>, vector<320x16xf32> -> vector<320x16xf32>
    %34 = arith.addf %29, %33 : vector<320x16xf32>
    %c36 = arith.constant 36 : index
    %c0_43 = arith.constant 0 : index
    %35 = vector.load %arg8[%c36, %c0_43] : memref<360x16xbf16, #tpu.memory_space<vmem>>, vector<320x16xbf16>
    %c0_44 = arith.constant 0 : index
    %c6 = arith.constant 6 : index
    %c0_45 = arith.constant 0 : index
    %c0_46 = arith.constant 0 : index
    %36 = vector.load %arg5[%c0_44, %c6, %c0_45, %c0_46] : memref<1x9x16x16xbf16, #tpu.memory_space<vmem>>, vector<1x1x16x16xbf16>
    %37 = vector.shape_cast %36 : vector<1x1x16x16xbf16> to vector<16x16xbf16>
    %cst_47 = arith.constant dense<0.000000e+00> : vector<320x16xf32>
    %38 = tpu.matmul %35, %37, %cst_47 {dimension_numbers = #tpu.dot_dimension_numbers<[1], [0], [0], [1], [0, 0, 1, 1], [], []>} : vector<320x16xbf16>, vector<16x16xbf16>, vector<320x16xf32> -> vector<320x16xf32>
    %39 = arith.addf %34, %38 : vector<320x16xf32>
    %c37 = arith.constant 37 : index
    %c0_48 = arith.constant 0 : index
    %40 = vector.load %arg8[%c37, %c0_48] : memref<360x16xbf16, #tpu.memory_space<vmem>>, vector<320x16xbf16>
    %c0_49 = arith.constant 0 : index
    %c7 = arith.constant 7 : index
    %c0_50 = arith.constant 0 : index
    %c0_51 = arith.constant 0 : index
    %41 = vector.load %arg5[%c0_49, %c7, %c0_50, %c0_51] : memref<1x9x16x16xbf16, #tpu.memory_space<vmem>>, vector<1x1x16x16xbf16>
    %42 = vector.shape_cast %41 : vector<1x1x16x16xbf16> to vector<16x16xbf16>
    %cst_52 = arith.constant dense<0.000000e+00> : vector<320x16xf32>
    %43 = tpu.matmul %40, %42, %cst_52 {dimension_numbers = #tpu.dot_dimension_numbers<[1], [0], [0], [1], [0, 0, 1, 1], [], []>} : vector<320x16xbf16>, vector<16x16xbf16>, vector<320x16xf32> -> vector<320x16xf32>
    %44 = arith.addf %39, %43 : vector<320x16xf32>
    %c38 = arith.constant 38 : index
    %c0_53 = arith.constant 0 : index
    %45 = vector.load %arg8[%c38, %c0_53] : memref<360x16xbf16, #tpu.memory_space<vmem>>, vector<320x16xbf16>
    %c0_54 = arith.constant 0 : index
    %c8 = arith.constant 8 : index
    %c0_55 = arith.constant 0 : index
    %c0_56 = arith.constant 0 : index
    %46 = vector.load %arg5[%c0_54, %c8, %c0_55, %c0_56] : memref<1x9x16x16xbf16, #tpu.memory_space<vmem>>, vector<1x1x16x16xbf16>
    %47 = vector.shape_cast %46 : vector<1x1x16x16xbf16> to vector<16x16xbf16>
    %cst_57 = arith.constant dense<0.000000e+00> : vector<320x16xf32>
    %48 = tpu.matmul %45, %47, %cst_57 {dimension_numbers = #tpu.dot_dimension_numbers<[1], [0], [0], [1], [0, 0, 1, 1], [], []>} : vector<320x16xbf16>, vector<16x16xbf16>, vector<320x16xf32> -> vector<320x16xf32>
    %49 = arith.addf %44, %48 : vector<320x16xf32>
    %c0_58 = arith.constant 0 : index
    %c0_59 = arith.constant 0 : index
    %c0_60 = arith.constant 0 : index
    %50 = vector.load %arg6[%c0_58, %c0_59, %c0_60] : memref<1x1x16xf32, #tpu.memory_space<vmem>>, vector<1x1x16xf32>
    %51 = vector.shape_cast %50 : vector<1x1x16xf32> to vector<1x16xf32>
    %52 = vector.broadcast %51 : vector<1x16xf32> to vector<320x16xf32>
    %53 = arith.addf %49, %52 : vector<320x16xf32>
    %cst_61 = arith.constant 0.000000e+00 : f32
    %54 = vector.broadcast %cst_61 : f32 to vector<320x16xf32>
    %55 = arith.cmpf oge, %53, %54 : vector<320x16xf32>
    %cst_62 = arith.constant 2.500000e-01 : f32
    %56 = vector.broadcast %cst_62 : f32 to vector<320x16xf32>
    %57 = arith.mulf %56, %53 : vector<320x16xf32>
    %58 = arith.select %55, %53, %57 : vector<320x16xi1>, vector<320x16xf32>
    %59 = arith.truncf %58 : vector<320x16xf32> to vector<320x16xbf16>
    %c0_63 = arith.constant 0 : index
    %c0_64 = arith.constant 0 : index
    %c0_65 = arith.constant 0 : index
    %c0_66 = arith.constant 0 : index
    %60 = vector.load %arg7[%c0_63, %c0_64, %c0_65, %c0_66] : memref<1x1x320x16xbf16, #tpu.memory_space<vmem>>, vector<1x1x320x16xbf16>
    %61 = vector.shape_cast %60 : vector<1x1x320x16xbf16> to vector<320x16xbf16>
    %62 = vector.shape_cast %59 : vector<320x16xbf16> to vector<1x1x320x16xbf16>
    tpu.vector_store %arg7[%c0_63, %c0_64, %c0_65, %c0_66], %62 {strides = array<i32>} : memref<1x1x320x16xbf16, #tpu.memory_space<vmem>>, vector<1x1x320x16xbf16>,
    return
  }
  func.func @transform_0(%arg0: i32, %arg1: i32, %arg2: i32) -> (i32, i32, i32, i32) {
    %c0_i32 = arith.constant 0 : i32
    %c0_i32_0 = arith.constant 0 : i32
    return %arg0, %arg1, %arg2, %c0_i32 : i32, i32, i32, i32
  }
  func.func @transform_1(%arg0: i32, %arg1: i32, %arg2: i32) -> (i32, i32, i32, i32) {
    %c1_i32 = arith.constant 1 : i32
    %0 = arith.addi %arg2, %c1_i32 : i32
    %c8_i32 = arith.constant 8 : i32
    %1 = arith.muli %0, %c8_i32 : i32
    %c0_i32 = arith.constant 0 : i32
    %c0_i32_0 = arith.constant 0 : i32
    return %arg0, %arg1, %1, %c0_i32 : i32, i32, i32, i32
  }
  func.func @transform_2(%arg0: i32, %arg1: i32, %arg2: i32) -> (i32, i32, i32, i32) {
    %c0_i32 = arith.constant 0 : i32
    %c0_i32_0 = arith.constant 0 : i32
    %c0_i32_1 = arith.constant 0 : i32
    %c0_i32_2 = arith.constant 0 : i32
    return %arg0, %c0_i32, %c0_i32_0, %c0_i32_1 : i32, i32, i32, i32
  }
  func.func @transform_3(%arg0: i32, %arg1: i32, %arg2: i32) -> (i32, i32, i32) {
    %c0_i32 = arith.constant 0 : i32
    %c0_i32_0 = arith.constant 0 : i32
    %c0_i32_1 = arith.constant 0 : i32
    return %arg0, %c0_i32, %c0_i32_0 : i32, i32, i32
  }
  func.func @transform_4(%arg0: i32, %arg1: i32, %arg2: i32) -> (i32, i32, i32, i32) {
    %c0_i32 = arith.constant 0 : i32
    %c0_i32_0 = arith.constant 0 : i32
    return %arg0, %arg1, %arg2, %c0_i32 : i32, i32, i32, i32
  }
}

module attributes {stable_mosaic.version = 11 : i64} {
  func.func @_cmdaf_kernel(%arg0: i32, %arg1: i32, %arg2: memref<1x1x32x128xbf16, #tpu.memory_space<vmem>>, %arg3: memref<1x1x32x128xbf16, #tpu.memory_space<vmem>>, %arg4: memref<1x1x32x128xf32, #tpu.memory_space<vmem>>, %arg5: memref<1x1x32x128xf32, #tpu.memory_space<vmem>>, %arg6: memref<1x1x32x128xbf16, #tpu.memory_space<vmem>>, %arg7: memref<1x1x32x128xbf16, #tpu.memory_space<vmem>>) attributes {dimension_semantics = [#tpu.dimension_semantics<parallel>, #tpu.dimension_semantics<parallel>], iteration_bounds = array<i64: 2, 1>, scalar_prefetch = 0 : i64, scratch_operands = 0 : i64, tpu.core_type = #tpu.core_type<tc>, window_params = [{transform_indices = @transform_0, window_bounds = array<i64: 1, 1, 32, 128>}, {transform_indices = @transform_1, window_bounds = array<i64: 1, 1, 32, 128>}, {transform_indices = @transform_2, window_bounds = array<i64: 1, 1, 32, 128>}, {transform_indices = @transform_3, window_bounds = array<i64: 1, 1, 32, 128>}, {transform_indices = @transform_4, window_bounds = array<i64: 1, 1, 32, 128>}, {transform_indices = @transform_5, window_bounds = array<i64: 1, 1, 32, 128>}]} {
    %c0 = arith.constant 0 : index
    %c0_0 = arith.constant 0 : index
    %c0_1 = arith.constant 0 : index
    %c0_2 = arith.constant 0 : index
    %0 = vector.load %arg2[%c0, %c0_0, %c0_1, %c0_2] : memref<1x1x32x128xbf16, #tpu.memory_space<vmem>>, vector<1x1x32x128xbf16>
    %1 = vector.shape_cast %0 : vector<1x1x32x128xbf16> to vector<32x128xbf16>
    %2 = arith.extf %1 : vector<32x128xbf16> to vector<32x128xf32>
    %c0_3 = arith.constant 0 : index
    %c0_4 = arith.constant 0 : index
    %c0_5 = arith.constant 0 : index
    %c0_6 = arith.constant 0 : index
    %3 = vector.load %arg3[%c0_3, %c0_4, %c0_5, %c0_6] : memref<1x1x32x128xbf16, #tpu.memory_space<vmem>>, vector<1x1x32x128xbf16>
    %4 = vector.shape_cast %3 : vector<1x1x32x128xbf16> to vector<32x128xbf16>
    %5 = arith.extf %4 : vector<32x128xbf16> to vector<32x128xf32>
    %6 = arith.subf %5, %2 : vector<32x128xf32>
    %c0_7 = arith.constant 0 : index
    %c0_8 = arith.constant 0 : index
    %c0_9 = arith.constant 0 : index
    %c0_10 = arith.constant 0 : index
    %7 = vector.load %arg4[%c0_7, %c0_8, %c0_9, %c0_10] : memref<1x1x32x128xf32, #tpu.memory_space<vmem>>, vector<1x1x32x128xf32>
    %8 = vector.shape_cast %7 : vector<1x1x32x128xf32> to vector<32x128xf32>
    %9 = arith.mulf %6, %8 : vector<32x128xf32>
    %10 = arith.addf %2, %9 : vector<32x128xf32>
    %11 = arith.truncf %10 : vector<32x128xf32> to vector<32x128xbf16>
    %c0_11 = arith.constant 0 : index
    %c0_12 = arith.constant 0 : index
    %c0_13 = arith.constant 0 : index
    %c0_14 = arith.constant 0 : index
    %12 = vector.load %arg6[%c0_11, %c0_12, %c0_13, %c0_14] : memref<1x1x32x128xbf16, #tpu.memory_space<vmem>>, vector<1x1x32x128xbf16>
    %13 = vector.shape_cast %12 : vector<1x1x32x128xbf16> to vector<32x128xbf16>
    %14 = vector.shape_cast %11 : vector<32x128xbf16> to vector<1x1x32x128xbf16>
    tpu.vector_store %arg6[%c0_11, %c0_12, %c0_13, %c0_14], %14 {strides = array<i32>} : memref<1x1x32x128xbf16, #tpu.memory_space<vmem>>, vector<1x1x32x128xbf16>,
    %c0_15 = arith.constant 0 : index
    %c0_16 = arith.constant 0 : index
    %c0_17 = arith.constant 0 : index
    %c0_18 = arith.constant 0 : index
    %15 = vector.load %arg5[%c0_15, %c0_16, %c0_17, %c0_18] : memref<1x1x32x128xf32, #tpu.memory_space<vmem>>, vector<1x1x32x128xf32>
    %16 = vector.shape_cast %15 : vector<1x1x32x128xf32> to vector<32x128xf32>
    %17 = arith.mulf %6, %16 : vector<32x128xf32>
    %18 = arith.subf %5, %17 : vector<32x128xf32>
    %19 = arith.truncf %18 : vector<32x128xf32> to vector<32x128xbf16>
    %c0_19 = arith.constant 0 : index
    %c0_20 = arith.constant 0 : index
    %c0_21 = arith.constant 0 : index
    %c0_22 = arith.constant 0 : index
    %20 = vector.load %arg7[%c0_19, %c0_20, %c0_21, %c0_22] : memref<1x1x32x128xbf16, #tpu.memory_space<vmem>>, vector<1x1x32x128xbf16>
    %21 = vector.shape_cast %20 : vector<1x1x32x128xbf16> to vector<32x128xbf16>
    %22 = vector.shape_cast %19 : vector<32x128xbf16> to vector<1x1x32x128xbf16>
    tpu.vector_store %arg7[%c0_19, %c0_20, %c0_21, %c0_22], %22 {strides = array<i32>} : memref<1x1x32x128xbf16, #tpu.memory_space<vmem>>, vector<1x1x32x128xbf16>,
    return
  }
  func.func @transform_0(%arg0: i32, %arg1: i32) -> (i32, i32, i32, i32) {
    %c0_i32 = arith.constant 0 : i32
    %c0_i32_0 = arith.constant 0 : i32
    %c0_i32_1 = arith.constant 0 : i32
    return %arg0, %arg1, %c0_i32, %c0_i32_0 : i32, i32, i32, i32
  }
  func.func @transform_1(%arg0: i32, %arg1: i32) -> (i32, i32, i32, i32) {
    %c0_i32 = arith.constant 0 : i32
    %c0_i32_0 = arith.constant 0 : i32
    %c0_i32_1 = arith.constant 0 : i32
    return %arg0, %arg1, %c0_i32, %c0_i32_0 : i32, i32, i32, i32
  }
  func.func @transform_2(%arg0: i32, %arg1: i32) -> (i32, i32, i32, i32) {
    %c0_i32 = arith.constant 0 : i32
    %c0_i32_0 = arith.constant 0 : i32
    %c0_i32_1 = arith.constant 0 : i32
    %c0_i32_2 = arith.constant 0 : i32
    return %arg0, %c0_i32, %c0_i32_0, %c0_i32_1 : i32, i32, i32, i32
  }
  func.func @transform_3(%arg0: i32, %arg1: i32) -> (i32, i32, i32, i32) {
    %c0_i32 = arith.constant 0 : i32
    %c0_i32_0 = arith.constant 0 : i32
    %c0_i32_1 = arith.constant 0 : i32
    %c0_i32_2 = arith.constant 0 : i32
    return %arg0, %c0_i32, %c0_i32_0, %c0_i32_1 : i32, i32, i32, i32
  }
  func.func @transform_4(%arg0: i32, %arg1: i32) -> (i32, i32, i32, i32) {
    %c0_i32 = arith.constant 0 : i32
    %c0_i32_0 = arith.constant 0 : i32
    %c0_i32_1 = arith.constant 0 : i32
    return %arg0, %arg1, %c0_i32, %c0_i32_0 : i32, i32, i32, i32
  }
  func.func @transform_5(%arg0: i32, %arg1: i32) -> (i32, i32, i32, i32) {
    %c0_i32 = arith.constant 0 : i32
    %c0_i32_0 = arith.constant 0 : i32
    %c0_i32_1 = arith.constant 0 : i32
    return %arg0, %arg1, %c0_i32, %c0_i32_0 : i32, i32, i32, i32
  }
}

module attributes {stable_mosaic.version = 11 : i64} {
  func.func @_dconv_kernel(%arg0: i32, %arg1: i32, %arg2: i32, %arg3: memref<1x1x320x16xbf16, #tpu.memory_space<vmem>>, %arg4: memref<1x1x40x16xbf16, #tpu.memory_space<vmem>>, %arg5: memref<1x9x16x32xbf16, #tpu.memory_space<vmem>>, %arg6: memref<1x1x32xf32, #tpu.memory_space<vmem>>, %arg7: memref<1x1x320x32xbf16, #tpu.memory_space<vmem>>, %arg8: memref<360x16xbf16, #tpu.memory_space<vmem>>) attributes {dimension_semantics = [#tpu.dimension_semantics<parallel>, #tpu.dimension_semantics<parallel>, #tpu.dimension_semantics<parallel>], iteration_bounds = array<i64: 2, 2, 1>, scalar_prefetch = 0 : i64, scratch_operands = 1 : i64, tpu.core_type = #tpu.core_type<tc>, window_params = [{transform_indices = @transform_0, window_bounds = array<i64: 1, 1, 320, 16>}, {transform_indices = @transform_1, window_bounds = array<i64: 1, 1, 40, 16>}, {transform_indices = @transform_2, window_bounds = array<i64: 1, 9, 16, 32>}, {transform_indices = @transform_3, window_bounds = array<i64: 1, 1, 32>}, {transform_indices = @transform_4, window_bounds = array<i64: 1, 1, 320, 32>}]} {
    %c0 = arith.constant 0 : index
    %c0_0 = arith.constant 0 : index
    %c0_1 = arith.constant 0 : index
    %c0_2 = arith.constant 0 : index
    %0 = vector.load %arg3[%c0, %c0_0, %c0_1, %c0_2] : memref<1x1x320x16xbf16, #tpu.memory_space<vmem>>, vector<1x1x320x16xbf16>
    %1 = vector.shape_cast %0 : vector<1x1x320x16xbf16> to vector<320x16xbf16>
    %c0_3 = arith.constant 0 : index
    %c0_4 = arith.constant 0 : index
    %2 = vector.load %arg8[%c0_3, %c0_4] : memref<360x16xbf16, #tpu.memory_space<vmem>>, vector<320x16xbf16>
    tpu.vector_store %arg8[%c0_3, %c0_4], %1 {strides = array<i32>} : memref<360x16xbf16, #tpu.memory_space<vmem>>, vector<320x16xbf16>,
    %c0_5 = arith.constant 0 : index
    %c0_6 = arith.constant 0 : index
    %c0_7 = arith.constant 0 : index
    %c0_8 = arith.constant 0 : index
    %3 = vector.load %arg4[%c0_5, %c0_6, %c0_7, %c0_8] : memref<1x1x40x16xbf16, #tpu.memory_space<vmem>>, vector<1x1x40x16xbf16>
    %4 = vector.shape_cast %3 : vector<1x1x40x16xbf16> to vector<40x16xbf16>
    %c320 = arith.constant 320 : index
    %c0_9 = arith.constant 0 : index
    %5 = vector.load %arg8[%c320, %c0_9] : memref<360x16xbf16, #tpu.memory_space<vmem>>, vector<40x16xbf16>
    tpu.vector_store %arg8[%c320, %c0_9], %4 {strides = array<i32>} : memref<360x16xbf16, #tpu.memory_space<vmem>>, vector<40x16xbf16>,
    %c0_10 = arith.constant 0 : index
    %c0_11 = arith.constant 0 : index
    %6 = vector.load %arg8[%c0_10, %c0_11] : memref<360x16xbf16, #tpu.memory_space<vmem>>, vector<320x16xbf16>
    %c0_12 = arith.constant 0 : index
    %c0_13 = arith.constant 0 : index
    %c0_14 = arith.constant 0 : index
    %c0_15 = arith.constant 0 : index
    %7 = vector.load %arg5[%c0_12, %c0_13, %c0_14, %c0_15] : memref<1x9x16x32xbf16, #tpu.memory_space<vmem>>, vector<1x1x16x32xbf16>
    %8 = vector.shape_cast %7 : vector<1x1x16x32xbf16> to vector<16x32xbf16>
    %cst = arith.constant dense<0.000000e+00> : vector<320x32xf32>
    %9 = tpu.matmul %6, %8, %cst {dimension_numbers = #tpu.dot_dimension_numbers<[1], [0], [0], [1], [0, 0, 1, 1], [], []>} : vector<320x16xbf16>, vector<16x32xbf16>, vector<320x32xf32> -> vector<320x32xf32>
    %c1 = arith.constant 1 : index
    %c0_16 = arith.constant 0 : index
    %10 = vector.load %arg8[%c1, %c0_16] : memref<360x16xbf16, #tpu.memory_space<vmem>>, vector<320x16xbf16>
    %c0_17 = arith.constant 0 : index
    %c1_18 = arith.constant 1 : index
    %c0_19 = arith.constant 0 : index
    %c0_20 = arith.constant 0 : index
    %11 = vector.load %arg5[%c0_17, %c1_18, %c0_19, %c0_20] : memref<1x9x16x32xbf16, #tpu.memory_space<vmem>>, vector<1x1x16x32xbf16>
    %12 = vector.shape_cast %11 : vector<1x1x16x32xbf16> to vector<16x32xbf16>
    %cst_21 = arith.constant dense<0.000000e+00> : vector<320x32xf32>
    %13 = tpu.matmul %10, %12, %cst_21 {dimension_numbers = #tpu.dot_dimension_numbers<[1], [0], [0], [1], [0, 0, 1, 1], [], []>} : vector<320x16xbf16>, vector<16x32xbf16>, vector<320x32xf32> -> vector<320x32xf32>
    %14 = arith.addf %9, %13 : vector<320x32xf32>
    %c2 = arith.constant 2 : index
    %c0_22 = arith.constant 0 : index
    %15 = vector.load %arg8[%c2, %c0_22] : memref<360x16xbf16, #tpu.memory_space<vmem>>, vector<320x16xbf16>
    %c0_23 = arith.constant 0 : index
    %c2_24 = arith.constant 2 : index
    %c0_25 = arith.constant 0 : index
    %c0_26 = arith.constant 0 : index
    %16 = vector.load %arg5[%c0_23, %c2_24, %c0_25, %c0_26] : memref<1x9x16x32xbf16, #tpu.memory_space<vmem>>, vector<1x1x16x32xbf16>
    %17 = vector.shape_cast %16 : vector<1x1x16x32xbf16> to vector<16x32xbf16>
    %cst_27 = arith.constant dense<0.000000e+00> : vector<320x32xf32>
    %18 = tpu.matmul %15, %17, %cst_27 {dimension_numbers = #tpu.dot_dimension_numbers<[1], [0], [0], [1], [0, 0, 1, 1], [], []>} : vector<320x16xbf16>, vector<16x32xbf16>, vector<320x32xf32> -> vector<320x32xf32>
    %19 = arith.addf %14, %18 : vector<320x32xf32>
    %c18 = arith.constant 18 : index
    %c0_28 = arith.constant 0 : index
    %20 = vector.load %arg8[%c18, %c0_28] : memref<360x16xbf16, #tpu.memory_space<vmem>>, vector<320x16xbf16>
    %c0_29 = arith.constant 0 : index
    %c3 = arith.constant 3 : index
    %c0_30 = arith.constant 0 : index
    %c0_31 = arith.constant 0 : index
    %21 = vector.load %arg5[%c0_29, %c3, %c0_30, %c0_31] : memref<1x9x16x32xbf16, #tpu.memory_space<vmem>>, vector<1x1x16x32xbf16>
    %22 = vector.shape_cast %21 : vector<1x1x16x32xbf16> to vector<16x32xbf16>
    %cst_32 = arith.constant dense<0.000000e+00> : vector<320x32xf32>
    %23 = tpu.matmul %20, %22, %cst_32 {dimension_numbers = #tpu.dot_dimension_numbers<[1], [0], [0], [1], [0, 0, 1, 1], [], []>} : vector<320x16xbf16>, vector<16x32xbf16>, vector<320x32xf32> -> vector<320x32xf32>
    %24 = arith.addf %19, %23 : vector<320x32xf32>
    %c19 = arith.constant 19 : index
    %c0_33 = arith.constant 0 : index
    %25 = vector.load %arg8[%c19, %c0_33] : memref<360x16xbf16, #tpu.memory_space<vmem>>, vector<320x16xbf16>
    %c0_34 = arith.constant 0 : index
    %c4 = arith.constant 4 : index
    %c0_35 = arith.constant 0 : index
    %c0_36 = arith.constant 0 : index
    %26 = vector.load %arg5[%c0_34, %c4, %c0_35, %c0_36] : memref<1x9x16x32xbf16, #tpu.memory_space<vmem>>, vector<1x1x16x32xbf16>
    %27 = vector.shape_cast %26 : vector<1x1x16x32xbf16> to vector<16x32xbf16>
    %cst_37 = arith.constant dense<0.000000e+00> : vector<320x32xf32>
    %28 = tpu.matmul %25, %27, %cst_37 {dimension_numbers = #tpu.dot_dimension_numbers<[1], [0], [0], [1], [0, 0, 1, 1], [], []>} : vector<320x16xbf16>, vector<16x32xbf16>, vector<320x32xf32> -> vector<320x32xf32>
    %29 = arith.addf %24, %28 : vector<320x32xf32>
    %c20 = arith.constant 20 : index
    %c0_38 = arith.constant 0 : index
    %30 = vector.load %arg8[%c20, %c0_38] : memref<360x16xbf16, #tpu.memory_space<vmem>>, vector<320x16xbf16>
    %c0_39 = arith.constant 0 : index
    %c5 = arith.constant 5 : index
    %c0_40 = arith.constant 0 : index
    %c0_41 = arith.constant 0 : index
    %31 = vector.load %arg5[%c0_39, %c5, %c0_40, %c0_41] : memref<1x9x16x32xbf16, #tpu.memory_space<vmem>>, vector<1x1x16x32xbf16>
    %32 = vector.shape_cast %31 : vector<1x1x16x32xbf16> to vector<16x32xbf16>
    %cst_42 = arith.constant dense<0.000000e+00> : vector<320x32xf32>
    %33 = tpu.matmul %30, %32, %cst_42 {dimension_numbers = #tpu.dot_dimension_numbers<[1], [0], [0], [1], [0, 0, 1, 1], [], []>} : vector<320x16xbf16>, vector<16x32xbf16>, vector<320x32xf32> -> vector<320x32xf32>
    %34 = arith.addf %29, %33 : vector<320x32xf32>
    %c36 = arith.constant 36 : index
    %c0_43 = arith.constant 0 : index
    %35 = vector.load %arg8[%c36, %c0_43] : memref<360x16xbf16, #tpu.memory_space<vmem>>, vector<320x16xbf16>
    %c0_44 = arith.constant 0 : index
    %c6 = arith.constant 6 : index
    %c0_45 = arith.constant 0 : index
    %c0_46 = arith.constant 0 : index
    %36 = vector.load %arg5[%c0_44, %c6, %c0_45, %c0_46] : memref<1x9x16x32xbf16, #tpu.memory_space<vmem>>, vector<1x1x16x32xbf16>
    %37 = vector.shape_cast %36 : vector<1x1x16x32xbf16> to vector<16x32xbf16>
    %cst_47 = arith.constant dense<0.000000e+00> : vector<320x32xf32>
    %38 = tpu.matmul %35, %37, %cst_47 {dimension_numbers = #tpu.dot_dimension_numbers<[1], [0], [0], [1], [0, 0, 1, 1], [], []>} : vector<320x16xbf16>, vector<16x32xbf16>, vector<320x32xf32> -> vector<320x32xf32>
    %39 = arith.addf %34, %38 : vector<320x32xf32>
    %c37 = arith.constant 37 : index
    %c0_48 = arith.constant 0 : index
    %40 = vector.load %arg8[%c37, %c0_48] : memref<360x16xbf16, #tpu.memory_space<vmem>>, vector<320x16xbf16>
    %c0_49 = arith.constant 0 : index
    %c7 = arith.constant 7 : index
    %c0_50 = arith.constant 0 : index
    %c0_51 = arith.constant 0 : index
    %41 = vector.load %arg5[%c0_49, %c7, %c0_50, %c0_51] : memref<1x9x16x32xbf16, #tpu.memory_space<vmem>>, vector<1x1x16x32xbf16>
    %42 = vector.shape_cast %41 : vector<1x1x16x32xbf16> to vector<16x32xbf16>
    %cst_52 = arith.constant dense<0.000000e+00> : vector<320x32xf32>
    %43 = tpu.matmul %40, %42, %cst_52 {dimension_numbers = #tpu.dot_dimension_numbers<[1], [0], [0], [1], [0, 0, 1, 1], [], []>} : vector<320x16xbf16>, vector<16x32xbf16>, vector<320x32xf32> -> vector<320x32xf32>
    %44 = arith.addf %39, %43 : vector<320x32xf32>
    %c38 = arith.constant 38 : index
    %c0_53 = arith.constant 0 : index
    %45 = vector.load %arg8[%c38, %c0_53] : memref<360x16xbf16, #tpu.memory_space<vmem>>, vector<320x16xbf16>
    %c0_54 = arith.constant 0 : index
    %c8 = arith.constant 8 : index
    %c0_55 = arith.constant 0 : index
    %c0_56 = arith.constant 0 : index
    %46 = vector.load %arg5[%c0_54, %c8, %c0_55, %c0_56] : memref<1x9x16x32xbf16, #tpu.memory_space<vmem>>, vector<1x1x16x32xbf16>
    %47 = vector.shape_cast %46 : vector<1x1x16x32xbf16> to vector<16x32xbf16>
    %cst_57 = arith.constant dense<0.000000e+00> : vector<320x32xf32>
    %48 = tpu.matmul %45, %47, %cst_57 {dimension_numbers = #tpu.dot_dimension_numbers<[1], [0], [0], [1], [0, 0, 1, 1], [], []>} : vector<320x16xbf16>, vector<16x32xbf16>, vector<320x32xf32> -> vector<320x32xf32>
    %49 = arith.addf %44, %48 : vector<320x32xf32>
    %c0_58 = arith.constant 0 : index
    %c0_59 = arith.constant 0 : index
    %c0_60 = arith.constant 0 : index
    %50 = vector.load %arg6[%c0_58, %c0_59, %c0_60] : memref<1x1x32xf32, #tpu.memory_space<vmem>>, vector<1x1x32xf32>
    %51 = vector.shape_cast %50 : vector<1x1x32xf32> to vector<1x32xf32>
    %52 = vector.broadcast %51 : vector<1x32xf32> to vector<320x32xf32>
    %53 = arith.addf %49, %52 : vector<320x32xf32>
    %cst_61 = arith.constant 0.000000e+00 : f32
    %54 = vector.broadcast %cst_61 : f32 to vector<320x32xf32>
    %55 = arith.cmpf oge, %53, %54 : vector<320x32xf32>
    %cst_62 = arith.constant 2.500000e-01 : f32
    %56 = vector.broadcast %cst_62 : f32 to vector<320x32xf32>
    %57 = arith.mulf %56, %53 : vector<320x32xf32>
    %58 = arith.select %55, %53, %57 : vector<320x32xi1>, vector<320x32xf32>
    %59 = arith.truncf %58 : vector<320x32xf32> to vector<320x32xbf16>
    %c0_63 = arith.constant 0 : index
    %c0_64 = arith.constant 0 : index
    %c0_65 = arith.constant 0 : index
    %c0_66 = arith.constant 0 : index
    %60 = vector.load %arg7[%c0_63, %c0_64, %c0_65, %c0_66] : memref<1x1x320x32xbf16, #tpu.memory_space<vmem>>, vector<1x1x320x32xbf16>
    %61 = vector.shape_cast %60 : vector<1x1x320x32xbf16> to vector<320x32xbf16>
    %62 = vector.shape_cast %59 : vector<320x32xbf16> to vector<1x1x320x32xbf16>
    tpu.vector_store %arg7[%c0_63, %c0_64, %c0_65, %c0_66], %62 {strides = array<i32>} : memref<1x1x320x32xbf16, #tpu.memory_space<vmem>>, vector<1x1x320x32xbf16>,
    return
  }
  func.func @transform_0(%arg0: i32, %arg1: i32, %arg2: i32) -> (i32, i32, i32, i32) {
    %c0_i32 = arith.constant 0 : i32
    %c0_i32_0 = arith.constant 0 : i32
    return %arg0, %arg1, %arg2, %c0_i32 : i32, i32, i32, i32
  }
  func.func @transform_1(%arg0: i32, %arg1: i32, %arg2: i32) -> (i32, i32, i32, i32) {
    %c1_i32 = arith.constant 1 : i32
    %0 = arith.addi %arg2, %c1_i32 : i32
    %c8_i32 = arith.constant 8 : i32
    %1 = arith.muli %0, %c8_i32 : i32
    %c0_i32 = arith.constant 0 : i32
    %c0_i32_0 = arith.constant 0 : i32
    return %arg0, %arg1, %1, %c0_i32 : i32, i32, i32, i32
  }
  func.func @transform_2(%arg0: i32, %arg1: i32, %arg2: i32) -> (i32, i32, i32, i32) {
    %c0_i32 = arith.constant 0 : i32
    %c0_i32_0 = arith.constant 0 : i32
    %c0_i32_1 = arith.constant 0 : i32
    %c0_i32_2 = arith.constant 0 : i32
    return %arg0, %c0_i32, %c0_i32_0, %c0_i32_1 : i32, i32, i32, i32
  }
  func.func @transform_3(%arg0: i32, %arg1: i32, %arg2: i32) -> (i32, i32, i32) {
    %c0_i32 = arith.constant 0 : i32
    %c0_i32_0 = arith.constant 0 : i32
    %c0_i32_1 = arith.constant 0 : i32
    return %arg0, %c0_i32, %c0_i32_0 : i32, i32, i32
  }
  func.func @transform_4(%arg0: i32, %arg1: i32, %arg2: i32) -> (i32, i32, i32, i32) {
    %c0_i32 = arith.constant 0 : i32
    %c0_i32_0 = arith.constant 0 : i32
    return %arg0, %arg1, %arg2, %c0_i32 : i32, i32, i32, i32
  }
}

module attributes {stable_mosaic.version = 11 : i64} {
  func.func @_cmdaf_kernel(%arg0: i32, %arg1: i32, %arg2: memref<1x1x64x128xbf16, #tpu.memory_space<vmem>>, %arg3: memref<1x1x64x128xbf16, #tpu.memory_space<vmem>>, %arg4: memref<1x1x64x128xf32, #tpu.memory_space<vmem>>, %arg5: memref<1x1x64x128xf32, #tpu.memory_space<vmem>>, %arg6: memref<1x1x64x128xbf16, #tpu.memory_space<vmem>>, %arg7: memref<1x1x64x128xbf16, #tpu.memory_space<vmem>>) attributes {dimension_semantics = [#tpu.dimension_semantics<parallel>, #tpu.dimension_semantics<parallel>], iteration_bounds = array<i64: 2, 1>, scalar_prefetch = 0 : i64, scratch_operands = 0 : i64, tpu.core_type = #tpu.core_type<tc>, window_params = [{transform_indices = @transform_0, window_bounds = array<i64: 1, 1, 64, 128>}, {transform_indices = @transform_1, window_bounds = array<i64: 1, 1, 64, 128>}, {transform_indices = @transform_2, window_bounds = array<i64: 1, 1, 64, 128>}, {transform_indices = @transform_3, window_bounds = array<i64: 1, 1, 64, 128>}, {transform_indices = @transform_4, window_bounds = array<i64: 1, 1, 64, 128>}, {transform_indices = @transform_5, window_bounds = array<i64: 1, 1, 64, 128>}]} {
    %c0 = arith.constant 0 : index
    %c0_0 = arith.constant 0 : index
    %c0_1 = arith.constant 0 : index
    %c0_2 = arith.constant 0 : index
    %0 = vector.load %arg2[%c0, %c0_0, %c0_1, %c0_2] : memref<1x1x64x128xbf16, #tpu.memory_space<vmem>>, vector<1x1x64x128xbf16>
    %1 = vector.shape_cast %0 : vector<1x1x64x128xbf16> to vector<64x128xbf16>
    %2 = arith.extf %1 : vector<64x128xbf16> to vector<64x128xf32>
    %c0_3 = arith.constant 0 : index
    %c0_4 = arith.constant 0 : index
    %c0_5 = arith.constant 0 : index
    %c0_6 = arith.constant 0 : index
    %3 = vector.load %arg3[%c0_3, %c0_4, %c0_5, %c0_6] : memref<1x1x64x128xbf16, #tpu.memory_space<vmem>>, vector<1x1x64x128xbf16>
    %4 = vector.shape_cast %3 : vector<1x1x64x128xbf16> to vector<64x128xbf16>
    %5 = arith.extf %4 : vector<64x128xbf16> to vector<64x128xf32>
    %6 = arith.subf %5, %2 : vector<64x128xf32>
    %c0_7 = arith.constant 0 : index
    %c0_8 = arith.constant 0 : index
    %c0_9 = arith.constant 0 : index
    %c0_10 = arith.constant 0 : index
    %7 = vector.load %arg4[%c0_7, %c0_8, %c0_9, %c0_10] : memref<1x1x64x128xf32, #tpu.memory_space<vmem>>, vector<1x1x64x128xf32>
    %8 = vector.shape_cast %7 : vector<1x1x64x128xf32> to vector<64x128xf32>
    %9 = arith.mulf %6, %8 : vector<64x128xf32>
    %10 = arith.addf %2, %9 : vector<64x128xf32>
    %11 = arith.truncf %10 : vector<64x128xf32> to vector<64x128xbf16>
    %c0_11 = arith.constant 0 : index
    %c0_12 = arith.constant 0 : index
    %c0_13 = arith.constant 0 : index
    %c0_14 = arith.constant 0 : index
    %12 = vector.load %arg6[%c0_11, %c0_12, %c0_13, %c0_14] : memref<1x1x64x128xbf16, #tpu.memory_space<vmem>>, vector<1x1x64x128xbf16>
    %13 = vector.shape_cast %12 : vector<1x1x64x128xbf16> to vector<64x128xbf16>
    %14 = vector.shape_cast %11 : vector<64x128xbf16> to vector<1x1x64x128xbf16>
    tpu.vector_store %arg6[%c0_11, %c0_12, %c0_13, %c0_14], %14 {strides = array<i32>} : memref<1x1x64x128xbf16, #tpu.memory_space<vmem>>, vector<1x1x64x128xbf16>,
    %c0_15 = arith.constant 0 : index
    %c0_16 = arith.constant 0 : index
    %c0_17 = arith.constant 0 : index
    %c0_18 = arith.constant 0 : index
    %15 = vector.load %arg5[%c0_15, %c0_16, %c0_17, %c0_18] : memref<1x1x64x128xf32, #tpu.memory_space<vmem>>, vector<1x1x64x128xf32>
    %16 = vector.shape_cast %15 : vector<1x1x64x128xf32> to vector<64x128xf32>
    %17 = arith.mulf %6, %16 : vector<64x128xf32>
    %18 = arith.subf %5, %17 : vector<64x128xf32>
    %19 = arith.truncf %18 : vector<64x128xf32> to vector<64x128xbf16>
    %c0_19 = arith.constant 0 : index
    %c0_20 = arith.constant 0 : index
    %c0_21 = arith.constant 0 : index
    %c0_22 = arith.constant 0 : index
    %20 = vector.load %arg7[%c0_19, %c0_20, %c0_21, %c0_22] : memref<1x1x64x128xbf16, #tpu.memory_space<vmem>>, vector<1x1x64x128xbf16>
    %21 = vector.shape_cast %20 : vector<1x1x64x128xbf16> to vector<64x128xbf16>
    %22 = vector.shape_cast %19 : vector<64x128xbf16> to vector<1x1x64x128xbf16>
    tpu.vector_store %arg7[%c0_19, %c0_20, %c0_21, %c0_22], %22 {strides = array<i32>} : memref<1x1x64x128xbf16, #tpu.memory_space<vmem>>, vector<1x1x64x128xbf16>,
    return
  }
  func.func @transform_0(%arg0: i32, %arg1: i32) -> (i32, i32, i32, i32) {
    %c0_i32 = arith.constant 0 : i32
    %c0_i32_0 = arith.constant 0 : i32
    %c0_i32_1 = arith.constant 0 : i32
    return %arg0, %arg1, %c0_i32, %c0_i32_0 : i32, i32, i32, i32
  }
  func.func @transform_1(%arg0: i32, %arg1: i32) -> (i32, i32, i32, i32) {
    %c0_i32 = arith.constant 0 : i32
    %c0_i32_0 = arith.constant 0 : i32
    %c0_i32_1 = arith.constant 0 : i32
    return %arg0, %arg1, %c0_i32, %c0_i32_0 : i32, i32, i32, i32
  }
  func.func @transform_2(%arg0: i32, %arg1: i32) -> (i32, i32, i32, i32) {
    %c0_i32 = arith.constant 0 : i32
    %c0_i32_0 = arith.constant 0 : i32
    %c0_i32_1 = arith.constant 0 : i32
    %c0_i32_2 = arith.constant 0 : i32
    return %arg0, %c0_i32, %c0_i32_0, %c0_i32_1 : i32, i32, i32, i32
  }
  func.func @transform_3(%arg0: i32, %arg1: i32) -> (i32, i32, i32, i32) {
    %c0_i32 = arith.constant 0 : i32
    %c0_i32_0 = arith.constant 0 : i32
    %c0_i32_1 = arith.constant 0 : i32
    %c0_i32_2 = arith.constant 0 : i32
    return %arg0, %c0_i32, %c0_i32_0, %c0_i32_1 : i32, i32, i32, i32
  }
  func.func @transform_4(%arg0: i32, %arg1: i32) -> (i32, i32, i32, i32) {
    %c0_i32 = arith.constant 0 : i32
    %c0_i32_0 = arith.constant 0 : i32
    %c0_i32_1 = arith.constant 0 : i32
    return %arg0, %arg1, %c0_i32, %c0_i32_0 : i32, i32, i32, i32
  }
  func.func @transform_5(%arg0: i32, %arg1: i32) -> (i32, i32, i32, i32) {
    %c0_i32 = arith.constant 0 : i32
    %c0_i32_0 = arith.constant 0 : i32
    %c0_i32_1 = arith.constant 0 : i32
    return %arg0, %arg1, %c0_i32, %c0_i32_0 : i32, i32, i32, i32
  }
}

module attributes {stable_mosaic.version = 11 : i64} {
  func.func @_dconv_kernel(%arg0: i32, %arg1: i32, %arg2: i32, %arg3: memref<1x1x320x32xbf16, #tpu.memory_space<vmem>>, %arg4: memref<1x1x40x32xbf16, #tpu.memory_space<vmem>>, %arg5: memref<1x9x32x64xbf16, #tpu.memory_space<vmem>>, %arg6: memref<1x1x64xf32, #tpu.memory_space<vmem>>, %arg7: memref<1x1x320x64xbf16, #tpu.memory_space<vmem>>, %arg8: memref<360x32xbf16, #tpu.memory_space<vmem>>) attributes {dimension_semantics = [#tpu.dimension_semantics<parallel>, #tpu.dimension_semantics<parallel>, #tpu.dimension_semantics<parallel>], iteration_bounds = array<i64: 2, 2, 1>, scalar_prefetch = 0 : i64, scratch_operands = 1 : i64, tpu.core_type = #tpu.core_type<tc>, window_params = [{transform_indices = @transform_0, window_bounds = array<i64: 1, 1, 320, 32>}, {transform_indices = @transform_1, window_bounds = array<i64: 1, 1, 40, 32>}, {transform_indices = @transform_2, window_bounds = array<i64: 1, 9, 32, 64>}, {transform_indices = @transform_3, window_bounds = array<i64: 1, 1, 64>}, {transform_indices = @transform_4, window_bounds = array<i64: 1, 1, 320, 64>}]} {
    %c0 = arith.constant 0 : index
    %c0_0 = arith.constant 0 : index
    %c0_1 = arith.constant 0 : index
    %c0_2 = arith.constant 0 : index
    %0 = vector.load %arg3[%c0, %c0_0, %c0_1, %c0_2] : memref<1x1x320x32xbf16, #tpu.memory_space<vmem>>, vector<1x1x320x32xbf16>
    %1 = vector.shape_cast %0 : vector<1x1x320x32xbf16> to vector<320x32xbf16>
    %c0_3 = arith.constant 0 : index
    %c0_4 = arith.constant 0 : index
    %2 = vector.load %arg8[%c0_3, %c0_4] : memref<360x32xbf16, #tpu.memory_space<vmem>>, vector<320x32xbf16>
    tpu.vector_store %arg8[%c0_3, %c0_4], %1 {strides = array<i32>} : memref<360x32xbf16, #tpu.memory_space<vmem>>, vector<320x32xbf16>,
    %c0_5 = arith.constant 0 : index
    %c0_6 = arith.constant 0 : index
    %c0_7 = arith.constant 0 : index
    %c0_8 = arith.constant 0 : index
    %3 = vector.load %arg4[%c0_5, %c0_6, %c0_7, %c0_8] : memref<1x1x40x32xbf16, #tpu.memory_space<vmem>>, vector<1x1x40x32xbf16>
    %4 = vector.shape_cast %3 : vector<1x1x40x32xbf16> to vector<40x32xbf16>
    %c320 = arith.constant 320 : index
    %c0_9 = arith.constant 0 : index
    %5 = vector.load %arg8[%c320, %c0_9] : memref<360x32xbf16, #tpu.memory_space<vmem>>, vector<40x32xbf16>
    tpu.vector_store %arg8[%c320, %c0_9], %4 {strides = array<i32>} : memref<360x32xbf16, #tpu.memory_space<vmem>>, vector<40x32xbf16>,
    %c0_10 = arith.constant 0 : index
    %c0_11 = arith.constant 0 : index
    %6 = vector.load %arg8[%c0_10, %c0_11] : memref<360x32xbf16, #tpu.memory_space<vmem>>, vector<320x32xbf16>
    %c0_12 = arith.constant 0 : index
    %c0_13 = arith.constant 0 : index
    %c0_14 = arith.constant 0 : index
    %c0_15 = arith.constant 0 : index
    %7 = vector.load %arg5[%c0_12, %c0_13, %c0_14, %c0_15] : memref<1x9x32x64xbf16, #tpu.memory_space<vmem>>, vector<1x1x32x64xbf16>
    %8 = vector.shape_cast %7 : vector<1x1x32x64xbf16> to vector<32x64xbf16>
    %cst = arith.constant dense<0.000000e+00> : vector<320x64xf32>
    %9 = tpu.matmul %6, %8, %cst {dimension_numbers = #tpu.dot_dimension_numbers<[1], [0], [0], [1], [0, 0, 1, 1], [], []>} : vector<320x32xbf16>, vector<32x64xbf16>, vector<320x64xf32> -> vector<320x64xf32>
    %c1 = arith.constant 1 : index
    %c0_16 = arith.constant 0 : index
    %10 = vector.load %arg8[%c1, %c0_16] : memref<360x32xbf16, #tpu.memory_space<vmem>>, vector<320x32xbf16>
    %c0_17 = arith.constant 0 : index
    %c1_18 = arith.constant 1 : index
    %c0_19 = arith.constant 0 : index
    %c0_20 = arith.constant 0 : index
    %11 = vector.load %arg5[%c0_17, %c1_18, %c0_19, %c0_20] : memref<1x9x32x64xbf16, #tpu.memory_space<vmem>>, vector<1x1x32x64xbf16>
    %12 = vector.shape_cast %11 : vector<1x1x32x64xbf16> to vector<32x64xbf16>
    %cst_21 = arith.constant dense<0.000000e+00> : vector<320x64xf32>
    %13 = tpu.matmul %10, %12, %cst_21 {dimension_numbers = #tpu.dot_dimension_numbers<[1], [0], [0], [1], [0, 0, 1, 1], [], []>} : vector<320x32xbf16>, vector<32x64xbf16>, vector<320x64xf32> -> vector<320x64xf32>
    %14 = arith.addf %9, %13 : vector<320x64xf32>
    %c2 = arith.constant 2 : index
    %c0_22 = arith.constant 0 : index
    %15 = vector.load %arg8[%c2, %c0_22] : memref<360x32xbf16, #tpu.memory_space<vmem>>, vector<320x32xbf16>
    %c0_23 = arith.constant 0 : index
    %c2_24 = arith.constant 2 : index
    %c0_25 = arith.constant 0 : index
    %c0_26 = arith.constant 0 : index
    %16 = vector.load %arg5[%c0_23, %c2_24, %c0_25, %c0_26] : memref<1x9x32x64xbf16, #tpu.memory_space<vmem>>, vector<1x1x32x64xbf16>
    %17 = vector.shape_cast %16 : vector<1x1x32x64xbf16> to vector<32x64xbf16>
    %cst_27 = arith.constant dense<0.000000e+00> : vector<320x64xf32>
    %18 = tpu.matmul %15, %17, %cst_27 {dimension_numbers = #tpu.dot_dimension_numbers<[1], [0], [0], [1], [0, 0, 1, 1], [], []>} : vector<320x32xbf16>, vector<32x64xbf16>, vector<320x64xf32> -> vector<320x64xf32>
    %19 = arith.addf %14, %18 : vector<320x64xf32>
    %c18 = arith.constant 18 : index
    %c0_28 = arith.constant 0 : index
    %20 = vector.load %arg8[%c18, %c0_28] : memref<360x32xbf16, #tpu.memory_space<vmem>>, vector<320x32xbf16>
    %c0_29 = arith.constant 0 : index
    %c3 = arith.constant 3 : index
    %c0_30 = arith.constant 0 : index
    %c0_31 = arith.constant 0 : index
    %21 = vector.load %arg5[%c0_29, %c3, %c0_30, %c0_31] : memref<1x9x32x64xbf16, #tpu.memory_space<vmem>>, vector<1x1x32x64xbf16>
    %22 = vector.shape_cast %21 : vector<1x1x32x64xbf16> to vector<32x64xbf16>
    %cst_32 = arith.constant dense<0.000000e+00> : vector<320x64xf32>
    %23 = tpu.matmul %20, %22, %cst_32 {dimension_numbers = #tpu.dot_dimension_numbers<[1], [0], [0], [1], [0, 0, 1, 1], [], []>} : vector<320x32xbf16>, vector<32x64xbf16>, vector<320x64xf32> -> vector<320x64xf32>
    %24 = arith.addf %19, %23 : vector<320x64xf32>
    %c19 = arith.constant 19 : index
    %c0_33 = arith.constant 0 : index
    %25 = vector.load %arg8[%c19, %c0_33] : memref<360x32xbf16, #tpu.memory_space<vmem>>, vector<320x32xbf16>
    %c0_34 = arith.constant 0 : index
    %c4 = arith.constant 4 : index
    %c0_35 = arith.constant 0 : index
    %c0_36 = arith.constant 0 : index
    %26 = vector.load %arg5[%c0_34, %c4, %c0_35, %c0_36] : memref<1x9x32x64xbf16, #tpu.memory_space<vmem>>, vector<1x1x32x64xbf16>
    %27 = vector.shape_cast %26 : vector<1x1x32x64xbf16> to vector<32x64xbf16>
    %cst_37 = arith.constant dense<0.000000e+00> : vector<320x64xf32>
    %28 = tpu.matmul %25, %27, %cst_37 {dimension_numbers = #tpu.dot_dimension_numbers<[1], [0], [0], [1], [0, 0, 1, 1], [], []>} : vector<320x32xbf16>, vector<32x64xbf16>, vector<320x64xf32> -> vector<320x64xf32>
    %29 = arith.addf %24, %28 : vector<320x64xf32>
    %c20 = arith.constant 20 : index
    %c0_38 = arith.constant 0 : index
    %30 = vector.load %arg8[%c20, %c0_38] : memref<360x32xbf16, #tpu.memory_space<vmem>>, vector<320x32xbf16>
    %c0_39 = arith.constant 0 : index
    %c5 = arith.constant 5 : index
    %c0_40 = arith.constant 0 : index
    %c0_41 = arith.constant 0 : index
    %31 = vector.load %arg5[%c0_39, %c5, %c0_40, %c0_41] : memref<1x9x32x64xbf16, #tpu.memory_space<vmem>>, vector<1x1x32x64xbf16>
    %32 = vector.shape_cast %31 : vector<1x1x32x64xbf16> to vector<32x64xbf16>
    %cst_42 = arith.constant dense<0.000000e+00> : vector<320x64xf32>
    %33 = tpu.matmul %30, %32, %cst_42 {dimension_numbers = #tpu.dot_dimension_numbers<[1], [0], [0], [1], [0, 0, 1, 1], [], []>} : vector<320x32xbf16>, vector<32x64xbf16>, vector<320x64xf32> -> vector<320x64xf32>
    %34 = arith.addf %29, %33 : vector<320x64xf32>
    %c36 = arith.constant 36 : index
    %c0_43 = arith.constant 0 : index
    %35 = vector.load %arg8[%c36, %c0_43] : memref<360x32xbf16, #tpu.memory_space<vmem>>, vector<320x32xbf16>
    %c0_44 = arith.constant 0 : index
    %c6 = arith.constant 6 : index
    %c0_45 = arith.constant 0 : index
    %c0_46 = arith.constant 0 : index
    %36 = vector.load %arg5[%c0_44, %c6, %c0_45, %c0_46] : memref<1x9x32x64xbf16, #tpu.memory_space<vmem>>, vector<1x1x32x64xbf16>
    %37 = vector.shape_cast %36 : vector<1x1x32x64xbf16> to vector<32x64xbf16>
    %cst_47 = arith.constant dense<0.000000e+00> : vector<320x64xf32>
    %38 = tpu.matmul %35, %37, %cst_47 {dimension_numbers = #tpu.dot_dimension_numbers<[1], [0], [0], [1], [0, 0, 1, 1], [], []>} : vector<320x32xbf16>, vector<32x64xbf16>, vector<320x64xf32> -> vector<320x64xf32>
    %39 = arith.addf %34, %38 : vector<320x64xf32>
    %c37 = arith.constant 37 : index
    %c0_48 = arith.constant 0 : index
    %40 = vector.load %arg8[%c37, %c0_48] : memref<360x32xbf16, #tpu.memory_space<vmem>>, vector<320x32xbf16>
    %c0_49 = arith.constant 0 : index
    %c7 = arith.constant 7 : index
    %c0_50 = arith.constant 0 : index
    %c0_51 = arith.constant 0 : index
    %41 = vector.load %arg5[%c0_49, %c7, %c0_50, %c0_51] : memref<1x9x32x64xbf16, #tpu.memory_space<vmem>>, vector<1x1x32x64xbf16>
    %42 = vector.shape_cast %41 : vector<1x1x32x64xbf16> to vector<32x64xbf16>
    %cst_52 = arith.constant dense<0.000000e+00> : vector<320x64xf32>
    %43 = tpu.matmul %40, %42, %cst_52 {dimension_numbers = #tpu.dot_dimension_numbers<[1], [0], [0], [1], [0, 0, 1, 1], [], []>} : vector<320x32xbf16>, vector<32x64xbf16>, vector<320x64xf32> -> vector<320x64xf32>
    %44 = arith.addf %39, %43 : vector<320x64xf32>
    %c38 = arith.constant 38 : index
    %c0_53 = arith.constant 0 : index
    %45 = vector.load %arg8[%c38, %c0_53] : memref<360x32xbf16, #tpu.memory_space<vmem>>, vector<320x32xbf16>
    %c0_54 = arith.constant 0 : index
    %c8 = arith.constant 8 : index
    %c0_55 = arith.constant 0 : index
    %c0_56 = arith.constant 0 : index
    %46 = vector.load %arg5[%c0_54, %c8, %c0_55, %c0_56] : memref<1x9x32x64xbf16, #tpu.memory_space<vmem>>, vector<1x1x32x64xbf16>
    %47 = vector.shape_cast %46 : vector<1x1x32x64xbf16> to vector<32x64xbf16>
    %cst_57 = arith.constant dense<0.000000e+00> : vector<320x64xf32>
    %48 = tpu.matmul %45, %47, %cst_57 {dimension_numbers = #tpu.dot_dimension_numbers<[1], [0], [0], [1], [0, 0, 1, 1], [], []>} : vector<320x32xbf16>, vector<32x64xbf16>, vector<320x64xf32> -> vector<320x64xf32>
    %49 = arith.addf %44, %48 : vector<320x64xf32>
    %c0_58 = arith.constant 0 : index
    %c0_59 = arith.constant 0 : index
    %c0_60 = arith.constant 0 : index
    %50 = vector.load %arg6[%c0_58, %c0_59, %c0_60] : memref<1x1x64xf32, #tpu.memory_space<vmem>>, vector<1x1x64xf32>
    %51 = vector.shape_cast %50 : vector<1x1x64xf32> to vector<1x64xf32>
    %52 = vector.broadcast %51 : vector<1x64xf32> to vector<320x64xf32>
    %53 = arith.addf %49, %52 : vector<320x64xf32>
    %cst_61 = arith.constant 0.000000e+00 : f32
    %54 = vector.broadcast %cst_61 : f32 to vector<320x64xf32>
    %55 = arith.cmpf oge, %53, %54 : vector<320x64xf32>
    %cst_62 = arith.constant 2.500000e-01 : f32
    %56 = vector.broadcast %cst_62 : f32 to vector<320x64xf32>
    %57 = arith.mulf %56, %53 : vector<320x64xf32>
    %58 = arith.select %55, %53, %57 : vector<320x64xi1>, vector<320x64xf32>
    %59 = arith.truncf %58 : vector<320x64xf32> to vector<320x64xbf16>
    %c0_63 = arith.constant 0 : index
    %c0_64 = arith.constant 0 : index
    %c0_65 = arith.constant 0 : index
    %c0_66 = arith.constant 0 : index
    %60 = vector.load %arg7[%c0_63, %c0_64, %c0_65, %c0_66] : memref<1x1x320x64xbf16, #tpu.memory_space<vmem>>, vector<1x1x320x64xbf16>
    %61 = vector.shape_cast %60 : vector<1x1x320x64xbf16> to vector<320x64xbf16>
    %62 = vector.shape_cast %59 : vector<320x64xbf16> to vector<1x1x320x64xbf16>
    tpu.vector_store %arg7[%c0_63, %c0_64, %c0_65, %c0_66], %62 {strides = array<i32>} : memref<1x1x320x64xbf16, #tpu.memory_space<vmem>>, vector<1x1x320x64xbf16>,
    return
  }
  func.func @transform_0(%arg0: i32, %arg1: i32, %arg2: i32) -> (i32, i32, i32, i32) {
    %c0_i32 = arith.constant 0 : i32
    %c0_i32_0 = arith.constant 0 : i32
    return %arg0, %arg1, %arg2, %c0_i32 : i32, i32, i32, i32
  }
  func.func @transform_1(%arg0: i32, %arg1: i32, %arg2: i32) -> (i32, i32, i32, i32) {
    %c1_i32 = arith.constant 1 : i32
    %0 = arith.addi %arg2, %c1_i32 : i32
    %c8_i32 = arith.constant 8 : i32
    %1 = arith.muli %0, %c8_i32 : i32
    %c0_i32 = arith.constant 0 : i32
    %c0_i32_0 = arith.constant 0 : i32
    return %arg0, %arg1, %1, %c0_i32 : i32, i32, i32, i32
  }
  func.func @transform_2(%arg0: i32, %arg1: i32, %arg2: i32) -> (i32, i32, i32, i32) {
    %c0_i32 = arith.constant 0 : i32
    %c0_i32_0 = arith.constant 0 : i32
    %c0_i32_1 = arith.constant 0 : i32
    %c0_i32_2 = arith.constant 0 : i32
    return %arg0, %c0_i32, %c0_i32_0, %c0_i32_1 : i32, i32, i32, i32
  }
  func.func @transform_3(%arg0: i32, %arg1: i32, %arg2: i32) -> (i32, i32, i32) {
    %c0_i32 = arith.constant 0 : i32
    %c0_i32_0 = arith.constant 0 : i32
    %c0_i32_1 = arith.constant 0 : i32
    return %arg0, %c0_i32, %c0_i32_0 : i32, i32, i32
  }
  func.func @transform_4(%arg0: i32, %arg1: i32, %arg2: i32) -> (i32, i32, i32, i32) {
    %c0_i32 = arith.constant 0 : i32
    %c0_i32_0 = arith.constant 0 : i32
    return %arg0, %arg1, %arg2, %c0_i32 : i32, i32, i32, i32
  }
}

module attributes {stable_mosaic.version = 11 : i64} {
  func.func @_cmdaf_kernel(%arg0: i32, %arg1: i32, %arg2: memref<1x1x128x128xbf16, #tpu.memory_space<vmem>>, %arg3: memref<1x1x128x128xbf16, #tpu.memory_space<vmem>>, %arg4: memref<1x1x128x128xf32, #tpu.memory_space<vmem>>, %arg5: memref<1x1x128x128xf32, #tpu.memory_space<vmem>>, %arg6: memref<1x1x128x128xbf16, #tpu.memory_space<vmem>>, %arg7: memref<1x1x128x128xbf16, #tpu.memory_space<vmem>>) attributes {dimension_semantics = [#tpu.dimension_semantics<parallel>, #tpu.dimension_semantics<parallel>], iteration_bounds = array<i64: 2, 1>, scalar_prefetch = 0 : i64, scratch_operands = 0 : i64, tpu.core_type = #tpu.core_type<tc>, window_params = [{transform_indices = @transform_0, window_bounds = array<i64: 1, 1, 128, 128>}, {transform_indices = @transform_1, window_bounds = array<i64: 1, 1, 128, 128>}, {transform_indices = @transform_2, window_bounds = array<i64: 1, 1, 128, 128>}, {transform_indices = @transform_3, window_bounds = array<i64: 1, 1, 128, 128>}, {transform_indices = @transform_4, window_bounds = array<i64: 1, 1, 128, 128>}, {transform_indices = @transform_5, window_bounds = array<i64: 1, 1, 128, 128>}]} {
    %c0 = arith.constant 0 : index
    %c0_0 = arith.constant 0 : index
    %c0_1 = arith.constant 0 : index
    %c0_2 = arith.constant 0 : index
    %0 = vector.load %arg2[%c0, %c0_0, %c0_1, %c0_2] : memref<1x1x128x128xbf16, #tpu.memory_space<vmem>>, vector<1x1x128x128xbf16>
    %1 = vector.shape_cast %0 : vector<1x1x128x128xbf16> to vector<128x128xbf16>
    %2 = arith.extf %1 : vector<128x128xbf16> to vector<128x128xf32>
    %c0_3 = arith.constant 0 : index
    %c0_4 = arith.constant 0 : index
    %c0_5 = arith.constant 0 : index
    %c0_6 = arith.constant 0 : index
    %3 = vector.load %arg3[%c0_3, %c0_4, %c0_5, %c0_6] : memref<1x1x128x128xbf16, #tpu.memory_space<vmem>>, vector<1x1x128x128xbf16>
    %4 = vector.shape_cast %3 : vector<1x1x128x128xbf16> to vector<128x128xbf16>
    %5 = arith.extf %4 : vector<128x128xbf16> to vector<128x128xf32>
    %6 = arith.subf %5, %2 : vector<128x128xf32>
    %c0_7 = arith.constant 0 : index
    %c0_8 = arith.constant 0 : index
    %c0_9 = arith.constant 0 : index
    %c0_10 = arith.constant 0 : index
    %7 = vector.load %arg4[%c0_7, %c0_8, %c0_9, %c0_10] : memref<1x1x128x128xf32, #tpu.memory_space<vmem>>, vector<1x1x128x128xf32>
    %8 = vector.shape_cast %7 : vector<1x1x128x128xf32> to vector<128x128xf32>
    %9 = arith.mulf %6, %8 : vector<128x128xf32>
    %10 = arith.addf %2, %9 : vector<128x128xf32>
    %11 = arith.truncf %10 : vector<128x128xf32> to vector<128x128xbf16>
    %c0_11 = arith.constant 0 : index
    %c0_12 = arith.constant 0 : index
    %c0_13 = arith.constant 0 : index
    %c0_14 = arith.constant 0 : index
    %12 = vector.load %arg6[%c0_11, %c0_12, %c0_13, %c0_14] : memref<1x1x128x128xbf16, #tpu.memory_space<vmem>>, vector<1x1x128x128xbf16>
    %13 = vector.shape_cast %12 : vector<1x1x128x128xbf16> to vector<128x128xbf16>
    %14 = vector.shape_cast %11 : vector<128x128xbf16> to vector<1x1x128x128xbf16>
    tpu.vector_store %arg6[%c0_11, %c0_12, %c0_13, %c0_14], %14 {strides = array<i32>} : memref<1x1x128x128xbf16, #tpu.memory_space<vmem>>, vector<1x1x128x128xbf16>,
    %c0_15 = arith.constant 0 : index
    %c0_16 = arith.constant 0 : index
    %c0_17 = arith.constant 0 : index
    %c0_18 = arith.constant 0 : index
    %15 = vector.load %arg5[%c0_15, %c0_16, %c0_17, %c0_18] : memref<1x1x128x128xf32, #tpu.memory_space<vmem>>, vector<1x1x128x128xf32>
    %16 = vector.shape_cast %15 : vector<1x1x128x128xf32> to vector<128x128xf32>
    %17 = arith.mulf %6, %16 : vector<128x128xf32>
    %18 = arith.subf %5, %17 : vector<128x128xf32>
    %19 = arith.truncf %18 : vector<128x128xf32> to vector<128x128xbf16>
    %c0_19 = arith.constant 0 : index
    %c0_20 = arith.constant 0 : index
    %c0_21 = arith.constant 0 : index
    %c0_22 = arith.constant 0 : index
    %20 = vector.load %arg7[%c0_19, %c0_20, %c0_21, %c0_22] : memref<1x1x128x128xbf16, #tpu.memory_space<vmem>>, vector<1x1x128x128xbf16>
    %21 = vector.shape_cast %20 : vector<1x1x128x128xbf16> to vector<128x128xbf16>
    %22 = vector.shape_cast %19 : vector<128x128xbf16> to vector<1x1x128x128xbf16>
    tpu.vector_store %arg7[%c0_19, %c0_20, %c0_21, %c0_22], %22 {strides = array<i32>} : memref<1x1x128x128xbf16, #tpu.memory_space<vmem>>, vector<1x1x128x128xbf16>,
    return
  }
  func.func @transform_0(%arg0: i32, %arg1: i32) -> (i32, i32, i32, i32) {
    %c0_i32 = arith.constant 0 : i32
    %c0_i32_0 = arith.constant 0 : i32
    %c0_i32_1 = arith.constant 0 : i32
    return %arg0, %arg1, %c0_i32, %c0_i32_0 : i32, i32, i32, i32
  }
  func.func @transform_1(%arg0: i32, %arg1: i32) -> (i32, i32, i32, i32) {
    %c0_i32 = arith.constant 0 : i32
    %c0_i32_0 = arith.constant 0 : i32
    %c0_i32_1 = arith.constant 0 : i32
    return %arg0, %arg1, %c0_i32, %c0_i32_0 : i32, i32, i32, i32
  }
  func.func @transform_2(%arg0: i32, %arg1: i32) -> (i32, i32, i32, i32) {
    %c0_i32 = arith.constant 0 : i32
    %c0_i32_0 = arith.constant 0 : i32
    %c0_i32_1 = arith.constant 0 : i32
    %c0_i32_2 = arith.constant 0 : i32
    return %arg0, %c0_i32, %c0_i32_0, %c0_i32_1 : i32, i32, i32, i32
  }
  func.func @transform_3(%arg0: i32, %arg1: i32) -> (i32, i32, i32, i32) {
    %c0_i32 = arith.constant 0 : i32
    %c0_i32_0 = arith.constant 0 : i32
    %c0_i32_1 = arith.constant 0 : i32
    %c0_i32_2 = arith.constant 0 : i32
    return %arg0, %c0_i32, %c0_i32_0, %c0_i32_1 : i32, i32, i32, i32
  }
  func.func @transform_4(%arg0: i32, %arg1: i32) -> (i32, i32, i32, i32) {
    %c0_i32 = arith.constant 0 : i32
    %c0_i32_0 = arith.constant 0 : i32
    %c0_i32_1 = arith.constant 0 : i32
    return %arg0, %arg1, %c0_i32, %c0_i32_0 : i32, i32, i32, i32
  }
  func.func @transform_5(%arg0: i32, %arg1: i32) -> (i32, i32, i32, i32) {
    %c0_i32 = arith.constant 0 : i32
    %c0_i32_0 = arith.constant 0 : i32
    %c0_i32_1 = arith.constant 0 : i32
    return %arg0, %arg1, %c0_i32, %c0_i32_0 : i32, i32, i32, i32
  }
}

module attributes {stable_mosaic.version = 11 : i64} {
  func.func @_dconv_kernel(%arg0: i32, %arg1: i32, %arg2: i32, %arg3: memref<1x1x320x64xbf16, #tpu.memory_space<vmem>>, %arg4: memref<1x1x40x64xbf16, #tpu.memory_space<vmem>>, %arg5: memref<1x9x64x128xbf16, #tpu.memory_space<vmem>>, %arg6: memref<1x1x128xf32, #tpu.memory_space<vmem>>, %arg7: memref<1x1x320x128xbf16, #tpu.memory_space<vmem>>, %arg8: memref<360x64xbf16, #tpu.memory_space<vmem>>) attributes {dimension_semantics = [#tpu.dimension_semantics<parallel>, #tpu.dimension_semantics<parallel>, #tpu.dimension_semantics<parallel>], iteration_bounds = array<i64: 2, 2, 1>, scalar_prefetch = 0 : i64, scratch_operands = 1 : i64, tpu.core_type = #tpu.core_type<tc>, window_params = [{transform_indices = @transform_0, window_bounds = array<i64: 1, 1, 320, 64>}, {transform_indices = @transform_1, window_bounds = array<i64: 1, 1, 40, 64>}, {transform_indices = @transform_2, window_bounds = array<i64: 1, 9, 64, 128>}, {transform_indices = @transform_3, window_bounds = array<i64: 1, 1, 128>}, {transform_indices = @transform_4, window_bounds = array<i64: 1, 1, 320, 128>}]} {
    %c0 = arith.constant 0 : index
    %c0_0 = arith.constant 0 : index
    %c0_1 = arith.constant 0 : index
    %c0_2 = arith.constant 0 : index
    %0 = vector.load %arg3[%c0, %c0_0, %c0_1, %c0_2] : memref<1x1x320x64xbf16, #tpu.memory_space<vmem>>, vector<1x1x320x64xbf16>
    %1 = vector.shape_cast %0 : vector<1x1x320x64xbf16> to vector<320x64xbf16>
    %c0_3 = arith.constant 0 : index
    %c0_4 = arith.constant 0 : index
    %2 = vector.load %arg8[%c0_3, %c0_4] : memref<360x64xbf16, #tpu.memory_space<vmem>>, vector<320x64xbf16>
    tpu.vector_store %arg8[%c0_3, %c0_4], %1 {strides = array<i32>} : memref<360x64xbf16, #tpu.memory_space<vmem>>, vector<320x64xbf16>,
    %c0_5 = arith.constant 0 : index
    %c0_6 = arith.constant 0 : index
    %c0_7 = arith.constant 0 : index
    %c0_8 = arith.constant 0 : index
    %3 = vector.load %arg4[%c0_5, %c0_6, %c0_7, %c0_8] : memref<1x1x40x64xbf16, #tpu.memory_space<vmem>>, vector<1x1x40x64xbf16>
    %4 = vector.shape_cast %3 : vector<1x1x40x64xbf16> to vector<40x64xbf16>
    %c320 = arith.constant 320 : index
    %c0_9 = arith.constant 0 : index
    %5 = vector.load %arg8[%c320, %c0_9] : memref<360x64xbf16, #tpu.memory_space<vmem>>, vector<40x64xbf16>
    tpu.vector_store %arg8[%c320, %c0_9], %4 {strides = array<i32>} : memref<360x64xbf16, #tpu.memory_space<vmem>>, vector<40x64xbf16>,
    %c0_10 = arith.constant 0 : index
    %c0_11 = arith.constant 0 : index
    %6 = vector.load %arg8[%c0_10, %c0_11] : memref<360x64xbf16, #tpu.memory_space<vmem>>, vector<320x64xbf16>
    %c0_12 = arith.constant 0 : index
    %c0_13 = arith.constant 0 : index
    %c0_14 = arith.constant 0 : index
    %c0_15 = arith.constant 0 : index
    %7 = vector.load %arg5[%c0_12, %c0_13, %c0_14, %c0_15] : memref<1x9x64x128xbf16, #tpu.memory_space<vmem>>, vector<1x1x64x128xbf16>
    %8 = vector.shape_cast %7 : vector<1x1x64x128xbf16> to vector<64x128xbf16>
    %cst = arith.constant dense<0.000000e+00> : vector<320x128xf32>
    %9 = tpu.matmul %6, %8, %cst {dimension_numbers = #tpu.dot_dimension_numbers<[1], [0], [0], [1], [0, 0, 1, 1], [], []>} : vector<320x64xbf16>, vector<64x128xbf16>, vector<320x128xf32> -> vector<320x128xf32>
    %c1 = arith.constant 1 : index
    %c0_16 = arith.constant 0 : index
    %10 = vector.load %arg8[%c1, %c0_16] : memref<360x64xbf16, #tpu.memory_space<vmem>>, vector<320x64xbf16>
    %c0_17 = arith.constant 0 : index
    %c1_18 = arith.constant 1 : index
    %c0_19 = arith.constant 0 : index
    %c0_20 = arith.constant 0 : index
    %11 = vector.load %arg5[%c0_17, %c1_18, %c0_19, %c0_20] : memref<1x9x64x128xbf16, #tpu.memory_space<vmem>>, vector<1x1x64x128xbf16>
    %12 = vector.shape_cast %11 : vector<1x1x64x128xbf16> to vector<64x128xbf16>
    %cst_21 = arith.constant dense<0.000000e+00> : vector<320x128xf32>
    %13 = tpu.matmul %10, %12, %cst_21 {dimension_numbers = #tpu.dot_dimension_numbers<[1], [0], [0], [1], [0, 0, 1, 1], [], []>} : vector<320x64xbf16>, vector<64x128xbf16>, vector<320x128xf32> -> vector<320x128xf32>
    %14 = arith.addf %9, %13 : vector<320x128xf32>
    %c2 = arith.constant 2 : index
    %c0_22 = arith.constant 0 : index
    %15 = vector.load %arg8[%c2, %c0_22] : memref<360x64xbf16, #tpu.memory_space<vmem>>, vector<320x64xbf16>
    %c0_23 = arith.constant 0 : index
    %c2_24 = arith.constant 2 : index
    %c0_25 = arith.constant 0 : index
    %c0_26 = arith.constant 0 : index
    %16 = vector.load %arg5[%c0_23, %c2_24, %c0_25, %c0_26] : memref<1x9x64x128xbf16, #tpu.memory_space<vmem>>, vector<1x1x64x128xbf16>
    %17 = vector.shape_cast %16 : vector<1x1x64x128xbf16> to vector<64x128xbf16>
    %cst_27 = arith.constant dense<0.000000e+00> : vector<320x128xf32>
    %18 = tpu.matmul %15, %17, %cst_27 {dimension_numbers = #tpu.dot_dimension_numbers<[1], [0], [0], [1], [0, 0, 1, 1], [], []>} : vector<320x64xbf16>, vector<64x128xbf16>, vector<320x128xf32> -> vector<320x128xf32>
    %19 = arith.addf %14, %18 : vector<320x128xf32>
    %c18 = arith.constant 18 : index
    %c0_28 = arith.constant 0 : index
    %20 = vector.load %arg8[%c18, %c0_28] : memref<360x64xbf16, #tpu.memory_space<vmem>>, vector<320x64xbf16>
    %c0_29 = arith.constant 0 : index
    %c3 = arith.constant 3 : index
    %c0_30 = arith.constant 0 : index
    %c0_31 = arith.constant 0 : index
    %21 = vector.load %arg5[%c0_29, %c3, %c0_30, %c0_31] : memref<1x9x64x128xbf16, #tpu.memory_space<vmem>>, vector<1x1x64x128xbf16>
    %22 = vector.shape_cast %21 : vector<1x1x64x128xbf16> to vector<64x128xbf16>
    %cst_32 = arith.constant dense<0.000000e+00> : vector<320x128xf32>
    %23 = tpu.matmul %20, %22, %cst_32 {dimension_numbers = #tpu.dot_dimension_numbers<[1], [0], [0], [1], [0, 0, 1, 1], [], []>} : vector<320x64xbf16>, vector<64x128xbf16>, vector<320x128xf32> -> vector<320x128xf32>
    %24 = arith.addf %19, %23 : vector<320x128xf32>
    %c19 = arith.constant 19 : index
    %c0_33 = arith.constant 0 : index
    %25 = vector.load %arg8[%c19, %c0_33] : memref<360x64xbf16, #tpu.memory_space<vmem>>, vector<320x64xbf16>
    %c0_34 = arith.constant 0 : index
    %c4 = arith.constant 4 : index
    %c0_35 = arith.constant 0 : index
    %c0_36 = arith.constant 0 : index
    %26 = vector.load %arg5[%c0_34, %c4, %c0_35, %c0_36] : memref<1x9x64x128xbf16, #tpu.memory_space<vmem>>, vector<1x1x64x128xbf16>
    %27 = vector.shape_cast %26 : vector<1x1x64x128xbf16> to vector<64x128xbf16>
    %cst_37 = arith.constant dense<0.000000e+00> : vector<320x128xf32>
    %28 = tpu.matmul %25, %27, %cst_37 {dimension_numbers = #tpu.dot_dimension_numbers<[1], [0], [0], [1], [0, 0, 1, 1], [], []>} : vector<320x64xbf16>, vector<64x128xbf16>, vector<320x128xf32> -> vector<320x128xf32>
    %29 = arith.addf %24, %28 : vector<320x128xf32>
    %c20 = arith.constant 20 : index
    %c0_38 = arith.constant 0 : index
    %30 = vector.load %arg8[%c20, %c0_38] : memref<360x64xbf16, #tpu.memory_space<vmem>>, vector<320x64xbf16>
    %c0_39 = arith.constant 0 : index
    %c5 = arith.constant 5 : index
    %c0_40 = arith.constant 0 : index
    %c0_41 = arith.constant 0 : index
    %31 = vector.load %arg5[%c0_39, %c5, %c0_40, %c0_41] : memref<1x9x64x128xbf16, #tpu.memory_space<vmem>>, vector<1x1x64x128xbf16>
    %32 = vector.shape_cast %31 : vector<1x1x64x128xbf16> to vector<64x128xbf16>
    %cst_42 = arith.constant dense<0.000000e+00> : vector<320x128xf32>
    %33 = tpu.matmul %30, %32, %cst_42 {dimension_numbers = #tpu.dot_dimension_numbers<[1], [0], [0], [1], [0, 0, 1, 1], [], []>} : vector<320x64xbf16>, vector<64x128xbf16>, vector<320x128xf32> -> vector<320x128xf32>
    %34 = arith.addf %29, %33 : vector<320x128xf32>
    %c36 = arith.constant 36 : index
    %c0_43 = arith.constant 0 : index
    %35 = vector.load %arg8[%c36, %c0_43] : memref<360x64xbf16, #tpu.memory_space<vmem>>, vector<320x64xbf16>
    %c0_44 = arith.constant 0 : index
    %c6 = arith.constant 6 : index
    %c0_45 = arith.constant 0 : index
    %c0_46 = arith.constant 0 : index
    %36 = vector.load %arg5[%c0_44, %c6, %c0_45, %c0_46] : memref<1x9x64x128xbf16, #tpu.memory_space<vmem>>, vector<1x1x64x128xbf16>
    %37 = vector.shape_cast %36 : vector<1x1x64x128xbf16> to vector<64x128xbf16>
    %cst_47 = arith.constant dense<0.000000e+00> : vector<320x128xf32>
    %38 = tpu.matmul %35, %37, %cst_47 {dimension_numbers = #tpu.dot_dimension_numbers<[1], [0], [0], [1], [0, 0, 1, 1], [], []>} : vector<320x64xbf16>, vector<64x128xbf16>, vector<320x128xf32> -> vector<320x128xf32>
    %39 = arith.addf %34, %38 : vector<320x128xf32>
    %c37 = arith.constant 37 : index
    %c0_48 = arith.constant 0 : index
    %40 = vector.load %arg8[%c37, %c0_48] : memref<360x64xbf16, #tpu.memory_space<vmem>>, vector<320x64xbf16>
    %c0_49 = arith.constant 0 : index
    %c7 = arith.constant 7 : index
    %c0_50 = arith.constant 0 : index
    %c0_51 = arith.constant 0 : index
    %41 = vector.load %arg5[%c0_49, %c7, %c0_50, %c0_51] : memref<1x9x64x128xbf16, #tpu.memory_space<vmem>>, vector<1x1x64x128xbf16>
    %42 = vector.shape_cast %41 : vector<1x1x64x128xbf16> to vector<64x128xbf16>
    %cst_52 = arith.constant dense<0.000000e+00> : vector<320x128xf32>
    %43 = tpu.matmul %40, %42, %cst_52 {dimension_numbers = #tpu.dot_dimension_numbers<[1], [0], [0], [1], [0, 0, 1, 1], [], []>} : vector<320x64xbf16>, vector<64x128xbf16>, vector<320x128xf32> -> vector<320x128xf32>
    %44 = arith.addf %39, %43 : vector<320x128xf32>
    %c38 = arith.constant 38 : index
    %c0_53 = arith.constant 0 : index
    %45 = vector.load %arg8[%c38, %c0_53] : memref<360x64xbf16, #tpu.memory_space<vmem>>, vector<320x64xbf16>
    %c0_54 = arith.constant 0 : index
    %c8 = arith.constant 8 : index
    %c0_55 = arith.constant 0 : index
    %c0_56 = arith.constant 0 : index
    %46 = vector.load %arg5[%c0_54, %c8, %c0_55, %c0_56] : memref<1x9x64x128xbf16, #tpu.memory_space<vmem>>, vector<1x1x64x128xbf16>
    %47 = vector.shape_cast %46 : vector<1x1x64x128xbf16> to vector<64x128xbf16>
    %cst_57 = arith.constant dense<0.000000e+00> : vector<320x128xf32>
    %48 = tpu.matmul %45, %47, %cst_57 {dimension_numbers = #tpu.dot_dimension_numbers<[1], [0], [0], [1], [0, 0, 1, 1], [], []>} : vector<320x64xbf16>, vector<64x128xbf16>, vector<320x128xf32> -> vector<320x128xf32>
    %49 = arith.addf %44, %48 : vector<320x128xf32>
    %c0_58 = arith.constant 0 : index
    %c0_59 = arith.constant 0 : index
    %c0_60 = arith.constant 0 : index
    %50 = vector.load %arg6[%c0_58, %c0_59, %c0_60] : memref<1x1x128xf32, #tpu.memory_space<vmem>>, vector<1x1x128xf32>
    %51 = vector.shape_cast %50 : vector<1x1x128xf32> to vector<1x128xf32>
    %52 = vector.broadcast %51 : vector<1x128xf32> to vector<320x128xf32>
    %53 = arith.addf %49, %52 : vector<320x128xf32>
    %cst_61 = arith.constant 0.000000e+00 : f32
    %54 = vector.broadcast %cst_61 : f32 to vector<320x128xf32>
    %55 = arith.cmpf oge, %53, %54 : vector<320x128xf32>
    %cst_62 = arith.constant 2.500000e-01 : f32
    %56 = vector.broadcast %cst_62 : f32 to vector<320x128xf32>
    %57 = arith.mulf %56, %53 : vector<320x128xf32>
    %58 = arith.select %55, %53, %57 : vector<320x128xi1>, vector<320x128xf32>
    %59 = arith.truncf %58 : vector<320x128xf32> to vector<320x128xbf16>
    %c0_63 = arith.constant 0 : index
    %c0_64 = arith.constant 0 : index
    %c0_65 = arith.constant 0 : index
    %c0_66 = arith.constant 0 : index
    %60 = vector.load %arg7[%c0_63, %c0_64, %c0_65, %c0_66] : memref<1x1x320x128xbf16, #tpu.memory_space<vmem>>, vector<1x1x320x128xbf16>
    %61 = vector.shape_cast %60 : vector<1x1x320x128xbf16> to vector<320x128xbf16>
    %62 = vector.shape_cast %59 : vector<320x128xbf16> to vector<1x1x320x128xbf16>
    tpu.vector_store %arg7[%c0_63, %c0_64, %c0_65, %c0_66], %62 {strides = array<i32>} : memref<1x1x320x128xbf16, #tpu.memory_space<vmem>>, vector<1x1x320x128xbf16>,
    return
  }
  func.func @transform_0(%arg0: i32, %arg1: i32, %arg2: i32) -> (i32, i32, i32, i32) {
    %c0_i32 = arith.constant 0 : i32
    %c0_i32_0 = arith.constant 0 : i32
    return %arg0, %arg1, %arg2, %c0_i32 : i32, i32, i32, i32
  }
  func.func @transform_1(%arg0: i32, %arg1: i32, %arg2: i32) -> (i32, i32, i32, i32) {
    %c1_i32 = arith.constant 1 : i32
    %0 = arith.addi %arg2, %c1_i32 : i32
    %c8_i32 = arith.constant 8 : i32
    %1 = arith.muli %0, %c8_i32 : i32
    %c0_i32 = arith.constant 0 : i32
    %c0_i32_0 = arith.constant 0 : i32
    return %arg0, %arg1, %1, %c0_i32 : i32, i32, i32, i32
  }
  func.func @transform_2(%arg0: i32, %arg1: i32, %arg2: i32) -> (i32, i32, i32, i32) {
    %c0_i32 = arith.constant 0 : i32
    %c0_i32_0 = arith.constant 0 : i32
    %c0_i32_1 = arith.constant 0 : i32
    %c0_i32_2 = arith.constant 0 : i32
    return %arg0, %c0_i32, %c0_i32_0, %c0_i32_1 : i32, i32, i32, i32
  }
  func.func @transform_3(%arg0: i32, %arg1: i32, %arg2: i32) -> (i32, i32, i32) {
    %c0_i32 = arith.constant 0 : i32
    %c0_i32_0 = arith.constant 0 : i32
    %c0_i32_1 = arith.constant 0 : i32
    return %arg0, %c0_i32, %c0_i32_0 : i32, i32, i32
  }
  func.func @transform_4(%arg0: i32, %arg1: i32, %arg2: i32) -> (i32, i32, i32, i32) {
    %c0_i32 = arith.constant 0 : i32
    %c0_i32_0 = arith.constant 0 : i32
    return %arg0, %arg1, %arg2, %c0_i32 : i32, i32, i32, i32
  }
}

module attributes {stable_mosaic.version = 11 : i64} {
  func.func @_dconv_kernel(%arg0: i32, %arg1: i32, %arg2: i32, %arg3: memref<1x1x320x256xbf16, #tpu.memory_space<vmem>>, %arg4: memref<1x1x40x256xbf16, #tpu.memory_space<vmem>>, %arg5: memref<1x9x256x128xbf16, #tpu.memory_space<vmem>>, %arg6: memref<1x1x128xf32, #tpu.memory_space<vmem>>, %arg7: memref<1x1x320x128xbf16, #tpu.memory_space<vmem>>, %arg8: memref<360x256xbf16, #tpu.memory_space<vmem>>) attributes {dimension_semantics = [#tpu.dimension_semantics<parallel>, #tpu.dimension_semantics<parallel>, #tpu.dimension_semantics<parallel>], iteration_bounds = array<i64: 1, 2, 1>, scalar_prefetch = 0 : i64, scratch_operands = 1 : i64, tpu.core_type = #tpu.core_type<tc>, window_params = [{transform_indices = @transform_0, window_bounds = array<i64: 1, 1, 320, 256>}, {transform_indices = @transform_1, window_bounds = array<i64: 1, 1, 40, 256>}, {transform_indices = @transform_2, window_bounds = array<i64: 1, 9, 256, 128>}, {transform_indices = @transform_3, window_bounds = array<i64: 1, 1, 128>}, {transform_indices = @transform_4, window_bounds = array<i64: 1, 1, 320, 128>}]} {
    %c0 = arith.constant 0 : index
    %c0_0 = arith.constant 0 : index
    %c0_1 = arith.constant 0 : index
    %c0_2 = arith.constant 0 : index
    %0 = vector.load %arg3[%c0, %c0_0, %c0_1, %c0_2] : memref<1x1x320x256xbf16, #tpu.memory_space<vmem>>, vector<1x1x320x256xbf16>
    %1 = vector.shape_cast %0 : vector<1x1x320x256xbf16> to vector<320x256xbf16>
    %c0_3 = arith.constant 0 : index
    %c0_4 = arith.constant 0 : index
    %2 = vector.load %arg8[%c0_3, %c0_4] : memref<360x256xbf16, #tpu.memory_space<vmem>>, vector<320x256xbf16>
    tpu.vector_store %arg8[%c0_3, %c0_4], %1 {strides = array<i32>} : memref<360x256xbf16, #tpu.memory_space<vmem>>, vector<320x256xbf16>,
    %c0_5 = arith.constant 0 : index
    %c0_6 = arith.constant 0 : index
    %c0_7 = arith.constant 0 : index
    %c0_8 = arith.constant 0 : index
    %3 = vector.load %arg4[%c0_5, %c0_6, %c0_7, %c0_8] : memref<1x1x40x256xbf16, #tpu.memory_space<vmem>>, vector<1x1x40x256xbf16>
    %4 = vector.shape_cast %3 : vector<1x1x40x256xbf16> to vector<40x256xbf16>
    %c320 = arith.constant 320 : index
    %c0_9 = arith.constant 0 : index
    %5 = vector.load %arg8[%c320, %c0_9] : memref<360x256xbf16, #tpu.memory_space<vmem>>, vector<40x256xbf16>
    tpu.vector_store %arg8[%c320, %c0_9], %4 {strides = array<i32>} : memref<360x256xbf16, #tpu.memory_space<vmem>>, vector<40x256xbf16>,
    %c0_10 = arith.constant 0 : index
    %c0_11 = arith.constant 0 : index
    %6 = vector.load %arg8[%c0_10, %c0_11] : memref<360x256xbf16, #tpu.memory_space<vmem>>, vector<320x256xbf16>
    %c0_12 = arith.constant 0 : index
    %c0_13 = arith.constant 0 : index
    %c0_14 = arith.constant 0 : index
    %c0_15 = arith.constant 0 : index
    %7 = vector.load %arg5[%c0_12, %c0_13, %c0_14, %c0_15] : memref<1x9x256x128xbf16, #tpu.memory_space<vmem>>, vector<1x1x256x128xbf16>
    %8 = vector.shape_cast %7 : vector<1x1x256x128xbf16> to vector<256x128xbf16>
    %cst = arith.constant dense<0.000000e+00> : vector<320x128xf32>
    %9 = tpu.matmul %6, %8, %cst {dimension_numbers = #tpu.dot_dimension_numbers<[1], [0], [0], [1], [0, 0, 1, 1], [], []>} : vector<320x256xbf16>, vector<256x128xbf16>, vector<320x128xf32> -> vector<320x128xf32>
    %c1 = arith.constant 1 : index
    %c0_16 = arith.constant 0 : index
    %10 = vector.load %arg8[%c1, %c0_16] : memref<360x256xbf16, #tpu.memory_space<vmem>>, vector<320x256xbf16>
    %c0_17 = arith.constant 0 : index
    %c1_18 = arith.constant 1 : index
    %c0_19 = arith.constant 0 : index
    %c0_20 = arith.constant 0 : index
    %11 = vector.load %arg5[%c0_17, %c1_18, %c0_19, %c0_20] : memref<1x9x256x128xbf16, #tpu.memory_space<vmem>>, vector<1x1x256x128xbf16>
    %12 = vector.shape_cast %11 : vector<1x1x256x128xbf16> to vector<256x128xbf16>
    %cst_21 = arith.constant dense<0.000000e+00> : vector<320x128xf32>
    %13 = tpu.matmul %10, %12, %cst_21 {dimension_numbers = #tpu.dot_dimension_numbers<[1], [0], [0], [1], [0, 0, 1, 1], [], []>} : vector<320x256xbf16>, vector<256x128xbf16>, vector<320x128xf32> -> vector<320x128xf32>
    %14 = arith.addf %9, %13 : vector<320x128xf32>
    %c2 = arith.constant 2 : index
    %c0_22 = arith.constant 0 : index
    %15 = vector.load %arg8[%c2, %c0_22] : memref<360x256xbf16, #tpu.memory_space<vmem>>, vector<320x256xbf16>
    %c0_23 = arith.constant 0 : index
    %c2_24 = arith.constant 2 : index
    %c0_25 = arith.constant 0 : index
    %c0_26 = arith.constant 0 : index
    %16 = vector.load %arg5[%c0_23, %c2_24, %c0_25, %c0_26] : memref<1x9x256x128xbf16, #tpu.memory_space<vmem>>, vector<1x1x256x128xbf16>
    %17 = vector.shape_cast %16 : vector<1x1x256x128xbf16> to vector<256x128xbf16>
    %cst_27 = arith.constant dense<0.000000e+00> : vector<320x128xf32>
    %18 = tpu.matmul %15, %17, %cst_27 {dimension_numbers = #tpu.dot_dimension_numbers<[1], [0], [0], [1], [0, 0, 1, 1], [], []>} : vector<320x256xbf16>, vector<256x128xbf16>, vector<320x128xf32> -> vector<320x128xf32>
    %19 = arith.addf %14, %18 : vector<320x128xf32>
    %c18 = arith.constant 18 : index
    %c0_28 = arith.constant 0 : index
    %20 = vector.load %arg8[%c18, %c0_28] : memref<360x256xbf16, #tpu.memory_space<vmem>>, vector<320x256xbf16>
    %c0_29 = arith.constant 0 : index
    %c3 = arith.constant 3 : index
    %c0_30 = arith.constant 0 : index
    %c0_31 = arith.constant 0 : index
    %21 = vector.load %arg5[%c0_29, %c3, %c0_30, %c0_31] : memref<1x9x256x128xbf16, #tpu.memory_space<vmem>>, vector<1x1x256x128xbf16>
    %22 = vector.shape_cast %21 : vector<1x1x256x128xbf16> to vector<256x128xbf16>
    %cst_32 = arith.constant dense<0.000000e+00> : vector<320x128xf32>
    %23 = tpu.matmul %20, %22, %cst_32 {dimension_numbers = #tpu.dot_dimension_numbers<[1], [0], [0], [1], [0, 0, 1, 1], [], []>} : vector<320x256xbf16>, vector<256x128xbf16>, vector<320x128xf32> -> vector<320x128xf32>
    %24 = arith.addf %19, %23 : vector<320x128xf32>
    %c19 = arith.constant 19 : index
    %c0_33 = arith.constant 0 : index
    %25 = vector.load %arg8[%c19, %c0_33] : memref<360x256xbf16, #tpu.memory_space<vmem>>, vector<320x256xbf16>
    %c0_34 = arith.constant 0 : index
    %c4 = arith.constant 4 : index
    %c0_35 = arith.constant 0 : index
    %c0_36 = arith.constant 0 : index
    %26 = vector.load %arg5[%c0_34, %c4, %c0_35, %c0_36] : memref<1x9x256x128xbf16, #tpu.memory_space<vmem>>, vector<1x1x256x128xbf16>
    %27 = vector.shape_cast %26 : vector<1x1x256x128xbf16> to vector<256x128xbf16>
    %cst_37 = arith.constant dense<0.000000e+00> : vector<320x128xf32>
    %28 = tpu.matmul %25, %27, %cst_37 {dimension_numbers = #tpu.dot_dimension_numbers<[1], [0], [0], [1], [0, 0, 1, 1], [], []>} : vector<320x256xbf16>, vector<256x128xbf16>, vector<320x128xf32> -> vector<320x128xf32>
    %29 = arith.addf %24, %28 : vector<320x128xf32>
    %c20 = arith.constant 20 : index
    %c0_38 = arith.constant 0 : index
    %30 = vector.load %arg8[%c20, %c0_38] : memref<360x256xbf16, #tpu.memory_space<vmem>>, vector<320x256xbf16>
    %c0_39 = arith.constant 0 : index
    %c5 = arith.constant 5 : index
    %c0_40 = arith.constant 0 : index
    %c0_41 = arith.constant 0 : index
    %31 = vector.load %arg5[%c0_39, %c5, %c0_40, %c0_41] : memref<1x9x256x128xbf16, #tpu.memory_space<vmem>>, vector<1x1x256x128xbf16>
    %32 = vector.shape_cast %31 : vector<1x1x256x128xbf16> to vector<256x128xbf16>
    %cst_42 = arith.constant dense<0.000000e+00> : vector<320x128xf32>
    %33 = tpu.matmul %30, %32, %cst_42 {dimension_numbers = #tpu.dot_dimension_numbers<[1], [0], [0], [1], [0, 0, 1, 1], [], []>} : vector<320x256xbf16>, vector<256x128xbf16>, vector<320x128xf32> -> vector<320x128xf32>
    %34 = arith.addf %29, %33 : vector<320x128xf32>
    %c36 = arith.constant 36 : index
    %c0_43 = arith.constant 0 : index
    %35 = vector.load %arg8[%c36, %c0_43] : memref<360x256xbf16, #tpu.memory_space<vmem>>, vector<320x256xbf16>
    %c0_44 = arith.constant 0 : index
    %c6 = arith.constant 6 : index
    %c0_45 = arith.constant 0 : index
    %c0_46 = arith.constant 0 : index
    %36 = vector.load %arg5[%c0_44, %c6, %c0_45, %c0_46] : memref<1x9x256x128xbf16, #tpu.memory_space<vmem>>, vector<1x1x256x128xbf16>
    %37 = vector.shape_cast %36 : vector<1x1x256x128xbf16> to vector<256x128xbf16>
    %cst_47 = arith.constant dense<0.000000e+00> : vector<320x128xf32>
    %38 = tpu.matmul %35, %37, %cst_47 {dimension_numbers = #tpu.dot_dimension_numbers<[1], [0], [0], [1], [0, 0, 1, 1], [], []>} : vector<320x256xbf16>, vector<256x128xbf16>, vector<320x128xf32> -> vector<320x128xf32>
    %39 = arith.addf %34, %38 : vector<320x128xf32>
    %c37 = arith.constant 37 : index
    %c0_48 = arith.constant 0 : index
    %40 = vector.load %arg8[%c37, %c0_48] : memref<360x256xbf16, #tpu.memory_space<vmem>>, vector<320x256xbf16>
    %c0_49 = arith.constant 0 : index
    %c7 = arith.constant 7 : index
    %c0_50 = arith.constant 0 : index
    %c0_51 = arith.constant 0 : index
    %41 = vector.load %arg5[%c0_49, %c7, %c0_50, %c0_51] : memref<1x9x256x128xbf16, #tpu.memory_space<vmem>>, vector<1x1x256x128xbf16>
    %42 = vector.shape_cast %41 : vector<1x1x256x128xbf16> to vector<256x128xbf16>
    %cst_52 = arith.constant dense<0.000000e+00> : vector<320x128xf32>
    %43 = tpu.matmul %40, %42, %cst_52 {dimension_numbers = #tpu.dot_dimension_numbers<[1], [0], [0], [1], [0, 0, 1, 1], [], []>} : vector<320x256xbf16>, vector<256x128xbf16>, vector<320x128xf32> -> vector<320x128xf32>
    %44 = arith.addf %39, %43 : vector<320x128xf32>
    %c38 = arith.constant 38 : index
    %c0_53 = arith.constant 0 : index
    %45 = vector.load %arg8[%c38, %c0_53] : memref<360x256xbf16, #tpu.memory_space<vmem>>, vector<320x256xbf16>
    %c0_54 = arith.constant 0 : index
    %c8 = arith.constant 8 : index
    %c0_55 = arith.constant 0 : index
    %c0_56 = arith.constant 0 : index
    %46 = vector.load %arg5[%c0_54, %c8, %c0_55, %c0_56] : memref<1x9x256x128xbf16, #tpu.memory_space<vmem>>, vector<1x1x256x128xbf16>
    %47 = vector.shape_cast %46 : vector<1x1x256x128xbf16> to vector<256x128xbf16>
    %cst_57 = arith.constant dense<0.000000e+00> : vector<320x128xf32>
    %48 = tpu.matmul %45, %47, %cst_57 {dimension_numbers = #tpu.dot_dimension_numbers<[1], [0], [0], [1], [0, 0, 1, 1], [], []>} : vector<320x256xbf16>, vector<256x128xbf16>, vector<320x128xf32> -> vector<320x128xf32>
    %49 = arith.addf %44, %48 : vector<320x128xf32>
    %c0_58 = arith.constant 0 : index
    %c0_59 = arith.constant 0 : index
    %c0_60 = arith.constant 0 : index
    %50 = vector.load %arg6[%c0_58, %c0_59, %c0_60] : memref<1x1x128xf32, #tpu.memory_space<vmem>>, vector<1x1x128xf32>
    %51 = vector.shape_cast %50 : vector<1x1x128xf32> to vector<1x128xf32>
    %52 = vector.broadcast %51 : vector<1x128xf32> to vector<320x128xf32>
    %53 = arith.addf %49, %52 : vector<320x128xf32>
    %cst_61 = arith.constant 0.000000e+00 : f32
    %54 = vector.broadcast %cst_61 : f32 to vector<320x128xf32>
    %55 = arith.cmpf oge, %53, %54 : vector<320x128xf32>
    %cst_62 = arith.constant 2.500000e-01 : f32
    %56 = vector.broadcast %cst_62 : f32 to vector<320x128xf32>
    %57 = arith.mulf %56, %53 : vector<320x128xf32>
    %58 = arith.select %55, %53, %57 : vector<320x128xi1>, vector<320x128xf32>
    %59 = arith.truncf %58 : vector<320x128xf32> to vector<320x128xbf16>
    %c0_63 = arith.constant 0 : index
    %c0_64 = arith.constant 0 : index
    %c0_65 = arith.constant 0 : index
    %c0_66 = arith.constant 0 : index
    %60 = vector.load %arg7[%c0_63, %c0_64, %c0_65, %c0_66] : memref<1x1x320x128xbf16, #tpu.memory_space<vmem>>, vector<1x1x320x128xbf16>
    %61 = vector.shape_cast %60 : vector<1x1x320x128xbf16> to vector<320x128xbf16>
    %62 = vector.shape_cast %59 : vector<320x128xbf16> to vector<1x1x320x128xbf16>
    tpu.vector_store %arg7[%c0_63, %c0_64, %c0_65, %c0_66], %62 {strides = array<i32>} : memref<1x1x320x128xbf16, #tpu.memory_space<vmem>>, vector<1x1x320x128xbf16>,
    return
  }
  func.func @transform_0(%arg0: i32, %arg1: i32, %arg2: i32) -> (i32, i32, i32, i32) {
    %c0_i32 = arith.constant 0 : i32
    %c0_i32_0 = arith.constant 0 : i32
    return %arg0, %arg1, %arg2, %c0_i32 : i32, i32, i32, i32
  }
  func.func @transform_1(%arg0: i32, %arg1: i32, %arg2: i32) -> (i32, i32, i32, i32) {
    %c1_i32 = arith.constant 1 : i32
    %0 = arith.addi %arg2, %c1_i32 : i32
    %c8_i32 = arith.constant 8 : i32
    %1 = arith.muli %0, %c8_i32 : i32
    %c0_i32 = arith.constant 0 : i32
    %c0_i32_0 = arith.constant 0 : i32
    return %arg0, %arg1, %1, %c0_i32 : i32, i32, i32, i32
  }
  func.func @transform_2(%arg0: i32, %arg1: i32, %arg2: i32) -> (i32, i32, i32, i32) {
    %c0_i32 = arith.constant 0 : i32
    %c0_i32_0 = arith.constant 0 : i32
    %c0_i32_1 = arith.constant 0 : i32
    %c0_i32_2 = arith.constant 0 : i32
    return %arg0, %c0_i32, %c0_i32_0, %c0_i32_1 : i32, i32, i32, i32
  }
  func.func @transform_3(%arg0: i32, %arg1: i32, %arg2: i32) -> (i32, i32, i32) {
    %c0_i32 = arith.constant 0 : i32
    %c0_i32_0 = arith.constant 0 : i32
    %c0_i32_1 = arith.constant 0 : i32
    return %arg0, %c0_i32, %c0_i32_0 : i32, i32, i32
  }
  func.func @transform_4(%arg0: i32, %arg1: i32, %arg2: i32) -> (i32, i32, i32, i32) {
    %c0_i32 = arith.constant 0 : i32
    %c0_i32_0 = arith.constant 0 : i32
    return %arg0, %arg1, %arg2, %c0_i32 : i32, i32, i32, i32
  }
}

module attributes {stable_mosaic.version = 11 : i64} {
  func.func @_dconv_kernel(%arg0: i32, %arg1: i32, %arg2: i32, %arg3: memref<1x1x320x128xbf16, #tpu.memory_space<vmem>>, %arg4: memref<1x1x40x128xbf16, #tpu.memory_space<vmem>>, %arg5: memref<1x9x128x64xbf16, #tpu.memory_space<vmem>>, %arg6: memref<1x1x64xf32, #tpu.memory_space<vmem>>, %arg7: memref<1x1x320x64xbf16, #tpu.memory_space<vmem>>, %arg8: memref<360x128xbf16, #tpu.memory_space<vmem>>) attributes {dimension_semantics = [#tpu.dimension_semantics<parallel>, #tpu.dimension_semantics<parallel>, #tpu.dimension_semantics<parallel>], iteration_bounds = array<i64: 1, 2, 1>, scalar_prefetch = 0 : i64, scratch_operands = 1 : i64, tpu.core_type = #tpu.core_type<tc>, window_params = [{transform_indices = @transform_0, window_bounds = array<i64: 1, 1, 320, 128>}, {transform_indices = @transform_1, window_bounds = array<i64: 1, 1, 40, 128>}, {transform_indices = @transform_2, window_bounds = array<i64: 1, 9, 128, 64>}, {transform_indices = @transform_3, window_bounds = array<i64: 1, 1, 64>}, {transform_indices = @transform_4, window_bounds = array<i64: 1, 1, 320, 64>}]} {
    %c0 = arith.constant 0 : index
    %c0_0 = arith.constant 0 : index
    %c0_1 = arith.constant 0 : index
    %c0_2 = arith.constant 0 : index
    %0 = vector.load %arg3[%c0, %c0_0, %c0_1, %c0_2] : memref<1x1x320x128xbf16, #tpu.memory_space<vmem>>, vector<1x1x320x128xbf16>
    %1 = vector.shape_cast %0 : vector<1x1x320x128xbf16> to vector<320x128xbf16>
    %c0_3 = arith.constant 0 : index
    %c0_4 = arith.constant 0 : index
    %2 = vector.load %arg8[%c0_3, %c0_4] : memref<360x128xbf16, #tpu.memory_space<vmem>>, vector<320x128xbf16>
    tpu.vector_store %arg8[%c0_3, %c0_4], %1 {strides = array<i32>} : memref<360x128xbf16, #tpu.memory_space<vmem>>, vector<320x128xbf16>,
    %c0_5 = arith.constant 0 : index
    %c0_6 = arith.constant 0 : index
    %c0_7 = arith.constant 0 : index
    %c0_8 = arith.constant 0 : index
    %3 = vector.load %arg4[%c0_5, %c0_6, %c0_7, %c0_8] : memref<1x1x40x128xbf16, #tpu.memory_space<vmem>>, vector<1x1x40x128xbf16>
    %4 = vector.shape_cast %3 : vector<1x1x40x128xbf16> to vector<40x128xbf16>
    %c320 = arith.constant 320 : index
    %c0_9 = arith.constant 0 : index
    %5 = vector.load %arg8[%c320, %c0_9] : memref<360x128xbf16, #tpu.memory_space<vmem>>, vector<40x128xbf16>
    tpu.vector_store %arg8[%c320, %c0_9], %4 {strides = array<i32>} : memref<360x128xbf16, #tpu.memory_space<vmem>>, vector<40x128xbf16>,
    %c0_10 = arith.constant 0 : index
    %c0_11 = arith.constant 0 : index
    %6 = vector.load %arg8[%c0_10, %c0_11] : memref<360x128xbf16, #tpu.memory_space<vmem>>, vector<320x128xbf16>
    %c0_12 = arith.constant 0 : index
    %c0_13 = arith.constant 0 : index
    %c0_14 = arith.constant 0 : index
    %c0_15 = arith.constant 0 : index
    %7 = vector.load %arg5[%c0_12, %c0_13, %c0_14, %c0_15] : memref<1x9x128x64xbf16, #tpu.memory_space<vmem>>, vector<1x1x128x64xbf16>
    %8 = vector.shape_cast %7 : vector<1x1x128x64xbf16> to vector<128x64xbf16>
    %cst = arith.constant dense<0.000000e+00> : vector<320x64xf32>
    %9 = tpu.matmul %6, %8, %cst {dimension_numbers = #tpu.dot_dimension_numbers<[1], [0], [0], [1], [0, 0, 1, 1], [], []>} : vector<320x128xbf16>, vector<128x64xbf16>, vector<320x64xf32> -> vector<320x64xf32>
    %c1 = arith.constant 1 : index
    %c0_16 = arith.constant 0 : index
    %10 = vector.load %arg8[%c1, %c0_16] : memref<360x128xbf16, #tpu.memory_space<vmem>>, vector<320x128xbf16>
    %c0_17 = arith.constant 0 : index
    %c1_18 = arith.constant 1 : index
    %c0_19 = arith.constant 0 : index
    %c0_20 = arith.constant 0 : index
    %11 = vector.load %arg5[%c0_17, %c1_18, %c0_19, %c0_20] : memref<1x9x128x64xbf16, #tpu.memory_space<vmem>>, vector<1x1x128x64xbf16>
    %12 = vector.shape_cast %11 : vector<1x1x128x64xbf16> to vector<128x64xbf16>
    %cst_21 = arith.constant dense<0.000000e+00> : vector<320x64xf32>
    %13 = tpu.matmul %10, %12, %cst_21 {dimension_numbers = #tpu.dot_dimension_numbers<[1], [0], [0], [1], [0, 0, 1, 1], [], []>} : vector<320x128xbf16>, vector<128x64xbf16>, vector<320x64xf32> -> vector<320x64xf32>
    %14 = arith.addf %9, %13 : vector<320x64xf32>
    %c2 = arith.constant 2 : index
    %c0_22 = arith.constant 0 : index
    %15 = vector.load %arg8[%c2, %c0_22] : memref<360x128xbf16, #tpu.memory_space<vmem>>, vector<320x128xbf16>
    %c0_23 = arith.constant 0 : index
    %c2_24 = arith.constant 2 : index
    %c0_25 = arith.constant 0 : index
    %c0_26 = arith.constant 0 : index
    %16 = vector.load %arg5[%c0_23, %c2_24, %c0_25, %c0_26] : memref<1x9x128x64xbf16, #tpu.memory_space<vmem>>, vector<1x1x128x64xbf16>
    %17 = vector.shape_cast %16 : vector<1x1x128x64xbf16> to vector<128x64xbf16>
    %cst_27 = arith.constant dense<0.000000e+00> : vector<320x64xf32>
    %18 = tpu.matmul %15, %17, %cst_27 {dimension_numbers = #tpu.dot_dimension_numbers<[1], [0], [0], [1], [0, 0, 1, 1], [], []>} : vector<320x128xbf16>, vector<128x64xbf16>, vector<320x64xf32> -> vector<320x64xf32>
    %19 = arith.addf %14, %18 : vector<320x64xf32>
    %c18 = arith.constant 18 : index
    %c0_28 = arith.constant 0 : index
    %20 = vector.load %arg8[%c18, %c0_28] : memref<360x128xbf16, #tpu.memory_space<vmem>>, vector<320x128xbf16>
    %c0_29 = arith.constant 0 : index
    %c3 = arith.constant 3 : index
    %c0_30 = arith.constant 0 : index
    %c0_31 = arith.constant 0 : index
    %21 = vector.load %arg5[%c0_29, %c3, %c0_30, %c0_31] : memref<1x9x128x64xbf16, #tpu.memory_space<vmem>>, vector<1x1x128x64xbf16>
    %22 = vector.shape_cast %21 : vector<1x1x128x64xbf16> to vector<128x64xbf16>
    %cst_32 = arith.constant dense<0.000000e+00> : vector<320x64xf32>
    %23 = tpu.matmul %20, %22, %cst_32 {dimension_numbers = #tpu.dot_dimension_numbers<[1], [0], [0], [1], [0, 0, 1, 1], [], []>} : vector<320x128xbf16>, vector<128x64xbf16>, vector<320x64xf32> -> vector<320x64xf32>
    %24 = arith.addf %19, %23 : vector<320x64xf32>
    %c19 = arith.constant 19 : index
    %c0_33 = arith.constant 0 : index
    %25 = vector.load %arg8[%c19, %c0_33] : memref<360x128xbf16, #tpu.memory_space<vmem>>, vector<320x128xbf16>
    %c0_34 = arith.constant 0 : index
    %c4 = arith.constant 4 : index
    %c0_35 = arith.constant 0 : index
    %c0_36 = arith.constant 0 : index
    %26 = vector.load %arg5[%c0_34, %c4, %c0_35, %c0_36] : memref<1x9x128x64xbf16, #tpu.memory_space<vmem>>, vector<1x1x128x64xbf16>
    %27 = vector.shape_cast %26 : vector<1x1x128x64xbf16> to vector<128x64xbf16>
    %cst_37 = arith.constant dense<0.000000e+00> : vector<320x64xf32>
    %28 = tpu.matmul %25, %27, %cst_37 {dimension_numbers = #tpu.dot_dimension_numbers<[1], [0], [0], [1], [0, 0, 1, 1], [], []>} : vector<320x128xbf16>, vector<128x64xbf16>, vector<320x64xf32> -> vector<320x64xf32>
    %29 = arith.addf %24, %28 : vector<320x64xf32>
    %c20 = arith.constant 20 : index
    %c0_38 = arith.constant 0 : index
    %30 = vector.load %arg8[%c20, %c0_38] : memref<360x128xbf16, #tpu.memory_space<vmem>>, vector<320x128xbf16>
    %c0_39 = arith.constant 0 : index
    %c5 = arith.constant 5 : index
    %c0_40 = arith.constant 0 : index
    %c0_41 = arith.constant 0 : index
    %31 = vector.load %arg5[%c0_39, %c5, %c0_40, %c0_41] : memref<1x9x128x64xbf16, #tpu.memory_space<vmem>>, vector<1x1x128x64xbf16>
    %32 = vector.shape_cast %31 : vector<1x1x128x64xbf16> to vector<128x64xbf16>
    %cst_42 = arith.constant dense<0.000000e+00> : vector<320x64xf32>
    %33 = tpu.matmul %30, %32, %cst_42 {dimension_numbers = #tpu.dot_dimension_numbers<[1], [0], [0], [1], [0, 0, 1, 1], [], []>} : vector<320x128xbf16>, vector<128x64xbf16>, vector<320x64xf32> -> vector<320x64xf32>
    %34 = arith.addf %29, %33 : vector<320x64xf32>
    %c36 = arith.constant 36 : index
    %c0_43 = arith.constant 0 : index
    %35 = vector.load %arg8[%c36, %c0_43] : memref<360x128xbf16, #tpu.memory_space<vmem>>, vector<320x128xbf16>
    %c0_44 = arith.constant 0 : index
    %c6 = arith.constant 6 : index
    %c0_45 = arith.constant 0 : index
    %c0_46 = arith.constant 0 : index
    %36 = vector.load %arg5[%c0_44, %c6, %c0_45, %c0_46] : memref<1x9x128x64xbf16, #tpu.memory_space<vmem>>, vector<1x1x128x64xbf16>
    %37 = vector.shape_cast %36 : vector<1x1x128x64xbf16> to vector<128x64xbf16>
    %cst_47 = arith.constant dense<0.000000e+00> : vector<320x64xf32>
    %38 = tpu.matmul %35, %37, %cst_47 {dimension_numbers = #tpu.dot_dimension_numbers<[1], [0], [0], [1], [0, 0, 1, 1], [], []>} : vector<320x128xbf16>, vector<128x64xbf16>, vector<320x64xf32> -> vector<320x64xf32>
    %39 = arith.addf %34, %38 : vector<320x64xf32>
    %c37 = arith.constant 37 : index
    %c0_48 = arith.constant 0 : index
    %40 = vector.load %arg8[%c37, %c0_48] : memref<360x128xbf16, #tpu.memory_space<vmem>>, vector<320x128xbf16>
    %c0_49 = arith.constant 0 : index
    %c7 = arith.constant 7 : index
    %c0_50 = arith.constant 0 : index
    %c0_51 = arith.constant 0 : index
    %41 = vector.load %arg5[%c0_49, %c7, %c0_50, %c0_51] : memref<1x9x128x64xbf16, #tpu.memory_space<vmem>>, vector<1x1x128x64xbf16>
    %42 = vector.shape_cast %41 : vector<1x1x128x64xbf16> to vector<128x64xbf16>
    %cst_52 = arith.constant dense<0.000000e+00> : vector<320x64xf32>
    %43 = tpu.matmul %40, %42, %cst_52 {dimension_numbers = #tpu.dot_dimension_numbers<[1], [0], [0], [1], [0, 0, 1, 1], [], []>} : vector<320x128xbf16>, vector<128x64xbf16>, vector<320x64xf32> -> vector<320x64xf32>
    %44 = arith.addf %39, %43 : vector<320x64xf32>
    %c38 = arith.constant 38 : index
    %c0_53 = arith.constant 0 : index
    %45 = vector.load %arg8[%c38, %c0_53] : memref<360x128xbf16, #tpu.memory_space<vmem>>, vector<320x128xbf16>
    %c0_54 = arith.constant 0 : index
    %c8 = arith.constant 8 : index
    %c0_55 = arith.constant 0 : index
    %c0_56 = arith.constant 0 : index
    %46 = vector.load %arg5[%c0_54, %c8, %c0_55, %c0_56] : memref<1x9x128x64xbf16, #tpu.memory_space<vmem>>, vector<1x1x128x64xbf16>
    %47 = vector.shape_cast %46 : vector<1x1x128x64xbf16> to vector<128x64xbf16>
    %cst_57 = arith.constant dense<0.000000e+00> : vector<320x64xf32>
    %48 = tpu.matmul %45, %47, %cst_57 {dimension_numbers = #tpu.dot_dimension_numbers<[1], [0], [0], [1], [0, 0, 1, 1], [], []>} : vector<320x128xbf16>, vector<128x64xbf16>, vector<320x64xf32> -> vector<320x64xf32>
    %49 = arith.addf %44, %48 : vector<320x64xf32>
    %c0_58 = arith.constant 0 : index
    %c0_59 = arith.constant 0 : index
    %c0_60 = arith.constant 0 : index
    %50 = vector.load %arg6[%c0_58, %c0_59, %c0_60] : memref<1x1x64xf32, #tpu.memory_space<vmem>>, vector<1x1x64xf32>
    %51 = vector.shape_cast %50 : vector<1x1x64xf32> to vector<1x64xf32>
    %52 = vector.broadcast %51 : vector<1x64xf32> to vector<320x64xf32>
    %53 = arith.addf %49, %52 : vector<320x64xf32>
    %cst_61 = arith.constant 0.000000e+00 : f32
    %54 = vector.broadcast %cst_61 : f32 to vector<320x64xf32>
    %55 = arith.cmpf oge, %53, %54 : vector<320x64xf32>
    %cst_62 = arith.constant 2.500000e-01 : f32
    %56 = vector.broadcast %cst_62 : f32 to vector<320x64xf32>
    %57 = arith.mulf %56, %53 : vector<320x64xf32>
    %58 = arith.select %55, %53, %57 : vector<320x64xi1>, vector<320x64xf32>
    %59 = arith.truncf %58 : vector<320x64xf32> to vector<320x64xbf16>
    %c0_63 = arith.constant 0 : index
    %c0_64 = arith.constant 0 : index
    %c0_65 = arith.constant 0 : index
    %c0_66 = arith.constant 0 : index
    %60 = vector.load %arg7[%c0_63, %c0_64, %c0_65, %c0_66] : memref<1x1x320x64xbf16, #tpu.memory_space<vmem>>, vector<1x1x320x64xbf16>
    %61 = vector.shape_cast %60 : vector<1x1x320x64xbf16> to vector<320x64xbf16>
    %62 = vector.shape_cast %59 : vector<320x64xbf16> to vector<1x1x320x64xbf16>
    tpu.vector_store %arg7[%c0_63, %c0_64, %c0_65, %c0_66], %62 {strides = array<i32>} : memref<1x1x320x64xbf16, #tpu.memory_space<vmem>>, vector<1x1x320x64xbf16>,
    return
  }
  func.func @transform_0(%arg0: i32, %arg1: i32, %arg2: i32) -> (i32, i32, i32, i32) {
    %c0_i32 = arith.constant 0 : i32
    %c0_i32_0 = arith.constant 0 : i32
    return %arg0, %arg1, %arg2, %c0_i32 : i32, i32, i32, i32
  }
  func.func @transform_1(%arg0: i32, %arg1: i32, %arg2: i32) -> (i32, i32, i32, i32) {
    %c1_i32 = arith.constant 1 : i32
    %0 = arith.addi %arg2, %c1_i32 : i32
    %c8_i32 = arith.constant 8 : i32
    %1 = arith.muli %0, %c8_i32 : i32
    %c0_i32 = arith.constant 0 : i32
    %c0_i32_0 = arith.constant 0 : i32
    return %arg0, %arg1, %1, %c0_i32 : i32, i32, i32, i32
  }
  func.func @transform_2(%arg0: i32, %arg1: i32, %arg2: i32) -> (i32, i32, i32, i32) {
    %c0_i32 = arith.constant 0 : i32
    %c0_i32_0 = arith.constant 0 : i32
    %c0_i32_1 = arith.constant 0 : i32
    %c0_i32_2 = arith.constant 0 : i32
    return %arg0, %c0_i32, %c0_i32_0, %c0_i32_1 : i32, i32, i32, i32
  }
  func.func @transform_3(%arg0: i32, %arg1: i32, %arg2: i32) -> (i32, i32, i32) {
    %c0_i32 = arith.constant 0 : i32
    %c0_i32_0 = arith.constant 0 : i32
    %c0_i32_1 = arith.constant 0 : i32
    return %arg0, %c0_i32, %c0_i32_0 : i32, i32, i32
  }
  func.func @transform_4(%arg0: i32, %arg1: i32, %arg2: i32) -> (i32, i32, i32, i32) {
    %c0_i32 = arith.constant 0 : i32
    %c0_i32_0 = arith.constant 0 : i32
    return %arg0, %arg1, %arg2, %c0_i32 : i32, i32, i32, i32
  }
}

module attributes {stable_mosaic.version = 11 : i64} {
  func.func @_dconv_kernel(%arg0: i32, %arg1: i32, %arg2: i32, %arg3: memref<1x1x320x64xbf16, #tpu.memory_space<vmem>>, %arg4: memref<1x1x40x64xbf16, #tpu.memory_space<vmem>>, %arg5: memref<1x9x64x32xbf16, #tpu.memory_space<vmem>>, %arg6: memref<1x1x32xf32, #tpu.memory_space<vmem>>, %arg7: memref<1x1x320x32xbf16, #tpu.memory_space<vmem>>, %arg8: memref<360x64xbf16, #tpu.memory_space<vmem>>) attributes {dimension_semantics = [#tpu.dimension_semantics<parallel>, #tpu.dimension_semantics<parallel>, #tpu.dimension_semantics<parallel>], iteration_bounds = array<i64: 1, 2, 1>, scalar_prefetch = 0 : i64, scratch_operands = 1 : i64, tpu.core_type = #tpu.core_type<tc>, window_params = [{transform_indices = @transform_0, window_bounds = array<i64: 1, 1, 320, 64>}, {transform_indices = @transform_1, window_bounds = array<i64: 1, 1, 40, 64>}, {transform_indices = @transform_2, window_bounds = array<i64: 1, 9, 64, 32>}, {transform_indices = @transform_3, window_bounds = array<i64: 1, 1, 32>}, {transform_indices = @transform_4, window_bounds = array<i64: 1, 1, 320, 32>}]} {
    %c0 = arith.constant 0 : index
    %c0_0 = arith.constant 0 : index
    %c0_1 = arith.constant 0 : index
    %c0_2 = arith.constant 0 : index
    %0 = vector.load %arg3[%c0, %c0_0, %c0_1, %c0_2] : memref<1x1x320x64xbf16, #tpu.memory_space<vmem>>, vector<1x1x320x64xbf16>
    %1 = vector.shape_cast %0 : vector<1x1x320x64xbf16> to vector<320x64xbf16>
    %c0_3 = arith.constant 0 : index
    %c0_4 = arith.constant 0 : index
    %2 = vector.load %arg8[%c0_3, %c0_4] : memref<360x64xbf16, #tpu.memory_space<vmem>>, vector<320x64xbf16>
    tpu.vector_store %arg8[%c0_3, %c0_4], %1 {strides = array<i32>} : memref<360x64xbf16, #tpu.memory_space<vmem>>, vector<320x64xbf16>,
    %c0_5 = arith.constant 0 : index
    %c0_6 = arith.constant 0 : index
    %c0_7 = arith.constant 0 : index
    %c0_8 = arith.constant 0 : index
    %3 = vector.load %arg4[%c0_5, %c0_6, %c0_7, %c0_8] : memref<1x1x40x64xbf16, #tpu.memory_space<vmem>>, vector<1x1x40x64xbf16>
    %4 = vector.shape_cast %3 : vector<1x1x40x64xbf16> to vector<40x64xbf16>
    %c320 = arith.constant 320 : index
    %c0_9 = arith.constant 0 : index
    %5 = vector.load %arg8[%c320, %c0_9] : memref<360x64xbf16, #tpu.memory_space<vmem>>, vector<40x64xbf16>
    tpu.vector_store %arg8[%c320, %c0_9], %4 {strides = array<i32>} : memref<360x64xbf16, #tpu.memory_space<vmem>>, vector<40x64xbf16>,
    %c0_10 = arith.constant 0 : index
    %c0_11 = arith.constant 0 : index
    %6 = vector.load %arg8[%c0_10, %c0_11] : memref<360x64xbf16, #tpu.memory_space<vmem>>, vector<320x64xbf16>
    %c0_12 = arith.constant 0 : index
    %c0_13 = arith.constant 0 : index
    %c0_14 = arith.constant 0 : index
    %c0_15 = arith.constant 0 : index
    %7 = vector.load %arg5[%c0_12, %c0_13, %c0_14, %c0_15] : memref<1x9x64x32xbf16, #tpu.memory_space<vmem>>, vector<1x1x64x32xbf16>
    %8 = vector.shape_cast %7 : vector<1x1x64x32xbf16> to vector<64x32xbf16>
    %cst = arith.constant dense<0.000000e+00> : vector<320x32xf32>
    %9 = tpu.matmul %6, %8, %cst {dimension_numbers = #tpu.dot_dimension_numbers<[1], [0], [0], [1], [0, 0, 1, 1], [], []>} : vector<320x64xbf16>, vector<64x32xbf16>, vector<320x32xf32> -> vector<320x32xf32>
    %c1 = arith.constant 1 : index
    %c0_16 = arith.constant 0 : index
    %10 = vector.load %arg8[%c1, %c0_16] : memref<360x64xbf16, #tpu.memory_space<vmem>>, vector<320x64xbf16>
    %c0_17 = arith.constant 0 : index
    %c1_18 = arith.constant 1 : index
    %c0_19 = arith.constant 0 : index
    %c0_20 = arith.constant 0 : index
    %11 = vector.load %arg5[%c0_17, %c1_18, %c0_19, %c0_20] : memref<1x9x64x32xbf16, #tpu.memory_space<vmem>>, vector<1x1x64x32xbf16>
    %12 = vector.shape_cast %11 : vector<1x1x64x32xbf16> to vector<64x32xbf16>
    %cst_21 = arith.constant dense<0.000000e+00> : vector<320x32xf32>
    %13 = tpu.matmul %10, %12, %cst_21 {dimension_numbers = #tpu.dot_dimension_numbers<[1], [0], [0], [1], [0, 0, 1, 1], [], []>} : vector<320x64xbf16>, vector<64x32xbf16>, vector<320x32xf32> -> vector<320x32xf32>
    %14 = arith.addf %9, %13 : vector<320x32xf32>
    %c2 = arith.constant 2 : index
    %c0_22 = arith.constant 0 : index
    %15 = vector.load %arg8[%c2, %c0_22] : memref<360x64xbf16, #tpu.memory_space<vmem>>, vector<320x64xbf16>
    %c0_23 = arith.constant 0 : index
    %c2_24 = arith.constant 2 : index
    %c0_25 = arith.constant 0 : index
    %c0_26 = arith.constant 0 : index
    %16 = vector.load %arg5[%c0_23, %c2_24, %c0_25, %c0_26] : memref<1x9x64x32xbf16, #tpu.memory_space<vmem>>, vector<1x1x64x32xbf16>
    %17 = vector.shape_cast %16 : vector<1x1x64x32xbf16> to vector<64x32xbf16>
    %cst_27 = arith.constant dense<0.000000e+00> : vector<320x32xf32>
    %18 = tpu.matmul %15, %17, %cst_27 {dimension_numbers = #tpu.dot_dimension_numbers<[1], [0], [0], [1], [0, 0, 1, 1], [], []>} : vector<320x64xbf16>, vector<64x32xbf16>, vector<320x32xf32> -> vector<320x32xf32>
    %19 = arith.addf %14, %18 : vector<320x32xf32>
    %c18 = arith.constant 18 : index
    %c0_28 = arith.constant 0 : index
    %20 = vector.load %arg8[%c18, %c0_28] : memref<360x64xbf16, #tpu.memory_space<vmem>>, vector<320x64xbf16>
    %c0_29 = arith.constant 0 : index
    %c3 = arith.constant 3 : index
    %c0_30 = arith.constant 0 : index
    %c0_31 = arith.constant 0 : index
    %21 = vector.load %arg5[%c0_29, %c3, %c0_30, %c0_31] : memref<1x9x64x32xbf16, #tpu.memory_space<vmem>>, vector<1x1x64x32xbf16>
    %22 = vector.shape_cast %21 : vector<1x1x64x32xbf16> to vector<64x32xbf16>
    %cst_32 = arith.constant dense<0.000000e+00> : vector<320x32xf32>
    %23 = tpu.matmul %20, %22, %cst_32 {dimension_numbers = #tpu.dot_dimension_numbers<[1], [0], [0], [1], [0, 0, 1, 1], [], []>} : vector<320x64xbf16>, vector<64x32xbf16>, vector<320x32xf32> -> vector<320x32xf32>
    %24 = arith.addf %19, %23 : vector<320x32xf32>
    %c19 = arith.constant 19 : index
    %c0_33 = arith.constant 0 : index
    %25 = vector.load %arg8[%c19, %c0_33] : memref<360x64xbf16, #tpu.memory_space<vmem>>, vector<320x64xbf16>
    %c0_34 = arith.constant 0 : index
    %c4 = arith.constant 4 : index
    %c0_35 = arith.constant 0 : index
    %c0_36 = arith.constant 0 : index
    %26 = vector.load %arg5[%c0_34, %c4, %c0_35, %c0_36] : memref<1x9x64x32xbf16, #tpu.memory_space<vmem>>, vector<1x1x64x32xbf16>
    %27 = vector.shape_cast %26 : vector<1x1x64x32xbf16> to vector<64x32xbf16>
    %cst_37 = arith.constant dense<0.000000e+00> : vector<320x32xf32>
    %28 = tpu.matmul %25, %27, %cst_37 {dimension_numbers = #tpu.dot_dimension_numbers<[1], [0], [0], [1], [0, 0, 1, 1], [], []>} : vector<320x64xbf16>, vector<64x32xbf16>, vector<320x32xf32> -> vector<320x32xf32>
    %29 = arith.addf %24, %28 : vector<320x32xf32>
    %c20 = arith.constant 20 : index
    %c0_38 = arith.constant 0 : index
    %30 = vector.load %arg8[%c20, %c0_38] : memref<360x64xbf16, #tpu.memory_space<vmem>>, vector<320x64xbf16>
    %c0_39 = arith.constant 0 : index
    %c5 = arith.constant 5 : index
    %c0_40 = arith.constant 0 : index
    %c0_41 = arith.constant 0 : index
    %31 = vector.load %arg5[%c0_39, %c5, %c0_40, %c0_41] : memref<1x9x64x32xbf16, #tpu.memory_space<vmem>>, vector<1x1x64x32xbf16>
    %32 = vector.shape_cast %31 : vector<1x1x64x32xbf16> to vector<64x32xbf16>
    %cst_42 = arith.constant dense<0.000000e+00> : vector<320x32xf32>
    %33 = tpu.matmul %30, %32, %cst_42 {dimension_numbers = #tpu.dot_dimension_numbers<[1], [0], [0], [1], [0, 0, 1, 1], [], []>} : vector<320x64xbf16>, vector<64x32xbf16>, vector<320x32xf32> -> vector<320x32xf32>
    %34 = arith.addf %29, %33 : vector<320x32xf32>
    %c36 = arith.constant 36 : index
    %c0_43 = arith.constant 0 : index
    %35 = vector.load %arg8[%c36, %c0_43] : memref<360x64xbf16, #tpu.memory_space<vmem>>, vector<320x64xbf16>
    %c0_44 = arith.constant 0 : index
    %c6 = arith.constant 6 : index
    %c0_45 = arith.constant 0 : index
    %c0_46 = arith.constant 0 : index
    %36 = vector.load %arg5[%c0_44, %c6, %c0_45, %c0_46] : memref<1x9x64x32xbf16, #tpu.memory_space<vmem>>, vector<1x1x64x32xbf16>
    %37 = vector.shape_cast %36 : vector<1x1x64x32xbf16> to vector<64x32xbf16>
    %cst_47 = arith.constant dense<0.000000e+00> : vector<320x32xf32>
    %38 = tpu.matmul %35, %37, %cst_47 {dimension_numbers = #tpu.dot_dimension_numbers<[1], [0], [0], [1], [0, 0, 1, 1], [], []>} : vector<320x64xbf16>, vector<64x32xbf16>, vector<320x32xf32> -> vector<320x32xf32>
    %39 = arith.addf %34, %38 : vector<320x32xf32>
    %c37 = arith.constant 37 : index
    %c0_48 = arith.constant 0 : index
    %40 = vector.load %arg8[%c37, %c0_48] : memref<360x64xbf16, #tpu.memory_space<vmem>>, vector<320x64xbf16>
    %c0_49 = arith.constant 0 : index
    %c7 = arith.constant 7 : index
    %c0_50 = arith.constant 0 : index
    %c0_51 = arith.constant 0 : index
    %41 = vector.load %arg5[%c0_49, %c7, %c0_50, %c0_51] : memref<1x9x64x32xbf16, #tpu.memory_space<vmem>>, vector<1x1x64x32xbf16>
    %42 = vector.shape_cast %41 : vector<1x1x64x32xbf16> to vector<64x32xbf16>
    %cst_52 = arith.constant dense<0.000000e+00> : vector<320x32xf32>
    %43 = tpu.matmul %40, %42, %cst_52 {dimension_numbers = #tpu.dot_dimension_numbers<[1], [0], [0], [1], [0, 0, 1, 1], [], []>} : vector<320x64xbf16>, vector<64x32xbf16>, vector<320x32xf32> -> vector<320x32xf32>
    %44 = arith.addf %39, %43 : vector<320x32xf32>
    %c38 = arith.constant 38 : index
    %c0_53 = arith.constant 0 : index
    %45 = vector.load %arg8[%c38, %c0_53] : memref<360x64xbf16, #tpu.memory_space<vmem>>, vector<320x64xbf16>
    %c0_54 = arith.constant 0 : index
    %c8 = arith.constant 8 : index
    %c0_55 = arith.constant 0 : index
    %c0_56 = arith.constant 0 : index
    %46 = vector.load %arg5[%c0_54, %c8, %c0_55, %c0_56] : memref<1x9x64x32xbf16, #tpu.memory_space<vmem>>, vector<1x1x64x32xbf16>
    %47 = vector.shape_cast %46 : vector<1x1x64x32xbf16> to vector<64x32xbf16>
    %cst_57 = arith.constant dense<0.000000e+00> : vector<320x32xf32>
    %48 = tpu.matmul %45, %47, %cst_57 {dimension_numbers = #tpu.dot_dimension_numbers<[1], [0], [0], [1], [0, 0, 1, 1], [], []>} : vector<320x64xbf16>, vector<64x32xbf16>, vector<320x32xf32> -> vector<320x32xf32>
    %49 = arith.addf %44, %48 : vector<320x32xf32>
    %c0_58 = arith.constant 0 : index
    %c0_59 = arith.constant 0 : index
    %c0_60 = arith.constant 0 : index
    %50 = vector.load %arg6[%c0_58, %c0_59, %c0_60] : memref<1x1x32xf32, #tpu.memory_space<vmem>>, vector<1x1x32xf32>
    %51 = vector.shape_cast %50 : vector<1x1x32xf32> to vector<1x32xf32>
    %52 = vector.broadcast %51 : vector<1x32xf32> to vector<320x32xf32>
    %53 = arith.addf %49, %52 : vector<320x32xf32>
    %cst_61 = arith.constant 0.000000e+00 : f32
    %54 = vector.broadcast %cst_61 : f32 to vector<320x32xf32>
    %55 = arith.cmpf oge, %53, %54 : vector<320x32xf32>
    %cst_62 = arith.constant 2.500000e-01 : f32
    %56 = vector.broadcast %cst_62 : f32 to vector<320x32xf32>
    %57 = arith.mulf %56, %53 : vector<320x32xf32>
    %58 = arith.select %55, %53, %57 : vector<320x32xi1>, vector<320x32xf32>
    %59 = arith.truncf %58 : vector<320x32xf32> to vector<320x32xbf16>
    %c0_63 = arith.constant 0 : index
    %c0_64 = arith.constant 0 : index
    %c0_65 = arith.constant 0 : index
    %c0_66 = arith.constant 0 : index
    %60 = vector.load %arg7[%c0_63, %c0_64, %c0_65, %c0_66] : memref<1x1x320x32xbf16, #tpu.memory_space<vmem>>, vector<1x1x320x32xbf16>
    %61 = vector.shape_cast %60 : vector<1x1x320x32xbf16> to vector<320x32xbf16>
    %62 = vector.shape_cast %59 : vector<320x32xbf16> to vector<1x1x320x32xbf16>
    tpu.vector_store %arg7[%c0_63, %c0_64, %c0_65, %c0_66], %62 {strides = array<i32>} : memref<1x1x320x32xbf16, #tpu.memory_space<vmem>>, vector<1x1x320x32xbf16>,
    return
  }
  func.func @transform_0(%arg0: i32, %arg1: i32, %arg2: i32) -> (i32, i32, i32, i32) {
    %c0_i32 = arith.constant 0 : i32
    %c0_i32_0 = arith.constant 0 : i32
    return %arg0, %arg1, %arg2, %c0_i32 : i32, i32, i32, i32
  }
  func.func @transform_1(%arg0: i32, %arg1: i32, %arg2: i32) -> (i32, i32, i32, i32) {
    %c1_i32 = arith.constant 1 : i32
    %0 = arith.addi %arg2, %c1_i32 : i32
    %c8_i32 = arith.constant 8 : i32
    %1 = arith.muli %0, %c8_i32 : i32
    %c0_i32 = arith.constant 0 : i32
    %c0_i32_0 = arith.constant 0 : i32
    return %arg0, %arg1, %1, %c0_i32 : i32, i32, i32, i32
  }
  func.func @transform_2(%arg0: i32, %arg1: i32, %arg2: i32) -> (i32, i32, i32, i32) {
    %c0_i32 = arith.constant 0 : i32
    %c0_i32_0 = arith.constant 0 : i32
    %c0_i32_1 = arith.constant 0 : i32
    %c0_i32_2 = arith.constant 0 : i32
    return %arg0, %c0_i32, %c0_i32_0, %c0_i32_1 : i32, i32, i32, i32
  }
  func.func @transform_3(%arg0: i32, %arg1: i32, %arg2: i32) -> (i32, i32, i32) {
    %c0_i32 = arith.constant 0 : i32
    %c0_i32_0 = arith.constant 0 : i32
    %c0_i32_1 = arith.constant 0 : i32
    return %arg0, %c0_i32, %c0_i32_0 : i32, i32, i32
  }
  func.func @transform_4(%arg0: i32, %arg1: i32, %arg2: i32) -> (i32, i32, i32, i32) {
    %c0_i32 = arith.constant 0 : i32
    %c0_i32_0 = arith.constant 0 : i32
    return %arg0, %arg1, %arg2, %c0_i32 : i32, i32, i32, i32
  }
}

module attributes {stable_mosaic.version = 11 : i64} {
  func.func @_dconv_head_kernel(%arg0: i32, %arg1: i32, %arg2: i32, %arg3: memref<1x1x320x32xbf16, #tpu.memory_space<vmem>>, %arg4: memref<1x1x40x32xbf16, #tpu.memory_space<vmem>>, %arg5: memref<1x9x32x16xbf16, #tpu.memory_space<vmem>>, %arg6: memref<1x1x16xf32, #tpu.memory_space<vmem>>, %arg7: memref<1x16xf32, #tpu.memory_space<vmem>>, %arg8: memref<1x1xf32, #tpu.memory_space<vmem>>, %arg9: memref<1x1x320x1xf32, #tpu.memory_space<vmem>>, %arg10: memref<360x32xbf16, #tpu.memory_space<vmem>>) attributes {dimension_semantics = [#tpu.dimension_semantics<parallel>, #tpu.dimension_semantics<parallel>, #tpu.dimension_semantics<parallel>], iteration_bounds = array<i64: 1, 2, 1>, scalar_prefetch = 0 : i64, scratch_operands = 1 : i64, tpu.core_type = #tpu.core_type<tc>, window_params = [{transform_indices = @transform_0, window_bounds = array<i64: 1, 1, 320, 32>}, {transform_indices = @transform_1, window_bounds = array<i64: 1, 1, 40, 32>}, {transform_indices = @transform_2, window_bounds = array<i64: 1, 9, 32, 16>}, {transform_indices = @transform_3, window_bounds = array<i64: 1, 1, 16>}, {pipeline_mode = #tpu.pipeline_mode<synchronous>, transform_indices = @transform_4, window_bounds = array<i64: 1, 16>}, {pipeline_mode = #tpu.pipeline_mode<synchronous>, transform_indices = @transform_5, window_bounds = array<i64: 1, 1>}, {transform_indices = @transform_6, window_bounds = array<i64: 1, 1, 320, 1>}]} {
    %c0 = arith.constant 0 : index
    %c0_0 = arith.constant 0 : index
    %c0_1 = arith.constant 0 : index
    %c0_2 = arith.constant 0 : index
    %0 = vector.load %arg3[%c0, %c0_0, %c0_1, %c0_2] : memref<1x1x320x32xbf16, #tpu.memory_space<vmem>>, vector<1x1x320x32xbf16>
    %1 = vector.shape_cast %0 : vector<1x1x320x32xbf16> to vector<320x32xbf16>
    %c0_3 = arith.constant 0 : index
    %c0_4 = arith.constant 0 : index
    %2 = vector.load %arg10[%c0_3, %c0_4] : memref<360x32xbf16, #tpu.memory_space<vmem>>, vector<320x32xbf16>
    tpu.vector_store %arg10[%c0_3, %c0_4], %1 {strides = array<i32>} : memref<360x32xbf16, #tpu.memory_space<vmem>>, vector<320x32xbf16>,
    %c0_5 = arith.constant 0 : index
    %c0_6 = arith.constant 0 : index
    %c0_7 = arith.constant 0 : index
    %c0_8 = arith.constant 0 : index
    %3 = vector.load %arg4[%c0_5, %c0_6, %c0_7, %c0_8] : memref<1x1x40x32xbf16, #tpu.memory_space<vmem>>, vector<1x1x40x32xbf16>
    %4 = vector.shape_cast %3 : vector<1x1x40x32xbf16> to vector<40x32xbf16>
    %c320 = arith.constant 320 : index
    %c0_9 = arith.constant 0 : index
    %5 = vector.load %arg10[%c320, %c0_9] : memref<360x32xbf16, #tpu.memory_space<vmem>>, vector<40x32xbf16>
    tpu.vector_store %arg10[%c320, %c0_9], %4 {strides = array<i32>} : memref<360x32xbf16, #tpu.memory_space<vmem>>, vector<40x32xbf16>,
    %c0_10 = arith.constant 0 : index
    %c0_11 = arith.constant 0 : index
    %6 = vector.load %arg10[%c0_10, %c0_11] : memref<360x32xbf16, #tpu.memory_space<vmem>>, vector<320x32xbf16>
    %c0_12 = arith.constant 0 : index
    %c0_13 = arith.constant 0 : index
    %c0_14 = arith.constant 0 : index
    %c0_15 = arith.constant 0 : index
    %7 = vector.load %arg5[%c0_12, %c0_13, %c0_14, %c0_15] : memref<1x9x32x16xbf16, #tpu.memory_space<vmem>>, vector<1x1x32x16xbf16>
    %8 = vector.shape_cast %7 : vector<1x1x32x16xbf16> to vector<32x16xbf16>
    %cst = arith.constant dense<0.000000e+00> : vector<320x16xf32>
    %9 = tpu.matmul %6, %8, %cst {dimension_numbers = #tpu.dot_dimension_numbers<[1], [0], [0], [1], [0, 0, 1, 1], [], []>} : vector<320x32xbf16>, vector<32x16xbf16>, vector<320x16xf32> -> vector<320x16xf32>
    %c1 = arith.constant 1 : index
    %c0_16 = arith.constant 0 : index
    %10 = vector.load %arg10[%c1, %c0_16] : memref<360x32xbf16, #tpu.memory_space<vmem>>, vector<320x32xbf16>
    %c0_17 = arith.constant 0 : index
    %c1_18 = arith.constant 1 : index
    %c0_19 = arith.constant 0 : index
    %c0_20 = arith.constant 0 : index
    %11 = vector.load %arg5[%c0_17, %c1_18, %c0_19, %c0_20] : memref<1x9x32x16xbf16, #tpu.memory_space<vmem>>, vector<1x1x32x16xbf16>
    %12 = vector.shape_cast %11 : vector<1x1x32x16xbf16> to vector<32x16xbf16>
    %cst_21 = arith.constant dense<0.000000e+00> : vector<320x16xf32>
    %13 = tpu.matmul %10, %12, %cst_21 {dimension_numbers = #tpu.dot_dimension_numbers<[1], [0], [0], [1], [0, 0, 1, 1], [], []>} : vector<320x32xbf16>, vector<32x16xbf16>, vector<320x16xf32> -> vector<320x16xf32>
    %14 = arith.addf %9, %13 : vector<320x16xf32>
    %c2 = arith.constant 2 : index
    %c0_22 = arith.constant 0 : index
    %15 = vector.load %arg10[%c2, %c0_22] : memref<360x32xbf16, #tpu.memory_space<vmem>>, vector<320x32xbf16>
    %c0_23 = arith.constant 0 : index
    %c2_24 = arith.constant 2 : index
    %c0_25 = arith.constant 0 : index
    %c0_26 = arith.constant 0 : index
    %16 = vector.load %arg5[%c0_23, %c2_24, %c0_25, %c0_26] : memref<1x9x32x16xbf16, #tpu.memory_space<vmem>>, vector<1x1x32x16xbf16>
    %17 = vector.shape_cast %16 : vector<1x1x32x16xbf16> to vector<32x16xbf16>
    %cst_27 = arith.constant dense<0.000000e+00> : vector<320x16xf32>
    %18 = tpu.matmul %15, %17, %cst_27 {dimension_numbers = #tpu.dot_dimension_numbers<[1], [0], [0], [1], [0, 0, 1, 1], [], []>} : vector<320x32xbf16>, vector<32x16xbf16>, vector<320x16xf32> -> vector<320x16xf32>
    %19 = arith.addf %14, %18 : vector<320x16xf32>
    %c18 = arith.constant 18 : index
    %c0_28 = arith.constant 0 : index
    %20 = vector.load %arg10[%c18, %c0_28] : memref<360x32xbf16, #tpu.memory_space<vmem>>, vector<320x32xbf16>
    %c0_29 = arith.constant 0 : index
    %c3 = arith.constant 3 : index
    %c0_30 = arith.constant 0 : index
    %c0_31 = arith.constant 0 : index
    %21 = vector.load %arg5[%c0_29, %c3, %c0_30, %c0_31] : memref<1x9x32x16xbf16, #tpu.memory_space<vmem>>, vector<1x1x32x16xbf16>
    %22 = vector.shape_cast %21 : vector<1x1x32x16xbf16> to vector<32x16xbf16>
    %cst_32 = arith.constant dense<0.000000e+00> : vector<320x16xf32>
    %23 = tpu.matmul %20, %22, %cst_32 {dimension_numbers = #tpu.dot_dimension_numbers<[1], [0], [0], [1], [0, 0, 1, 1], [], []>} : vector<320x32xbf16>, vector<32x16xbf16>, vector<320x16xf32> -> vector<320x16xf32>
    %24 = arith.addf %19, %23 : vector<320x16xf32>
    %c19 = arith.constant 19 : index
    %c0_33 = arith.constant 0 : index
    %25 = vector.load %arg10[%c19, %c0_33] : memref<360x32xbf16, #tpu.memory_space<vmem>>, vector<320x32xbf16>
    %c0_34 = arith.constant 0 : index
    %c4 = arith.constant 4 : index
    %c0_35 = arith.constant 0 : index
    %c0_36 = arith.constant 0 : index
    %26 = vector.load %arg5[%c0_34, %c4, %c0_35, %c0_36] : memref<1x9x32x16xbf16, #tpu.memory_space<vmem>>, vector<1x1x32x16xbf16>
    %27 = vector.shape_cast %26 : vector<1x1x32x16xbf16> to vector<32x16xbf16>
    %cst_37 = arith.constant dense<0.000000e+00> : vector<320x16xf32>
    %28 = tpu.matmul %25, %27, %cst_37 {dimension_numbers = #tpu.dot_dimension_numbers<[1], [0], [0], [1], [0, 0, 1, 1], [], []>} : vector<320x32xbf16>, vector<32x16xbf16>, vector<320x16xf32> -> vector<320x16xf32>
    %29 = arith.addf %24, %28 : vector<320x16xf32>
    %c20 = arith.constant 20 : index
    %c0_38 = arith.constant 0 : index
    %30 = vector.load %arg10[%c20, %c0_38] : memref<360x32xbf16, #tpu.memory_space<vmem>>, vector<320x32xbf16>
    %c0_39 = arith.constant 0 : index
    %c5 = arith.constant 5 : index
    %c0_40 = arith.constant 0 : index
    %c0_41 = arith.constant 0 : index
    %31 = vector.load %arg5[%c0_39, %c5, %c0_40, %c0_41] : memref<1x9x32x16xbf16, #tpu.memory_space<vmem>>, vector<1x1x32x16xbf16>
    %32 = vector.shape_cast %31 : vector<1x1x32x16xbf16> to vector<32x16xbf16>
    %cst_42 = arith.constant dense<0.000000e+00> : vector<320x16xf32>
    %33 = tpu.matmul %30, %32, %cst_42 {dimension_numbers = #tpu.dot_dimension_numbers<[1], [0], [0], [1], [0, 0, 1, 1], [], []>} : vector<320x32xbf16>, vector<32x16xbf16>, vector<320x16xf32> -> vector<320x16xf32>
    %34 = arith.addf %29, %33 : vector<320x16xf32>
    %c36 = arith.constant 36 : index
    %c0_43 = arith.constant 0 : index
    %35 = vector.load %arg10[%c36, %c0_43] : memref<360x32xbf16, #tpu.memory_space<vmem>>, vector<320x32xbf16>
    %c0_44 = arith.constant 0 : index
    %c6 = arith.constant 6 : index
    %c0_45 = arith.constant 0 : index
    %c0_46 = arith.constant 0 : index
    %36 = vector.load %arg5[%c0_44, %c6, %c0_45, %c0_46] : memref<1x9x32x16xbf16, #tpu.memory_space<vmem>>, vector<1x1x32x16xbf16>
    %37 = vector.shape_cast %36 : vector<1x1x32x16xbf16> to vector<32x16xbf16>
    %cst_47 = arith.constant dense<0.000000e+00> : vector<320x16xf32>
    %38 = tpu.matmul %35, %37, %cst_47 {dimension_numbers = #tpu.dot_dimension_numbers<[1], [0], [0], [1], [0, 0, 1, 1], [], []>} : vector<320x32xbf16>, vector<32x16xbf16>, vector<320x16xf32> -> vector<320x16xf32>
    %39 = arith.addf %34, %38 : vector<320x16xf32>
    %c37 = arith.constant 37 : index
    %c0_48 = arith.constant 0 : index
    %40 = vector.load %arg10[%c37, %c0_48] : memref<360x32xbf16, #tpu.memory_space<vmem>>, vector<320x32xbf16>
    %c0_49 = arith.constant 0 : index
    %c7 = arith.constant 7 : index
    %c0_50 = arith.constant 0 : index
    %c0_51 = arith.constant 0 : index
    %41 = vector.load %arg5[%c0_49, %c7, %c0_50, %c0_51] : memref<1x9x32x16xbf16, #tpu.memory_space<vmem>>, vector<1x1x32x16xbf16>
    %42 = vector.shape_cast %41 : vector<1x1x32x16xbf16> to vector<32x16xbf16>
    %cst_52 = arith.constant dense<0.000000e+00> : vector<320x16xf32>
    %43 = tpu.matmul %40, %42, %cst_52 {dimension_numbers = #tpu.dot_dimension_numbers<[1], [0], [0], [1], [0, 0, 1, 1], [], []>} : vector<320x32xbf16>, vector<32x16xbf16>, vector<320x16xf32> -> vector<320x16xf32>
    %44 = arith.addf %39, %43 : vector<320x16xf32>
    %c38 = arith.constant 38 : index
    %c0_53 = arith.constant 0 : index
    %45 = vector.load %arg10[%c38, %c0_53] : memref<360x32xbf16, #tpu.memory_space<vmem>>, vector<320x32xbf16>
    %c0_54 = arith.constant 0 : index
    %c8 = arith.constant 8 : index
    %c0_55 = arith.constant 0 : index
    %c0_56 = arith.constant 0 : index
    %46 = vector.load %arg5[%c0_54, %c8, %c0_55, %c0_56] : memref<1x9x32x16xbf16, #tpu.memory_space<vmem>>, vector<1x1x32x16xbf16>
    %47 = vector.shape_cast %46 : vector<1x1x32x16xbf16> to vector<32x16xbf16>
    %cst_57 = arith.constant dense<0.000000e+00> : vector<320x16xf32>
    %48 = tpu.matmul %45, %47, %cst_57 {dimension_numbers = #tpu.dot_dimension_numbers<[1], [0], [0], [1], [0, 0, 1, 1], [], []>} : vector<320x32xbf16>, vector<32x16xbf16>, vector<320x16xf32> -> vector<320x16xf32>
    %49 = arith.addf %44, %48 : vector<320x16xf32>
    %c0_58 = arith.constant 0 : index
    %c0_59 = arith.constant 0 : index
    %c0_60 = arith.constant 0 : index
    %50 = vector.load %arg6[%c0_58, %c0_59, %c0_60] : memref<1x1x16xf32, #tpu.memory_space<vmem>>, vector<1x1x16xf32>
    %51 = vector.shape_cast %50 : vector<1x1x16xf32> to vector<1x16xf32>
    %52 = vector.broadcast %51 : vector<1x16xf32> to vector<320x16xf32>
    %53 = arith.addf %49, %52 : vector<320x16xf32>
    %cst_61 = arith.constant 0.000000e+00 : f32
    %54 = vector.broadcast %cst_61 : f32 to vector<320x16xf32>
    %55 = arith.cmpf oge, %53, %54 : vector<320x16xf32>
    %cst_62 = arith.constant 2.500000e-01 : f32
    %56 = vector.broadcast %cst_62 : f32 to vector<320x16xf32>
    %57 = arith.mulf %56, %53 : vector<320x16xf32>
    %58 = arith.select %55, %53, %57 : vector<320x16xi1>, vector<320x16xf32>
    %c0_63 = arith.constant 0 : index
    %c0_64 = arith.constant 0 : index
    %59 = vector.load %arg7[%c0_63, %c0_64] : memref<1x16xf32, #tpu.memory_space<vmem>>, vector<1x16xf32>
    %60 = vector.broadcast %59 : vector<1x16xf32> to vector<320x16xf32>
    %61 = arith.mulf %58, %60 : vector<320x16xf32>
    %cst_65 = arith.constant dense<0.000000e+00> : vector<320xf32>
    %62 = vector.multi_reduction <add>, %61, %cst_65 [1] : vector<320x16xf32> to vector<320xf32>
    %63 = vector.shape_cast %62 : vector<320xf32> to vector<320x1xf32>
    %c0_66 = arith.constant 0 : index
    %c0_67 = arith.constant 0 : index
    %64 = vector.load %arg8[%c0_66, %c0_67] : memref<1x1xf32, #tpu.memory_space<vmem>>, vector<1x1xf32>
    %65 = vector.extract %64[0, 0] : f32 from vector<1x1xf32>
    %66 = vector.broadcast %65 : f32 to vector<320x1xf32>
    %67 = arith.addf %63, %66 : vector<320x1xf32>
    %68 = math.tanh %67 : vector<320x1xf32>
    %cst_68 = arith.constant 5.000000e-01 : f32
    %69 = vector.broadcast %cst_68 : f32 to vector<320x1xf32>
    %70 = arith.mulf %68, %69 : vector<320x1xf32>
    %cst_69 = arith.constant 5.000000e-01 : f32
    %71 = vector.broadcast %cst_69 : f32 to vector<320x1xf32>
    %72 = arith.addf %70, %71 : vector<320x1xf32>
    %c0_70 = arith.constant 0 : index
    %c0_71 = arith.constant 0 : index
    %c0_72 = arith.constant 0 : index
    %c0_73 = arith.constant 0 : index
    %73 = vector.load %arg9[%c0_70, %c0_71, %c0_72, %c0_73] : memref<1x1x320x1xf32, #tpu.memory_space<vmem>>, vector<1x1x320x1xf32>
    %74 = vector.shape_cast %73 : vector<1x1x320x1xf32> to vector<320x1xf32>
    %75 = vector.shape_cast %72 : vector<320x1xf32> to vector<1x1x320x1xf32>
    tpu.vector_store %arg9[%c0_70, %c0_71, %c0_72, %c0_73], %75 {strides = array<i32>} : memref<1x1x320x1xf32, #tpu.memory_space<vmem>>, vector<1x1x320x1xf32>,
    return
  }
  func.func @transform_0(%arg0: i32, %arg1: i32, %arg2: i32) -> (i32, i32, i32, i32) {
    %c0_i32 = arith.constant 0 : i32
    %c0_i32_0 = arith.constant 0 : i32
    return %arg0, %arg1, %arg2, %c0_i32 : i32, i32, i32, i32
  }
  func.func @transform_1(%arg0: i32, %arg1: i32, %arg2: i32) -> (i32, i32, i32, i32) {
    %c1_i32 = arith.constant 1 : i32
    %0 = arith.addi %arg2, %c1_i32 : i32
    %c8_i32 = arith.constant 8 : i32
    %1 = arith.muli %0, %c8_i32 : i32
    %c0_i32 = arith.constant 0 : i32
    %c0_i32_0 = arith.constant 0 : i32
    return %arg0, %arg1, %1, %c0_i32 : i32, i32, i32, i32
  }
  func.func @transform_2(%arg0: i32, %arg1: i32, %arg2: i32) -> (i32, i32, i32, i32) {
    %c0_i32 = arith.constant 0 : i32
    %c0_i32_0 = arith.constant 0 : i32
    %c0_i32_1 = arith.constant 0 : i32
    %c0_i32_2 = arith.constant 0 : i32
    return %arg0, %c0_i32, %c0_i32_0, %c0_i32_1 : i32, i32, i32, i32
  }
  func.func @transform_3(%arg0: i32, %arg1: i32, %arg2: i32) -> (i32, i32, i32) {
    %c0_i32 = arith.constant 0 : i32
    %c0_i32_0 = arith.constant 0 : i32
    %c0_i32_1 = arith.constant 0 : i32
    return %arg0, %c0_i32, %c0_i32_0 : i32, i32, i32
  }
  func.func @transform_4(%arg0: i32, %arg1: i32, %arg2: i32) -> (i32, i32) {
    %c0_i32 = arith.constant 0 : i32
    %c0_i32_0 = arith.constant 0 : i32
    %c0_i32_1 = arith.constant 0 : i32
    return %c0_i32, %c0_i32_0 : i32, i32
  }
  func.func @transform_5(%arg0: i32, %arg1: i32, %arg2: i32) -> (i32, i32) {
    %c0_i32 = arith.constant 0 : i32
    %c0_i32_0 = arith.constant 0 : i32
    %c0_i32_1 = arith.constant 0 : i32
    return %c0_i32, %c0_i32_0 : i32, i32
  }
  func.func @transform_6(%arg0: i32, %arg1: i32, %arg2: i32) -> (i32, i32, i32, i32) {
    %c0_i32 = arith.constant 0 : i32
    %c0_i32_0 = arith.constant 0 : i32
    return %arg0, %arg1, %arg2, %c0_i32 : i32, i32, i32, i32
  }
}

</mosaic_0001>

<llo_original>
// kernel: squeeze.17
$region0: #{squeeze.17}
  %s0 = inlined_call_operand.vmem [shape: bf16[1,2,16,16,16], index: 0, kind: input, shape index: {}]
  %s1 = inlined_call_operand.vmem [shape: bf16[2,1,32,128], index: 1, kind: output, shape index: {}]
  $region1: #{squeeze.17} parent=0
    #allocation0 [shape = 'u8[32768]{0}', space=vmem, size = 0x8000, scoped, tag = 'scoped mem for output reshape']
    #allocation1 [shape = 'u8[262144]{0}', space=vmem, size = 0x40000, scoped, tag = 'scoped mem for input reshape']
    %s3 = smul.u32 4, 2
    %s4 = sshllo.u32 0, %s3
    %s5 = smul.addr 4, 63
    %s6 = scalar_lea.vmem %s0, %s5
    %s7 = sshrl.u32 %s4, 1
    %s8 = sor.u32 %s4, %s7
    %s9 = sand.u32 %s8, 85
    %s10 = sshrl.u32 %s9, 1
    %s11 = sor.u32 %s9, %s10
    %s12 = sand.u32 51, %s11
    %s13 = sshrl.u32 %s12, 2
    %s14 = sor.u32 %s12, %s13
    %s15 = sand.u32 15, %s14
    %v16 = vld [vmem:[%s6] sm:%s15]
    %v17 = vunpack.c.l.bf16 %v16
    %v18 = vunpack.c.h.bf16 %v16
    %s19 = scalar_lea.vmem [#allocation1], 504
    %20 = vst [vmem:[%s19] sm:%s4] %v17
    %s21 = smul.addr 4, 62
    %s22 = scalar_lea.vmem %s0, %s21
    %s23 = sshrl.u32 %s4, 1
    %s24 = sor.u32 %s4, %s23
    %s25 = sand.u32 %s24, 85
    %s26 = sshrl.u32 %s25, 1
    %s27 = sor.u32 %s25, %s26
    %s28 = sand.u32 51, %s27
    %s29 = sshrl.u32 %s28, 2
    %s30 = sor.u32 %s28, %s29
    %s31 = sand.u32 15, %s30
    %v32 = vld [vmem:[%s22] sm:%s31]
    %v33 = vunpack.c.l.bf16 %v32
    %v34 = vunpack.c.h.bf16 %v32
    %s35 = scalar_lea.vmem [#allocation1], 496
    %36 = vst [vmem:[%s35] sm:%s4] %v33
    %s37 = smul.addr 4, 61
    %s38 = scalar_lea.vmem %s0, %s37
    %s39 = sshrl.u32 %s4, 1
    %s40 = sor.u32 %s4, %s39
    %s41 = sand.u32 %s40, 85
    %s42 = sshrl.u32 %s41, 1
    %s43 = sor.u32 %s41, %s42
    %s44 = sand.u32 51, %s43
    %s45 = sshrl.u32 %s44, 2
    %s46 = sor.u32 %s44, %s45
    %s47 = sand.u32 15, %s46
    %v48 = vld [vmem:[%s38] sm:%s47]
    %v49 = vunpack.c.l.bf16 %v48
    %v50 = vunpack.c.h.bf16 %v48
    %s51 = scalar_lea.vmem [#allocation1], 488
    %52 = vst [vmem:[%s51] sm:%s4] %v49
    %s53 = smul.addr 4, 60
    %s54 = scalar_lea.vmem %s0, %s53
    %s55 = sshrl.u32 %s4, 1
    %s56 = sor.u32 %s4, %s55
    %s57 = sand.u32 %s56, 85
    %s58 = sshrl.u32 %s57, 1
    %s59 = sor.u32 %s57, %s58
    %s60 = sand.u32 51, %s59
    %s61 = sshrl.u32 %s60, 2
    %s62 = sor.u32 %s60, %s61
    %s63 = sand.u32 15, %s62
    %v64 = vld [vmem:[%s54] sm:%s63]
    %v65 = vunpack.c.l.bf16 %v64
    %v66 = vunpack.c.h.bf16 %v64
    %s67 = scalar_lea.vmem [#allocation1], 480
    %68 = vst [vmem:[%s67] sm:%s4] %v65
    %s69 = smul.addr 4, 59
    %s70 = scalar_lea.vmem %s0, %s69
    %s71 = sshrl.u32 %s4, 1
    %s72 = sor.u32 %s4, %s71
    %s73 = sand.u32 %s72, 85
    %s74 = sshrl.u32 %s73, 1
    %s75 = sor.u32 %s73, %s74
    %s76 = sand.u32 51, %s75
    %s77 = sshrl.u32 %s76, 2
    %s78 = sor.u32 %s76, %s77
    %s79 = sand.u32 15, %s78
    %v80 = vld [vmem:[%s70] sm:%s79]
    %v81 = vunpack.c.l.bf16 %v80
    %v82 = vunpack.c.h.bf16 %v80
    %s83 = scalar_lea.vmem [#allocation1], 472
    %84 = vst [vmem:[%s83] sm:%s4] %v81
    %s85 = smul.addr 4, 58
    %s86 = scalar_lea.vmem %s0, %s85
    %s87 = sshrl.u32 %s4, 1
    %s88 = sor.u32 %s4, %s87
    %s89 = sand.u32 %s88, 85
    %s90 = sshrl.u32 %s89, 1
    %s91 = sor.u32 %s89, %s90
    %s92 = sand.u32 51, %s91
    %s93 = sshrl.u32 %s92, 2
    %s94 = sor.u32 %s92, %s93
    %s95 = sand.u32 15, %s94
    %v96 = vld [vmem:[%s86] sm:%s95]
    %v97 = vunpack.c.l.bf16 %v96
    %v98 = vunpack.c.h.bf16 %v96
    %s99 = scalar_lea.vmem [#allocation1], 464
    %100 = vst [vmem:[%s99] sm:%s4] %v97
    %s101 = smul.addr 4, 57
    %s102 = scalar_lea.vmem %s0, %s101
    %s103 = sshrl.u32 %s4, 1
    %s104 = sor.u32 %s4, %s103
    %s105 = sand.u32 %s104, 85
    %s106 = sshrl.u32 %s105, 1
    %s107 = sor.u32 %s105, %s106
    %s108 = sand.u32 51, %s107
    %s109 = sshrl.u32 %s108, 2
    %s110 = sor.u32 %s108, %s109
    %s111 = sand.u32 15, %s110
    %v112 = vld [vmem:[%s102] sm:%s111]
    %v113 = vunpack.c.l.bf16 %v112
    %v114 = vunpack.c.h.bf16 %v112
    %s115 = scalar_lea.vmem [#allocation1], 456
    %116 = vst [vmem:[%s115] sm:%s4] %v113
    %s117 = smul.addr 4, 56
    %s118 = scalar_lea.vmem %s0, %s117
    %s119 = sshrl.u32 %s4, 1
    %s120 = sor.u32 %s4, %s119
    %s121 = sand.u32 %s120, 85
    %s122 = sshrl.u32 %s121, 1
    %s123 = sor.u32 %s121, %s122
    %s124 = sand.u32 51, %s123
    %s125 = sshrl.u32 %s124, 2
    %s126 = sor.u32 %s124, %s125
    %s127 = sand.u32 15, %s126
    %v128 = vld [vmem:[%s118] sm:%s127]
    %v129 = vunpack.c.l.bf16 %v128
    %v130 = vunpack.c.h.bf16 %v128
    %s131 = scalar_lea.vmem [#allocation1], 448
    %132 = vst [vmem:[%s131] sm:%s4] %v129
    %s133 = smul.addr 4, 55
    %s134 = scalar_lea.vmem %s0, %s133
    %s135 = sshrl.u32 %s4, 1
    %s136 = sor.u32 %s4, %s135
    %s137 = sand.u32 %s136, 85
    %s138 = sshrl.u32 %s137, 1
    %s139 = sor.u32 %s137, %s138
    %s140 = sand.u32 51, %s139
    %s141 = sshrl.u32 %s140, 2
    %s142 = sor.u32 %s140, %s141
    %s143 = sand.u32 15, %s142
    %v144 = vld [vmem:[%s134] sm:%s143]
    %v145 = vunpack.c.l.bf16 %v144
    %v146 = vunpack.c.h.bf16 %v144
    %s147 = scalar_lea.vmem [#allocation1], 440
    %148 = vst [vmem:[%s147] sm:%s4] %v145
    %s149 = smul.addr 4, 54
    %s150 = scalar_lea.vmem %s0, %s149
    %s151 = sshrl.u32 %s4, 1
    %s152 = sor.u32 %s4, %s151
    %s153 = sand.u32 %s152, 85
    %s154 = sshrl.u32 %s153, 1
    %s155 = sor.u32 %s153, %s154
    %s156 = sand.u32 51, %s155
    %s157 = sshrl.u32 %s156, 2
    %s158 = sor.u32 %s156, %s157
    %s159 = sand.u32 15, %s158
    %v160 = vld [vmem:[%s150] sm:%s159]
    %v161 = vunpack.c.l.bf16 %v160
    %v162 = vunpack.c.h.bf16 %v160
    %s163 = scalar_lea.vmem [#allocation1], 432
    %164 = vst [vmem:[%s163] sm:%s4] %v161
    %s165 = smul.addr 4, 53
    %s166 = scalar_lea.vmem %s0, %s165
    %s167 = sshrl.u32 %s4, 1
    %s168 = sor.u32 %s4, %s167
    %s169 = sand.u32 %s168, 85
    %s170 = sshrl.u32 %s169, 1
    %s171 = sor.u32 %s169, %s170
    %s172 = sand.u32 51, %s171
    %s173 = sshrl.u32 %s172, 2
    %s174 = sor.u32 %s172, %s173
    %s175 = sand.u32 15, %s174
    %v176 = vld [vmem:[%s166] sm:%s175]
    %v177 = vunpack.c.l.bf16 %v176
    %v178 = vunpack.c.h.bf16 %v176
    %s179 = scalar_lea.vmem [#allocation1], 424
    %180 = vst [vmem:[%s179] sm:%s4] %v177
    %s181 = smul.addr 4, 52
    %s182 = scalar_lea.vmem %s0, %s181
    %s183 = sshrl.u32 %s4, 1
    %s184 = sor.u32 %s4, %s183
    %s185 = sand.u32 %s184, 85
    %s186 = sshrl.u32 %s185, 1
    %s187 = sor.u32 %s185, %s186
    %s188 = sand.u32 51, %s187
    %s189 = sshrl.u32 %s188, 2
    %s190 = sor.u32 %s188, %s189
    %s191 = sand.u32 15, %s190
    %v192 = vld [vmem:[%s182] sm:%s191]
    %v193 = vunpack.c.l.bf16 %v192
    %v194 = vunpack.c.h.bf16 %v192
    %s195 = scalar_lea.vmem [#allocation1], 416
    %196 = vst [vmem:[%s195] sm:%s4] %v193
    %s197 = smul.addr 4, 51
    %s198 = scalar_lea.vmem %s0, %s197
    %s199 = sshrl.u32 %s4, 1
    %s200 = sor.u32 %s4, %s199
    %s201 = sand.u32 %s200, 85
    %s202 = sshrl.u32 %s201, 1
    %s203 = sor.u32 %s201, %s202
    %s204 = sand.u32 51, %s203
    %s205 = sshrl.u32 %s204, 2
    %s206 = sor.u32 %s204, %s205
    %s207 = sand.u32 15, %s206
    %v208 = vld [vmem:[%s198] sm:%s207]
    %v209 = vunpack.c.l.bf16 %v208
    %v210 = vunpack.c.h.bf16 %v208
    %s211 = scalar_lea.vmem [#allocation1], 408
    %212 = vst [vmem:[%s211] sm:%s4] %v209
    %s213 = smul.addr 4, 50
    %s214 = scalar_lea.vmem %s0, %s213
    %s215 = sshrl.u32 %s4, 1
    %s216 = sor.u32 %s4, %s215
    %s217 = sand.u32 %s216, 85
    %s218 = sshrl.u32 %s217, 1
    %s219 = sor.u32 %s217, %s218
    %s220 = sand.u32 51, %s219
    %s221 = sshrl.u32 %s220, 2
    %s222 = sor.u32 %s220, %s221
    %s223 = sand.u32 15, %s222
    %v224 = vld [vmem:[%s214] sm:%s223]
    %v225 = vunpack.c.l.bf16 %v224
    %v226 = vunpack.c.h.bf16 %v224
    %s227 = scalar_lea.vmem [#allocation1], 400
    %228 = vst [vmem:[%s227] sm:%s4] %v225
    %s229 = smul.addr 4, 49
    %s230 = scalar_lea.vmem %s0, %s229
    %s231 = sshrl.u32 %s4, 1
    %s232 = sor.u32 %s4, %s231
    %s233 = sand.u32 %s232, 85
    %s234 = sshrl.u32 %s233, 1
    %s235 = sor.u32 %s233, %s234
    %s236 = sand.u32 51, %s235
    %s237 = sshrl.u32 %s236, 2
    %s238 = sor.u32 %s236, %s237
    %s239 = sand.u32 15, %s238
    %v240 = vld [vmem:[%s230] sm:%s239]
    %v241 = vunpack.c.l.bf16 %v240
    %v242 = vunpack.c.h.bf16 %v240
    %s243 = scalar_lea.vmem [#allocation1], 392
    %244 = vst [vmem:[%s243] sm:%s4] %v241
    %s245 = smul.addr 4, 48
    %s246 = scalar_lea.vmem %s0, %s245
    %s247 = sshrl.u32 %s4, 1
    %s248 = sor.u32 %s4, %s247
    %s249 = sand.u32 %s248, 85
    %s250 = sshrl.u32 %s249, 1
    %s251 = sor.u32 %s249, %s250
    %s252 = sand.u32 51, %s251
    %s253 = sshrl.u32 %s252, 2
    %s254 = sor.u32 %s252, %s253
    %s255 = sand.u32 15, %s254
    %v256 = vld [vmem:[%s246] sm:%s255]
    %v257 = vunpack.c.l.bf16 %v256
    %v258 = vunpack.c.h.bf16 %v256
    %s259 = scalar_lea.vmem [#allocation1], 384
    %260 = vst [vmem:[%s259] sm:%s4] %v257
    %s261 = smul.addr 4, 47
    %s262 = scalar_lea.vmem %s0, %s261
    %s263 = sshrl.u32 %s4, 1
    %s264 = sor.u32 %s4, %s263
    %s265 = sand.u32 %s264, 85
    %s266 = sshrl.u32 %s265, 1
    %s267 = sor.u32 %s265, %s266
    %s268 = sand.u32 51, %s267
    %s269 = sshrl.u32 %s268, 2
    %s270 = sor.u32 %s268, %s269
    %s271 = sand.u32 15, %s270
    %v272 = vld [vmem:[%s262] sm:%s271]
    %v273 = vunpack.c.l.bf16 %v272
    %v274 = vunpack.c.h.bf16 %v272
    %s275 = scalar_lea.vmem [#allocation1], 376
    %276 = vst [vmem:[%s275] sm:%s4] %v273
    %s277 = smul.addr 4, 46
    %s278 = scalar_lea.vmem %s0, %s277
    %s279 = sshrl.u32 %s4, 1
    %s280 = sor.u32 %s4, %s279
    %s281 = sand.u32 %s280, 85
    %s282 = sshrl.u32 %s281, 1
    %s283 = sor.u32 %s281, %s282
    %s284 = sand.u32 51, %s283
    %s285 = sshrl.u32 %s284, 2
    %s286 = sor.u32 %s284, %s285
    %s287 = sand.u32 15, %s286
    %v288 = vld [vmem:[%s278] sm:%s287]
    %v289 = vunpack.c.l.bf16 %v288
    %v290 = vunpack.c.h.bf16 %v288
    %s291 = scalar_lea.vmem [#allocation1], 368
    %292 = vst [vmem:[%s291] sm:%s4] %v289
    %s293 = smul.addr 4, 45
    %s294 = scalar_lea.vmem %s0, %s293
    %s295 = sshrl.u32 %s4, 1
    %s296 = sor.u32 %s4, %s295
    %s297 = sand.u32 %s296, 85
    %s298 = sshrl.u32 %s297, 1
    %s299 = sor.u32 %s297, %s298
    %s300 = sand.u32 51, %s299
    %s301 = sshrl.u32 %s300, 2
    %s302 = sor.u32 %s300, %s301
    %s303 = sand.u32 15, %s302
    %v304 = vld [vmem:[%s294] sm:%s303]
    %v305 = vunpack.c.l.bf16 %v304
    %v306 = vunpack.c.h.bf16 %v304
    %s307 = scalar_lea.vmem [#allocation1], 360
    %308 = vst [vmem:[%s307] sm:%s4] %v305
    %s309 = smul.addr 4, 44
    %s310 = scalar_lea.vmem %s0, %s309
    %s311 = sshrl.u32 %s4, 1
    %s312 = sor.u32 %s4, %s311
    %s313 = sand.u32 %s312, 85
    %s314 = sshrl.u32 %s313, 1
    %s315 = sor.u32 %s313, %s314
    %s316 = sand.u32 51, %s315
    %s317 = sshrl.u32 %s316, 2
    %s318 = sor.u32 %s316, %s317
    %s319 = sand.u32 15, %s318
    %v320 = vld [vmem:[%s310] sm:%s319]
    %v321 = vunpack.c.l.bf16 %v320
    %v322 = vunpack.c.h.bf16 %v320
    %s323 = scalar_lea.vmem [#allocation1], 352
    %324 = vst [vmem:[%s323] sm:%s4] %v321
    %s325 = smul.addr 4, 43
    %s326 = scalar_lea.vmem %s0, %s325
    %s327 = sshrl.u32 %s4, 1
    %s328 = sor.u32 %s4, %s327
    %s329 = sand.u32 %s328, 85
    %s330 = sshrl.u32 %s329, 1
    %s331 = sor.u32 %s329, %s330
    %s332 = sand.u32 51, %s331
    %s333 = sshrl.u32 %s332, 2
    %s334 = sor.u32 %s332, %s333
    %s335 = sand.u32 15, %s334
    %v336 = vld [vmem:[%s326] sm:%s335]
    %v337 = vunpack.c.l.bf16 %v336
    %v338 = vunpack.c.h.bf16 %v336
    %s339 = scalar_lea.vmem [#allocation1], 344
    %340 = vst [vmem:[%s339] sm:%s4] %v337
    %s341 = smul.addr 4, 42
    %s342 = scalar_lea.vmem %s0, %s341
    %s343 = sshrl.u32 %s4, 1
    %s344 = sor.u32 %s4, %s343
    %s345 = sand.u32 %s344, 85
    %s346 = sshrl.u32 %s345, 1
    %s347 = sor.u32 %s345, %s346
    %s348 = sand.u32 51, %s347
    %s349 = sshrl.u32 %s348, 2
    %s350 = sor.u32 %s348, %s349
    %s351 = sand.u32 15, %s350
    %v352 = vld [vmem:[%s342] sm:%s351]
    %v353 = vunpack.c.l.bf16 %v352
    %v354 = vunpack.c.h.bf16 %v352
    %s355 = scalar_lea.vmem [#allocation1], 336
    %356 = vst [vmem:[%s355] sm:%s4] %v353
    %s357 = smul.addr 4, 41
    %s358 = scalar_lea.vmem %s0, %s357
    %s359 = sshrl.u32 %s4, 1
    %s360 = sor.u32 %s4, %s359
    %s361 = sand.u32 %s360, 85
    %s362 = sshrl.u32 %s361, 1
    %s363 = sor.u32 %s361, %s362
    %s364 = sand.u32 51, %s363
    %s365 = sshrl.u32 %s364, 2
    %s366 = sor.u32 %s364, %s365
    %s367 = sand.u32 15, %s366
    %v368 = vld [vmem:[%s358] sm:%s367]
    %v369 = vunpack.c.l.bf16 %v368
    %v370 = vunpack.c.h.bf16 %v368
    %s371 = scalar_lea.vmem [#allocation1], 328
    %372 = vst [vmem:[%s371] sm:%s4] %v369
    %s373 = smul.addr 4, 40
    %s374 = scalar_lea.vmem %s0, %s373
    %s375 = sshrl.u32 %s4, 1
    %s376 = sor.u32 %s4, %s375
    %s377 = sand.u32 %s376, 85
    %s378 = sshrl.u32 %s377, 1
    %s379 = sor.u32 %s377, %s378
    %s380 = sand.u32 51, %s379
    %s381 = sshrl.u32 %s380, 2
    %s382 = sor.u32 %s380, %s381
    %s383 = sand.u32 15, %s382
    %v384 = vld [vmem:[%s374] sm:%s383]
    %v385 = vunpack.c.l.bf16 %v384
    %v386 = vunpack.c.h.bf16 %v384
    %s387 = scalar_lea.vmem [#allocation1], 320
    %388 = vst [vmem:[%s387] sm:%s4] %v385
    %s389 = smul.addr 4, 39
    %s390 = scalar_lea.vmem %s0, %s389
    %s391 = sshrl.u32 %s4, 1
    %s392 = sor.u32 %s4, %s391
    %s393 = sand.u32 %s392, 85
    %s394 = sshrl.u32 %s393, 1
    %s395 = sor.u32 %s393, %s394
    %s396 = sand.u32 51, %s395
    %s397 = sshrl.u32 %s396, 2
    %s398 = sor.u32 %s396, %s397
    %s399 = sand.u32 15, %s398
    %v400 = vld [vmem:[%s390] sm:%s399]
    %v401 = vunpack.c.l.bf16 %v400
    %v402 = vunpack.c.h.bf16 %v400
    %s403 = scalar_lea.vmem [#allocation1], 312
    %404 = vst [vmem:[%s403] sm:%s4] %v401
    %s405 = smul.addr 4, 38
    %s406 = scalar_lea.vmem %s0, %s405
    %s407 = sshrl.u32 %s4, 1
    %s408 = sor.u32 %s4, %s407
    %s409 = sand.u32 %s408, 85
    %s410 = sshrl.u32 %s409, 1
    %s411 = sor.u32 %s409, %s410
    %s412 = sand.u32 51, %s411
    %s413 = sshrl.u32 %s412, 2
    %s414 = sor.u32 %s412, %s413
    %s415 = sand.u32 15, %s414
    %v416 = vld [vmem:[%s406] sm:%s415]
    %v417 = vunpack.c.l.bf16 %v416
    %v418 = vunpack.c.h.bf16 %v416
    %s419 = scalar_lea.vmem [#allocation1], 304
    %420 = vst [vmem:[%s419] sm:%s4] %v417
    %s421 = smul.addr 4, 37
    %s422 = scalar_lea.vmem %s0, %s421
    %s423 = sshrl.u32 %s4, 1
    %s424 = sor.u32 %s4, %s423
    %s425 = sand.u32 %s424, 85
    %s426 = sshrl.u32 %s425, 1
    %s427 = sor.u32 %s425, %s426
    %s428 = sand.u32 51, %s427
    %s429 = sshrl.u32 %s428, 2
    %s430 = sor.u32 %s428, %s429
    %s431 = sand.u32 15, %s430
    %v432 = vld [vmem:[%s422] sm:%s431]
    %v433 = vunpack.c.l.bf16 %v432
    %v434 = vunpack.c.h.bf16 %v432
    %s435 = scalar_lea.vmem [#allocation1], 296
    %436 = vst [vmem:[%s435] sm:%s4] %v433
    %s437 = smul.addr 4, 36
    %s438 = scalar_lea.vmem %s0, %s437
    %s439 = sshrl.u32 %s4, 1
    %s440 = sor.u32 %s4, %s439
    %s441 = sand.u32 %s440, 85
    %s442 = sshrl.u32 %s441, 1
    %s443 = sor.u32 %s441, %s442
    %s444 = sand.u32 51, %s443
    %s445 = sshrl.u32 %s444, 2
    %s446 = sor.u32 %s444, %s445
    %s447 = sand.u32 15, %s446
    %v448 = vld [vmem:[%s438] sm:%s447]
    %v449 = vunpack.c.l.bf16 %v448
    %v450 = vunpack.c.h.bf16 %v448
    %s451 = scalar_lea.vmem [#allocation1], 288
    %452 = vst [vmem:[%s451] sm:%s4] %v449
    %s453 = smul.addr 4, 35
    %s454 = scalar_lea.vmem %s0, %s453
    %s455 = sshrl.u32 %s4, 1
    %s456 = sor.u32 %s4, %s455
    %s457 = sand.u32 %s456, 85
    %s458 = sshrl.u32 %s457, 1
    %s459 = sor.u32 %s457, %s458
    %s460 = sand.u32 51, %s459
    %s461 = sshrl.u32 %s460, 2
    %s462 = sor.u32 %s460, %s461
    %s463 = sand.u32 15, %s462
    %v464 = vld [vmem:[%s454] sm:%s463]
    %v465 = vunpack.c.l.bf16 %v464
    %v466 = vunpack.c.h.bf16 %v464
    %s467 = scalar_lea.vmem [#allocation1], 280
    %468 = vst [vmem:[%s467] sm:%s4] %v465
    %s469 = smul.addr 4, 34
    %s470 = scalar_lea.vmem %s0, %s469
    %s471 = sshrl.u32 %s4, 1
    %s472 = sor.u32 %s4, %s471
    %s473 = sand.u32 %s472, 85
    %s474 = sshrl.u32 %s473, 1
    %s475 = sor.u32 %s473, %s474
    %s476 = sand.u32 51, %s475
    %s477 = sshrl.u32 %s476, 2
    %s478 = sor.u32 %s476, %s477
    %s479 = sand.u32 15, %s478
    %v480 = vld [vmem:[%s470] sm:%s479]
    %v481 = vunpack.c.l.bf16 %v480
    %v482 = vunpack.c.h.bf16 %v480
    %s483 = scalar_lea.vmem [#allocation1], 272
    %484 = vst [vmem:[%s483] sm:%s4] %v481
    %s485 = smul.addr 4, 33
    %s486 = scalar_lea.vmem %s0, %s485
    %s487 = sshrl.u32 %s4, 1
    %s488 = sor.u32 %s4, %s487
    %s489 = sand.u32 %s488, 85
    %s490 = sshrl.u32 %s489, 1
    %s491 = sor.u32 %s489, %s490
    %s492 = sand.u32 51, %s491
    %s493 = sshrl.u32 %s492, 2
    %s494 = sor.u32 %s492, %s493
    %s495 = sand.u32 15, %s494
    %v496 = vld [vmem:[%s486] sm:%s495]
    %v497 = vunpack.c.l.bf16 %v496
    %v498 = vunpack.c.h.bf16 %v496
    %s499 = scalar_lea.vmem [#allocation1], 264
    %500 = vst [vmem:[%s499] sm:%s4] %v497
    %s501 = smul.addr 4, 32
    %s502 = scalar_lea.vmem %s0, %s501
    %s503 = sshrl.u32 %s4, 1
    %s504 = sor.u32 %s4, %s503
    %s505 = sand.u32 %s504, 85
    %s506 = sshrl.u32 %s505, 1
    %s507 = sor.u32 %s505, %s506
    %s508 = sand.u32 51, %s507
    %s509 = sshrl.u32 %s508, 2
    %s510 = sor.u32 %s508, %s509
    %s511 = sand.u32 15, %s510
    %v512 = vld [vmem:[%s502] sm:%s511]
    %v513 = vunpack.c.l.bf16 %v512
    %v514 = vunpack.c.h.bf16 %v512
    %s515 = scalar_lea.vmem [#allocation1], 256
    %516 = vst [vmem:[%s515] sm:%s4] %v513
    %s517 = smul.addr 4, 31
    %s518 = scalar_lea.vmem %s0, %s517
    %s519 = sshrl.u32 %s4, 1
    %s520 = sor.u32 %s4, %s519
    %s521 = sand.u32 %s520, 85
    %s522 = sshrl.u32 %s521, 1
    %s523 = sor.u32 %s521, %s522
    %s524 = sand.u32 51, %s523
    %s525 = sshrl.u32 %s524, 2
    %s526 = sor.u32 %s524, %s525
    %s527 = sand.u32 15, %s526
    %v528 = vld [vmem:[%s518] sm:%s527]
    %v529 = vunpack.c.l.bf16 %v528
    %v530 = vunpack.c.h.bf16 %v528
    %s531 = scalar_lea.vmem [#allocation1], 248
    %532 = vst [vmem:[%s531] sm:%s4] %v529
    %s533 = smul.addr 4, 30
    %s534 = scalar_lea.vmem %s0, %s533
    %s535 = sshrl.u32 %s4, 1
    %s536 = sor.u32 %s4, %s535
    %s537 = sand.u32 %s536, 85
    %s538 = sshrl.u32 %s537, 1
    %s539 = sor.u32 %s537, %s538
    %s540 = sand.u32 51, %s539
    %s541 = sshrl.u32 %s540, 2
    %s542 = sor.u32 %s540, %s541
    %s543 = sand.u32 15, %s542
    %v544 = vld [vmem:[%s534] sm:%s543]
    %v545 = vunpack.c.l.bf16 %v544
    %v546 = vunpack.c.h.bf16 %v544
    %s547 = scalar_lea.vmem [#allocation1], 240
    %548 = vst [vmem:[%s547] sm:%s4] %v545
    %s549 = smul.addr 4, 29
    %s550 = scalar_lea.vmem %s0, %s549
    %s551 = sshrl.u32 %s4, 1
    %s552 = sor.u32 %s4, %s551
    %s553 = sand.u32 %s552, 85
    %s554 = sshrl.u32 %s553, 1
    %s555 = sor.u32 %s553, %s554
    %s556 = sand.u32 51, %s555
    %s557 = sshrl.u32 %s556, 2
    %s558 = sor.u32 %s556, %s557
    %s559 = sand.u32 15, %s558
    %v560 = vld [vmem:[%s550] sm:%s559]
    %v561 = vunpack.c.l.bf16 %v560
    %v562 = vunpack.c.h.bf16 %v560
    %s563 = scalar_lea.vmem [#allocation1], 232
    %564 = vst [vmem:[%s563] sm:%s4] %v561
    %s565 = smul.addr 4, 28
    %s566 = scalar_lea.vmem %s0, %s565
    %s567 = sshrl.u32 %s4, 1
    %s568 = sor.u32 %s4, %s567
    %s569 = sand.u32 %s568, 85
    %s570 = sshrl.u32 %s569, 1
    %s571 = sor.u32 %s569, %s570
    %s572 = sand.u32 51, %s571
    %s573 = sshrl.u32 %s572, 2
    %s574 = sor.u32 %s572, %s573
    %s575 = sand.u32 15, %s574
    %v576 = vld [vmem:[%s566] sm:%s575]
    %v577 = vunpack.c.l.bf16 %v576
    %v578 = vunpack.c.h.bf16 %v576
    %s579 = scalar_lea.vmem [#allocation1], 224
    %580 = vst [vmem:[%s579] sm:%s4] %v577
    %s581 = smul.addr 4, 27
    %s582 = scalar_lea.vmem %s0, %s581
    %s583 = sshrl.u32 %s4, 1
    %s584 = sor.u32 %s4, %s583
    %s585 = sand.u32 %s584, 85
    %s586 = sshrl.u32 %s585, 1
    %s587 = sor.u32 %s585, %s586
    %s588 = sand.u32 51, %s587
    %s589 = sshrl.u32 %s588, 2
    %s590 = sor.u32 %s588, %s589
    %s591 = sand.u32 15, %s590
    %v592 = vld [vmem:[%s582] sm:%s591]
    %v593 = vunpack.c.l.bf16 %v592
    %v594 = vunpack.c.h.bf16 %v592
    %s595 = scalar_lea.vmem [#allocation1], 216
    %596 = vst [vmem:[%s595] sm:%s4] %v593
    %s597 = smul.addr 4, 26
    %s598 = scalar_lea.vmem %s0, %s597
    %s599 = sshrl.u32 %s4, 1
    %s600 = sor.u32 %s4, %s599
    %s601 = sand.u32 %s600, 85
    %s602 = sshrl.u32 %s601, 1
    %s603 = sor.u32 %s601, %s602
    %s604 = sand.u32 51, %s603
    %s605 = sshrl.u32 %s604, 2
    %s606 = sor.u32 %s604, %s605
    %s607 = sand.u32 15, %s606
    %v608 = vld [vmem:[%s598] sm:%s607]
    %v609 = vunpack.c.l.bf16 %v608
    %v610 = vunpack.c.h.bf16 %v608
    %s611 = scalar_lea.vmem [#allocation1], 208
    %612 = vst [vmem:[%s611] sm:%s4] %v609
    %s613 = smul.addr 4, 25
    %s614 = scalar_lea.vmem %s0, %s613
    %s615 = sshrl.u32 %s4, 1
    %s616 = sor.u32 %s4, %s615
    %s617 = sand.u32 %s616, 85
    %s618 = sshrl.u32 %s617, 1
    %s619 = sor.u32 %s617, %s618
    %s620 = sand.u32 51, %s619
    %s621 = sshrl.u32 %s620, 2
    %s622 = sor.u32 %s620, %s621
    %s623 = sand.u32 15, %s622
    %v624 = vld [vmem:[%s614] sm:%s623]
    %v625 = vunpack.c.l.bf16 %v624
    %v626 = vunpack.c.h.bf16 %v624
    %s627 = scalar_lea.vmem [#allocation1], 200
    %628 = vst [vmem:[%s627] sm:%s4] %v625
    %s629 = smul.addr 4, 24
    %s630 = scalar_lea.vmem %s0, %s629
    %s631 = sshrl.u32 %s4, 1
    %s632 = sor.u32 %s4, %s631
    %s633 = sand.u32 %s632, 85
    %s634 = sshrl.u32 %s633, 1
    %s635 = sor.u32 %s633, %s634
    %s636 = sand.u32 51, %s635
    %s637 = sshrl.u32 %s636, 2
    %s638 = sor.u32 %s636, %s637
    %s639 = sand.u32 15, %s638
    %v640 = vld [vmem:[%s630] sm:%s639]
    %v641 = vunpack.c.l.bf16 %v640
    %v642 = vunpack.c.h.bf16 %v640
    %s643 = scalar_lea.vmem [#allocation1], 192
    %644 = vst [vmem:[%s643] sm:%s4] %v641
    %s645 = smul.addr 4, 23
    %s646 = scalar_lea.vmem %s0, %s645
    %s647 = sshrl.u32 %s4, 1
    %s648 = sor.u32 %s4, %s647
    %s649 = sand.u32 %s648, 85
    %s650 = sshrl.u32 %s649, 1
    %s651 = sor.u32 %s649, %s650
    %s652 = sand.u32 51, %s651
    %s653 = sshrl.u32 %s652, 2
    %s654 = sor.u32 %s652, %s653
    %s655 = sand.u32 15, %s654
    %v656 = vld [vmem:[%s646] sm:%s655]
    %v657 = vunpack.c.l.bf16 %v656
    %v658 = vunpack.c.h.bf16 %v656
    %s659 = scalar_lea.vmem [#allocation1], 184
    %660 = vst [vmem:[%s659] sm:%s4] %v657
    %s661 = smul.addr 4, 22
    %s662 = scalar_lea.vmem %s0, %s661
    %s663 = sshrl.u32 %s4, 1
    %s664 = sor.u32 %s4, %s663
    %s665 = sand.u32 %s664, 85
    %s666 = sshrl.u32 %s665, 1
    %s667 = sor.u32 %s665, %s666
    %s668 = sand.u32 51, %s667
    %s669 = sshrl.u32 %s668, 2
    %s670 = sor.u32 %s668, %s669
    %s671 = sand.u32 15, %s670
    %v672 = vld [vmem:[%s662] sm:%s671]
    %v673 = vunpack.c.l.bf16 %v672
    %v674 = vunpack.c.h.bf16 %v672
    %s675 = scalar_lea.vmem [#allocation1], 176
    %676 = vst [vmem:[%s675] sm:%s4] %v673
    %s677 = smul.addr 4, 21
    %s678 = scalar_lea.vmem %s0, %s677
    %s679 = sshrl.u32 %s4, 1
    %s680 = sor.u32 %s4, %s679
    %s681 = sand.u32 %s680, 85
    %s682 = sshrl.u32 %s681, 1
    %s683 = sor.u32 %s681, %s682
    %s684 = sand.u32 51, %s683
    %s685 = sshrl.u32 %s684, 2
    %s686 = sor.u32 %s684, %s685
    %s687 = sand.u32 15, %s686
    %v688 = vld [vmem:[%s678] sm:%s687]
    %v689 = vunpack.c.l.bf16 %v688
    %v690 = vunpack.c.h.bf16 %v688
    %s691 = scalar_lea.vmem [#allocation1], 168
    %692 = vst [vmem:[%s691] sm:%s4] %v689
    %s693 = smul.addr 4, 20
    %s694 = scalar_lea.vmem %s0, %s693
    %s695 = sshrl.u32 %s4, 1
    %s696 = sor.u32 %s4, %s695
    %s697 = sand.u32 %s696, 85
    %s698 = sshrl.u32 %s697, 1
    %s699 = sor.u32 %s697, %s698
    %s700 = sand.u32 51, %s699
    %s701 = sshrl.u32 %s700, 2
    %s702 = sor.u32 %s700, %s701
    %s703 = sand.u32 15, %s702
    %v704 = vld [vmem:[%s694] sm:%s703]
    %v705 = vunpack.c.l.bf16 %v704
    %v706 = vunpack.c.h.bf16 %v704
    %s707 = scalar_lea.vmem [#allocation1], 160
    %708 = vst [vmem:[%s707] sm:%s4] %v705
    %s709 = smul.addr 4, 19
    %s710 = scalar_lea.vmem %s0, %s709
    %s711 = sshrl.u32 %s4, 1
    %s712 = sor.u32 %s4, %s711
    %s713 = sand.u32 %s712, 85
    %s714 = sshrl.u32 %s713, 1
    %s715 = sor.u32 %s713, %s714
    %s716 = sand.u32 51, %s715
    %s717 = sshrl.u32 %s716, 2
    %s718 = sor.u32 %s716, %s717
    %s719 = sand.u32 15, %s718
    %v720 = vld [vmem:[%s710] sm:%s719]
    %v721 = vunpack.c.l.bf16 %v720
    %v722 = vunpack.c.h.bf16 %v720
    %s723 = scalar_lea.vmem [#allocation1], 152
    %724 = vst [vmem:[%s723] sm:%s4] %v721
    %s725 = smul.addr 4, 18
    %s726 = scalar_lea.vmem %s0, %s725
    %s727 = sshrl.u32 %s4, 1
    %s728 = sor.u32 %s4, %s727
    %s729 = sand.u32 %s728, 85
    %s730 = sshrl.u32 %s729, 1
    %s731 = sor.u32 %s729, %s730
    %s732 = sand.u32 51, %s731
    %s733 = sshrl.u32 %s732, 2
    %s734 = sor.u32 %s732, %s733
    %s735 = sand.u32 15, %s734
    %v736 = vld [vmem:[%s726] sm:%s735]
    %v737 = vunpack.c.l.bf16 %v736
    %v738 = vunpack.c.h.bf16 %v736
    %s739 = scalar_lea.vmem [#allocation1], 144
    %740 = vst [vmem:[%s739] sm:%s4] %v737
    %s741 = smul.addr 4, 17
    %s742 = scalar_lea.vmem %s0, %s741
    %s743 = sshrl.u32 %s4, 1
    %s744 = sor.u32 %s4, %s743
    %s745 = sand.u32 %s744, 85
    %s746 = sshrl.u32 %s745, 1
    %s747 = sor.u32 %s745, %s746
    %s748 = sand.u32 51, %s747
    %s749 = sshrl.u32 %s748, 2
    %s750 = sor.u32 %s748, %s749
    %s751 = sand.u32 15, %s750
    %v752 = vld [vmem:[%s742] sm:%s751]
    %v753 = vunpack.c.l.bf16 %v752
    %v754 = vunpack.c.h.bf16 %v752
    %s755 = scalar_lea.vmem [#allocation1], 136
    %756 = vst [vmem:[%s755] sm:%s4] %v753
    %s757 = smul.addr 4, 16
    %s758 = scalar_lea.vmem %s0, %s757
    %s759 = sshrl.u32 %s4, 1
    %s760 = sor.u32 %s4, %s759
    %s761 = sand.u32 %s760, 85
    %s762 = sshrl.u32 %s761, 1
    %s763 = sor.u32 %s761, %s762
    %s764 = sand.u32 51, %s763
    %s765 = sshrl.u32 %s764, 2
    %s766 = sor.u32 %s764, %s765
    %s767 = sand.u32 15, %s766
    %v768 = vld [vmem:[%s758] sm:%s767]
    %v769 = vunpack.c.l.bf16 %v768
    %v770 = vunpack.c.h.bf16 %v768
    %s771 = scalar_lea.vmem [#allocation1], 128
    %772 = vst [vmem:[%s771] sm:%s4] %v769
    %s773 = smul.addr 4, 15
    %s774 = scalar_lea.vmem %s0, %s773
    %s775 = sshrl.u32 %s4, 1
    %s776 = sor.u32 %s4, %s775
    %s777 = sand.u32 %s776, 85
    %s778 = sshrl.u32 %s777, 1
    %s779 = sor.u32 %s777, %s778
    %s780 = sand.u32 51, %s779
    %s781 = sshrl.u32 %s780, 2
    %s782 = sor.u32 %s780, %s781
    %s783 = sand.u32 15, %s782
    %v784 = vld [vmem:[%s774] sm:%s783]
    %v785 = vunpack.c.l.bf16 %v784
    %v786 = vunpack.c.h.bf16 %v784
    %s787 = scalar_lea.vmem [#allocation1], 120
    %788 = vst [vmem:[%s787] sm:%s4] %v785
    %s789 = smul.addr 4, 14
    %s790 = scalar_lea.vmem %s0, %s789
    %s791 = sshrl.u32 %s4, 1
    %s792 = sor.u32 %s4, %s791
    %s793 = sand.u32 %s792, 85
    %s794 = sshrl.u32 %s793, 1
    %s795 = sor.u32 %s793, %s794
    %s796 = sand.u32 51, %s795
    %s797 = sshrl.u32 %s796, 2
    %s798 = sor.u32 %s796, %s797
    %s799 = sand.u32 15, %s798
    %v800 = vld [vmem:[%s790] sm:%s799]
    %v801 = vunpack.c.l.bf16 %v800
    %v802 = vunpack.c.h.bf16 %v800
    %s803 = scalar_lea.vmem [#allocation1], 112
    %804 = vst [vmem:[%s803] sm:%s4] %v801
    %s805 = smul.addr 4, 13
    %s806 = scalar_lea.vmem %s0, %s805
    %s807 = sshrl.u32 %s4, 1
    %s808 = sor.u32 %s4, %s807
    %s809 = sand.u32 %s808, 85
    %s810 = sshrl.u32 %s809, 1
    %s811 = sor.u32 %s809, %s810
    %s812 = sand.u32 51, %s811
    %s813 = sshrl.u32 %s812, 2
    %s814 = sor.u32 %s812, %s813
    %s815 = sand.u32 15, %s814
    %v816 = vld [vmem:[%s806] sm:%s815]
    %v817 = vunpack.c.l.bf16 %v816
    %v818 = vunpack.c.h.bf16 %v816
    %s819 = scalar_lea.vmem [#allocation1], 104
    %820 = vst [vmem:[%s819] sm:%s4] %v817
    %s821 = smul.addr 4, 12
    %s822 = scalar_lea.vmem %s0, %s821
    %s823 = sshrl.u32 %s4, 1
    %s824 = sor.u32 %s4, %s823
    %s825 = sand.u32 %s824, 85
    %s826 = sshrl.u32 %s825, 1
    %s827 = sor.u32 %s825, %s826
    %s828 = sand.u32 51, %s827
    %s829 = sshrl.u32 %s828, 2
    %s830 = sor.u32 %s828, %s829
    %s831 = sand.u32 15, %s830
    %v832 = vld [vmem:[%s822] sm:%s831]
    %v833 = vunpack.c.l.bf16 %v832
    %v834 = vunpack.c.h.bf16 %v832
    %s835 = scalar_lea.vmem [#allocation1], 96
    %836 = vst [vmem:[%s835] sm:%s4] %v833
    %s837 = smul.addr 4, 11
    %s838 = scalar_lea.vmem %s0, %s837
    %s839 = sshrl.u32 %s4, 1
    %s840 = sor.u32 %s4, %s839
    %s841 = sand.u32 %s840, 85
    %s842 = sshrl.u32 %s841, 1
    %s843 = sor.u32 %s841, %s842
    %s844 = sand.u32 51, %s843
    %s845 = sshrl.u32 %s844, 2
    %s846 = sor.u32 %s844, %s845
    %s847 = sand.u32 15, %s846
    %v848 = vld [vmem:[%s838] sm:%s847]
    %v849 = vunpack.c.l.bf16 %v848
    %v850 = vunpack.c.h.bf16 %v848
    %s851 = scalar_lea.vmem [#allocation1], 88
    %852 = vst [vmem:[%s851] sm:%s4] %v849
    %s853 = smul.addr 4, 10
    %s854 = scalar_lea.vmem %s0, %s853
    %s855 = sshrl.u32 %s4, 1
    %s856 = sor.u32 %s4, %s855
    %s857 = sand.u32 %s856, 85
    %s858 = sshrl.u32 %s857, 1
    %s859 = sor.u32 %s857, %s858
    %s860 = sand.u32 51, %s859
    %s861 = sshrl.u32 %s860, 2
    %s862 = sor.u32 %s860, %s861
    %s863 = sand.u32 15, %s862
    %v864 = vld [vmem:[%s854] sm:%s863]
    %v865 = vunpack.c.l.bf16 %v864
    %v866 = vunpack.c.h.bf16 %v864
    %s867 = scalar_lea.vmem [#allocation1], 80
    %868 = vst [vmem:[%s867] sm:%s4] %v865
    %s869 = smul.addr 4, 9
    %s870 = scalar_lea.vmem %s0, %s869
    %s871 = sshrl.u32 %s4, 1
    %s872 = sor.u32 %s4, %s871
    %s873 = sand.u32 %s872, 85
    %s874 = sshrl.u32 %s873, 1
    %s875 = sor.u32 %s873, %s874
    %s876 = sand.u32 51, %s875
    %s877 = sshrl.u32 %s876, 2
    %s878 = sor.u32 %s876, %s877
    %s879 = sand.u32 15, %s878
    %v880 = vld [vmem:[%s870] sm:%s879]
    %v881 = vunpack.c.l.bf16 %v880
    %v882 = vunpack.c.h.bf16 %v880
    %s883 = scalar_lea.vmem [#allocation1], 72
    %884 = vst [vmem:[%s883] sm:%s4] %v881
    %s885 = smul.addr 4, 8
    %s886 = scalar_lea.vmem %s0, %s885
    %s887 = sshrl.u32 %s4, 1
    %s888 = sor.u32 %s4, %s887
    %s889 = sand.u32 %s888, 85
    %s890 = sshrl.u32 %s889, 1
    %s891 = sor.u32 %s889, %s890
    %s892 = sand.u32 51, %s891
    %s893 = sshrl.u32 %s892, 2
    %s894 = sor.u32 %s892, %s893
    %s895 = sand.u32 15, %s894
    %v896 = vld [vmem:[%s886] sm:%s895]
    %v897 = vunpack.c.l.bf16 %v896
    %v898 = vunpack.c.h.bf16 %v896
    %s899 = scalar_lea.vmem [#allocation1], 64
    %900 = vst [vmem:[%s899] sm:%s4] %v897
    %s901 = smul.addr 4, 7
    %s902 = scalar_lea.vmem %s0, %s901
    %s903 = sshrl.u32 %s4, 1
    %s904 = sor.u32 %s4, %s903
    %s905 = sand.u32 %s904, 85
    %s906 = sshrl.u32 %s905, 1
    %s907 = sor.u32 %s905, %s906
    %s908 = sand.u32 51, %s907
    %s909 = sshrl.u32 %s908, 2
    %s910 = sor.u32 %s908, %s909
    %s911 = sand.u32 15, %s910
    %v912 = vld [vmem:[%s902] sm:%s911]
    %v913 = vunpack.c.l.bf16 %v912
    %v914 = vunpack.c.h.bf16 %v912
    %s915 = scalar_lea.vmem [#allocation1], 56
    %916 = vst [vmem:[%s915] sm:%s4] %v913
    %s917 = smul.addr 4, 6
    %s918 = scalar_lea.vmem %s0, %s917
    %s919 = sshrl.u32 %s4, 1
    %s920 = sor.u32 %s4, %s919
    %s921 = sand.u32 %s920, 85
    %s922 = sshrl.u32 %s921, 1
    %s923 = sor.u32 %s921, %s922
    %s924 = sand.u32 51, %s923
    %s925 = sshrl.u32 %s924, 2
    %s926 = sor.u32 %s924, %s925
    %s927 = sand.u32 15, %s926
    %v928 = vld [vmem:[%s918] sm:%s927]
    %v929 = vunpack.c.l.bf16 %v928
    %v930 = vunpack.c.h.bf16 %v928
    %s931 = scalar_lea.vmem [#allocation1], 48
    %932 = vst [vmem:[%s931] sm:%s4] %v929
    %s933 = smul.addr 4, 5
    %s934 = scalar_lea.vmem %s0, %s933
    %s935 = sshrl.u32 %s4, 1
    %s936 = sor.u32 %s4, %s935
    %s937 = sand.u32 %s936, 85
    %s938 = sshrl.u32 %s937, 1
    %s939 = sor.u32 %s937, %s938
    %s940 = sand.u32 51, %s939
    %s941 = sshrl.u32 %s940, 2
    %s942 = sor.u32 %s940, %s941
    %s943 = sand.u32 15, %s942
    %v944 = vld [vmem:[%s934] sm:%s943]
    %v945 = vunpack.c.l.bf16 %v944
    %v946 = vunpack.c.h.bf16 %v944
    %s947 = scalar_lea.vmem [#allocation1], 40
    %948 = vst [vmem:[%s947] sm:%s4] %v945
    %s949 = smul.addr 4, 4
    %s950 = scalar_lea.vmem %s0, %s949
    %s951 = sshrl.u32 %s4, 1
    %s952 = sor.u32 %s4, %s951
    %s953 = sand.u32 %s952, 85
    %s954 = sshrl.u32 %s953, 1
    %s955 = sor.u32 %s953, %s954
    %s956 = sand.u32 51, %s955
    %s957 = sshrl.u32 %s956, 2
    %s958 = sor.u32 %s956, %s957
    %s959 = sand.u32 15, %s958
    %v960 = vld [vmem:[%s950] sm:%s959]
    %v961 = vunpack.c.l.bf16 %v960
    %v962 = vunpack.c.h.bf16 %v960
    %s963 = scalar_lea.vmem [#allocation1], 32
    %964 = vst [vmem:[%s963] sm:%s4] %v961
    %s965 = smul.addr 4, 3
    %s966 = scalar_lea.vmem %s0, %s965
    %s967 = sshrl.u32 %s4, 1
    %s968 = sor.u32 %s4, %s967
    %s969 = sand.u32 %s968, 85
    %s970 = sshrl.u32 %s969, 1
    %s971 = sor.u32 %s969, %s970
    %s972 = sand.u32 51, %s971
    %s973 = sshrl.u32 %s972, 2
    %s974 = sor.u32 %s972, %s973
    %s975 = sand.u32 15, %s974
    %v976 = vld [vmem:[%s966] sm:%s975]
    %v977 = vunpack.c.l.bf16 %v976
    %v978 = vunpack.c.h.bf16 %v976
    %s979 = scalar_lea.vmem [#allocation1], 24
    %980 = vst [vmem:[%s979] sm:%s4] %v977
    %s981 = smul.addr 4, 2
    %s982 = scalar_lea.vmem %s0, %s981
    %s983 = sshrl.u32 %s4, 1
    %s984 = sor.u32 %s4, %s983
    %s985 = sand.u32 %s984, 85
    %s986 = sshrl.u32 %s985, 1
    %s987 = sor.u32 %s985, %s986
    %s988 = sand.u32 51, %s987
    %s989 = sshrl.u32 %s988, 2
    %s990 = sor.u32 %s988, %s989
    %s991 = sand.u32 15, %s990
    %v992 = vld [vmem:[%s982] sm:%s991]
    %v993 = vunpack.c.l.bf16 %v992
    %v994 = vunpack.c.h.bf16 %v992
    %s995 = scalar_lea.vmem [#allocation1], 16
    %996 = vst [vmem:[%s995] sm:%s4] %v993
    %s997 = scalar_lea.vmem %s0, 4
    %s998 = sshrl.u32 %s4, 1
    %s999 = sor.u32 %s4, %s998
    %s1000 = sand.u32 %s999, 85
    %s1001 = sshrl.u32 %s1000, 1
    %s1002 = sor.u32 %s1000, %s1001
    %s1003 = sand.u32 51, %s1002
    %s1004 = sshrl.u32 %s1003, 2
    %s1005 = sor.u32 %s1003, %s1004
    %s1006 = sand.u32 15, %s1005
    %v1007 = vld [vmem:[%s997] sm:%s1006]
    %v1008 = vunpack.c.l.bf16 %v1007
    %v1009 = vunpack.c.h.bf16 %v1007
    %s1010 = scalar_lea.vmem [#allocation1], 8
    %1011 = vst [vmem:[%s1010] sm:%s4] %v1008
    %s1012 = sshrl.u32 %s4, 1
    %s1013 = sor.u32 %s4, %s1012
    %s1014 = sand.u32 %s1013, 85
    %s1015 = sshrl.u32 %s1014, 1
    %s1016 = sor.u32 %s1014, %s1015
    %s1017 = sand.u32 51, %s1016
    %s1018 = sshrl.u32 %s1017, 2
    %s1019 = sor.u32 %s1017, %s1018
    %s1020 = sand.u32 15, %s1019
    %v1021 = vld [vmem:[%s0] sm:%s1020]
    %v1022 = vunpack.c.l.bf16 %v1021
    %v1023 = vunpack.c.h.bf16 %v1021
    %1024 = vst [vmem:[#allocation1] sm:%s4] %v1022
    %v1025 = vld [vmem:[#allocation1] ss:$8 sm:$0xf]
    %v1026 = vld [vmem:[#allocation1] ss:$8 sm:$0xf0]
    %vm1027 = vcmask 1047556
    %v1028 = vsel %vm1027, %v1026, %v1025
    %vm1029 = vcmask 130048
    %1030 = vst.msk [vmem:[#allocation0] sm:$0xff] %vm1029, %v1028
    %s1031 = scalar_lea.vmem [#allocation1], 64
    %v1032 = vld [vmem:[%s1031] ss:$8 sm:$0xf]
    %s1033 = scalar_lea.vmem [#allocation1], 64
    %v1034 = vld [vmem:[%s1033] ss:$8 sm:$0xf0]
    %vm1035 = vcmask 1047556
    %v1036 = vsel %vm1035, %v1034, %v1032
    %vm1037 = vcmask 130048
    %s1038 = scalar_lea.vmem [#allocation0], 8
    %1039 = vst.msk [vmem:[%s1038] sm:$0xff] %vm1037, %v1036
    %s1040 = scalar_lea.vmem [#allocation1], 128
    %v1041 = vld [vmem:[%s1040] ss:$8 sm:$0xf]
    %s1042 = scalar_lea.vmem [#allocation1], 128
    %v1043 = vld [vmem:[%s1042] ss:$8 sm:$0xf0]
    %vm1044 = vcmask 1047556
    %v1045 = vsel %vm1044, %v1043, %v1041
    %vm1046 = vcmask 130048
    %s1047 = scalar_lea.vmem [#allocation0], 16
    %1048 = vst.msk [vmem:[%s1047] sm:$0xff] %vm1046, %v1045
    %s1049 = scalar_lea.vmem [#allocation1], 192
    %v1050 = vld [vmem:[%s1049] ss:$8 sm:$0xf]
    %s1051 = scalar_lea.vmem [#allocation1], 192
    %v1052 = vld [vmem:[%s1051] ss:$8 sm:$0xf0]
    %vm1053 = vcmask 1047556
    %v1054 = vsel %vm1053, %v1052, %v1050
    %vm1055 = vcmask 130048
    %s1056 = scalar_lea.vmem [#allocation0], 24
    %1057 = vst.msk [vmem:[%s1056] sm:$0xff] %vm1055, %v1054
    %s1058 = scalar_lea.vmem [#allocation1], 256
    %v1059 = vld [vmem:[%s1058] ss:$8 sm:$0xf]
    %s1060 = scalar_lea.vmem [#allocation1], 256
    %v1061 = vld [vmem:[%s1060] ss:$8 sm:$0xf0]
    %vm1062 = vcmask 1047556
    %v1063 = vsel %vm1062, %v1061, %v1059
    %vm1064 = vcmask 130048
    %s1065 = scalar_lea.vmem [#allocation0], 32
    %1066 = vst.msk [vmem:[%s1065] sm:$0xff] %vm1064, %v1063
    %s1067 = scalar_lea.vmem [#allocation1], 320
    %v1068 = vld [vmem:[%s1067] ss:$8 sm:$0xf]
    %s1069 = scalar_lea.vmem [#allocation1], 320
    %v1070 = vld [vmem:[%s1069] ss:$8 sm:$0xf0]
    %vm1071 = vcmask 1047556
    %v1072 = vsel %vm1071, %v1070, %v1068
    %vm1073 = vcmask 130048
    %s1074 = scalar_lea.vmem [#allocation0], 40
    %1075 = vst.msk [vmem:[%s1074] sm:$0xff] %vm1073, %v1072
    %s1076 = scalar_lea.vmem [#allocation1], 384
    %v1077 = vld [vmem:[%s1076] ss:$8 sm:$0xf]
    %s1078 = scalar_lea.vmem [#allocation1], 384
    %v1079 = vld [vmem:[%s1078] ss:$8 sm:$0xf0]
    %vm1080 = vcmask 1047556
    %v1081 = vsel %vm1080, %v1079, %v1077
    %vm1082 = vcmask 130048
    %s1083 = scalar_lea.vmem [#allocation0], 48
    %1084 = vst.msk [vmem:[%s1083] sm:$0xff] %vm1082, %v1081
    %s1085 = scalar_lea.vmem [#allocation1], 448
    %v1086 = vld [vmem:[%s1085] ss:$8 sm:$0xf]
    %s1087 = scalar_lea.vmem [#allocation1], 448
    %v1088 = vld [vmem:[%s1087] ss:$8 sm:$0xf0]
    %vm1089 = vcmask 1047556
    %v1090 = vsel %vm1089, %v1088, %v1086
    %vm1091 = vcmask 130048
    %s1092 = scalar_lea.vmem [#allocation0], 56
    %1093 = vst.msk [vmem:[%s1092] sm:$0xff] %vm1091, %v1090
    %s1094 = scalar_lea.vmem [#allocation1], 7
    %v1095 = vld [vmem:[%s1094] ss:$8 sm:$0xf]
    %s1096 = scalar_lea.vmem [#allocation1], 7
    %v1097 = vld [vmem:[%s1096] ss:$8 sm:$0xf0]
    %vm1098 = vcmask 1047556
    %v1099 = vsel %vm1098, %v1097, %v1095
    %1100 = vrot.lane.b32.xlu0 %v1099, 112
    %v1101 = vpop.permute.xlu0 %1100
    %vm1102 = vcmask 1048448
    %1103 = vst.msk [vmem:[#allocation0] sm:$0xff] %vm1102, %v1101
    %s1104 = scalar_lea.vmem [#allocation1], 263
    %v1105 = vld [vmem:[%s1104] ss:$8 sm:$0xf]
    %s1106 = scalar_lea.vmem [#allocation1], 263
    %v1107 = vld [vmem:[%s1106] ss:$8 sm:$0xf0]
    %vm1108 = vcmask 1047556
    %v1109 = vsel %vm1108, %v1107, %v1105
    %1110 = vrot.lane.b32.xlu0 %v1109, 112
    %v1111 = vpop.permute.xlu0 %1110
    %vm1112 = vcmask 1048448
    %s1113 = scalar_lea.vmem [#allocation0], 32
    %1114 = vst.msk [vmem:[%s1113] sm:$0xff] %vm1112, %v1111
    %s1115 = scalar_lea.vmem [#allocation1], 71
    %v1116 = vld [vmem:[%s1115] ss:$8 sm:$0xf]
    %s1117 = scalar_lea.vmem [#allocation1], 71
    %v1118 = vld [vmem:[%s1117] ss:$8 sm:$0xf0]
    %vm1119 = vcmask 1047556
    %v1120 = vsel %vm1119, %v1118, %v1116
    %1121 = vrot.lane.b32.xlu0 %v1120, 112
    %v1122 = vpop.permute.xlu0 %1121
    %vm1123 = vcmask 1048448
    %s1124 = scalar_lea.vmem [#allocation0], 8
    %1125 = vst.msk [vmem:[%s1124] sm:$0xff] %vm1123, %v1122
    %s1126 = scalar_lea.vmem [#allocation1], 327
    %v1127 = vld [vmem:[%s1126] ss:$8 sm:$0xf]
    %s1128 = scalar_lea.vmem [#allocation1], 327
    %v1129 = vld [vmem:[%s1128] ss:$8 sm:$0xf0]
    %vm1130 = vcmask 1047556
    %v1131 = vsel %vm1130, %v1129, %v1127
    %1132 = vrot.lane.b32.xlu0 %v1131, 112
    %v1133 = vpop.permute.xlu0 %1132
    %vm1134 = vcmask 1048448
    %s1135 = scalar_lea.vmem [#allocation0], 40
    %1136 = vst.msk [vmem:[%s1135] sm:$0xff] %vm1134, %v1133
    %s1137 = scalar_lea.vmem [#allocation1], 135
    %v1138 = vld [vmem:[%s1137] ss:$8 sm:$0xf]
    %s1139 = scalar_lea.vmem [#allocation1], 135
    %v1140 = vld [vmem:[%s1139] ss:$8 sm:$0xf0]
    %vm1141 = vcmask 1047556
    %v1142 = vsel %vm1141, %v1140, %v1138
    %1143 = vrot.lane.b32.xlu0 %v1142, 112
    %v1144 = vpop.permute.xlu0 %1143
    %vm1145 = vcmask 1048448
    %s1146 = scalar_lea.vmem [#allocation0], 16
    %1147 = vst.msk [vmem:[%s1146] sm:$0xff] %vm1145, %v1144
    %s1148 = scalar_lea.vmem [#allocation1], 391
    %v1149 = vld [vmem:[%s1148] ss:$8 sm:$0xf]
    %s1150 = scalar_lea.vmem [#allocation1], 391
    %v1151 = vld [vmem:[%s1150] ss:$8 sm:$0xf0]
    %vm1152 = vcmask 1047556
    %v1153 = vsel %vm1152, %v1151, %v1149
    %1154 = vrot.lane.b32.xlu0 %v1153, 112
    %v1155 = vpop.permute.xlu0 %1154
    %vm1156 = vcmask 1048448
    %s1157 = scalar_lea.vmem [#allocation0], 48
    %1158 = vst.msk [vmem:[%s1157] sm:$0xff] %vm1156, %v1155
    %s1159 = scalar_lea.vmem [#allocation1], 199
    %v1160 = vld [vmem:[%s1159] ss:$8 sm:$0xf]
    %s1161 = scalar_lea.vmem [#allocation1], 199
    %v1162 = vld [vmem:[%s1161] ss:$8 sm:$0xf0]
    %vm1163 = vcmask 1047556
    %v1164 = vsel %vm1163, %v1162, %v1160
    %1165 = vrot.lane.b32.xlu0 %v1164, 112
    %v1166 = vpop.permute.xlu0 %1165
    %vm1167 = vcmask 1048448
    %s1168 = scalar_lea.vmem [#allocation0], 24
    %1169 = vst.msk [vmem:[%s1168] sm:$0xff] %vm1167, %v1166
    %s1170 = scalar_lea.vmem [#allocation1], 455
    %v1171 = vld [vmem:[%s1170] ss:$8 sm:$0xf]
    %s1172 = scalar_lea.vmem [#allocation1], 455
    %v1173 = vld [vmem:[%s1172] ss:$8 sm:$0xf0]
    %vm1174 = vcmask 1047556
    %v1175 = vsel %vm1174, %v1173, %v1171
    %1176 = vrot.lane.b32.xlu0 %v1175, 112
    %v1177 = vpop.permute.xlu0 %1176
    %vm1178 = vcmask 1048448
    %s1179 = scalar_lea.vmem [#allocation0], 56
    %1180 = vst.msk [vmem:[%s1179] sm:$0xff] %vm1178, %v1177
    %s1181 = scalar_lea.vmem [#allocation1], 6
    %v1182 = vld [vmem:[%s1181] ss:$8 sm:$0xf]
    %s1183 = scalar_lea.vmem [#allocation1], 6
    %v1184 = vld [vmem:[%s1183] ss:$8 sm:$0xf0]
    %vm1185 = vcmask 1047556
    %v1186 = vsel %vm1185, %v1184, %v1182
    %1187 = vrot.lane.b32.xlu0 %v1186, 96
    %v1188 = vpop.permute.xlu0 %1187
    %vm1189 = vcmask 917248
    %1190 = vst.msk [vmem:[#allocation0] sm:$0xff] %vm1189, %v1188
    %s1191 = scalar_lea.vmem [#allocation1], 262
    %v1192 = vld [vmem:[%s1191] ss:$8 sm:$0xf]
    %s1193 = scalar_lea.vmem [#allocation1], 262
    %v1194 = vld [vmem:[%s1193] ss:$8 sm:$0xf0]
    %vm1195 = vcmask 1047556
    %v1196 = vsel %vm1195, %v1194, %v1192
    %1197 = vrot.lane.b32.xlu0 %v1196, 96
    %v1198 = vpop.permute.xlu0 %1197
    %vm1199 = vcmask 917248
    %s1200 = scalar_lea.vmem [#allocation0], 32
    %1201 = vst.msk [vmem:[%s1200] sm:$0xff] %vm1199, %v1198
    %s1202 = scalar_lea.vmem [#allocation1], 70
    %v1203 = vld [vmem:[%s1202] ss:$8 sm:$0xf]
    %s1204 = scalar_lea.vmem [#allocation1], 70
    %v1205 = vld [vmem:[%s1204] ss:$8 sm:$0xf0]
    %vm1206 = vcmask 1047556
    %v1207 = vsel %vm1206, %v1205, %v1203
    %1208 = vrot.lane.b32.xlu0 %v1207, 96
    %v1209 = vpop.permute.xlu0 %1208
    %vm1210 = vcmask 917248
    %s1211 = scalar_lea.vmem [#allocation0], 8
    %1212 = vst.msk [vmem:[%s1211] sm:$0xff] %vm1210, %v1209
    %s1213 = scalar_lea.vmem [#allocation1], 326
    %v1214 = vld [vmem:[%s1213] ss:$8 sm:$0xf]
    %s1215 = scalar_lea.vmem [#allocation1], 326
    %v1216 = vld [vmem:[%s1215] ss:$8 sm:$0xf0]
    %vm1217 = vcmask 1047556
    %v1218 = vsel %vm1217, %v1216, %v1214
    %1219 = vrot.lane.b32.xlu0 %v1218, 96
    %v1220 = vpop.permute.xlu0 %1219
    %vm1221 = vcmask 917248
    %s1222 = scalar_lea.vmem [#allocation0], 40
    %1223 = vst.msk [vmem:[%s1222] sm:$0xff] %vm1221, %v1220
    %s1224 = scalar_lea.vmem [#allocation1], 134
    %v1225 = vld [vmem:[%s1224] ss:$8 sm:$0xf]
    %s1226 = scalar_lea.vmem [#allocation1], 134
    %v1227 = vld [vmem:[%s1226] ss:$8 sm:$0xf0]
    %vm1228 = vcmask 1047556
    %v1229 = vsel %vm1228, %v1227, %v1225
    %1230 = vrot.lane.b32.xlu0 %v1229, 96
    %v1231 = vpop.permute.xlu0 %1230
    %vm1232 = vcmask 917248
    %s1233 = scalar_lea.vmem [#allocation0], 16
    %1234 = vst.msk [vmem:[%s1233] sm:$0xff] %vm1232, %v1231
    %s1235 = scalar_lea.vmem [#allocation1], 390
    %v1236 = vld [vmem:[%s1235] ss:$8 sm:$0xf]
    %s1237 = scalar_lea.vmem [#allocation1], 390
    %v1238 = vld [vmem:[%s1237] ss:$8 sm:$0xf0]
    %vm1239 = vcmask 1047556
    %v1240 = vsel %vm1239, %v1238, %v1236
    %1241 = vrot.lane.b32.xlu0 %v1240, 96
    %v1242 = vpop.permute.xlu0 %1241
    %vm1243 = vcmask 917248
    %s1244 = scalar_lea.vmem [#allocation0], 48
    %1245 = vst.msk [vmem:[%s1244] sm:$0xff] %vm1243, %v1242
    %s1246 = scalar_lea.vmem [#allocation1], 198
    %v1247 = vld [vmem:[%s1246] ss:$8 sm:$0xf]
    %s1248 = scalar_lea.vmem [#allocation1], 198
    %v1249 = vld [vmem:[%s1248] ss:$8 sm:$0xf0]
    %vm1250 = vcmask 1047556
    %v1251 = vsel %vm1250, %v1249, %v1247
    %1252 = vrot.lane.b32.xlu0 %v1251, 96
    %v1253 = vpop.permute.xlu0 %1252
    %vm1254 = vcmask 917248
    %s1255 = scalar_lea.vmem [#allocation0], 24
    %1256 = vst.msk [vmem:[%s1255] sm:$0xff] %vm1254, %v1253
    %s1257 = scalar_lea.vmem [#allocation1], 454
    %v1258 = vld [vmem:[%s1257] ss:$8 sm:$0xf]
    %s1259 = scalar_lea.vmem [#allocation1], 454
    %v1260 = vld [vmem:[%s1259] ss:$8 sm:$0xf0]
    %vm1261 = vcmask 1047556
    %v1262 = vsel %vm1261, %v1260, %v1258
    %1263 = vrot.lane.b32.xlu0 %v1262, 96
    %v1264 = vpop.permute.xlu0 %1263
    %vm1265 = vcmask 917248
    %s1266 = scalar_lea.vmem [#allocation0], 56
    %1267 = vst.msk [vmem:[%s1266] sm:$0xff] %vm1265, %v1264
    %s1268 = scalar_lea.vmem [#allocation1], 5
    %v1269 = vld [vmem:[%s1268] ss:$8 sm:$0xf]
    %s1270 = scalar_lea.vmem [#allocation1], 5
    %v1271 = vld [vmem:[%s1270] ss:$8 sm:$0xf0]
    %vm1272 = vcmask 1047556
    %v1273 = vsel %vm1272, %v1271, %v1269
    %1274 = vrot.lane.b32.xlu0 %v1273, 80
    %v1275 = vpop.permute.xlu0 %1274
    %vm1276 = vcmask 786048
    %1277 = vst.msk [vmem:[#allocation0] sm:$0xff] %vm1276, %v1275
    %s1278 = scalar_lea.vmem [#allocation1], 261
    %v1279 = vld [vmem:[%s1278] ss:$8 sm:$0xf]
    %s1280 = scalar_lea.vmem [#allocation1], 261
    %v1281 = vld [vmem:[%s1280] ss:$8 sm:$0xf0]
    %vm1282 = vcmask 1047556
    %v1283 = vsel %vm1282, %v1281, %v1279
    %1284 = vrot.lane.b32.xlu0 %v1283, 80
    %v1285 = vpop.permute.xlu0 %1284
    %vm1286 = vcmask 786048
    %s1287 = scalar_lea.vmem [#allocation0], 32
    %1288 = vst.msk [vmem:[%s1287] sm:$0xff] %vm1286, %v1285
    %s1289 = scalar_lea.vmem [#allocation1], 69
    %v1290 = vld [vmem:[%s1289] ss:$8 sm:$0xf]
    %s1291 = scalar_lea.vmem [#allocation1], 69
    %v1292 = vld [vmem:[%s1291] ss:$8 sm:$0xf0]
    %vm1293 = vcmask 1047556
    %v1294 = vsel %vm1293, %v1292, %v1290
    %1295 = vrot.lane.b32.xlu0 %v1294, 80
    %v1296 = vpop.permute.xlu0 %1295
    %vm1297 = vcmask 786048
    %s1298 = scalar_lea.vmem [#allocation0], 8
    %1299 = vst.msk [vmem:[%s1298] sm:$0xff] %vm1297, %v1296
    %s1300 = scalar_lea.vmem [#allocation1], 325
    %v1301 = vld [vmem:[%s1300] ss:$8 sm:$0xf]
    %s1302 = scalar_lea.vmem [#allocation1], 325
    %v1303 = vld [vmem:[%s1302] ss:$8 sm:$0xf0]
    %vm1304 = vcmask 1047556
    %v1305 = vsel %vm1304, %v1303, %v1301
    %1306 = vrot.lane.b32.xlu0 %v1305, 80
    %v1307 = vpop.permute.xlu0 %1306
    %vm1308 = vcmask 786048
    %s1309 = scalar_lea.vmem [#allocation0], 40
    %1310 = vst.msk [vmem:[%s1309] sm:$0xff] %vm1308, %v1307
    %s1311 = scalar_lea.vmem [#allocation1], 133
    %v1312 = vld [vmem:[%s1311] ss:$8 sm:$0xf]
    %s1313 = scalar_lea.vmem [#allocation1], 133
    %v1314 = vld [vmem:[%s1313] ss:$8 sm:$0xf0]
    %vm1315 = vcmask 1047556
    %v1316 = vsel %vm1315, %v1314, %v1312
    %1317 = vrot.lane.b32.xlu0 %v1316, 80
    %v1318 = vpop.permute.xlu0 %1317
    %vm1319 = vcmask 786048
    %s1320 = scalar_lea.vmem [#allocation0], 16
    %1321 = vst.msk [vmem:[%s1320] sm:$0xff] %vm1319, %v1318
    %s1322 = scalar_lea.vmem [#allocation1], 389
    %v1323 = vld [vmem:[%s1322] ss:$8 sm:$0xf]
    %s1324 = scalar_lea.vmem [#allocation1], 389
    %v1325 = vld [vmem:[%s1324] ss:$8 sm:$0xf0]
    %vm1326 = vcmask 1047556
    %v1327 = vsel %vm1326, %v1325, %v1323
    %1328 = vrot.lane.b32.xlu0 %v1327, 80
    %v1329 = vpop.permute.xlu0 %1328
    %vm1330 = vcmask 786048
    %s1331 = scalar_lea.vmem [#allocation0], 48
    %1332 = vst.msk [vmem:[%s1331] sm:$0xff] %vm1330, %v1329
    %s1333 = scalar_lea.vmem [#allocation1], 197
    %v1334 = vld [vmem:[%s1333] ss:$8 sm:$0xf]
    %s1335 = scalar_lea.vmem [#allocation1], 197
    %v1336 = vld [vmem:[%s1335] ss:$8 sm:$0xf0]
    %vm1337 = vcmask 1047556
    %v1338 = vsel %vm1337, %v1336, %v1334
    %1339 = vrot.lane.b32.xlu0 %v1338, 80
    %v1340 = vpop.permute.xlu0 %1339
    %vm1341 = vcmask 786048
    %s1342 = scalar_lea.vmem [#allocation0], 24
    %1343 = vst.msk [vmem:[%s1342] sm:$0xff] %vm1341, %v1340
    %s1344 = scalar_lea.vmem [#allocation1], 453
    %v1345 = vld [vmem:[%s1344] ss:$8 sm:$0xf]
    %s1346 = scalar_lea.vmem [#allocation1], 453
    %v1347 = vld [vmem:[%s1346] ss:$8 sm:$0xf0]
    %vm1348 = vcmask 1047556
    %v1349 = vsel %vm1348, %v1347, %v1345
    %1350 = vrot.lane.b32.xlu0 %v1349, 80
    %v1351 = vpop.permute.xlu0 %1350
    %vm1352 = vcmask 786048
    %s1353 = scalar_lea.vmem [#allocation0], 56
    %1354 = vst.msk [vmem:[%s1353] sm:$0xff] %vm1352, %v1351
    %s1355 = scalar_lea.vmem [#allocation1], 4
    %v1356 = vld [vmem:[%s1355] ss:$8 sm:$0xf]
    %s1357 = scalar_lea.vmem [#allocation1], 4
    %v1358 = vld [vmem:[%s1357] ss:$8 sm:$0xf0]
    %vm1359 = vcmask 1047556
    %v1360 = vsel %vm1359, %v1358, %v1356
    %1361 = vrot.lane.b32.xlu0 %v1360, 64
    %v1362 = vpop.permute.xlu0 %1361
    %vm1363 = vcmask 654848
    %1364 = vst.msk [vmem:[#allocation0] sm:$0xff] %vm1363, %v1362
    %s1365 = scalar_lea.vmem [#allocation1], 260
    %v1366 = vld [vmem:[%s1365] ss:$8 sm:$0xf]
    %s1367 = scalar_lea.vmem [#allocation1], 260
    %v1368 = vld [vmem:[%s1367] ss:$8 sm:$0xf0]
    %vm1369 = vcmask 1047556
    %v1370 = vsel %vm1369, %v1368, %v1366
    %1371 = vrot.lane.b32.xlu0 %v1370, 64
    %v1372 = vpop.permute.xlu0 %1371
    %vm1373 = vcmask 654848
    %s1374 = scalar_lea.vmem [#allocation0], 32
    %1375 = vst.msk [vmem:[%s1374] sm:$0xff] %vm1373, %v1372
    %s1376 = scalar_lea.vmem [#allocation1], 68
    %v1377 = vld [vmem:[%s1376] ss:$8 sm:$0xf]
    %s1378 = scalar_lea.vmem [#allocation1], 68
    %v1379 = vld [vmem:[%s1378] ss:$8 sm:$0xf0]
    %vm1380 = vcmask 1047556
    %v1381 = vsel %vm1380, %v1379, %v1377
    %1382 = vrot.lane.b32.xlu0 %v1381, 64
    %v1383 = vpop.permute.xlu0 %1382
    %vm1384 = vcmask 654848
    %s1385 = scalar_lea.vmem [#allocation0], 8
    %1386 = vst.msk [vmem:[%s1385] sm:$0xff] %vm1384, %v1383
    %s1387 = scalar_lea.vmem [#allocation1], 324
    %v1388 = vld [vmem:[%s1387] ss:$8 sm:$0xf]
    %s1389 = scalar_lea.vmem [#allocation1], 324
    %v1390 = vld [vmem:[%s1389] ss:$8 sm:$0xf0]
    %vm1391 = vcmask 1047556
    %v1392 = vsel %vm1391, %v1390, %v1388
    %1393 = vrot.lane.b32.xlu0 %v1392, 64
    %v1394 = vpop.permute.xlu0 %1393
    %vm1395 = vcmask 654848
    %s1396 = scalar_lea.vmem [#allocation0], 40
    %1397 = vst.msk [vmem:[%s1396] sm:$0xff] %vm1395, %v1394
    %s1398 = scalar_lea.vmem [#allocation1], 132
    %v1399 = vld [vmem:[%s1398] ss:$8 sm:$0xf]
    %s1400 = scalar_lea.vmem [#allocation1], 132
    %v1401 = vld [vmem:[%s1400] ss:$8 sm:$0xf0]
    %vm1402 = vcmask 1047556
    %v1403 = vsel %vm1402, %v1401, %v1399
    %1404 = vrot.lane.b32.xlu0 %v1403, 64
    %v1405 = vpop.permute.xlu0 %1404
    %vm1406 = vcmask 654848
    %s1407 = scalar_lea.vmem [#allocation0], 16
    %1408 = vst.msk [vmem:[%s1407] sm:$0xff] %vm1406, %v1405
    %s1409 = scalar_lea.vmem [#allocation1], 388
    %v1410 = vld [vmem:[%s1409] ss:$8 sm:$0xf]
    %s1411 = scalar_lea.vmem [#allocation1], 388
    %v1412 = vld [vmem:[%s1411] ss:$8 sm:$0xf0]
    %vm1413 = vcmask 1047556
    %v1414 = vsel %vm1413, %v1412, %v1410
    %1415 = vrot.lane.b32.xlu0 %v1414, 64
    %v1416 = vpop.permute.xlu0 %1415
    %vm1417 = vcmask 654848
    %s1418 = scalar_lea.vmem [#allocation0], 48
    %1419 = vst.msk [vmem:[%s1418] sm:$0xff] %vm1417, %v1416
    %s1420 = scalar_lea.vmem [#allocation1], 196
    %v1421 = vld [vmem:[%s1420] ss:$8 sm:$0xf]
    %s1422 = scalar_lea.vmem [#allocation1], 196
    %v1423 = vld [vmem:[%s1422] ss:$8 sm:$0xf0]
    %vm1424 = vcmask 1047556
    %v1425 = vsel %vm1424, %v1423, %v1421
    %1426 = vrot.lane.b32.xlu0 %v1425, 64
    %v1427 = vpop.permute.xlu0 %1426
    %vm1428 = vcmask 654848
    %s1429 = scalar_lea.vmem [#allocation0], 24
    %1430 = vst.msk [vmem:[%s1429] sm:$0xff] %vm1428, %v1427
    %s1431 = scalar_lea.vmem [#allocation1], 452
    %v1432 = vld [vmem:[%s1431] ss:$8 sm:$0xf]
    %s1433 = scalar_lea.vmem [#allocation1], 452
    %v1434 = vld [vmem:[%s1433] ss:$8 sm:$0xf0]
    %vm1435 = vcmask 1047556
    %v1436 = vsel %vm1435, %v1434, %v1432
    %1437 = vrot.lane.b32.xlu0 %v1436, 64
    %v1438 = vpop.permute.xlu0 %1437
    %vm1439 = vcmask 654848
    %s1440 = scalar_lea.vmem [#allocation0], 56
    %1441 = vst.msk [vmem:[%s1440] sm:$0xff] %vm1439, %v1438
    %s1442 = scalar_lea.vmem [#allocation1], 3
    %v1443 = vld [vmem:[%s1442] ss:$8 sm:$0xf]
    %s1444 = scalar_lea.vmem [#allocation1], 3
    %v1445 = vld [vmem:[%s1444] ss:$8 sm:$0xf0]
    %vm1446 = vcmask 1047556
    %v1447 = vsel %vm1446, %v1445, %v1443
    %1448 = vrot.lane.b32.xlu0 %v1447, 48
    %v1449 = vpop.permute.xlu0 %1448
    %vm1450 = vcmask 523648
    %1451 = vst.msk [vmem:[#allocation0] sm:$0xff] %vm1450, %v1449
    %s1452 = scalar_lea.vmem [#allocation1], 259
    %v1453 = vld [vmem:[%s1452] ss:$8 sm:$0xf]
    %s1454 = scalar_lea.vmem [#allocation1], 259
    %v1455 = vld [vmem:[%s1454] ss:$8 sm:$0xf0]
    %vm1456 = vcmask 1047556
    %v1457 = vsel %vm1456, %v1455, %v1453
    %1458 = vrot.lane.b32.xlu0 %v1457, 48
    %v1459 = vpop.permute.xlu0 %1458
    %vm1460 = vcmask 523648
    %s1461 = scalar_lea.vmem [#allocation0], 32
    %1462 = vst.msk [vmem:[%s1461] sm:$0xff] %vm1460, %v1459
    %s1463 = scalar_lea.vmem [#allocation1], 67
    %v1464 = vld [vmem:[%s1463] ss:$8 sm:$0xf]
    %s1465 = scalar_lea.vmem [#allocation1], 67
    %v1466 = vld [vmem:[%s1465] ss:$8 sm:$0xf0]
    %vm1467 = vcmask 1047556
    %v1468 = vsel %vm1467, %v1466, %v1464
    %1469 = vrot.lane.b32.xlu0 %v1468, 48
    %v1470 = vpop.permute.xlu0 %1469
    %vm1471 = vcmask 523648
    %s1472 = scalar_lea.vmem [#allocation0], 8
    %1473 = vst.msk [vmem:[%s1472] sm:$0xff] %vm1471, %v1470
    %s1474 = scalar_lea.vmem [#allocation1], 323
    %v1475 = vld [vmem:[%s1474] ss:$8 sm:$0xf]
    %s1476 = scalar_lea.vmem [#allocation1], 323
    %v1477 = vld [vmem:[%s1476] ss:$8 sm:$0xf0]
    %vm1478 = vcmask 1047556
    %v1479 = vsel %vm1478, %v1477, %v1475
    %1480 = vrot.lane.b32.xlu0 %v1479, 48
    %v1481 = vpop.permute.xlu0 %1480
    %vm1482 = vcmask 523648
    %s1483 = scalar_lea.vmem [#allocation0], 40
    %1484 = vst.msk [vmem:[%s1483] sm:$0xff] %vm1482, %v1481
    %s1485 = scalar_lea.vmem [#allocation1], 131
    %v1486 = vld [vmem:[%s1485] ss:$8 sm:$0xf]
    %s1487 = scalar_lea.vmem [#allocation1], 131
    %v1488 = vld [vmem:[%s1487] ss:$8 sm:$0xf0]
    %vm1489 = vcmask 1047556
    %v1490 = vsel %vm1489, %v1488, %v1486
    %1491 = vrot.lane.b32.xlu0 %v1490, 48
    %v1492 = vpop.permute.xlu0 %1491
    %vm1493 = vcmask 523648
    %s1494 = scalar_lea.vmem [#allocation0], 16
    %1495 = vst.msk [vmem:[%s1494] sm:$0xff] %vm1493, %v1492
    %s1496 = scalar_lea.vmem [#allocation1], 387
    %v1497 = vld [vmem:[%s1496] ss:$8 sm:$0xf]
    %s1498 = scalar_lea.vmem [#allocation1], 387
    %v1499 = vld [vmem:[%s1498] ss:$8 sm:$0xf0]
    %vm1500 = vcmask 1047556
    %v1501 = vsel %vm1500, %v1499, %v1497
    %1502 = vrot.lane.b32.xlu0 %v1501, 48
    %v1503 = vpop.permute.xlu0 %1502
    %vm1504 = vcmask 523648
    %s1505 = scalar_lea.vmem [#allocation0], 48
    %1506 = vst.msk [vmem:[%s1505] sm:$0xff] %vm1504, %v1503
    %s1507 = scalar_lea.vmem [#allocation1], 195
    %v1508 = vld [vmem:[%s1507] ss:$8 sm:$0xf]
    %s1509 = scalar_lea.vmem [#allocation1], 195
    %v1510 = vld [vmem:[%s1509] ss:$8 sm:$0xf0]
    %vm1511 = vcmask 1047556
    %v1512 = vsel %vm1511, %v1510, %v1508
    %1513 = vrot.lane.b32.xlu0 %v1512, 48
    %v1514 = vpop.permute.xlu0 %1513
    %vm1515 = vcmask 523648
    %s1516 = scalar_lea.vmem [#allocation0], 24
    %1517 = vst.msk [vmem:[%s1516] sm:$0xff] %vm1515, %v1514
    %s1518 = scalar_lea.vmem [#allocation1], 451
    %v1519 = vld [vmem:[%s1518] ss:$8 sm:$0xf]
    %s1520 = scalar_lea.vmem [#allocation1], 451
    %v1521 = vld [vmem:[%s1520] ss:$8 sm:$0xf0]
    %vm1522 = vcmask 1047556
    %v1523 = vsel %vm1522, %v1521, %v1519
    %1524 = vrot.lane.b32.xlu0 %v1523, 48
    %v1525 = vpop.permute.xlu0 %1524
    %vm1526 = vcmask 523648
    %s1527 = scalar_lea.vmem [#allocation0], 56
    %1528 = vst.msk [vmem:[%s1527] sm:$0xff] %vm1526, %v1525
    %s1529 = scalar_lea.vmem [#allocation1], 2
    %v1530 = vld [vmem:[%s1529] ss:$8 sm:$0xf]
    %s1531 = scalar_lea.vmem [#allocation1], 2
    %v1532 = vld [vmem:[%s1531] ss:$8 sm:$0xf0]
    %vm1533 = vcmask 1047556
    %v1534 = vsel %vm1533, %v1532, %v1530
    %1535 = vrot.lane.b32.xlu0 %v1534, 32
    %v1536 = vpop.permute.xlu0 %1535
    %vm1537 = vcmask 392448
    %1538 = vst.msk [vmem:[#allocation0] sm:$0xff] %vm1537, %v1536
    %s1539 = scalar_lea.vmem [#allocation1], 258
    %v1540 = vld [vmem:[%s1539] ss:$8 sm:$0xf]
    %s1541 = scalar_lea.vmem [#allocation1], 258
    %v1542 = vld [vmem:[%s1541] ss:$8 sm:$0xf0]
    %vm1543 = vcmask 1047556
    %v1544 = vsel %vm1543, %v1542, %v1540
    %1545 = vrot.lane.b32.xlu0 %v1544, 32
    %v1546 = vpop.permute.xlu0 %1545
    %vm1547 = vcmask 392448
    %s1548 = scalar_lea.vmem [#allocation0], 32
    %1549 = vst.msk [vmem:[%s1548] sm:$0xff] %vm1547, %v1546
    %s1550 = scalar_lea.vmem [#allocation1], 66
    %v1551 = vld [vmem:[%s1550] ss:$8 sm:$0xf]
    %s1552 = scalar_lea.vmem [#allocation1], 66
    %v1553 = vld [vmem:[%s1552] ss:$8 sm:$0xf0]
    %vm1554 = vcmask 1047556
    %v1555 = vsel %vm1554, %v1553, %v1551
    %1556 = vrot.lane.b32.xlu0 %v1555, 32
    %v1557 = vpop.permute.xlu0 %1556
    %vm1558 = vcmask 392448
    %s1559 = scalar_lea.vmem [#allocation0], 8
    %1560 = vst.msk [vmem:[%s1559] sm:$0xff] %vm1558, %v1557
    %s1561 = scalar_lea.vmem [#allocation1], 322
    %v1562 = vld [vmem:[%s1561] ss:$8 sm:$0xf]
    %s1563 = scalar_lea.vmem [#allocation1], 322
    %v1564 = vld [vmem:[%s1563] ss:$8 sm:$0xf0]
    %vm1565 = vcmask 1047556
    %v1566 = vsel %vm1565, %v1564, %v1562
    %1567 = vrot.lane.b32.xlu0 %v1566, 32
    %v1568 = vpop.permute.xlu0 %1567
    %vm1569 = vcmask 392448
    %s1570 = scalar_lea.vmem [#allocation0], 40
    %1571 = vst.msk [vmem:[%s1570] sm:$0xff] %vm1569, %v1568
    %s1572 = scalar_lea.vmem [#allocation1], 130
    %v1573 = vld [vmem:[%s1572] ss:$8 sm:$0xf]
    %s1574 = scalar_lea.vmem [#allocation1], 130
    %v1575 = vld [vmem:[%s1574] ss:$8 sm:$0xf0]
    %vm1576 = vcmask 1047556
    %v1577 = vsel %vm1576, %v1575, %v1573
    %1578 = vrot.lane.b32.xlu0 %v1577, 32
    %v1579 = vpop.permute.xlu0 %1578
    %vm1580 = vcmask 392448
    %s1581 = scalar_lea.vmem [#allocation0], 16
    %1582 = vst.msk [vmem:[%s1581] sm:$0xff] %vm1580, %v1579
    %s1583 = scalar_lea.vmem [#allocation1], 386
    %v1584 = vld [vmem:[%s1583] ss:$8 sm:$0xf]
    %s1585 = scalar_lea.vmem [#allocation1], 386
    %v1586 = vld [vmem:[%s1585] ss:$8 sm:$0xf0]
    %vm1587 = vcmask 1047556
    %v1588 = vsel %vm1587, %v1586, %v1584
    %1589 = vrot.lane.b32.xlu0 %v1588, 32
    %v1590 = vpop.permute.xlu0 %1589
    %vm1591 = vcmask 392448
    %s1592 = scalar_lea.vmem [#allocation0], 48
    %1593 = vst.msk [vmem:[%s1592] sm:$0xff] %vm1591, %v1590
    %s1594 = scalar_lea.vmem [#allocation1], 194
    %v1595 = vld [vmem:[%s1594] ss:$8 sm:$0xf]
    %s1596 = scalar_lea.vmem [#allocation1], 194
    %v1597 = vld [vmem:[%s1596] ss:$8 sm:$0xf0]
    %vm1598 = vcmask 1047556
    %v1599 = vsel %vm1598, %v1597, %v1595
    %1600 = vrot.lane.b32.xlu0 %v1599, 32
    %v1601 = vpop.permute.xlu0 %1600
    %vm1602 = vcmask 392448
    %s1603 = scalar_lea.vmem [#allocation0], 24
    %1604 = vst.msk [vmem:[%s1603] sm:$0xff] %vm1602, %v1601
    %s1605 = scalar_lea.vmem [#allocation1], 450
    %v1606 = vld [vmem:[%s1605] ss:$8 sm:$0xf]
    %s1607 = scalar_lea.vmem [#allocation1], 450
    %v1608 = vld [vmem:[%s1607] ss:$8 sm:$0xf0]
    %vm1609 = vcmask 1047556
    %v1610 = vsel %vm1609, %v1608, %v1606
    %1611 = vrot.lane.b32.xlu0 %v1610, 32
    %v1612 = vpop.permute.xlu0 %1611
    %vm1613 = vcmask 392448
    %s1614 = scalar_lea.vmem [#allocation0], 56
    %1615 = vst.msk [vmem:[%s1614] sm:$0xff] %vm1613, %v1612
    %s1616 = scalar_lea.vmem [#allocation1], 1
    %v1617 = vld [vmem:[%s1616] ss:$8 sm:$0xf]
    %s1618 = scalar_lea.vmem [#allocation1], 1
    %v1619 = vld [vmem:[%s1618] ss:$8 sm:$0xf0]
    %vm1620 = vcmask 1047556
    %v1621 = vsel %vm1620, %v1619, %v1617
    %1622 = vrot.lane.b32.xlu0 %v1621, 16
    %v1623 = vpop.permute.xlu0 %1622
    %vm1624 = vcmask 261248
    %1625 = vst.msk [vmem:[#allocation0] sm:$0xff] %vm1624, %v1623
    %s1626 = scalar_lea.vmem [#allocation1], 257
    %v1627 = vld [vmem:[%s1626] ss:$8 sm:$0xf]
    %s1628 = scalar_lea.vmem [#allocation1], 257
    %v1629 = vld [vmem:[%s1628] ss:$8 sm:$0xf0]
    %vm1630 = vcmask 1047556
    %v1631 = vsel %vm1630, %v1629, %v1627
    %1632 = vrot.lane.b32.xlu0 %v1631, 16
    %v1633 = vpop.permute.xlu0 %1632
    %vm1634 = vcmask 261248
    %s1635 = scalar_lea.vmem [#allocation0], 32
    %1636 = vst.msk [vmem:[%s1635] sm:$0xff] %vm1634, %v1633
    %s1637 = scalar_lea.vmem [#allocation1], 65
    %v1638 = vld [vmem:[%s1637] ss:$8 sm:$0xf]
    %s1639 = scalar_lea.vmem [#allocation1], 65
    %v1640 = vld [vmem:[%s1639] ss:$8 sm:$0xf0]
    %vm1641 = vcmask 1047556
    %v1642 = vsel %vm1641, %v1640, %v1638
    %1643 = vrot.lane.b32.xlu0 %v1642, 16
    %v1644 = vpop.permute.xlu0 %1643
    %vm1645 = vcmask 261248
    %s1646 = scalar_lea.vmem [#allocation0], 8
    %1647 = vst.msk [vmem:[%s1646] sm:$0xff] %vm1645, %v1644
    %s1648 = scalar_lea.vmem [#allocation1], 321
    %v1649 = vld [vmem:[%s1648] ss:$8 sm:$0xf]
    %s1650 = scalar_lea.vmem [#allocation1], 321
    %v1651 = vld [vmem:[%s1650] ss:$8 sm:$0xf0]
    %vm1652 = vcmask 1047556
    %v1653 = vsel %vm1652, %v1651, %v1649
    %1654 = vrot.lane.b32.xlu0 %v1653, 16
    %v1655 = vpop.permute.xlu0 %1654
    %vm1656 = vcmask 261248
    %s1657 = scalar_lea.vmem [#allocation0], 40
    %1658 = vst.msk [vmem:[%s1657] sm:$0xff] %vm1656, %v1655
    %s1659 = scalar_lea.vmem [#allocation1], 129
    %v1660 = vld [vmem:[%s1659] ss:$8 sm:$0xf]
    %s1661 = scalar_lea.vmem [#allocation1], 129
    %v1662 = vld [vmem:[%s1661] ss:$8 sm:$0xf0]
    %vm1663 = vcmask 1047556
    %v1664 = vsel %vm1663, %v1662, %v1660
    %1665 = vrot.lane.b32.xlu0 %v1664, 16
    %v1666 = vpop.permute.xlu0 %1665
    %vm1667 = vcmask 261248
    %s1668 = scalar_lea.vmem [#allocation0], 16
    %1669 = vst.msk [vmem:[%s1668] sm:$0xff] %vm1667, %v1666
    %s1670 = scalar_lea.vmem [#allocation1], 385
    %v1671 = vld [vmem:[%s1670] ss:$8 sm:$0xf]
    %s1672 = scalar_lea.vmem [#allocation1], 385
    %v1673 = vld [vmem:[%s1672] ss:$8 sm:$0xf0]
    %vm1674 = vcmask 1047556
    %v1675 = vsel %vm1674, %v1673, %v1671
    %1676 = vrot.lane.b32.xlu0 %v1675, 16
    %v1677 = vpop.permute.xlu0 %1676
    %vm1678 = vcmask 261248
    %s1679 = scalar_lea.vmem [#allocation0], 48
    %1680 = vst.msk [vmem:[%s1679] sm:$0xff] %vm1678, %v1677
    %s1681 = scalar_lea.vmem [#allocation1], 193
    %v1682 = vld [vmem:[%s1681] ss:$8 sm:$0xf]
    %s1683 = scalar_lea.vmem [#allocation1], 193
    %v1684 = vld [vmem:[%s1683] ss:$8 sm:$0xf0]
    %vm1685 = vcmask 1047556
    %v1686 = vsel %vm1685, %v1684, %v1682
    %1687 = vrot.lane.b32.xlu0 %v1686, 16
    %v1688 = vpop.permute.xlu0 %1687
    %vm1689 = vcmask 261248
    %s1690 = scalar_lea.vmem [#allocation0], 24
    %1691 = vst.msk [vmem:[%s1690] sm:$0xff] %vm1689, %v1688
    %s1692 = scalar_lea.vmem [#allocation1], 449
    %v1693 = vld [vmem:[%s1692] ss:$8 sm:$0xf]
    %s1694 = scalar_lea.vmem [#allocation1], 449
    %v1695 = vld [vmem:[%s1694] ss:$8 sm:$0xf0]
    %vm1696 = vcmask 1047556
    %v1697 = vsel %vm1696, %v1695, %v1693
    %1698 = vrot.lane.b32.xlu0 %v1697, 16
    %v1699 = vpop.permute.xlu0 %1698
    %vm1700 = vcmask 261248
    %s1701 = scalar_lea.vmem [#allocation0], 56
    %1702 = vst.msk [vmem:[%s1701] sm:$0xff] %vm1700, %v1699
    %s1704 = smul.u32 4, 2
    %s1705 = sshllo.u32 0, %s1704
    %s1706 = sshrl.u32 %s1704, 1
    %v1707 = vld [vmem:[#allocation0] sm:%s1705]
    %v1708 = vpack.c.bf16 0.0, %v1707
    %s1709 = sshllo.u32 0, %s1706
    %1710 = vst [vmem:[%s1] sm:%s1709] %v1708
    %s1711 = scalar_lea.vmem [#allocation0], 8
    %v1712 = vld [vmem:[%s1711] sm:%s1705]
    %v1713 = vpack.c.bf16 0.0, %v1712
    %s1714 = sshllo.u32 0, %s1706
    %s1715 = scalar_lea.vmem %s1, 4
    %1716 = vst [vmem:[%s1715] sm:%s1714] %v1713
    %s1717 = scalar_lea.vmem [#allocation0], 16
    %v1718 = vld [vmem:[%s1717] sm:%s1705]
    %v1719 = vpack.c.bf16 0.0, %v1718
    %s1720 = sshllo.u32 0, %s1706
    %s1721 = smul.addr 4, 2
    %s1722 = scalar_lea.vmem %s1, %s1721
    %1723 = vst [vmem:[%s1722] sm:%s1720] %v1719
    %s1724 = scalar_lea.vmem [#allocation0], 24
    %v1725 = vld [vmem:[%s1724] sm:%s1705]
    %v1726 = vpack.c.bf16 0.0, %v1725
    %s1727 = sshllo.u32 0, %s1706
    %s1728 = smul.addr 4, 3
    %s1729 = scalar_lea.vmem %s1, %s1728
    %1730 = vst [vmem:[%s1729] sm:%s1727] %v1726
    %s1731 = scalar_lea.vmem [#allocation0], 32
    %v1732 = vld [vmem:[%s1731] sm:%s1705]
    %v1733 = vpack.c.bf16 0.0, %v1732
    %s1734 = sshllo.u32 0, %s1706
    %s1735 = smul.addr 4, 4
    %s1736 = scalar_lea.vmem %s1, %s1735
    %1737 = vst [vmem:[%s1736] sm:%s1734] %v1733
    %s1738 = scalar_lea.vmem [#allocation0], 40
    %v1739 = vld [vmem:[%s1738] sm:%s1705]
    %v1740 = vpack.c.bf16 0.0, %v1739
    %s1741 = sshllo.u32 0, %s1706
    %s1742 = smul.addr 4, 5
    %s1743 = scalar_lea.vmem %s1, %s1742
    %1744 = vst [vmem:[%s1743] sm:%s1741] %v1740
    %s1745 = scalar_lea.vmem [#allocation0], 48
    %v1746 = vld [vmem:[%s1745] sm:%s1705]
    %v1747 = vpack.c.bf16 0.0, %v1746
    %s1748 = sshllo.u32 0, %s1706
    %s1749 = smul.addr 4, 6
    %s1750 = scalar_lea.vmem %s1, %s1749
    %1751 = vst [vmem:[%s1750] sm:%s1748] %v1747
    %s1752 = scalar_lea.vmem [#allocation0], 56
    %v1753 = vld [vmem:[%s1752] sm:%s1705]
    %v1754 = vpack.c.bf16 0.0, %v1753
    %s1755 = sshllo.u32 0, %s1706
    %s1756 = smul.addr 4, 7
    %s1757 = scalar_lea.vmem %s1, %s1756
    %1758 = vst [vmem:[%s1757] sm:%s1755] %v1754

// kernel: squeeze.21
$region0: #{squeeze.21}
  %s0 = inlined_call_operand.vmem [shape: bf16[1,2,16,16,32], index: 0, kind: input, shape index: {}]
  %s1 = inlined_call_operand.vmem [shape: bf16[2,1,64,128], index: 1, kind: output, shape index: {}]
  $region1: #{squeeze.21} parent=0
    #allocation0 [shape = 'u8[65536]{0}', space=vmem, size = 0x10000, scoped, tag = 'scoped mem for output reshape']
    #allocation1 [shape = 'u8[262144]{0}', space=vmem, size = 0x40000, scoped, tag = 'scoped mem for input reshape']
    %s3 = smul.u32 4, 2
    %s4 = sshllo.u32 0, %s3
    %s5 = smul.addr 4, 63
    %s6 = scalar_lea.vmem %s0, %s5
    %s7 = sshrl.u32 %s4, 1
    %s8 = sor.u32 %s4, %s7
    %s9 = sand.u32 %s8, 85
    %s10 = sshrl.u32 %s9, 1
    %s11 = sor.u32 %s9, %s10
    %s12 = sand.u32 51, %s11
    %s13 = sshrl.u32 %s12, 2
    %s14 = sor.u32 %s12, %s13
    %s15 = sand.u32 15, %s14
    %v16 = vld [vmem:[%s6] sm:%s15]
    %v17 = vunpack.c.l.bf16 %v16
    %v18 = vunpack.c.h.bf16 %v16
    %s19 = scalar_lea.vmem [#allocation1], 504
    %20 = vst [vmem:[%s19] sm:%s4] %v17
    %s21 = smul.addr 4, 62
    %s22 = scalar_lea.vmem %s0, %s21
    %s23 = sshrl.u32 %s4, 1
    %s24 = sor.u32 %s4, %s23
    %s25 = sand.u32 %s24, 85
    %s26 = sshrl.u32 %s25, 1
    %s27 = sor.u32 %s25, %s26
    %s28 = sand.u32 51, %s27
    %s29 = sshrl.u32 %s28, 2
    %s30 = sor.u32 %s28, %s29
    %s31 = sand.u32 15, %s30
    %v32 = vld [vmem:[%s22] sm:%s31]
    %v33 = vunpack.c.l.bf16 %v32
    %v34 = vunpack.c.h.bf16 %v32
    %s35 = scalar_lea.vmem [#allocation1], 496
    %36 = vst [vmem:[%s35] sm:%s4] %v33
    %s37 = smul.addr 4, 61
    %s38 = scalar_lea.vmem %s0, %s37
    %s39 = sshrl.u32 %s4, 1
    %s40 = sor.u32 %s4, %s39
    %s41 = sand.u32 %s40, 85
    %s42 = sshrl.u32 %s41, 1
    %s43 = sor.u32 %s41, %s42
    %s44 = sand.u32 51, %s43
    %s45 = sshrl.u32 %s44, 2
    %s46 = sor.u32 %s44, %s45
    %s47 = sand.u32 15, %s46
    %v48 = vld [vmem:[%s38] sm:%s47]
    %v49 = vunpack.c.l.bf16 %v48
    %v50 = vunpack.c.h.bf16 %v48
    %s51 = scalar_lea.vmem [#allocation1], 488
    %52 = vst [vmem:[%s51] sm:%s4] %v49
    %s53 = smul.addr 4, 60
    %s54 = scalar_lea.vmem %s0, %s53
    %s55 = sshrl.u32 %s4, 1
    %s56 = sor.u32 %s4, %s55
    %s57 = sand.u32 %s56, 85
    %s58 = sshrl.u32 %s57, 1
    %s59 = sor.u32 %s57, %s58
    %s60 = sand.u32 51, %s59
    %s61 = sshrl.u32 %s60, 2
    %s62 = sor.u32 %s60, %s61
    %s63 = sand.u32 15, %s62
    %v64 = vld [vmem:[%s54] sm:%s63]
    %v65 = vunpack.c.l.bf16 %v64
    %v66 = vunpack.c.h.bf16 %v64
    %s67 = scalar_lea.vmem [#allocation1], 480
    %68 = vst [vmem:[%s67] sm:%s4] %v65
    %s69 = smul.addr 4, 59
    %s70 = scalar_lea.vmem %s0, %s69
    %s71 = sshrl.u32 %s4, 1
    %s72 = sor.u32 %s4, %s71
    %s73 = sand.u32 %s72, 85
    %s74 = sshrl.u32 %s73, 1
    %s75 = sor.u32 %s73, %s74
    %s76 = sand.u32 51, %s75
    %s77 = sshrl.u32 %s76, 2
    %s78 = sor.u32 %s76, %s77
    %s79 = sand.u32 15, %s78
    %v80 = vld [vmem:[%s70] sm:%s79]
    %v81 = vunpack.c.l.bf16 %v80
    %v82 = vunpack.c.h.bf16 %v80
    %s83 = scalar_lea.vmem [#allocation1], 472
    %84 = vst [vmem:[%s83] sm:%s4] %v81
    %s85 = smul.addr 4, 58
    %s86 = scalar_lea.vmem %s0, %s85
    %s87 = sshrl.u32 %s4, 1
    %s88 = sor.u32 %s4, %s87
    %s89 = sand.u32 %s88, 85
    %s90 = sshrl.u32 %s89, 1
    %s91 = sor.u32 %s89, %s90
    %s92 = sand.u32 51, %s91
    %s93 = sshrl.u32 %s92, 2
    %s94 = sor.u32 %s92, %s93
    %s95 = sand.u32 15, %s94
    %v96 = vld [vmem:[%s86] sm:%s95]
    %v97 = vunpack.c.l.bf16 %v96
    %v98 = vunpack.c.h.bf16 %v96
    %s99 = scalar_lea.vmem [#allocation1], 464
    %100 = vst [vmem:[%s99] sm:%s4] %v97
    %s101 = smul.addr 4, 57
    %s102 = scalar_lea.vmem %s0, %s101
    %s103 = sshrl.u32 %s4, 1
    %s104 = sor.u32 %s4, %s103
    %s105 = sand.u32 %s104, 85
    %s106 = sshrl.u32 %s105, 1
    %s107 = sor.u32 %s105, %s106
    %s108 = sand.u32 51, %s107
    %s109 = sshrl.u32 %s108, 2
    %s110 = sor.u32 %s108, %s109
    %s111 = sand.u32 15, %s110
    %v112 = vld [vmem:[%s102] sm:%s111]
    %v113 = vunpack.c.l.bf16 %v112
    %v114 = vunpack.c.h.bf16 %v112
    %s115 = scalar_lea.vmem [#allocation1], 456
    %116 = vst [vmem:[%s115] sm:%s4] %v113
    %s117 = smul.addr 4, 56
    %s118 = scalar_lea.vmem %s0, %s117
    %s119 = sshrl.u32 %s4, 1
    %s120 = sor.u32 %s4, %s119
    %s121 = sand.u32 %s120, 85
    %s122 = sshrl.u32 %s121, 1
    %s123 = sor.u32 %s121, %s122
    %s124 = sand.u32 51, %s123
    %s125 = sshrl.u32 %s124, 2
    %s126 = sor.u32 %s124, %s125
    %s127 = sand.u32 15, %s126
    %v128 = vld [vmem:[%s118] sm:%s127]
    %v129 = vunpack.c.l.bf16 %v128
    %v130 = vunpack.c.h.bf16 %v128
    %s131 = scalar_lea.vmem [#allocation1], 448
    %132 = vst [vmem:[%s131] sm:%s4] %v129
    %s133 = smul.addr 4, 55
    %s134 = scalar_lea.vmem %s0, %s133
    %s135 = sshrl.u32 %s4, 1
    %s136 = sor.u32 %s4, %s135
    %s137 = sand.u32 %s136, 85
    %s138 = sshrl.u32 %s137, 1
    %s139 = sor.u32 %s137, %s138
    %s140 = sand.u32 51, %s139
    %s141 = sshrl.u32 %s140, 2
    %s142 = sor.u32 %s140, %s141
    %s143 = sand.u32 15, %s142
    %v144 = vld [vmem:[%s134] sm:%s143]
    %v145 = vunpack.c.l.bf16 %v144
    %v146 = vunpack.c.h.bf16 %v144
    %s147 = scalar_lea.vmem [#allocation1], 440
    %148 = vst [vmem:[%s147] sm:%s4] %v145
    %s149 = smul.addr 4, 54
    %s150 = scalar_lea.vmem %s0, %s149
    %s151 = sshrl.u32 %s4, 1
    %s152 = sor.u32 %s4, %s151
    %s153 = sand.u32 %s152, 85
    %s154 = sshrl.u32 %s153, 1
    %s155 = sor.u32 %s153, %s154
    %s156 = sand.u32 51, %s155
    %s157 = sshrl.u32 %s156, 2
    %s158 = sor.u32 %s156, %s157
    %s159 = sand.u32 15, %s158
    %v160 = vld [vmem:[%s150] sm:%s159]
    %v161 = vunpack.c.l.bf16 %v160
    %v162 = vunpack.c.h.bf16 %v160
    %s163 = scalar_lea.vmem [#allocation1], 432
    %164 = vst [vmem:[%s163] sm:%s4] %v161
    %s165 = smul.addr 4, 53
    %s166 = scalar_lea.vmem %s0, %s165
    %s167 = sshrl.u32 %s4, 1
    %s168 = sor.u32 %s4, %s167
    %s169 = sand.u32 %s168, 85
    %s170 = sshrl.u32 %s169, 1
    %s171 = sor.u32 %s169, %s170
    %s172 = sand.u32 51, %s171
    %s173 = sshrl.u32 %s172, 2
    %s174 = sor.u32 %s172, %s173
    %s175 = sand.u32 15, %s174
    %v176 = vld [vmem:[%s166] sm:%s175]
    %v177 = vunpack.c.l.bf16 %v176
    %v178 = vunpack.c.h.bf16 %v176
    %s179 = scalar_lea.vmem [#allocation1], 424
    %180 = vst [vmem:[%s179] sm:%s4] %v177
    %s181 = smul.addr 4, 52
    %s182 = scalar_lea.vmem %s0, %s181
    %s183 = sshrl.u32 %s4, 1
    %s184 = sor.u32 %s4, %s183
    %s185 = sand.u32 %s184, 85
    %s186 = sshrl.u32 %s185, 1
    %s187 = sor.u32 %s185, %s186
    %s188 = sand.u32 51, %s187
    %s189 = sshrl.u32 %s188, 2
    %s190 = sor.u32 %s188, %s189
    %s191 = sand.u32 15, %s190
    %v192 = vld [vmem:[%s182] sm:%s191]
    %v193 = vunpack.c.l.bf16 %v192
    %v194 = vunpack.c.h.bf16 %v192
    %s195 = scalar_lea.vmem [#allocation1], 416
    %196 = vst [vmem:[%s195] sm:%s4] %v193
    %s197 = smul.addr 4, 51
    %s198 = scalar_lea.vmem %s0, %s197
    %s199 = sshrl.u32 %s4, 1
    %s200 = sor.u32 %s4, %s199
    %s201 = sand.u32 %s200, 85
    %s202 = sshrl.u32 %s201, 1
    %s203 = sor.u32 %s201, %s202
    %s204 = sand.u32 51, %s203
    %s205 = sshrl.u32 %s204, 2
    %s206 = sor.u32 %s204, %s205
    %s207 = sand.u32 15, %s206
    %v208 = vld [vmem:[%s198] sm:%s207]
    %v209 = vunpack.c.l.bf16 %v208
    %v210 = vunpack.c.h.bf16 %v208
    %s211 = scalar_lea.vmem [#allocation1], 408
    %212 = vst [vmem:[%s211] sm:%s4] %v209
    %s213 = smul.addr 4, 50
    %s214 = scalar_lea.vmem %s0, %s213
    %s215 = sshrl.u32 %s4, 1
    %s216 = sor.u32 %s4, %s215
    %s217 = sand.u32 %s216, 85
    %s218 = sshrl.u32 %s217, 1
    %s219 = sor.u32 %s217, %s218
    %s220 = sand.u32 51, %s219
    %s221 = sshrl.u32 %s220, 2
    %s222 = sor.u32 %s220, %s221
    %s223 = sand.u32 15, %s222
    %v224 = vld [vmem:[%s214] sm:%s223]
    %v225 = vunpack.c.l.bf16 %v224
    %v226 = vunpack.c.h.bf16 %v224
    %s227 = scalar_lea.vmem [#allocation1], 400
    %228 = vst [vmem:[%s227] sm:%s4] %v225
    %s229 = smul.addr 4, 49
    %s230 = scalar_lea.vmem %s0, %s229
    %s231 = sshrl.u32 %s4, 1
    %s232 = sor.u32 %s4, %s231
    %s233 = sand.u32 %s232, 85
    %s234 = sshrl.u32 %s233, 1
    %s235 = sor.u32 %s233, %s234
    %s236 = sand.u32 51, %s235
    %s237 = sshrl.u32 %s236, 2
    %s238 = sor.u32 %s236, %s237
    %s239 = sand.u32 15, %s238
    %v240 = vld [vmem:[%s230] sm:%s239]
    %v241 = vunpack.c.l.bf16 %v240
    %v242 = vunpack.c.h.bf16 %v240
    %s243 = scalar_lea.vmem [#allocation1], 392
    %244 = vst [vmem:[%s243] sm:%s4] %v241
    %s245 = smul.addr 4, 48
    %s246 = scalar_lea.vmem %s0, %s245
    %s247 = sshrl.u32 %s4, 1
    %s248 = sor.u32 %s4, %s247
    %s249 = sand.u32 %s248, 85
    %s250 = sshrl.u32 %s249, 1
    %s251 = sor.u32 %s249, %s250
    %s252 = sand.u32 51, %s251
    %s253 = sshrl.u32 %s252, 2
    %s254 = sor.u32 %s252, %s253
    %s255 = sand.u32 15, %s254
    %v256 = vld [vmem:[%s246] sm:%s255]
    %v257 = vunpack.c.l.bf16 %v256
    %v258 = vunpack.c.h.bf16 %v256
    %s259 = scalar_lea.vmem [#allocation1], 384
    %260 = vst [vmem:[%s259] sm:%s4] %v257
    %s261 = smul.addr 4, 47
    %s262 = scalar_lea.vmem %s0, %s261
    %s263 = sshrl.u32 %s4, 1
    %s264 = sor.u32 %s4, %s263
    %s265 = sand.u32 %s264, 85
    %s266 = sshrl.u32 %s265, 1
    %s267 = sor.u32 %s265, %s266
    %s268 = sand.u32 51, %s267
    %s269 = sshrl.u32 %s268, 2
    %s270 = sor.u32 %s268, %s269
    %s271 = sand.u32 15, %s270
    %v272 = vld [vmem:[%s262] sm:%s271]
    %v273 = vunpack.c.l.bf16 %v272
    %v274 = vunpack.c.h.bf16 %v272
    %s275 = scalar_lea.vmem [#allocation1], 376
    %276 = vst [vmem:[%s275] sm:%s4] %v273
    %s277 = smul.addr 4, 46
    %s278 = scalar_lea.vmem %s0, %s277
    %s279 = sshrl.u32 %s4, 1
    %s280 = sor.u32 %s4, %s279
    %s281 = sand.u32 %s280, 85
    %s282 = sshrl.u32 %s281, 1
    %s283 = sor.u32 %s281, %s282
    %s284 = sand.u32 51, %s283
    %s285 = sshrl.u32 %s284, 2
    %s286 = sor.u32 %s284, %s285
    %s287 = sand.u32 15, %s286
    %v288 = vld [vmem:[%s278] sm:%s287]
    %v289 = vunpack.c.l.bf16 %v288
    %v290 = vunpack.c.h.bf16 %v288
    %s291 = scalar_lea.vmem [#allocation1], 368
    %292 = vst [vmem:[%s291] sm:%s4] %v289
    %s293 = smul.addr 4, 45
    %s294 = scalar_lea.vmem %s0, %s293
    %s295 = sshrl.u32 %s4, 1
    %s296 = sor.u32 %s4, %s295
    %s297 = sand.u32 %s296, 85
    %s298 = sshrl.u32 %s297, 1
    %s299 = sor.u32 %s297, %s298
    %s300 = sand.u32 51, %s299
    %s301 = sshrl.u32 %s300, 2
    %s302 = sor.u32 %s300, %s301
    %s303 = sand.u32 15, %s302
    %v304 = vld [vmem:[%s294] sm:%s303]
    %v305 = vunpack.c.l.bf16 %v304
    %v306 = vunpack.c.h.bf16 %v304
    %s307 = scalar_lea.vmem [#allocation1], 360
    %308 = vst [vmem:[%s307] sm:%s4] %v305
    %s309 = smul.addr 4, 44
    %s310 = scalar_lea.vmem %s0, %s309
    %s311 = sshrl.u32 %s4, 1
    %s312 = sor.u32 %s4, %s311
    %s313 = sand.u32 %s312, 85
    %s314 = sshrl.u32 %s313, 1
    %s315 = sor.u32 %s313, %s314
    %s316 = sand.u32 51, %s315
    %s317 = sshrl.u32 %s316, 2
    %s318 = sor.u32 %s316, %s317
    %s319 = sand.u32 15, %s318
    %v320 = vld [vmem:[%s310] sm:%s319]
    %v321 = vunpack.c.l.bf16 %v320
    %v322 = vunpack.c.h.bf16 %v320
    %s323 = scalar_lea.vmem [#allocation1], 352
    %324 = vst [vmem:[%s323] sm:%s4] %v321
    %s325 = smul.addr 4, 43
    %s326 = scalar_lea.vmem %s0, %s325
    %s327 = sshrl.u32 %s4, 1
    %s328 = sor.u32 %s4, %s327
    %s329 = sand.u32 %s328, 85
    %s330 = sshrl.u32 %s329, 1
    %s331 = sor.u32 %s329, %s330
    %s332 = sand.u32 51, %s331
    %s333 = sshrl.u32 %s332, 2
    %s334 = sor.u32 %s332, %s333
    %s335 = sand.u32 15, %s334
    %v336 = vld [vmem:[%s326] sm:%s335]
    %v337 = vunpack.c.l.bf16 %v336
    %v338 = vunpack.c.h.bf16 %v336
    %s339 = scalar_lea.vmem [#allocation1], 344
    %340 = vst [vmem:[%s339] sm:%s4] %v337
    %s341 = smul.addr 4, 42
    %s342 = scalar_lea.vmem %s0, %s341
    %s343 = sshrl.u32 %s4, 1
    %s344 = sor.u32 %s4, %s343
    %s345 = sand.u32 %s344, 85
    %s346 = sshrl.u32 %s345, 1
    %s347 = sor.u32 %s345, %s346
    %s348 = sand.u32 51, %s347
    %s349 = sshrl.u32 %s348, 2
    %s350 = sor.u32 %s348, %s349
    %s351 = sand.u32 15, %s350
    %v352 = vld [vmem:[%s342] sm:%s351]
    %v353 = vunpack.c.l.bf16 %v352
    %v354 = vunpack.c.h.bf16 %v352
    %s355 = scalar_lea.vmem [#allocation1], 336
    %356 = vst [vmem:[%s355] sm:%s4] %v353
    %s357 = smul.addr 4, 41
    %s358 = scalar_lea.vmem %s0, %s357
    %s359 = sshrl.u32 %s4, 1
    %s360 = sor.u32 %s4, %s359
    %s361 = sand.u32 %s360, 85
    %s362 = sshrl.u32 %s361, 1
    %s363 = sor.u32 %s361, %s362
    %s364 = sand.u32 51, %s363
    %s365 = sshrl.u32 %s364, 2
    %s366 = sor.u32 %s364, %s365
    %s367 = sand.u32 15, %s366
    %v368 = vld [vmem:[%s358] sm:%s367]
    %v369 = vunpack.c.l.bf16 %v368
    %v370 = vunpack.c.h.bf16 %v368
    %s371 = scalar_lea.vmem [#allocation1], 328
    %372 = vst [vmem:[%s371] sm:%s4] %v369
    %s373 = smul.addr 4, 40
    %s374 = scalar_lea.vmem %s0, %s373
    %s375 = sshrl.u32 %s4, 1
    %s376 = sor.u32 %s4, %s375
    %s377 = sand.u32 %s376, 85
    %s378 = sshrl.u32 %s377, 1
    %s379 = sor.u32 %s377, %s378
    %s380 = sand.u32 51, %s379
    %s381 = sshrl.u32 %s380, 2
    %s382 = sor.u32 %s380, %s381
    %s383 = sand.u32 15, %s382
    %v384 = vld [vmem:[%s374] sm:%s383]
    %v385 = vunpack.c.l.bf16 %v384
    %v386 = vunpack.c.h.bf16 %v384
    %s387 = scalar_lea.vmem [#allocation1], 320
    %388 = vst [vmem:[%s387] sm:%s4] %v385
    %s389 = smul.addr 4, 39
    %s390 = scalar_lea.vmem %s0, %s389
    %s391 = sshrl.u32 %s4, 1
    %s392 = sor.u32 %s4, %s391
    %s393 = sand.u32 %s392, 85
    %s394 = sshrl.u32 %s393, 1
    %s395 = sor.u32 %s393, %s394
    %s396 = sand.u32 51, %s395
    %s397 = sshrl.u32 %s396, 2
    %s398 = sor.u32 %s396, %s397
    %s399 = sand.u32 15, %s398
    %v400 = vld [vmem:[%s390] sm:%s399]
    %v401 = vunpack.c.l.bf16 %v400
    %v402 = vunpack.c.h.bf16 %v400
    %s403 = scalar_lea.vmem [#allocation1], 312
    %404 = vst [vmem:[%s403] sm:%s4] %v401
    %s405 = smul.addr 4, 38
    %s406 = scalar_lea.vmem %s0, %s405
    %s407 = sshrl.u32 %s4, 1
    %s408 = sor.u32 %s4, %s407
    %s409 = sand.u32 %s408, 85
    %s410 = sshrl.u32 %s409, 1
    %s411 = sor.u32 %s409, %s410
    %s412 = sand.u32 51, %s411
    %s413 = sshrl.u32 %s412, 2
    %s414 = sor.u32 %s412, %s413
    %s415 = sand.u32 15, %s414
    %v416 = vld [vmem:[%s406] sm:%s415]
    %v417 = vunpack.c.l.bf16 %v416
    %v418 = vunpack.c.h.bf16 %v416
    %s419 = scalar_lea.vmem [#allocation1], 304
    %420 = vst [vmem:[%s419] sm:%s4] %v417
    %s421 = smul.addr 4, 37
    %s422 = scalar_lea.vmem %s0, %s421
    %s423 = sshrl.u32 %s4, 1
    %s424 = sor.u32 %s4, %s423
    %s425 = sand.u32 %s424, 85
    %s426 = sshrl.u32 %s425, 1
    %s427 = sor.u32 %s425, %s426
    %s428 = sand.u32 51, %s427
    %s429 = sshrl.u32 %s428, 2
    %s430 = sor.u32 %s428, %s429
    %s431 = sand.u32 15, %s430
    %v432 = vld [vmem:[%s422] sm:%s431]
    %v433 = vunpack.c.l.bf16 %v432
    %v434 = vunpack.c.h.bf16 %v432
    %s435 = scalar_lea.vmem [#allocation1], 296
    %436 = vst [vmem:[%s435] sm:%s4] %v433
    %s437 = smul.addr 4, 36
    %s438 = scalar_lea.vmem %s0, %s437
    %s439 = sshrl.u32 %s4, 1
    %s440 = sor.u32 %s4, %s439
    %s441 = sand.u32 %s440, 85
    %s442 = sshrl.u32 %s441, 1
    %s443 = sor.u32 %s441, %s442
    %s444 = sand.u32 51, %s443
    %s445 = sshrl.u32 %s444, 2
    %s446 = sor.u32 %s444, %s445
    %s447 = sand.u32 15, %s446
    %v448 = vld [vmem:[%s438] sm:%s447]
    %v449 = vunpack.c.l.bf16 %v448
    %v450 = vunpack.c.h.bf16 %v448
    %s451 = scalar_lea.vmem [#allocation1], 288
    %452 = vst [vmem:[%s451] sm:%s4] %v449
    %s453 = smul.addr 4, 35
    %s454 = scalar_lea.vmem %s0, %s453
    %s455 = sshrl.u32 %s4, 1
    %s456 = sor.u32 %s4, %s455
    %s457 = sand.u32 %s456, 85
    %s458 = sshrl.u32 %s457, 1
    %s459 = sor.u32 %s457, %s458
    %s460 = sand.u32 51, %s459
    %s461 = sshrl.u32 %s460, 2
    %s462 = sor.u32 %s460, %s461
    %s463 = sand.u32 15, %s462
    %v464 = vld [vmem:[%s454] sm:%s463]
    %v465 = vunpack.c.l.bf16 %v464
    %v466 = vunpack.c.h.bf16 %v464
    %s467 = scalar_lea.vmem [#allocation1], 280
    %468 = vst [vmem:[%s467] sm:%s4] %v465
    %s469 = smul.addr 4, 34
    %s470 = scalar_lea.vmem %s0, %s469
    %s471 = sshrl.u32 %s4, 1
    %s472 = sor.u32 %s4, %s471
    %s473 = sand.u32 %s472, 85
    %s474 = sshrl.u32 %s473, 1
    %s475 = sor.u32 %s473, %s474
    %s476 = sand.u32 51, %s475
    %s477 = sshrl.u32 %s476, 2
    %s478 = sor.u32 %s476, %s477
    %s479 = sand.u32 15, %s478
    %v480 = vld [vmem:[%s470] sm:%s479]
    %v481 = vunpack.c.l.bf16 %v480
    %v482 = vunpack.c.h.bf16 %v480
    %s483 = scalar_lea.vmem [#allocation1], 272
    %484 = vst [vmem:[%s483] sm:%s4] %v481
    %s485 = smul.addr 4, 33
    %s486 = scalar_lea.vmem %s0, %s485
    %s487 = sshrl.u32 %s4, 1
    %s488 = sor.u32 %s4, %s487
    %s489 = sand.u32 %s488, 85
    %s490 = sshrl.u32 %s489, 1
    %s491 = sor.u32 %s489, %s490
    %s492 = sand.u32 51, %s491
    %s493 = sshrl.u32 %s492, 2
    %s494 = sor.u32 %s492, %s493
    %s495 = sand.u32 15, %s494
    %v496 = vld [vmem:[%s486] sm:%s495]
    %v497 = vunpack.c.l.bf16 %v496
    %v498 = vunpack.c.h.bf16 %v496
    %s499 = scalar_lea.vmem [#allocation1], 264
    %500 = vst [vmem:[%s499] sm:%s4] %v497
    %s501 = smul.addr 4, 32
    %s502 = scalar_lea.vmem %s0, %s501
    %s503 = sshrl.u32 %s4, 1
    %s504 = sor.u32 %s4, %s503
    %s505 = sand.u32 %s504, 85
    %s506 = sshrl.u32 %s505, 1
    %s507 = sor.u32 %s505, %s506
    %s508 = sand.u32 51, %s507
    %s509 = sshrl.u32 %s508, 2
    %s510 = sor.u32 %s508, %s509
    %s511 = sand.u32 15, %s510
    %v512 = vld [vmem:[%s502] sm:%s511]
    %v513 = vunpack.c.l.bf16 %v512
    %v514 = vunpack.c.h.bf16 %v512
    %s515 = scalar_lea.vmem [#allocation1], 256
    %516 = vst [vmem:[%s515] sm:%s4] %v513
    %s517 = smul.addr 4, 31
    %s518 = scalar_lea.vmem %s0, %s517
    %s519 = sshrl.u32 %s4, 1
    %s520 = sor.u32 %s4, %s519
    %s521 = sand.u32 %s520, 85
    %s522 = sshrl.u32 %s521, 1
    %s523 = sor.u32 %s521, %s522
    %s524 = sand.u32 51, %s523
    %s525 = sshrl.u32 %s524, 2
    %s526 = sor.u32 %s524, %s525
    %s527 = sand.u32 15, %s526
    %v528 = vld [vmem:[%s518] sm:%s527]
    %v529 = vunpack.c.l.bf16 %v528
    %v530 = vunpack.c.h.bf16 %v528
    %s531 = scalar_lea.vmem [#allocation1], 248
    %532 = vst [vmem:[%s531] sm:%s4] %v529
    %s533 = smul.addr 4, 30
    %s534 = scalar_lea.vmem %s0, %s533
    %s535 = sshrl.u32 %s4, 1
    %s536 = sor.u32 %s4, %s535
    %s537 = sand.u32 %s536, 85
    %s538 = sshrl.u32 %s537, 1
    %s539 = sor.u32 %s537, %s538
    %s540 = sand.u32 51, %s539
    %s541 = sshrl.u32 %s540, 2
    %s542 = sor.u32 %s540, %s541
    %s543 = sand.u32 15, %s542
    %v544 = vld [vmem:[%s534] sm:%s543]
    %v545 = vunpack.c.l.bf16 %v544
    %v546 = vunpack.c.h.bf16 %v544
    %s547 = scalar_lea.vmem [#allocation1], 240
    %548 = vst [vmem:[%s547] sm:%s4] %v545
    %s549 = smul.addr 4, 29
    %s550 = scalar_lea.vmem %s0, %s549
    %s551 = sshrl.u32 %s4, 1
    %s552 = sor.u32 %s4, %s551
    %s553 = sand.u32 %s552, 85
    %s554 = sshrl.u32 %s553, 1
    %s555 = sor.u32 %s553, %s554
    %s556 = sand.u32 51, %s555
    %s557 = sshrl.u32 %s556, 2
    %s558 = sor.u32 %s556, %s557
    %s559 = sand.u32 15, %s558
    %v560 = vld [vmem:[%s550] sm:%s559]
    %v561 = vunpack.c.l.bf16 %v560
    %v562 = vunpack.c.h.bf16 %v560
    %s563 = scalar_lea.vmem [#allocation1], 232
    %564 = vst [vmem:[%s563] sm:%s4] %v561
    %s565 = smul.addr 4, 28
    %s566 = scalar_lea.vmem %s0, %s565
    %s567 = sshrl.u32 %s4, 1
    %s568 = sor.u32 %s4, %s567
    %s569 = sand.u32 %s568, 85
    %s570 = sshrl.u32 %s569, 1
    %s571 = sor.u32 %s569, %s570
    %s572 = sand.u32 51, %s571
    %s573 = sshrl.u32 %s572, 2
    %s574 = sor.u32 %s572, %s573
    %s575 = sand.u32 15, %s574
    %v576 = vld [vmem:[%s566] sm:%s575]
    %v577 = vunpack.c.l.bf16 %v576
    %v578 = vunpack.c.h.bf16 %v576
    %s579 = scalar_lea.vmem [#allocation1], 224
    %580 = vst [vmem:[%s579] sm:%s4] %v577
    %s581 = smul.addr 4, 27
    %s582 = scalar_lea.vmem %s0, %s581
    %s583 = sshrl.u32 %s4, 1
    %s584 = sor.u32 %s4, %s583
    %s585 = sand.u32 %s584, 85
    %s586 = sshrl.u32 %s585, 1
    %s587 = sor.u32 %s585, %s586
    %s588 = sand.u32 51, %s587
    %s589 = sshrl.u32 %s588, 2
    %s590 = sor.u32 %s588, %s589
    %s591 = sand.u32 15, %s590
    %v592 = vld [vmem:[%s582] sm:%s591]
    %v593 = vunpack.c.l.bf16 %v592
    %v594 = vunpack.c.h.bf16 %v592
    %s595 = scalar_lea.vmem [#allocation1], 216
    %596 = vst [vmem:[%s595] sm:%s4] %v593
    %s597 = smul.addr 4, 26
    %s598 = scalar_lea.vmem %s0, %s597
    %s599 = sshrl.u32 %s4, 1
    %s600 = sor.u32 %s4, %s599
    %s601 = sand.u32 %s600, 85
    %s602 = sshrl.u32 %s601, 1
    %s603 = sor.u32 %s601, %s602
    %s604 = sand.u32 51, %s603
    %s605 = sshrl.u32 %s604, 2
    %s606 = sor.u32 %s604, %s605
    %s607 = sand.u32 15, %s606
    %v608 = vld [vmem:[%s598] sm:%s607]
    %v609 = vunpack.c.l.bf16 %v608
    %v610 = vunpack.c.h.bf16 %v608
    %s611 = scalar_lea.vmem [#allocation1], 208
    %612 = vst [vmem:[%s611] sm:%s4] %v609
    %s613 = smul.addr 4, 25
    %s614 = scalar_lea.vmem %s0, %s613
    %s615 = sshrl.u32 %s4, 1
    %s616 = sor.u32 %s4, %s615
    %s617 = sand.u32 %s616, 85
    %s618 = sshrl.u32 %s617, 1
    %s619 = sor.u32 %s617, %s618
    %s620 = sand.u32 51, %s619
    %s621 = sshrl.u32 %s620, 2
    %s622 = sor.u32 %s620, %s621
    %s623 = sand.u32 15, %s622
    %v624 = vld [vmem:[%s614] sm:%s623]
    %v625 = vunpack.c.l.bf16 %v624
    %v626 = vunpack.c.h.bf16 %v624
    %s627 = scalar_lea.vmem [#allocation1], 200
    %628 = vst [vmem:[%s627] sm:%s4] %v625
    %s629 = smul.addr 4, 24
    %s630 = scalar_lea.vmem %s0, %s629
    %s631 = sshrl.u32 %s4, 1
    %s632 = sor.u32 %s4, %s631
    %s633 = sand.u32 %s632, 85
    %s634 = sshrl.u32 %s633, 1
    %s635 = sor.u32 %s633, %s634
    %s636 = sand.u32 51, %s635
    %s637 = sshrl.u32 %s636, 2
    %s638 = sor.u32 %s636, %s637
    %s639 = sand.u32 15, %s638
    %v640 = vld [vmem:[%s630] sm:%s639]
    %v641 = vunpack.c.l.bf16 %v640
    %v642 = vunpack.c.h.bf16 %v640
    %s643 = scalar_lea.vmem [#allocation1], 192
    %644 = vst [vmem:[%s643] sm:%s4] %v641
    %s645 = smul.addr 4, 23
    %s646 = scalar_lea.vmem %s0, %s645
    %s647 = sshrl.u32 %s4, 1
    %s648 = sor.u32 %s4, %s647
    %s649 = sand.u32 %s648, 85
    %s650 = sshrl.u32 %s649, 1
    %s651 = sor.u32 %s649, %s650
    %s652 = sand.u32 51, %s651
    %s653 = sshrl.u32 %s652, 2
    %s654 = sor.u32 %s652, %s653
    %s655 = sand.u32 15, %s654
    %v656 = vld [vmem:[%s646] sm:%s655]
    %v657 = vunpack.c.l.bf16 %v656
    %v658 = vunpack.c.h.bf16 %v656
    %s659 = scalar_lea.vmem [#allocation1], 184
    %660 = vst [vmem:[%s659] sm:%s4] %v657
    %s661 = smul.addr 4, 22
    %s662 = scalar_lea.vmem %s0, %s661
    %s663 = sshrl.u32 %s4, 1
    %s664 = sor.u32 %s4, %s663
    %s665 = sand.u32 %s664, 85
    %s666 = sshrl.u32 %s665, 1
    %s667 = sor.u32 %s665, %s666
    %s668 = sand.u32 51, %s667
    %s669 = sshrl.u32 %s668, 2
    %s670 = sor.u32 %s668, %s669
    %s671 = sand.u32 15, %s670
    %v672 = vld [vmem:[%s662] sm:%s671]
    %v673 = vunpack.c.l.bf16 %v672
    %v674 = vunpack.c.h.bf16 %v672
    %s675 = scalar_lea.vmem [#allocation1], 176
    %676 = vst [vmem:[%s675] sm:%s4] %v673
    %s677 = smul.addr 4, 21
    %s678 = scalar_lea.vmem %s0, %s677
    %s679 = sshrl.u32 %s4, 1
    %s680 = sor.u32 %s4, %s679
    %s681 = sand.u32 %s680, 85
    %s682 = sshrl.u32 %s681, 1
    %s683 = sor.u32 %s681, %s682
    %s684 = sand.u32 51, %s683
    %s685 = sshrl.u32 %s684, 2
    %s686 = sor.u32 %s684, %s685
    %s687 = sand.u32 15, %s686
    %v688 = vld [vmem:[%s678] sm:%s687]
    %v689 = vunpack.c.l.bf16 %v688
    %v690 = vunpack.c.h.bf16 %v688
    %s691 = scalar_lea.vmem [#allocation1], 168
    %692 = vst [vmem:[%s691] sm:%s4] %v689
    %s693 = smul.addr 4, 20
    %s694 = scalar_lea.vmem %s0, %s693
    %s695 = sshrl.u32 %s4, 1
    %s696 = sor.u32 %s4, %s695
    %s697 = sand.u32 %s696, 85
    %s698 = sshrl.u32 %s697, 1
    %s699 = sor.u32 %s697, %s698
    %s700 = sand.u32 51, %s699
    %s701 = sshrl.u32 %s700, 2
    %s702 = sor.u32 %s700, %s701
    %s703 = sand.u32 15, %s702
    %v704 = vld [vmem:[%s694] sm:%s703]
    %v705 = vunpack.c.l.bf16 %v704
    %v706 = vunpack.c.h.bf16 %v704
    %s707 = scalar_lea.vmem [#allocation1], 160
    %708 = vst [vmem:[%s707] sm:%s4] %v705
    %s709 = smul.addr 4, 19
    %s710 = scalar_lea.vmem %s0, %s709
    %s711 = sshrl.u32 %s4, 1
    %s712 = sor.u32 %s4, %s711
    %s713 = sand.u32 %s712, 85
    %s714 = sshrl.u32 %s713, 1
    %s715 = sor.u32 %s713, %s714
    %s716 = sand.u32 51, %s715
    %s717 = sshrl.u32 %s716, 2
    %s718 = sor.u32 %s716, %s717
    %s719 = sand.u32 15, %s718
    %v720 = vld [vmem:[%s710] sm:%s719]
    %v721 = vunpack.c.l.bf16 %v720
    %v722 = vunpack.c.h.bf16 %v720
    %s723 = scalar_lea.vmem [#allocation1], 152
    %724 = vst [vmem:[%s723] sm:%s4] %v721
    %s725 = smul.addr 4, 18
    %s726 = scalar_lea.vmem %s0, %s725
    %s727 = sshrl.u32 %s4, 1
    %s728 = sor.u32 %s4, %s727
    %s729 = sand.u32 %s728, 85
    %s730 = sshrl.u32 %s729, 1
    %s731 = sor.u32 %s729, %s730
    %s732 = sand.u32 51, %s731
    %s733 = sshrl.u32 %s732, 2
    %s734 = sor.u32 %s732, %s733
    %s735 = sand.u32 15, %s734
    %v736 = vld [vmem:[%s726] sm:%s735]
    %v737 = vunpack.c.l.bf16 %v736
    %v738 = vunpack.c.h.bf16 %v736
    %s739 = scalar_lea.vmem [#allocation1], 144
    %740 = vst [vmem:[%s739] sm:%s4] %v737
    %s741 = smul.addr 4, 17
    %s742 = scalar_lea.vmem %s0, %s741
    %s743 = sshrl.u32 %s4, 1
    %s744 = sor.u32 %s4, %s743
    %s745 = sand.u32 %s744, 85
    %s746 = sshrl.u32 %s745, 1
    %s747 = sor.u32 %s745, %s746
    %s748 = sand.u32 51, %s747
    %s749 = sshrl.u32 %s748, 2
    %s750 = sor.u32 %s748, %s749
    %s751 = sand.u32 15, %s750
    %v752 = vld [vmem:[%s742] sm:%s751]
    %v753 = vunpack.c.l.bf16 %v752
    %v754 = vunpack.c.h.bf16 %v752
    %s755 = scalar_lea.vmem [#allocation1], 136
    %756 = vst [vmem:[%s755] sm:%s4] %v753
    %s757 = smul.addr 4, 16
    %s758 = scalar_lea.vmem %s0, %s757
    %s759 = sshrl.u32 %s4, 1
    %s760 = sor.u32 %s4, %s759
    %s761 = sand.u32 %s760, 85
    %s762 = sshrl.u32 %s761, 1
    %s763 = sor.u32 %s761, %s762
    %s764 = sand.u32 51, %s763
    %s765 = sshrl.u32 %s764, 2
    %s766 = sor.u32 %s764, %s765
    %s767 = sand.u32 15, %s766
    %v768 = vld [vmem:[%s758] sm:%s767]
    %v769 = vunpack.c.l.bf16 %v768
    %v770 = vunpack.c.h.bf16 %v768
    %s771 = scalar_lea.vmem [#allocation1], 128
    %772 = vst [vmem:[%s771] sm:%s4] %v769
    %s773 = smul.addr 4, 15
    %s774 = scalar_lea.vmem %s0, %s773
    %s775 = sshrl.u32 %s4, 1
    %s776 = sor.u32 %s4, %s775
    %s777 = sand.u32 %s776, 85
    %s778 = sshrl.u32 %s777, 1
    %s779 = sor.u32 %s777, %s778
    %s780 = sand.u32 51, %s779
    %s781 = sshrl.u32 %s780, 2
    %s782 = sor.u32 %s780, %s781
    %s783 = sand.u32 15, %s782
    %v784 = vld [vmem:[%s774] sm:%s783]
    %v785 = vunpack.c.l.bf16 %v784
    %v786 = vunpack.c.h.bf16 %v784
    %s787 = scalar_lea.vmem [#allocation1], 120
    %788 = vst [vmem:[%s787] sm:%s4] %v785
    %s789 = smul.addr 4, 14
    %s790 = scalar_lea.vmem %s0, %s789
    %s791 = sshrl.u32 %s4, 1
    %s792 = sor.u32 %s4, %s791
    %s793 = sand.u32 %s792, 85
    %s794 = sshrl.u32 %s793, 1
    %s795 = sor.u32 %s793, %s794
    %s796 = sand.u32 51, %s795
    %s797 = sshrl.u32 %s796, 2
    %s798 = sor.u32 %s796, %s797
    %s799 = sand.u32 15, %s798
    %v800 = vld [vmem:[%s790] sm:%s799]
    %v801 = vunpack.c.l.bf16 %v800
    %v802 = vunpack.c.h.bf16 %v800
    %s803 = scalar_lea.vmem [#allocation1], 112
    %804 = vst [vmem:[%s803] sm:%s4] %v801
    %s805 = smul.addr 4, 13
    %s806 = scalar_lea.vmem %s0, %s805
    %s807 = sshrl.u32 %s4, 1
    %s808 = sor.u32 %s4, %s807
    %s809 = sand.u32 %s808, 85
    %s810 = sshrl.u32 %s809, 1
    %s811 = sor.u32 %s809, %s810
    %s812 = sand.u32 51, %s811
    %s813 = sshrl.u32 %s812, 2
    %s814 = sor.u32 %s812, %s813
    %s815 = sand.u32 15, %s814
    %v816 = vld [vmem:[%s806] sm:%s815]
    %v817 = vunpack.c.l.bf16 %v816
    %v818 = vunpack.c.h.bf16 %v816
    %s819 = scalar_lea.vmem [#allocation1], 104
    %820 = vst [vmem:[%s819] sm:%s4] %v817
    %s821 = smul.addr 4, 12
    %s822 = scalar_lea.vmem %s0, %s821
    %s823 = sshrl.u32 %s4, 1
    %s824 = sor.u32 %s4, %s823
    %s825 = sand.u32 %s824, 85
    %s826 = sshrl.u32 %s825, 1
    %s827 = sor.u32 %s825, %s826
    %s828 = sand.u32 51, %s827
    %s829 = sshrl.u32 %s828, 2
    %s830 = sor.u32 %s828, %s829
    %s831 = sand.u32 15, %s830
    %v832 = vld [vmem:[%s822] sm:%s831]
    %v833 = vunpack.c.l.bf16 %v832
    %v834 = vunpack.c.h.bf16 %v832
    %s835 = scalar_lea.vmem [#allocation1], 96
    %836 = vst [vmem:[%s835] sm:%s4] %v833
    %s837 = smul.addr 4, 11
    %s838 = scalar_lea.vmem %s0, %s837
    %s839 = sshrl.u32 %s4, 1
    %s840 = sor.u32 %s4, %s839
    %s841 = sand.u32 %s840, 85
    %s842 = sshrl.u32 %s841, 1
    %s843 = sor.u32 %s841, %s842
    %s844 = sand.u32 51, %s843
    %s845 = sshrl.u32 %s844, 2
    %s846 = sor.u32 %s844, %s845
    %s847 = sand.u32 15, %s846
    %v848 = vld [vmem:[%s838] sm:%s847]
    %v849 = vunpack.c.l.bf16 %v848
    %v850 = vunpack.c.h.bf16 %v848
    %s851 = scalar_lea.vmem [#allocation1], 88
    %852 = vst [vmem:[%s851] sm:%s4] %v849
    %s853 = smul.addr 4, 10
    %s854 = scalar_lea.vmem %s0, %s853
    %s855 = sshrl.u32 %s4, 1
    %s856 = sor.u32 %s4, %s855
    %s857 = sand.u32 %s856, 85
    %s858 = sshrl.u32 %s857, 1
    %s859 = sor.u32 %s857, %s858
    %s860 = sand.u32 51, %s859
    %s861 = sshrl.u32 %s860, 2
    %s862 = sor.u32 %s860, %s861
    %s863 = sand.u32 15, %s862
    %v864 = vld [vmem:[%s854] sm:%s863]
    %v865 = vunpack.c.l.bf16 %v864
    %v866 = vunpack.c.h.bf16 %v864
    %s867 = scalar_lea.vmem [#allocation1], 80
    %868 = vst [vmem:[%s867] sm:%s4] %v865
    %s869 = smul.addr 4, 9
    %s870 = scalar_lea.vmem %s0, %s869
    %s871 = sshrl.u32 %s4, 1
    %s872 = sor.u32 %s4, %s871
    %s873 = sand.u32 %s872, 85
    %s874 = sshrl.u32 %s873, 1
    %s875 = sor.u32 %s873, %s874
    %s876 = sand.u32 51, %s875
    %s877 = sshrl.u32 %s876, 2
    %s878 = sor.u32 %s876, %s877
    %s879 = sand.u32 15, %s878
    %v880 = vld [vmem:[%s870] sm:%s879]
    %v881 = vunpack.c.l.bf16 %v880
    %v882 = vunpack.c.h.bf16 %v880
    %s883 = scalar_lea.vmem [#allocation1], 72
    %884 = vst [vmem:[%s883] sm:%s4] %v881
    %s885 = smul.addr 4, 8
    %s886 = scalar_lea.vmem %s0, %s885
    %s887 = sshrl.u32 %s4, 1
    %s888 = sor.u32 %s4, %s887
    %s889 = sand.u32 %s888, 85
    %s890 = sshrl.u32 %s889, 1
    %s891 = sor.u32 %s889, %s890
    %s892 = sand.u32 51, %s891
    %s893 = sshrl.u32 %s892, 2
    %s894 = sor.u32 %s892, %s893
    %s895 = sand.u32 15, %s894
    %v896 = vld [vmem:[%s886] sm:%s895]
    %v897 = vunpack.c.l.bf16 %v896
    %v898 = vunpack.c.h.bf16 %v896
    %s899 = scalar_lea.vmem [#allocation1], 64
    %900 = vst [vmem:[%s899] sm:%s4] %v897
    %s901 = smul.addr 4, 7
    %s902 = scalar_lea.vmem %s0, %s901
    %s903 = sshrl.u32 %s4, 1
    %s904 = sor.u32 %s4, %s903
    %s905 = sand.u32 %s904, 85
    %s906 = sshrl.u32 %s905, 1
    %s907 = sor.u32 %s905, %s906
    %s908 = sand.u32 51, %s907
    %s909 = sshrl.u32 %s908, 2
    %s910 = sor.u32 %s908, %s909
    %s911 = sand.u32 15, %s910
    %v912 = vld [vmem:[%s902] sm:%s911]
    %v913 = vunpack.c.l.bf16 %v912
    %v914 = vunpack.c.h.bf16 %v912
    %s915 = scalar_lea.vmem [#allocation1], 56
    %916 = vst [vmem:[%s915] sm:%s4] %v913
    %s917 = smul.addr 4, 6
    %s918 = scalar_lea.vmem %s0, %s917
    %s919 = sshrl.u32 %s4, 1
    %s920 = sor.u32 %s4, %s919
    %s921 = sand.u32 %s920, 85
    %s922 = sshrl.u32 %s921, 1
    %s923 = sor.u32 %s921, %s922
    %s924 = sand.u32 51, %s923
    %s925 = sshrl.u32 %s924, 2
    %s926 = sor.u32 %s924, %s925
    %s927 = sand.u32 15, %s926
    %v928 = vld [vmem:[%s918] sm:%s927]
    %v929 = vunpack.c.l.bf16 %v928
    %v930 = vunpack.c.h.bf16 %v928
    %s931 = scalar_lea.vmem [#allocation1], 48
    %932 = vst [vmem:[%s931] sm:%s4] %v929
    %s933 = smul.addr 4, 5
    %s934 = scalar_lea.vmem %s0, %s933
    %s935 = sshrl.u32 %s4, 1
    %s936 = sor.u32 %s4, %s935
    %s937 = sand.u32 %s936, 85
    %s938 = sshrl.u32 %s937, 1
    %s939 = sor.u32 %s937, %s938
    %s940 = sand.u32 51, %s939
    %s941 = sshrl.u32 %s940, 2
    %s942 = sor.u32 %s940, %s941
    %s943 = sand.u32 15, %s942
    %v944 = vld [vmem:[%s934] sm:%s943]
    %v945 = vunpack.c.l.bf16 %v944
    %v946 = vunpack.c.h.bf16 %v944
    %s947 = scalar_lea.vmem [#allocation1], 40
    %948 = vst [vmem:[%s947] sm:%s4] %v945
    %s949 = smul.addr 4, 4
    %s950 = scalar_lea.vmem %s0, %s949
    %s951 = sshrl.u32 %s4, 1
    %s952 = sor.u32 %s4, %s951
    %s953 = sand.u32 %s952, 85
    %s954 = sshrl.u32 %s953, 1
    %s955 = sor.u32 %s953, %s954
    %s956 = sand.u32 51, %s955
    %s957 = sshrl.u32 %s956, 2
    %s958 = sor.u32 %s956, %s957
    %s959 = sand.u32 15, %s958
    %v960 = vld [vmem:[%s950] sm:%s959]
    %v961 = vunpack.c.l.bf16 %v960
    %v962 = vunpack.c.h.bf16 %v960
    %s963 = scalar_lea.vmem [#allocation1], 32
    %964 = vst [vmem:[%s963] sm:%s4] %v961
    %s965 = smul.addr 4, 3
    %s966 = scalar_lea.vmem %s0, %s965
    %s967 = sshrl.u32 %s4, 1
    %s968 = sor.u32 %s4, %s967
    %s969 = sand.u32 %s968, 85
    %s970 = sshrl.u32 %s969, 1
    %s971 = sor.u32 %s969, %s970
    %s972 = sand.u32 51, %s971
    %s973 = sshrl.u32 %s972, 2
    %s974 = sor.u32 %s972, %s973
    %s975 = sand.u32 15, %s974
    %v976 = vld [vmem:[%s966] sm:%s975]
    %v977 = vunpack.c.l.bf16 %v976
    %v978 = vunpack.c.h.bf16 %v976
    %s979 = scalar_lea.vmem [#allocation1], 24
    %980 = vst [vmem:[%s979] sm:%s4] %v977
    %s981 = smul.addr 4, 2
    %s982 = scalar_lea.vmem %s0, %s981
    %s983 = sshrl.u32 %s4, 1
    %s984 = sor.u32 %s4, %s983
    %s985 = sand.u32 %s984, 85
    %s986 = sshrl.u32 %s985, 1
    %s987 = sor.u32 %s985, %s986
    %s988 = sand.u32 51, %s987
    %s989 = sshrl.u32 %s988, 2
    %s990 = sor.u32 %s988, %s989
    %s991 = sand.u32 15, %s990
    %v992 = vld [vmem:[%s982] sm:%s991]
    %v993 = vunpack.c.l.bf16 %v992
    %v994 = vunpack.c.h.bf16 %v992
    %s995 = scalar_lea.vmem [#allocation1], 16
    %996 = vst [vmem:[%s995] sm:%s4] %v993
    %s997 = scalar_lea.vmem %s0, 4
    %s998 = sshrl.u32 %s4, 1
    %s999 = sor.u32 %s4, %s998
    %s1000 = sand.u32 %s999, 85
    %s1001 = sshrl.u32 %s1000, 1
    %s1002 = sor.u32 %s1000, %s1001
    %s1003 = sand.u32 51, %s1002
    %s1004 = sshrl.u32 %s1003, 2
    %s1005 = sor.u32 %s1003, %s1004
    %s1006 = sand.u32 15, %s1005
    %v1007 = vld [vmem:[%s997] sm:%s1006]
    %v1008 = vunpack.c.l.bf16 %v1007
    %v1009 = vunpack.c.h.bf16 %v1007
    %s1010 = scalar_lea.vmem [#allocation1], 8
    %1011 = vst [vmem:[%s1010] sm:%s4] %v1008
    %s1012 = sshrl.u32 %s4, 1
    %s1013 = sor.u32 %s4, %s1012
    %s1014 = sand.u32 %s1013, 85
    %s1015 = sshrl.u32 %s1014, 1
    %s1016 = sor.u32 %s1014, %s1015
    %s1017 = sand.u32 51, %s1016
    %s1018 = sshrl.u32 %s1017, 2
    %s1019 = sor.u32 %s1017, %s1018
    %s1020 = sand.u32 15, %s1019
    %v1021 = vld [vmem:[%s0] sm:%s1020]
    %v1022 = vunpack.c.l.bf16 %v1021
    %v1023 = vunpack.c.h.bf16 %v1021
    %1024 = vst [vmem:[#allocation1] sm:%s4] %v1022
    %v1025 = vld [vmem:[#allocation1] ss:$4 sm:$0xff]
    %vm1026 = vcmask 261120
    %1027 = vst.msk [vmem:[#allocation0] sm:$0xff] %vm1026, %v1025
    %s1028 = scalar_lea.vmem [#allocation1], 32
    %v1029 = vld [vmem:[%s1028] ss:$4 sm:$0xff]
    %vm1030 = vcmask 261120
    %s1031 = scalar_lea.vmem [#allocation0], 8
    %1032 = vst.msk [vmem:[%s1031] sm:$0xff] %vm1030, %v1029
    %s1033 = scalar_lea.vmem [#allocation1], 64
    %v1034 = vld [vmem:[%s1033] ss:$4 sm:$0xff]
    %vm1035 = vcmask 261120
    %s1036 = scalar_lea.vmem [#allocation0], 16
    %1037 = vst.msk [vmem:[%s1036] sm:$0xff] %vm1035, %v1034
    %s1038 = scalar_lea.vmem [#allocation1], 96
    %v1039 = vld [vmem:[%s1038] ss:$4 sm:$0xff]
    %vm1040 = vcmask 261120
    %s1041 = scalar_lea.vmem [#allocation0], 24
    %1042 = vst.msk [vmem:[%s1041] sm:$0xff] %vm1040, %v1039
    %s1043 = scalar_lea.vmem [#allocation1], 128
    %v1044 = vld [vmem:[%s1043] ss:$4 sm:$0xff]
    %vm1045 = vcmask 261120
    %s1046 = scalar_lea.vmem [#allocation0], 32
    %1047 = vst.msk [vmem:[%s1046] sm:$0xff] %vm1045, %v1044
    %s1048 = scalar_lea.vmem [#allocation1], 160
    %v1049 = vld [vmem:[%s1048] ss:$4 sm:$0xff]
    %vm1050 = vcmask 261120
    %s1051 = scalar_lea.vmem [#allocation0], 40
    %1052 = vst.msk [vmem:[%s1051] sm:$0xff] %vm1050, %v1049
    %s1053 = scalar_lea.vmem [#allocation1], 192
    %v1054 = vld [vmem:[%s1053] ss:$4 sm:$0xff]
    %vm1055 = vcmask 261120
    %s1056 = scalar_lea.vmem [#allocation0], 48
    %1057 = vst.msk [vmem:[%s1056] sm:$0xff] %vm1055, %v1054
    %s1058 = scalar_lea.vmem [#allocation1], 224
    %v1059 = vld [vmem:[%s1058] ss:$4 sm:$0xff]
    %vm1060 = vcmask 261120
    %s1061 = scalar_lea.vmem [#allocation0], 56
    %1062 = vst.msk [vmem:[%s1061] sm:$0xff] %vm1060, %v1059
    %s1063 = scalar_lea.vmem [#allocation1], 256
    %v1064 = vld [vmem:[%s1063] ss:$4 sm:$0xff]
    %vm1065 = vcmask 261120
    %s1066 = scalar_lea.vmem [#allocation0], 64
    %1067 = vst.msk [vmem:[%s1066] sm:$0xff] %vm1065, %v1064
    %s1068 = scalar_lea.vmem [#allocation1], 288
    %v1069 = vld [vmem:[%s1068] ss:$4 sm:$0xff]
    %vm1070 = vcmask 261120
    %s1071 = scalar_lea.vmem [#allocation0], 72
    %1072 = vst.msk [vmem:[%s1071] sm:$0xff] %vm1070, %v1069
    %s1073 = scalar_lea.vmem [#allocation1], 320
    %v1074 = vld [vmem:[%s1073] ss:$4 sm:$0xff]
    %vm1075 = vcmask 261120
    %s1076 = scalar_lea.vmem [#allocation0], 80
    %1077 = vst.msk [vmem:[%s1076] sm:$0xff] %vm1075, %v1074
    %s1078 = scalar_lea.vmem [#allocation1], 352
    %v1079 = vld [vmem:[%s1078] ss:$4 sm:$0xff]
    %vm1080 = vcmask 261120
    %s1081 = scalar_lea.vmem [#allocation0], 88
    %1082 = vst.msk [vmem:[%s1081] sm:$0xff] %vm1080, %v1079
    %s1083 = scalar_lea.vmem [#allocation1], 384
    %v1084 = vld [vmem:[%s1083] ss:$4 sm:$0xff]
    %vm1085 = vcmask 261120
    %s1086 = scalar_lea.vmem [#allocation0], 96
    %1087 = vst.msk [vmem:[%s1086] sm:$0xff] %vm1085, %v1084
    %s1088 = scalar_lea.vmem [#allocation1], 416
    %v1089 = vld [vmem:[%s1088] ss:$4 sm:$0xff]
    %vm1090 = vcmask 261120
    %s1091 = scalar_lea.vmem [#allocation0], 104
    %1092 = vst.msk [vmem:[%s1091] sm:$0xff] %vm1090, %v1089
    %s1093 = scalar_lea.vmem [#allocation1], 448
    %v1094 = vld [vmem:[%s1093] ss:$4 sm:$0xff]
    %vm1095 = vcmask 261120
    %s1096 = scalar_lea.vmem [#allocation0], 112
    %1097 = vst.msk [vmem:[%s1096] sm:$0xff] %vm1095, %v1094
    %s1098 = scalar_lea.vmem [#allocation1], 480
    %v1099 = vld [vmem:[%s1098] ss:$4 sm:$0xff]
    %vm1100 = vcmask 261120
    %s1101 = scalar_lea.vmem [#allocation0], 120
    %1102 = vst.msk [vmem:[%s1101] sm:$0xff] %vm1100, %v1099
    %s1103 = scalar_lea.vmem [#allocation1], 3
    %v1104 = vld [vmem:[%s1103] ss:$4 sm:$0xff]
    %1105 = vrot.lane.b32.xlu0 %v1104, 96
    %v1106 = vpop.permute.xlu0 %1105
    %vm1107 = vcmask 1048320
    %1108 = vst.msk [vmem:[#allocation0] sm:$0xff] %vm1107, %v1106
    %s1109 = scalar_lea.vmem [#allocation1], 131
    %v1110 = vld [vmem:[%s1109] ss:$4 sm:$0xff]
    %1111 = vrot.lane.b32.xlu0 %v1110, 96
    %v1112 = vpop.permute.xlu0 %1111
    %vm1113 = vcmask 1048320
    %s1114 = scalar_lea.vmem [#allocation0], 32
    %1115 = vst.msk [vmem:[%s1114] sm:$0xff] %vm1113, %v1112
    %s1116 = scalar_lea.vmem [#allocation1], 259
    %v1117 = vld [vmem:[%s1116] ss:$4 sm:$0xff]
    %1118 = vrot.lane.b32.xlu0 %v1117, 96
    %v1119 = vpop.permute.xlu0 %1118
    %vm1120 = vcmask 1048320
    %s1121 = scalar_lea.vmem [#allocation0], 64
    %1122 = vst.msk [vmem:[%s1121] sm:$0xff] %vm1120, %v1119
    %s1123 = scalar_lea.vmem [#allocation1], 387
    %v1124 = vld [vmem:[%s1123] ss:$4 sm:$0xff]
    %1125 = vrot.lane.b32.xlu0 %v1124, 96
    %v1126 = vpop.permute.xlu0 %1125
    %vm1127 = vcmask 1048320
    %s1128 = scalar_lea.vmem [#allocation0], 96
    %1129 = vst.msk [vmem:[%s1128] sm:$0xff] %vm1127, %v1126
    %s1130 = scalar_lea.vmem [#allocation1], 35
    %v1131 = vld [vmem:[%s1130] ss:$4 sm:$0xff]
    %1132 = vrot.lane.b32.xlu0 %v1131, 96
    %v1133 = vpop.permute.xlu0 %1132
    %vm1134 = vcmask 1048320
    %s1135 = scalar_lea.vmem [#allocation0], 8
    %1136 = vst.msk [vmem:[%s1135] sm:$0xff] %vm1134, %v1133
    %s1137 = scalar_lea.vmem [#allocation1], 163
    %v1138 = vld [vmem:[%s1137] ss:$4 sm:$0xff]
    %1139 = vrot.lane.b32.xlu0 %v1138, 96
    %v1140 = vpop.permute.xlu0 %1139
    %vm1141 = vcmask 1048320
    %s1142 = scalar_lea.vmem [#allocation0], 40
    %1143 = vst.msk [vmem:[%s1142] sm:$0xff] %vm1141, %v1140
    %s1144 = scalar_lea.vmem [#allocation1], 291
    %v1145 = vld [vmem:[%s1144] ss:$4 sm:$0xff]
    %1146 = vrot.lane.b32.xlu0 %v1145, 96
    %v1147 = vpop.permute.xlu0 %1146
    %vm1148 = vcmask 1048320
    %s1149 = scalar_lea.vmem [#allocation0], 72
    %1150 = vst.msk [vmem:[%s1149] sm:$0xff] %vm1148, %v1147
    %s1151 = scalar_lea.vmem [#allocation1], 419
    %v1152 = vld [vmem:[%s1151] ss:$4 sm:$0xff]
    %1153 = vrot.lane.b32.xlu0 %v1152, 96
    %v1154 = vpop.permute.xlu0 %1153
    %vm1155 = vcmask 1048320
    %s1156 = scalar_lea.vmem [#allocation0], 104
    %1157 = vst.msk [vmem:[%s1156] sm:$0xff] %vm1155, %v1154
    %s1158 = scalar_lea.vmem [#allocation1], 67
    %v1159 = vld [vmem:[%s1158] ss:$4 sm:$0xff]
    %1160 = vrot.lane.b32.xlu0 %v1159, 96
    %v1161 = vpop.permute.xlu0 %1160
    %vm1162 = vcmask 1048320
    %s1163 = scalar_lea.vmem [#allocation0], 16
    %1164 = vst.msk [vmem:[%s1163] sm:$0xff] %vm1162, %v1161
    %s1165 = scalar_lea.vmem [#allocation1], 195
    %v1166 = vld [vmem:[%s1165] ss:$4 sm:$0xff]
    %1167 = vrot.lane.b32.xlu0 %v1166, 96
    %v1168 = vpop.permute.xlu0 %1167
    %vm1169 = vcmask 1048320
    %s1170 = scalar_lea.vmem [#allocation0], 48
    %1171 = vst.msk [vmem:[%s1170] sm:$0xff] %vm1169, %v1168
    %s1172 = scalar_lea.vmem [#allocation1], 323
    %v1173 = vld [vmem:[%s1172] ss:$4 sm:$0xff]
    %1174 = vrot.lane.b32.xlu0 %v1173, 96
    %v1175 = vpop.permute.xlu0 %1174
    %vm1176 = vcmask 1048320
    %s1177 = scalar_lea.vmem [#allocation0], 80
    %1178 = vst.msk [vmem:[%s1177] sm:$0xff] %vm1176, %v1175
    %s1179 = scalar_lea.vmem [#allocation1], 451
    %v1180 = vld [vmem:[%s1179] ss:$4 sm:$0xff]
    %1181 = vrot.lane.b32.xlu0 %v1180, 96
    %v1182 = vpop.permute.xlu0 %1181
    %vm1183 = vcmask 1048320
    %s1184 = scalar_lea.vmem [#allocation0], 112
    %1185 = vst.msk [vmem:[%s1184] sm:$0xff] %vm1183, %v1182
    %s1186 = scalar_lea.vmem [#allocation1], 99
    %v1187 = vld [vmem:[%s1186] ss:$4 sm:$0xff]
    %1188 = vrot.lane.b32.xlu0 %v1187, 96
    %v1189 = vpop.permute.xlu0 %1188
    %vm1190 = vcmask 1048320
    %s1191 = scalar_lea.vmem [#allocation0], 24
    %1192 = vst.msk [vmem:[%s1191] sm:$0xff] %vm1190, %v1189
    %s1193 = scalar_lea.vmem [#allocation1], 227
    %v1194 = vld [vmem:[%s1193] ss:$4 sm:$0xff]
    %1195 = vrot.lane.b32.xlu0 %v1194, 96
    %v1196 = vpop.permute.xlu0 %1195
    %vm1197 = vcmask 1048320
    %s1198 = scalar_lea.vmem [#allocation0], 56
    %1199 = vst.msk [vmem:[%s1198] sm:$0xff] %vm1197, %v1196
    %s1200 = scalar_lea.vmem [#allocation1], 355
    %v1201 = vld [vmem:[%s1200] ss:$4 sm:$0xff]
    %1202 = vrot.lane.b32.xlu0 %v1201, 96
    %v1203 = vpop.permute.xlu0 %1202
    %vm1204 = vcmask 1048320
    %s1205 = scalar_lea.vmem [#allocation0], 88
    %1206 = vst.msk [vmem:[%s1205] sm:$0xff] %vm1204, %v1203
    %s1207 = scalar_lea.vmem [#allocation1], 483
    %v1208 = vld [vmem:[%s1207] ss:$4 sm:$0xff]
    %1209 = vrot.lane.b32.xlu0 %v1208, 96
    %v1210 = vpop.permute.xlu0 %1209
    %vm1211 = vcmask 1048320
    %s1212 = scalar_lea.vmem [#allocation0], 120
    %1213 = vst.msk [vmem:[%s1212] sm:$0xff] %vm1211, %v1210
    %s1214 = scalar_lea.vmem [#allocation1], 2
    %v1215 = vld [vmem:[%s1214] ss:$4 sm:$0xff]
    %1216 = vrot.lane.b32.xlu0 %v1215, 64
    %v1217 = vpop.permute.xlu0 %1216
    %vm1218 = vcmask 785920
    %1219 = vst.msk [vmem:[#allocation0] sm:$0xff] %vm1218, %v1217
    %s1220 = scalar_lea.vmem [#allocation1], 130
    %v1221 = vld [vmem:[%s1220] ss:$4 sm:$0xff]
    %1222 = vrot.lane.b32.xlu0 %v1221, 64
    %v1223 = vpop.permute.xlu0 %1222
    %vm1224 = vcmask 785920
    %s1225 = scalar_lea.vmem [#allocation0], 32
    %1226 = vst.msk [vmem:[%s1225] sm:$0xff] %vm1224, %v1223
    %s1227 = scalar_lea.vmem [#allocation1], 258
    %v1228 = vld [vmem:[%s1227] ss:$4 sm:$0xff]
    %1229 = vrot.lane.b32.xlu0 %v1228, 64
    %v1230 = vpop.permute.xlu0 %1229
    %vm1231 = vcmask 785920
    %s1232 = scalar_lea.vmem [#allocation0], 64
    %1233 = vst.msk [vmem:[%s1232] sm:$0xff] %vm1231, %v1230
    %s1234 = scalar_lea.vmem [#allocation1], 386
    %v1235 = vld [vmem:[%s1234] ss:$4 sm:$0xff]
    %1236 = vrot.lane.b32.xlu0 %v1235, 64
    %v1237 = vpop.permute.xlu0 %1236
    %vm1238 = vcmask 785920
    %s1239 = scalar_lea.vmem [#allocation0], 96
    %1240 = vst.msk [vmem:[%s1239] sm:$0xff] %vm1238, %v1237
    %s1241 = scalar_lea.vmem [#allocation1], 34
    %v1242 = vld [vmem:[%s1241] ss:$4 sm:$0xff]
    %1243 = vrot.lane.b32.xlu0 %v1242, 64
    %v1244 = vpop.permute.xlu0 %1243
    %vm1245 = vcmask 785920
    %s1246 = scalar_lea.vmem [#allocation0], 8
    %1247 = vst.msk [vmem:[%s1246] sm:$0xff] %vm1245, %v1244
    %s1248 = scalar_lea.vmem [#allocation1], 162
    %v1249 = vld [vmem:[%s1248] ss:$4 sm:$0xff]
    %1250 = vrot.lane.b32.xlu0 %v1249, 64
    %v1251 = vpop.permute.xlu0 %1250
    %vm1252 = vcmask 785920
    %s1253 = scalar_lea.vmem [#allocation0], 40
    %1254 = vst.msk [vmem:[%s1253] sm:$0xff] %vm1252, %v1251
    %s1255 = scalar_lea.vmem [#allocation1], 290
    %v1256 = vld [vmem:[%s1255] ss:$4 sm:$0xff]
    %1257 = vrot.lane.b32.xlu0 %v1256, 64
    %v1258 = vpop.permute.xlu0 %1257
    %vm1259 = vcmask 785920
    %s1260 = scalar_lea.vmem [#allocation0], 72
    %1261 = vst.msk [vmem:[%s1260] sm:$0xff] %vm1259, %v1258
    %s1262 = scalar_lea.vmem [#allocation1], 418
    %v1263 = vld [vmem:[%s1262] ss:$4 sm:$0xff]
    %1264 = vrot.lane.b32.xlu0 %v1263, 64
    %v1265 = vpop.permute.xlu0 %1264
    %vm1266 = vcmask 785920
    %s1267 = scalar_lea.vmem [#allocation0], 104
    %1268 = vst.msk [vmem:[%s1267] sm:$0xff] %vm1266, %v1265
    %s1269 = scalar_lea.vmem [#allocation1], 66
    %v1270 = vld [vmem:[%s1269] ss:$4 sm:$0xff]
    %1271 = vrot.lane.b32.xlu0 %v1270, 64
    %v1272 = vpop.permute.xlu0 %1271
    %vm1273 = vcmask 785920
    %s1274 = scalar_lea.vmem [#allocation0], 16
    %1275 = vst.msk [vmem:[%s1274] sm:$0xff] %vm1273, %v1272
    %s1276 = scalar_lea.vmem [#allocation1], 194
    %v1277 = vld [vmem:[%s1276] ss:$4 sm:$0xff]
    %1278 = vrot.lane.b32.xlu0 %v1277, 64
    %v1279 = vpop.permute.xlu0 %1278
    %vm1280 = vcmask 785920
    %s1281 = scalar_lea.vmem [#allocation0], 48
    %1282 = vst.msk [vmem:[%s1281] sm:$0xff] %vm1280, %v1279
    %s1283 = scalar_lea.vmem [#allocation1], 322
    %v1284 = vld [vmem:[%s1283] ss:$4 sm:$0xff]
    %1285 = vrot.lane.b32.xlu0 %v1284, 64
    %v1286 = vpop.permute.xlu0 %1285
    %vm1287 = vcmask 785920
    %s1288 = scalar_lea.vmem [#allocation0], 80
    %1289 = vst.msk [vmem:[%s1288] sm:$0xff] %vm1287, %v1286
    %s1290 = scalar_lea.vmem [#allocation1], 450
    %v1291 = vld [vmem:[%s1290] ss:$4 sm:$0xff]
    %1292 = vrot.lane.b32.xlu0 %v1291, 64
    %v1293 = vpop.permute.xlu0 %1292
    %vm1294 = vcmask 785920
    %s1295 = scalar_lea.vmem [#allocation0], 112
    %1296 = vst.msk [vmem:[%s1295] sm:$0xff] %vm1294, %v1293
    %s1297 = scalar_lea.vmem [#allocation1], 98
    %v1298 = vld [vmem:[%s1297] ss:$4 sm:$0xff]
    %1299 = vrot.lane.b32.xlu0 %v1298, 64
    %v1300 = vpop.permute.xlu0 %1299
    %vm1301 = vcmask 785920
    %s1302 = scalar_lea.vmem [#allocation0], 24
    %1303 = vst.msk [vmem:[%s1302] sm:$0xff] %vm1301, %v1300
    %s1304 = scalar_lea.vmem [#allocation1], 226
    %v1305 = vld [vmem:[%s1304] ss:$4 sm:$0xff]
    %1306 = vrot.lane.b32.xlu0 %v1305, 64
    %v1307 = vpop.permute.xlu0 %1306
    %vm1308 = vcmask 785920
    %s1309 = scalar_lea.vmem [#allocation0], 56
    %1310 = vst.msk [vmem:[%s1309] sm:$0xff] %vm1308, %v1307
    %s1311 = scalar_lea.vmem [#allocation1], 354
    %v1312 = vld [vmem:[%s1311] ss:$4 sm:$0xff]
    %1313 = vrot.lane.b32.xlu0 %v1312, 64
    %v1314 = vpop.permute.xlu0 %1313
    %vm1315 = vcmask 785920
    %s1316 = scalar_lea.vmem [#allocation0], 88
    %1317 = vst.msk [vmem:[%s1316] sm:$0xff] %vm1315, %v1314
    %s1318 = scalar_lea.vmem [#allocation1], 482
    %v1319 = vld [vmem:[%s1318] ss:$4 sm:$0xff]
    %1320 = vrot.lane.b32.xlu0 %v1319, 64
    %v1321 = vpop.permute.xlu0 %1320
    %vm1322 = vcmask 785920
    %s1323 = scalar_lea.vmem [#allocation0], 120
    %1324 = vst.msk [vmem:[%s1323] sm:$0xff] %vm1322, %v1321
    %s1325 = scalar_lea.vmem [#allocation1], 1
    %v1326 = vld [vmem:[%s1325] ss:$4 sm:$0xff]
    %1327 = vrot.lane.b32.xlu0 %v1326, 32
    %v1328 = vpop.permute.xlu0 %1327
    %vm1329 = vcmask 523520
    %1330 = vst.msk [vmem:[#allocation0] sm:$0xff] %vm1329, %v1328
    %s1331 = scalar_lea.vmem [#allocation1], 129
    %v1332 = vld [vmem:[%s1331] ss:$4 sm:$0xff]
    %1333 = vrot.lane.b32.xlu0 %v1332, 32
    %v1334 = vpop.permute.xlu0 %1333
    %vm1335 = vcmask 523520
    %s1336 = scalar_lea.vmem [#allocation0], 32
    %1337 = vst.msk [vmem:[%s1336] sm:$0xff] %vm1335, %v1334
    %s1338 = scalar_lea.vmem [#allocation1], 257
    %v1339 = vld [vmem:[%s1338] ss:$4 sm:$0xff]
    %1340 = vrot.lane.b32.xlu0 %v1339, 32
    %v1341 = vpop.permute.xlu0 %1340
    %vm1342 = vcmask 523520
    %s1343 = scalar_lea.vmem [#allocation0], 64
    %1344 = vst.msk [vmem:[%s1343] sm:$0xff] %vm1342, %v1341
    %s1345 = scalar_lea.vmem [#allocation1], 385
    %v1346 = vld [vmem:[%s1345] ss:$4 sm:$0xff]
    %1347 = vrot.lane.b32.xlu0 %v1346, 32
    %v1348 = vpop.permute.xlu0 %1347
    %vm1349 = vcmask 523520
    %s1350 = scalar_lea.vmem [#allocation0], 96
    %1351 = vst.msk [vmem:[%s1350] sm:$0xff] %vm1349, %v1348
    %s1352 = scalar_lea.vmem [#allocation1], 33
    %v1353 = vld [vmem:[%s1352] ss:$4 sm:$0xff]
    %1354 = vrot.lane.b32.xlu0 %v1353, 32
    %v1355 = vpop.permute.xlu0 %1354
    %vm1356 = vcmask 523520
    %s1357 = scalar_lea.vmem [#allocation0], 8
    %1358 = vst.msk [vmem:[%s1357] sm:$0xff] %vm1356, %v1355
    %s1359 = scalar_lea.vmem [#allocation1], 161
    %v1360 = vld [vmem:[%s1359] ss:$4 sm:$0xff]
    %1361 = vrot.lane.b32.xlu0 %v1360, 32
    %v1362 = vpop.permute.xlu0 %1361
    %vm1363 = vcmask 523520
    %s1364 = scalar_lea.vmem [#allocation0], 40
    %1365 = vst.msk [vmem:[%s1364] sm:$0xff] %vm1363, %v1362
    %s1366 = scalar_lea.vmem [#allocation1], 289
    %v1367 = vld [vmem:[%s1366] ss:$4 sm:$0xff]
    %1368 = vrot.lane.b32.xlu0 %v1367, 32
    %v1369 = vpop.permute.xlu0 %1368
    %vm1370 = vcmask 523520
    %s1371 = scalar_lea.vmem [#allocation0], 72
    %1372 = vst.msk [vmem:[%s1371] sm:$0xff] %vm1370, %v1369
    %s1373 = scalar_lea.vmem [#allocation1], 417
    %v1374 = vld [vmem:[%s1373] ss:$4 sm:$0xff]
    %1375 = vrot.lane.b32.xlu0 %v1374, 32
    %v1376 = vpop.permute.xlu0 %1375
    %vm1377 = vcmask 523520
    %s1378 = scalar_lea.vmem [#allocation0], 104
    %1379 = vst.msk [vmem:[%s1378] sm:$0xff] %vm1377, %v1376
    %s1380 = scalar_lea.vmem [#allocation1], 65
    %v1381 = vld [vmem:[%s1380] ss:$4 sm:$0xff]
    %1382 = vrot.lane.b32.xlu0 %v1381, 32
    %v1383 = vpop.permute.xlu0 %1382
    %vm1384 = vcmask 523520
    %s1385 = scalar_lea.vmem [#allocation0], 16
    %1386 = vst.msk [vmem:[%s1385] sm:$0xff] %vm1384, %v1383
    %s1387 = scalar_lea.vmem [#allocation1], 193
    %v1388 = vld [vmem:[%s1387] ss:$4 sm:$0xff]
    %1389 = vrot.lane.b32.xlu0 %v1388, 32
    %v1390 = vpop.permute.xlu0 %1389
    %vm1391 = vcmask 523520
    %s1392 = scalar_lea.vmem [#allocation0], 48
    %1393 = vst.msk [vmem:[%s1392] sm:$0xff] %vm1391, %v1390
    %s1394 = scalar_lea.vmem [#allocation1], 321
    %v1395 = vld [vmem:[%s1394] ss:$4 sm:$0xff]
    %1396 = vrot.lane.b32.xlu0 %v1395, 32
    %v1397 = vpop.permute.xlu0 %1396
    %vm1398 = vcmask 523520
    %s1399 = scalar_lea.vmem [#allocation0], 80
    %1400 = vst.msk [vmem:[%s1399] sm:$0xff] %vm1398, %v1397
    %s1401 = scalar_lea.vmem [#allocation1], 449
    %v1402 = vld [vmem:[%s1401] ss:$4 sm:$0xff]
    %1403 = vrot.lane.b32.xlu0 %v1402, 32
    %v1404 = vpop.permute.xlu0 %1403
    %vm1405 = vcmask 523520
    %s1406 = scalar_lea.vmem [#allocation0], 112
    %1407 = vst.msk [vmem:[%s1406] sm:$0xff] %vm1405, %v1404
    %s1408 = scalar_lea.vmem [#allocation1], 97
    %v1409 = vld [vmem:[%s1408] ss:$4 sm:$0xff]
    %1410 = vrot.lane.b32.xlu0 %v1409, 32
    %v1411 = vpop.permute.xlu0 %1410
    %vm1412 = vcmask 523520
    %s1413 = scalar_lea.vmem [#allocation0], 24
    %1414 = vst.msk [vmem:[%s1413] sm:$0xff] %vm1412, %v1411
    %s1415 = scalar_lea.vmem [#allocation1], 225
    %v1416 = vld [vmem:[%s1415] ss:$4 sm:$0xff]
    %1417 = vrot.lane.b32.xlu0 %v1416, 32
    %v1418 = vpop.permute.xlu0 %1417
    %vm1419 = vcmask 523520
    %s1420 = scalar_lea.vmem [#allocation0], 56
    %1421 = vst.msk [vmem:[%s1420] sm:$0xff] %vm1419, %v1418
    %s1422 = scalar_lea.vmem [#allocation1], 353
    %v1423 = vld [vmem:[%s1422] ss:$4 sm:$0xff]
    %1424 = vrot.lane.b32.xlu0 %v1423, 32
    %v1425 = vpop.permute.xlu0 %1424
    %vm1426 = vcmask 523520
    %s1427 = scalar_lea.vmem [#allocation0], 88
    %1428 = vst.msk [vmem:[%s1427] sm:$0xff] %vm1426, %v1425
    %s1429 = scalar_lea.vmem [#allocation1], 481
    %v1430 = vld [vmem:[%s1429] ss:$4 sm:$0xff]
    %1431 = vrot.lane.b32.xlu0 %v1430, 32
    %v1432 = vpop.permute.xlu0 %1431
    %vm1433 = vcmask 523520
    %s1434 = scalar_lea.vmem [#allocation0], 120
    %1435 = vst.msk [vmem:[%s1434] sm:$0xff] %vm1433, %v1432
    %s1437 = smul.u32 4, 2
    %s1438 = sshllo.u32 0, %s1437
    %s1439 = sshrl.u32 %s1437, 1
    %v1440 = vld [vmem:[#allocation0] sm:%s1438]
    %v1441 = vpack.c.bf16 0.0, %v1440
    %s1442 = sshllo.u32 0, %s1439
    %1443 = vst [vmem:[%s1] sm:%s1442] %v1441
    %s1444 = scalar_lea.vmem [#allocation0], 8
    %v1445 = vld [vmem:[%s1444] sm:%s1438]
    %v1446 = vpack.c.bf16 0.0, %v1445
    %s1447 = sshllo.u32 0, %s1439
    %s1448 = scalar_lea.vmem %s1, 4
    %1449 = vst [vmem:[%s1448] sm:%s1447] %v1446
    %s1450 = scalar_lea.vmem [#allocation0], 16
    %v1451 = vld [vmem:[%s1450] sm:%s1438]
    %v1452 = vpack.c.bf16 0.0, %v1451
    %s1453 = sshllo.u32 0, %s1439
    %s1454 = smul.addr 4, 2
    %s1455 = scalar_lea.vmem %s1, %s1454
    %1456 = vst [vmem:[%s1455] sm:%s1453] %v1452
    %s1457 = scalar_lea.vmem [#allocation0], 24
    %v1458 = vld [vmem:[%s1457] sm:%s1438]
    %v1459 = vpack.c.bf16 0.0, %v1458
    %s1460 = sshllo.u32 0, %s1439
    %s1461 = smul.addr 4, 3
    %s1462 = scalar_lea.vmem %s1, %s1461
    %1463 = vst [vmem:[%s1462] sm:%s1460] %v1459
    %s1464 = scalar_lea.vmem [#allocation0], 32
    %v1465 = vld [vmem:[%s1464] sm:%s1438]
    %v1466 = vpack.c.bf16 0.0, %v1465
    %s1467 = sshllo.u32 0, %s1439
    %s1468 = smul.addr 4, 4
    %s1469 = scalar_lea.vmem %s1, %s1468
    %1470 = vst [vmem:[%s1469] sm:%s1467] %v1466
    %s1471 = scalar_lea.vmem [#allocation0], 40
    %v1472 = vld [vmem:[%s1471] sm:%s1438]
    %v1473 = vpack.c.bf16 0.0, %v1472
    %s1474 = sshllo.u32 0, %s1439
    %s1475 = smul.addr 4, 5
    %s1476 = scalar_lea.vmem %s1, %s1475
    %1477 = vst [vmem:[%s1476] sm:%s1474] %v1473
    %s1478 = scalar_lea.vmem [#allocation0], 48
    %v1479 = vld [vmem:[%s1478] sm:%s1438]
    %v1480 = vpack.c.bf16 0.0, %v1479
    %s1481 = sshllo.u32 0, %s1439
    %s1482 = smul.addr 4, 6
    %s1483 = scalar_lea.vmem %s1, %s1482
    %1484 = vst [vmem:[%s1483] sm:%s1481] %v1480
    %s1485 = scalar_lea.vmem [#allocation0], 56
    %v1486 = vld [vmem:[%s1485] sm:%s1438]
    %v1487 = vpack.c.bf16 0.0, %v1486
    %s1488 = sshllo.u32 0, %s1439
    %s1489 = smul.addr 4, 7
    %s1490 = scalar_lea.vmem %s1, %s1489
    %1491 = vst [vmem:[%s1490] sm:%s1488] %v1487
    %s1492 = scalar_lea.vmem [#allocation0], 64
    %v1493 = vld [vmem:[%s1492] sm:%s1438]
    %v1494 = vpack.c.bf16 0.0, %v1493
    %s1495 = sshllo.u32 0, %s1439
    %s1496 = smul.addr 4, 8
    %s1497 = scalar_lea.vmem %s1, %s1496
    %1498 = vst [vmem:[%s1497] sm:%s1495] %v1494
    %s1499 = scalar_lea.vmem [#allocation0], 72
    %v1500 = vld [vmem:[%s1499] sm:%s1438]
    %v1501 = vpack.c.bf16 0.0, %v1500
    %s1502 = sshllo.u32 0, %s1439
    %s1503 = smul.addr 4, 9
    %s1504 = scalar_lea.vmem %s1, %s1503
    %1505 = vst [vmem:[%s1504] sm:%s1502] %v1501
    %s1506 = scalar_lea.vmem [#allocation0], 80
    %v1507 = vld [vmem:[%s1506] sm:%s1438]
    %v1508 = vpack.c.bf16 0.0, %v1507
    %s1509 = sshllo.u32 0, %s1439
    %s1510 = smul.addr 4, 10
    %s1511 = scalar_lea.vmem %s1, %s1510
    %1512 = vst [vmem:[%s1511] sm:%s1509] %v1508
    %s1513 = scalar_lea.vmem [#allocation0], 88
    %v1514 = vld [vmem:[%s1513] sm:%s1438]
    %v1515 = vpack.c.bf16 0.0, %v1514
    %s1516 = sshllo.u32 0, %s1439
    %s1517 = smul.addr 4, 11
    %s1518 = scalar_lea.vmem %s1, %s1517
    %1519 = vst [vmem:[%s1518] sm:%s1516] %v1515
    %s1520 = scalar_lea.vmem [#allocation0], 96
    %v1521 = vld [vmem:[%s1520] sm:%s1438]
    %v1522 = vpack.c.bf16 0.0, %v1521
    %s1523 = sshllo.u32 0, %s1439
    %s1524 = smul.addr 4, 12
    %s1525 = scalar_lea.vmem %s1, %s1524
    %1526 = vst [vmem:[%s1525] sm:%s1523] %v1522
    %s1527 = scalar_lea.vmem [#allocation0], 104
    %v1528 = vld [vmem:[%s1527] sm:%s1438]
    %v1529 = vpack.c.bf16 0.0, %v1528
    %s1530 = sshllo.u32 0, %s1439
    %s1531 = smul.addr 4, 13
    %s1532 = scalar_lea.vmem %s1, %s1531
    %1533 = vst [vmem:[%s1532] sm:%s1530] %v1529
    %s1534 = scalar_lea.vmem [#allocation0], 112
    %v1535 = vld [vmem:[%s1534] sm:%s1438]
    %v1536 = vpack.c.bf16 0.0, %v1535
    %s1537 = sshllo.u32 0, %s1439
    %s1538 = smul.addr 4, 14
    %s1539 = scalar_lea.vmem %s1, %s1538
    %1540 = vst [vmem:[%s1539] sm:%s1537] %v1536
    %s1541 = scalar_lea.vmem [#allocation0], 120
    %v1542 = vld [vmem:[%s1541] sm:%s1438]
    %v1543 = vpack.c.bf16 0.0, %v1542
    %s1544 = sshllo.u32 0, %s1439
    %s1545 = smul.addr 4, 15
    %s1546 = scalar_lea.vmem %s1, %s1545
    %1547 = vst [vmem:[%s1546] sm:%s1544] %v1543

// kernel: squeeze.25
$region0: #{squeeze.25}
  %s0 = inlined_call_operand.vmem [shape: bf16[1,2,16,16,64], index: 0, kind: input, shape index: {}]
  %s1 = inlined_call_operand.vmem [shape: bf16[2,1,128,128], index: 1, kind: output, shape index: {}]
  $region1: #{squeeze.25} parent=0
    #allocation0 [shape = 'u8[131072]{0}', space=vmem, size = 0x20000, scoped, tag = 'scoped mem for output reshape']
    #allocation1 [shape = 'u8[262144]{0}', space=vmem, size = 0x40000, scoped, tag = 'scoped mem for input reshape']
    %s3 = smul.u32 4, 2
    %s4 = sshllo.u32 0, %s3
    %s5 = smul.addr 4, 63
    %s6 = scalar_lea.vmem %s0, %s5
    %s7 = sshrl.u32 %s4, 1
    %s8 = sor.u32 %s4, %s7
    %s9 = sand.u32 %s8, 85
    %s10 = sshrl.u32 %s9, 1
    %s11 = sor.u32 %s9, %s10
    %s12 = sand.u32 51, %s11
    %s13 = sshrl.u32 %s12, 2
    %s14 = sor.u32 %s12, %s13
    %s15 = sand.u32 15, %s14
    %v16 = vld [vmem:[%s6] sm:%s15]
    %v17 = vunpack.c.l.bf16 %v16
    %v18 = vunpack.c.h.bf16 %v16
    %s19 = scalar_lea.vmem [#allocation1], 504
    %20 = vst [vmem:[%s19] sm:%s4] %v17
    %s21 = smul.addr 4, 62
    %s22 = scalar_lea.vmem %s0, %s21
    %s23 = sshrl.u32 %s4, 1
    %s24 = sor.u32 %s4, %s23
    %s25 = sand.u32 %s24, 85
    %s26 = sshrl.u32 %s25, 1
    %s27 = sor.u32 %s25, %s26
    %s28 = sand.u32 51, %s27
    %s29 = sshrl.u32 %s28, 2
    %s30 = sor.u32 %s28, %s29
    %s31 = sand.u32 15, %s30
    %v32 = vld [vmem:[%s22] sm:%s31]
    %v33 = vunpack.c.l.bf16 %v32
    %v34 = vunpack.c.h.bf16 %v32
    %s35 = scalar_lea.vmem [#allocation1], 496
    %36 = vst [vmem:[%s35] sm:%s4] %v33
    %s37 = smul.addr 4, 61
    %s38 = scalar_lea.vmem %s0, %s37
    %s39 = sshrl.u32 %s4, 1
    %s40 = sor.u32 %s4, %s39
    %s41 = sand.u32 %s40, 85
    %s42 = sshrl.u32 %s41, 1
    %s43 = sor.u32 %s41, %s42
    %s44 = sand.u32 51, %s43
    %s45 = sshrl.u32 %s44, 2
    %s46 = sor.u32 %s44, %s45
    %s47 = sand.u32 15, %s46
    %v48 = vld [vmem:[%s38] sm:%s47]
    %v49 = vunpack.c.l.bf16 %v48
    %v50 = vunpack.c.h.bf16 %v48
    %s51 = scalar_lea.vmem [#allocation1], 488
    %52 = vst [vmem:[%s51] sm:%s4] %v49
    %s53 = smul.addr 4, 60
    %s54 = scalar_lea.vmem %s0, %s53
    %s55 = sshrl.u32 %s4, 1
    %s56 = sor.u32 %s4, %s55
    %s57 = sand.u32 %s56, 85
    %s58 = sshrl.u32 %s57, 1
    %s59 = sor.u32 %s57, %s58
    %s60 = sand.u32 51, %s59
    %s61 = sshrl.u32 %s60, 2
    %s62 = sor.u32 %s60, %s61
    %s63 = sand.u32 15, %s62
    %v64 = vld [vmem:[%s54] sm:%s63]
    %v65 = vunpack.c.l.bf16 %v64
    %v66 = vunpack.c.h.bf16 %v64
    %s67 = scalar_lea.vmem [#allocation1], 480
    %68 = vst [vmem:[%s67] sm:%s4] %v65
    %s69 = smul.addr 4, 59
    %s70 = scalar_lea.vmem %s0, %s69
    %s71 = sshrl.u32 %s4, 1
    %s72 = sor.u32 %s4, %s71
    %s73 = sand.u32 %s72, 85
    %s74 = sshrl.u32 %s73, 1
    %s75 = sor.u32 %s73, %s74
    %s76 = sand.u32 51, %s75
    %s77 = sshrl.u32 %s76, 2
    %s78 = sor.u32 %s76, %s77
    %s79 = sand.u32 15, %s78
    %v80 = vld [vmem:[%s70] sm:%s79]
    %v81 = vunpack.c.l.bf16 %v80
    %v82 = vunpack.c.h.bf16 %v80
    %s83 = scalar_lea.vmem [#allocation1], 472
    %84 = vst [vmem:[%s83] sm:%s4] %v81
    %s85 = smul.addr 4, 58
    %s86 = scalar_lea.vmem %s0, %s85
    %s87 = sshrl.u32 %s4, 1
    %s88 = sor.u32 %s4, %s87
    %s89 = sand.u32 %s88, 85
    %s90 = sshrl.u32 %s89, 1
    %s91 = sor.u32 %s89, %s90
    %s92 = sand.u32 51, %s91
    %s93 = sshrl.u32 %s92, 2
    %s94 = sor.u32 %s92, %s93
    %s95 = sand.u32 15, %s94
    %v96 = vld [vmem:[%s86] sm:%s95]
    %v97 = vunpack.c.l.bf16 %v96
    %v98 = vunpack.c.h.bf16 %v96
    %s99 = scalar_lea.vmem [#allocation1], 464
    %100 = vst [vmem:[%s99] sm:%s4] %v97
    %s101 = smul.addr 4, 57
    %s102 = scalar_lea.vmem %s0, %s101
    %s103 = sshrl.u32 %s4, 1
    %s104 = sor.u32 %s4, %s103
    %s105 = sand.u32 %s104, 85
    %s106 = sshrl.u32 %s105, 1
    %s107 = sor.u32 %s105, %s106
    %s108 = sand.u32 51, %s107
    %s109 = sshrl.u32 %s108, 2
    %s110 = sor.u32 %s108, %s109
    %s111 = sand.u32 15, %s110
    %v112 = vld [vmem:[%s102] sm:%s111]
    %v113 = vunpack.c.l.bf16 %v112
    %v114 = vunpack.c.h.bf16 %v112
    %s115 = scalar_lea.vmem [#allocation1], 456
    %116 = vst [vmem:[%s115] sm:%s4] %v113
    %s117 = smul.addr 4, 56
    %s118 = scalar_lea.vmem %s0, %s117
    %s119 = sshrl.u32 %s4, 1
    %s120 = sor.u32 %s4, %s119
    %s121 = sand.u32 %s120, 85
    %s122 = sshrl.u32 %s121, 1
    %s123 = sor.u32 %s121, %s122
    %s124 = sand.u32 51, %s123
    %s125 = sshrl.u32 %s124, 2
    %s126 = sor.u32 %s124, %s125
    %s127 = sand.u32 15, %s126
    %v128 = vld [vmem:[%s118] sm:%s127]
    %v129 = vunpack.c.l.bf16 %v128
    %v130 = vunpack.c.h.bf16 %v128
    %s131 = scalar_lea.vmem [#allocation1], 448
    %132 = vst [vmem:[%s131] sm:%s4] %v129
    %s133 = smul.addr 4, 55
    %s134 = scalar_lea.vmem %s0, %s133
    %s135 = sshrl.u32 %s4, 1
    %s136 = sor.u32 %s4, %s135
    %s137 = sand.u32 %s136, 85
    %s138 = sshrl.u32 %s137, 1
    %s139 = sor.u32 %s137, %s138
    %s140 = sand.u32 51, %s139
    %s141 = sshrl.u32 %s140, 2
    %s142 = sor.u32 %s140, %s141
    %s143 = sand.u32 15, %s142
    %v144 = vld [vmem:[%s134] sm:%s143]
    %v145 = vunpack.c.l.bf16 %v144
    %v146 = vunpack.c.h.bf16 %v144
    %s147 = scalar_lea.vmem [#allocation1], 440
    %148 = vst [vmem:[%s147] sm:%s4] %v145
    %s149 = smul.addr 4, 54
    %s150 = scalar_lea.vmem %s0, %s149
    %s151 = sshrl.u32 %s4, 1
    %s152 = sor.u32 %s4, %s151
    %s153 = sand.u32 %s152, 85
    %s154 = sshrl.u32 %s153, 1
    %s155 = sor.u32 %s153, %s154
    %s156 = sand.u32 51, %s155
    %s157 = sshrl.u32 %s156, 2
    %s158 = sor.u32 %s156, %s157
    %s159 = sand.u32 15, %s158
    %v160 = vld [vmem:[%s150] sm:%s159]
    %v161 = vunpack.c.l.bf16 %v160
    %v162 = vunpack.c.h.bf16 %v160
    %s163 = scalar_lea.vmem [#allocation1], 432
    %164 = vst [vmem:[%s163] sm:%s4] %v161
    %s165 = smul.addr 4, 53
    %s166 = scalar_lea.vmem %s0, %s165
    %s167 = sshrl.u32 %s4, 1
    %s168 = sor.u32 %s4, %s167
    %s169 = sand.u32 %s168, 85
    %s170 = sshrl.u32 %s169, 1
    %s171 = sor.u32 %s169, %s170
    %s172 = sand.u32 51, %s171
    %s173 = sshrl.u32 %s172, 2
    %s174 = sor.u32 %s172, %s173
    %s175 = sand.u32 15, %s174
    %v176 = vld [vmem:[%s166] sm:%s175]
    %v177 = vunpack.c.l.bf16 %v176
    %v178 = vunpack.c.h.bf16 %v176
    %s179 = scalar_lea.vmem [#allocation1], 424
    %180 = vst [vmem:[%s179] sm:%s4] %v177
    %s181 = smul.addr 4, 52
    %s182 = scalar_lea.vmem %s0, %s181
    %s183 = sshrl.u32 %s4, 1
    %s184 = sor.u32 %s4, %s183
    %s185 = sand.u32 %s184, 85
    %s186 = sshrl.u32 %s185, 1
    %s187 = sor.u32 %s185, %s186
    %s188 = sand.u32 51, %s187
    %s189 = sshrl.u32 %s188, 2
    %s190 = sor.u32 %s188, %s189
    %s191 = sand.u32 15, %s190
    %v192 = vld [vmem:[%s182] sm:%s191]
    %v193 = vunpack.c.l.bf16 %v192
    %v194 = vunpack.c.h.bf16 %v192
    %s195 = scalar_lea.vmem [#allocation1], 416
    %196 = vst [vmem:[%s195] sm:%s4] %v193
    %s197 = smul.addr 4, 51
    %s198 = scalar_lea.vmem %s0, %s197
    %s199 = sshrl.u32 %s4, 1
    %s200 = sor.u32 %s4, %s199
    %s201 = sand.u32 %s200, 85
    %s202 = sshrl.u32 %s201, 1
    %s203 = sor.u32 %s201, %s202
    %s204 = sand.u32 51, %s203
    %s205 = sshrl.u32 %s204, 2
    %s206 = sor.u32 %s204, %s205
    %s207 = sand.u32 15, %s206
    %v208 = vld [vmem:[%s198] sm:%s207]
    %v209 = vunpack.c.l.bf16 %v208
    %v210 = vunpack.c.h.bf16 %v208
    %s211 = scalar_lea.vmem [#allocation1], 408
    %212 = vst [vmem:[%s211] sm:%s4] %v209
    %s213 = smul.addr 4, 50
    %s214 = scalar_lea.vmem %s0, %s213
    %s215 = sshrl.u32 %s4, 1
    %s216 = sor.u32 %s4, %s215
    %s217 = sand.u32 %s216, 85
    %s218 = sshrl.u32 %s217, 1
    %s219 = sor.u32 %s217, %s218
    %s220 = sand.u32 51, %s219
    %s221 = sshrl.u32 %s220, 2
    %s222 = sor.u32 %s220, %s221
    %s223 = sand.u32 15, %s222
    %v224 = vld [vmem:[%s214] sm:%s223]
    %v225 = vunpack.c.l.bf16 %v224
    %v226 = vunpack.c.h.bf16 %v224
    %s227 = scalar_lea.vmem [#allocation1], 400
    %228 = vst [vmem:[%s227] sm:%s4] %v225
    %s229 = smul.addr 4, 49
    %s230 = scalar_lea.vmem %s0, %s229
    %s231 = sshrl.u32 %s4, 1
    %s232 = sor.u32 %s4, %s231
    %s233 = sand.u32 %s232, 85
    %s234 = sshrl.u32 %s233, 1
    %s235 = sor.u32 %s233, %s234
    %s236 = sand.u32 51, %s235
    %s237 = sshrl.u32 %s236, 2
    %s238 = sor.u32 %s236, %s237
    %s239 = sand.u32 15, %s238
    %v240 = vld [vmem:[%s230] sm:%s239]
    %v241 = vunpack.c.l.bf16 %v240
    %v242 = vunpack.c.h.bf16 %v240
    %s243 = scalar_lea.vmem [#allocation1], 392
    %244 = vst [vmem:[%s243] sm:%s4] %v241
    %s245 = smul.addr 4, 48
    %s246 = scalar_lea.vmem %s0, %s245
    %s247 = sshrl.u32 %s4, 1
    %s248 = sor.u32 %s4, %s247
    %s249 = sand.u32 %s248, 85
    %s250 = sshrl.u32 %s249, 1
    %s251 = sor.u32 %s249, %s250
    %s252 = sand.u32 51, %s251
    %s253 = sshrl.u32 %s252, 2
    %s254 = sor.u32 %s252, %s253
    %s255 = sand.u32 15, %s254
    %v256 = vld [vmem:[%s246] sm:%s255]
    %v257 = vunpack.c.l.bf16 %v256
    %v258 = vunpack.c.h.bf16 %v256
    %s259 = scalar_lea.vmem [#allocation1], 384
    %260 = vst [vmem:[%s259] sm:%s4] %v257
    %s261 = smul.addr 4, 47
    %s262 = scalar_lea.vmem %s0, %s261
    %s263 = sshrl.u32 %s4, 1
    %s264 = sor.u32 %s4, %s263
    %s265 = sand.u32 %s264, 85
    %s266 = sshrl.u32 %s265, 1
    %s267 = sor.u32 %s265, %s266
    %s268 = sand.u32 51, %s267
    %s269 = sshrl.u32 %s268, 2
    %s270 = sor.u32 %s268, %s269
    %s271 = sand.u32 15, %s270
    %v272 = vld [vmem:[%s262] sm:%s271]
    %v273 = vunpack.c.l.bf16 %v272
    %v274 = vunpack.c.h.bf16 %v272
    %s275 = scalar_lea.vmem [#allocation1], 376
    %276 = vst [vmem:[%s275] sm:%s4] %v273
    %s277 = smul.addr 4, 46
    %s278 = scalar_lea.vmem %s0, %s277
    %s279 = sshrl.u32 %s4, 1
    %s280 = sor.u32 %s4, %s279
    %s281 = sand.u32 %s280, 85
    %s282 = sshrl.u32 %s281, 1
    %s283 = sor.u32 %s281, %s282
    %s284 = sand.u32 51, %s283
    %s285 = sshrl.u32 %s284, 2
    %s286 = sor.u32 %s284, %s285
    %s287 = sand.u32 15, %s286
    %v288 = vld [vmem:[%s278] sm:%s287]
    %v289 = vunpack.c.l.bf16 %v288
    %v290 = vunpack.c.h.bf16 %v288
    %s291 = scalar_lea.vmem [#allocation1], 368
    %292 = vst [vmem:[%s291] sm:%s4] %v289
    %s293 = smul.addr 4, 45
    %s294 = scalar_lea.vmem %s0, %s293
    %s295 = sshrl.u32 %s4, 1
    %s296 = sor.u32 %s4, %s295
    %s297 = sand.u32 %s296, 85
    %s298 = sshrl.u32 %s297, 1
    %s299 = sor.u32 %s297, %s298
    %s300 = sand.u32 51, %s299
    %s301 = sshrl.u32 %s300, 2
    %s302 = sor.u32 %s300, %s301
    %s303 = sand.u32 15, %s302
    %v304 = vld [vmem:[%s294] sm:%s303]
    %v305 = vunpack.c.l.bf16 %v304
    %v306 = vunpack.c.h.bf16 %v304
    %s307 = scalar_lea.vmem [#allocation1], 360
    %308 = vst [vmem:[%s307] sm:%s4] %v305
    %s309 = smul.addr 4, 44
    %s310 = scalar_lea.vmem %s0, %s309
    %s311 = sshrl.u32 %s4, 1
    %s312 = sor.u32 %s4, %s311
    %s313 = sand.u32 %s312, 85
    %s314 = sshrl.u32 %s313, 1
    %s315 = sor.u32 %s313, %s314
    %s316 = sand.u32 51, %s315
    %s317 = sshrl.u32 %s316, 2
    %s318 = sor.u32 %s316, %s317
    %s319 = sand.u32 15, %s318
    %v320 = vld [vmem:[%s310] sm:%s319]
    %v321 = vunpack.c.l.bf16 %v320
    %v322 = vunpack.c.h.bf16 %v320
    %s323 = scalar_lea.vmem [#allocation1], 352
    %324 = vst [vmem:[%s323] sm:%s4] %v321
    %s325 = smul.addr 4, 43
    %s326 = scalar_lea.vmem %s0, %s325
    %s327 = sshrl.u32 %s4, 1
    %s328 = sor.u32 %s4, %s327
    %s329 = sand.u32 %s328, 85
    %s330 = sshrl.u32 %s329, 1
    %s331 = sor.u32 %s329, %s330
    %s332 = sand.u32 51, %s331
    %s333 = sshrl.u32 %s332, 2
    %s334 = sor.u32 %s332, %s333
    %s335 = sand.u32 15, %s334
    %v336 = vld [vmem:[%s326] sm:%s335]
    %v337 = vunpack.c.l.bf16 %v336
    %v338 = vunpack.c.h.bf16 %v336
    %s339 = scalar_lea.vmem [#allocation1], 344
    %340 = vst [vmem:[%s339] sm:%s4] %v337
    %s341 = smul.addr 4, 42
    %s342 = scalar_lea.vmem %s0, %s341
    %s343 = sshrl.u32 %s4, 1
    %s344 = sor.u32 %s4, %s343
    %s345 = sand.u32 %s344, 85
    %s346 = sshrl.u32 %s345, 1
    %s347 = sor.u32 %s345, %s346
    %s348 = sand.u32 51, %s347
    %s349 = sshrl.u32 %s348, 2
    %s350 = sor.u32 %s348, %s349
    %s351 = sand.u32 15, %s350
    %v352 = vld [vmem:[%s342] sm:%s351]
    %v353 = vunpack.c.l.bf16 %v352
    %v354 = vunpack.c.h.bf16 %v352
    %s355 = scalar_lea.vmem [#allocation1], 336
    %356 = vst [vmem:[%s355] sm:%s4] %v353
    %s357 = smul.addr 4, 41
    %s358 = scalar_lea.vmem %s0, %s357
    %s359 = sshrl.u32 %s4, 1
    %s360 = sor.u32 %s4, %s359
    %s361 = sand.u32 %s360, 85
    %s362 = sshrl.u32 %s361, 1
    %s363 = sor.u32 %s361, %s362
    %s364 = sand.u32 51, %s363
    %s365 = sshrl.u32 %s364, 2
    %s366 = sor.u32 %s364, %s365
    %s367 = sand.u32 15, %s366
    %v368 = vld [vmem:[%s358] sm:%s367]
    %v369 = vunpack.c.l.bf16 %v368
    %v370 = vunpack.c.h.bf16 %v368
    %s371 = scalar_lea.vmem [#allocation1], 328
    %372 = vst [vmem:[%s371] sm:%s4] %v369
    %s373 = smul.addr 4, 40
    %s374 = scalar_lea.vmem %s0, %s373
    %s375 = sshrl.u32 %s4, 1
    %s376 = sor.u32 %s4, %s375
    %s377 = sand.u32 %s376, 85
    %s378 = sshrl.u32 %s377, 1
    %s379 = sor.u32 %s377, %s378
    %s380 = sand.u32 51, %s379
    %s381 = sshrl.u32 %s380, 2
    %s382 = sor.u32 %s380, %s381
    %s383 = sand.u32 15, %s382
    %v384 = vld [vmem:[%s374] sm:%s383]
    %v385 = vunpack.c.l.bf16 %v384
    %v386 = vunpack.c.h.bf16 %v384
    %s387 = scalar_lea.vmem [#allocation1], 320
    %388 = vst [vmem:[%s387] sm:%s4] %v385
    %s389 = smul.addr 4, 39
    %s390 = scalar_lea.vmem %s0, %s389
    %s391 = sshrl.u32 %s4, 1
    %s392 = sor.u32 %s4, %s391
    %s393 = sand.u32 %s392, 85
    %s394 = sshrl.u32 %s393, 1
    %s395 = sor.u32 %s393, %s394
    %s396 = sand.u32 51, %s395
    %s397 = sshrl.u32 %s396, 2
    %s398 = sor.u32 %s396, %s397
    %s399 = sand.u32 15, %s398
    %v400 = vld [vmem:[%s390] sm:%s399]
    %v401 = vunpack.c.l.bf16 %v400
    %v402 = vunpack.c.h.bf16 %v400
    %s403 = scalar_lea.vmem [#allocation1], 312
    %404 = vst [vmem:[%s403] sm:%s4] %v401
    %s405 = smul.addr 4, 38
    %s406 = scalar_lea.vmem %s0, %s405
    %s407 = sshrl.u32 %s4, 1
    %s408 = sor.u32 %s4, %s407
    %s409 = sand.u32 %s408, 85
    %s410 = sshrl.u32 %s409, 1
    %s411 = sor.u32 %s409, %s410
    %s412 = sand.u32 51, %s411
    %s413 = sshrl.u32 %s412, 2
    %s414 = sor.u32 %s412, %s413
    %s415 = sand.u32 15, %s414
    %v416 = vld [vmem:[%s406] sm:%s415]
    %v417 = vunpack.c.l.bf16 %v416
    %v418 = vunpack.c.h.bf16 %v416
    %s419 = scalar_lea.vmem [#allocation1], 304
    %420 = vst [vmem:[%s419] sm:%s4] %v417
    %s421 = smul.addr 4, 37
    %s422 = scalar_lea.vmem %s0, %s421
    %s423 = sshrl.u32 %s4, 1
    %s424 = sor.u32 %s4, %s423
    %s425 = sand.u32 %s424, 85
    %s426 = sshrl.u32 %s425, 1
    %s427 = sor.u32 %s425, %s426
    %s428 = sand.u32 51, %s427
    %s429 = sshrl.u32 %s428, 2
    %s430 = sor.u32 %s428, %s429
    %s431 = sand.u32 15, %s430
    %v432 = vld [vmem:[%s422] sm:%s431]
    %v433 = vunpack.c.l.bf16 %v432
    %v434 = vunpack.c.h.bf16 %v432
    %s435 = scalar_lea.vmem [#allocation1], 296
    %436 = vst [vmem:[%s435] sm:%s4] %v433
    %s437 = smul.addr 4, 36
    %s438 = scalar_lea.vmem %s0, %s437
    %s439 = sshrl.u32 %s4, 1
    %s440 = sor.u32 %s4, %s439
    %s441 = sand.u32 %s440, 85
    %s442 = sshrl.u32 %s441, 1
    %s443 = sor.u32 %s441, %s442
    %s444 = sand.u32 51, %s443
    %s445 = sshrl.u32 %s444, 2
    %s446 = sor.u32 %s444, %s445
    %s447 = sand.u32 15, %s446
    %v448 = vld [vmem:[%s438] sm:%s447]
    %v449 = vunpack.c.l.bf16 %v448
    %v450 = vunpack.c.h.bf16 %v448
    %s451 = scalar_lea.vmem [#allocation1], 288
    %452 = vst [vmem:[%s451] sm:%s4] %v449
    %s453 = smul.addr 4, 35
    %s454 = scalar_lea.vmem %s0, %s453
    %s455 = sshrl.u32 %s4, 1
    %s456 = sor.u32 %s4, %s455
    %s457 = sand.u32 %s456, 85
    %s458 = sshrl.u32 %s457, 1
    %s459 = sor.u32 %s457, %s458
    %s460 = sand.u32 51, %s459
    %s461 = sshrl.u32 %s460, 2
    %s462 = sor.u32 %s460, %s461
    %s463 = sand.u32 15, %s462
    %v464 = vld [vmem:[%s454] sm:%s463]
    %v465 = vunpack.c.l.bf16 %v464
    %v466 = vunpack.c.h.bf16 %v464
    %s467 = scalar_lea.vmem [#allocation1], 280
    %468 = vst [vmem:[%s467] sm:%s4] %v465
    %s469 = smul.addr 4, 34
    %s470 = scalar_lea.vmem %s0, %s469
    %s471 = sshrl.u32 %s4, 1
    %s472 = sor.u32 %s4, %s471
    %s473 = sand.u32 %s472, 85
    %s474 = sshrl.u32 %s473, 1
    %s475 = sor.u32 %s473, %s474
    %s476 = sand.u32 51, %s475
    %s477 = sshrl.u32 %s476, 2
    %s478 = sor.u32 %s476, %s477
    %s479 = sand.u32 15, %s478
    %v480 = vld [vmem:[%s470] sm:%s479]
    %v481 = vunpack.c.l.bf16 %v480
    %v482 = vunpack.c.h.bf16 %v480
    %s483 = scalar_lea.vmem [#allocation1], 272
    %484 = vst [vmem:[%s483] sm:%s4] %v481
    %s485 = smul.addr 4, 33
    %s486 = scalar_lea.vmem %s0, %s485
    %s487 = sshrl.u32 %s4, 1
    %s488 = sor.u32 %s4, %s487
    %s489 = sand.u32 %s488, 85
    %s490 = sshrl.u32 %s489, 1
    %s491 = sor.u32 %s489, %s490
    %s492 = sand.u32 51, %s491
    %s493 = sshrl.u32 %s492, 2
    %s494 = sor.u32 %s492, %s493
    %s495 = sand.u32 15, %s494
    %v496 = vld [vmem:[%s486] sm:%s495]
    %v497 = vunpack.c.l.bf16 %v496
    %v498 = vunpack.c.h.bf16 %v496
    %s499 = scalar_lea.vmem [#allocation1], 264
    %500 = vst [vmem:[%s499] sm:%s4] %v497
    %s501 = smul.addr 4, 32
    %s502 = scalar_lea.vmem %s0, %s501
    %s503 = sshrl.u32 %s4, 1
    %s504 = sor.u32 %s4, %s503
    %s505 = sand.u32 %s504, 85
    %s506 = sshrl.u32 %s505, 1
    %s507 = sor.u32 %s505, %s506
    %s508 = sand.u32 51, %s507
    %s509 = sshrl.u32 %s508, 2
    %s510 = sor.u32 %s508, %s509
    %s511 = sand.u32 15, %s510
    %v512 = vld [vmem:[%s502] sm:%s511]
    %v513 = vunpack.c.l.bf16 %v512
    %v514 = vunpack.c.h.bf16 %v512
    %s515 = scalar_lea.vmem [#allocation1], 256
    %516 = vst [vmem:[%s515] sm:%s4] %v513
    %s517 = smul.addr 4, 31
    %s518 = scalar_lea.vmem %s0, %s517
    %s519 = sshrl.u32 %s4, 1
    %s520 = sor.u32 %s4, %s519
    %s521 = sand.u32 %s520, 85
    %s522 = sshrl.u32 %s521, 1
    %s523 = sor.u32 %s521, %s522
    %s524 = sand.u32 51, %s523
    %s525 = sshrl.u32 %s524, 2
    %s526 = sor.u32 %s524, %s525
    %s527 = sand.u32 15, %s526
    %v528 = vld [vmem:[%s518] sm:%s527]
    %v529 = vunpack.c.l.bf16 %v528
    %v530 = vunpack.c.h.bf16 %v528
    %s531 = scalar_lea.vmem [#allocation1], 248
    %532 = vst [vmem:[%s531] sm:%s4] %v529
    %s533 = smul.addr 4, 30
    %s534 = scalar_lea.vmem %s0, %s533
    %s535 = sshrl.u32 %s4, 1
    %s536 = sor.u32 %s4, %s535
    %s537 = sand.u32 %s536, 85
    %s538 = sshrl.u32 %s537, 1
    %s539 = sor.u32 %s537, %s538
    %s540 = sand.u32 51, %s539
    %s541 = sshrl.u32 %s540, 2
    %s542 = sor.u32 %s540, %s541
    %s543 = sand.u32 15, %s542
    %v544 = vld [vmem:[%s534] sm:%s543]
    %v545 = vunpack.c.l.bf16 %v544
    %v546 = vunpack.c.h.bf16 %v544
    %s547 = scalar_lea.vmem [#allocation1], 240
    %548 = vst [vmem:[%s547] sm:%s4] %v545
    %s549 = smul.addr 4, 29
    %s550 = scalar_lea.vmem %s0, %s549
    %s551 = sshrl.u32 %s4, 1
    %s552 = sor.u32 %s4, %s551
    %s553 = sand.u32 %s552, 85
    %s554 = sshrl.u32 %s553, 1
    %s555 = sor.u32 %s553, %s554
    %s556 = sand.u32 51, %s555
    %s557 = sshrl.u32 %s556, 2
    %s558 = sor.u32 %s556, %s557
    %s559 = sand.u32 15, %s558
    %v560 = vld [vmem:[%s550] sm:%s559]
    %v561 = vunpack.c.l.bf16 %v560
    %v562 = vunpack.c.h.bf16 %v560
    %s563 = scalar_lea.vmem [#allocation1], 232
    %564 = vst [vmem:[%s563] sm:%s4] %v561
    %s565 = smul.addr 4, 28
    %s566 = scalar_lea.vmem %s0, %s565
    %s567 = sshrl.u32 %s4, 1
    %s568 = sor.u32 %s4, %s567
    %s569 = sand.u32 %s568, 85
    %s570 = sshrl.u32 %s569, 1
    %s571 = sor.u32 %s569, %s570
    %s572 = sand.u32 51, %s571
    %s573 = sshrl.u32 %s572, 2
    %s574 = sor.u32 %s572, %s573
    %s575 = sand.u32 15, %s574
    %v576 = vld [vmem:[%s566] sm:%s575]
    %v577 = vunpack.c.l.bf16 %v576
    %v578 = vunpack.c.h.bf16 %v576
    %s579 = scalar_lea.vmem [#allocation1], 224
    %580 = vst [vmem:[%s579] sm:%s4] %v577
    %s581 = smul.addr 4, 27
    %s582 = scalar_lea.vmem %s0, %s581
    %s583 = sshrl.u32 %s4, 1
    %s584 = sor.u32 %s4, %s583
    %s585 = sand.u32 %s584, 85
    %s586 = sshrl.u32 %s585, 1
    %s587 = sor.u32 %s585, %s586
    %s588 = sand.u32 51, %s587
    %s589 = sshrl.u32 %s588, 2
    %s590 = sor.u32 %s588, %s589
    %s591 = sand.u32 15, %s590
    %v592 = vld [vmem:[%s582] sm:%s591]
    %v593 = vunpack.c.l.bf16 %v592
    %v594 = vunpack.c.h.bf16 %v592
    %s595 = scalar_lea.vmem [#allocation1], 216
    %596 = vst [vmem:[%s595] sm:%s4] %v593
    %s597 = smul.addr 4, 26
    %s598 = scalar_lea.vmem %s0, %s597
    %s599 = sshrl.u32 %s4, 1
    %s600 = sor.u32 %s4, %s599
    %s601 = sand.u32 %s600, 85
    %s602 = sshrl.u32 %s601, 1
    %s603 = sor.u32 %s601, %s602
    %s604 = sand.u32 51, %s603
    %s605 = sshrl.u32 %s604, 2
    %s606 = sor.u32 %s604, %s605
    %s607 = sand.u32 15, %s606
    %v608 = vld [vmem:[%s598] sm:%s607]
    %v609 = vunpack.c.l.bf16 %v608
    %v610 = vunpack.c.h.bf16 %v608
    %s611 = scalar_lea.vmem [#allocation1], 208
    %612 = vst [vmem:[%s611] sm:%s4] %v609
    %s613 = smul.addr 4, 25
    %s614 = scalar_lea.vmem %s0, %s613
    %s615 = sshrl.u32 %s4, 1
    %s616 = sor.u32 %s4, %s615
    %s617 = sand.u32 %s616, 85
    %s618 = sshrl.u32 %s617, 1
    %s619 = sor.u32 %s617, %s618
    %s620 = sand.u32 51, %s619
    %s621 = sshrl.u32 %s620, 2
    %s622 = sor.u32 %s620, %s621
    %s623 = sand.u32 15, %s622
    %v624 = vld [vmem:[%s614] sm:%s623]
    %v625 = vunpack.c.l.bf16 %v624
    %v626 = vunpack.c.h.bf16 %v624
    %s627 = scalar_lea.vmem [#allocation1], 200
    %628 = vst [vmem:[%s627] sm:%s4] %v625
    %s629 = smul.addr 4, 24
    %s630 = scalar_lea.vmem %s0, %s629
    %s631 = sshrl.u32 %s4, 1
    %s632 = sor.u32 %s4, %s631
    %s633 = sand.u32 %s632, 85
    %s634 = sshrl.u32 %s633, 1
    %s635 = sor.u32 %s633, %s634
    %s636 = sand.u32 51, %s635
    %s637 = sshrl.u32 %s636, 2
    %s638 = sor.u32 %s636, %s637
    %s639 = sand.u32 15, %s638
    %v640 = vld [vmem:[%s630] sm:%s639]
    %v641 = vunpack.c.l.bf16 %v640
    %v642 = vunpack.c.h.bf16 %v640
    %s643 = scalar_lea.vmem [#allocation1], 192
    %644 = vst [vmem:[%s643] sm:%s4] %v641
    %s645 = smul.addr 4, 23
    %s646 = scalar_lea.vmem %s0, %s645
    %s647 = sshrl.u32 %s4, 1
    %s648 = sor.u32 %s4, %s647
    %s649 = sand.u32 %s648, 85
    %s650 = sshrl.u32 %s649, 1
    %s651 = sor.u32 %s649, %s650
    %s652 = sand.u32 51, %s651
    %s653 = sshrl.u32 %s652, 2
    %s654 = sor.u32 %s652, %s653
    %s655 = sand.u32 15, %s654
    %v656 = vld [vmem:[%s646] sm:%s655]
    %v657 = vunpack.c.l.bf16 %v656
    %v658 = vunpack.c.h.bf16 %v656
    %s659 = scalar_lea.vmem [#allocation1], 184
    %660 = vst [vmem:[%s659] sm:%s4] %v657
    %s661 = smul.addr 4, 22
    %s662 = scalar_lea.vmem %s0, %s661
    %s663 = sshrl.u32 %s4, 1
    %s664 = sor.u32 %s4, %s663
    %s665 = sand.u32 %s664, 85
    %s666 = sshrl.u32 %s665, 1
    %s667 = sor.u32 %s665, %s666
    %s668 = sand.u32 51, %s667
    %s669 = sshrl.u32 %s668, 2
    %s670 = sor.u32 %s668, %s669
    %s671 = sand.u32 15, %s670
    %v672 = vld [vmem:[%s662] sm:%s671]
    %v673 = vunpack.c.l.bf16 %v672
    %v674 = vunpack.c.h.bf16 %v672
    %s675 = scalar_lea.vmem [#allocation1], 176
    %676 = vst [vmem:[%s675] sm:%s4] %v673
    %s677 = smul.addr 4, 21
    %s678 = scalar_lea.vmem %s0, %s677
    %s679 = sshrl.u32 %s4, 1
    %s680 = sor.u32 %s4, %s679
    %s681 = sand.u32 %s680, 85
    %s682 = sshrl.u32 %s681, 1
    %s683 = sor.u32 %s681, %s682
    %s684 = sand.u32 51, %s683
    %s685 = sshrl.u32 %s684, 2
    %s686 = sor.u32 %s684, %s685
    %s687 = sand.u32 15, %s686
    %v688 = vld [vmem:[%s678] sm:%s687]
    %v689 = vunpack.c.l.bf16 %v688
    %v690 = vunpack.c.h.bf16 %v688
    %s691 = scalar_lea.vmem [#allocation1], 168
    %692 = vst [vmem:[%s691] sm:%s4] %v689
    %s693 = smul.addr 4, 20
    %s694 = scalar_lea.vmem %s0, %s693
    %s695 = sshrl.u32 %s4, 1
    %s696 = sor.u32 %s4, %s695
    %s697 = sand.u32 %s696, 85
    %s698 = sshrl.u32 %s697, 1
    %s699 = sor.u32 %s697, %s698
    %s700 = sand.u32 51, %s699
    %s701 = sshrl.u32 %s700, 2
    %s702 = sor.u32 %s700, %s701
    %s703 = sand.u32 15, %s702
    %v704 = vld [vmem:[%s694] sm:%s703]
    %v705 = vunpack.c.l.bf16 %v704
    %v706 = vunpack.c.h.bf16 %v704
    %s707 = scalar_lea.vmem [#allocation1], 160
    %708 = vst [vmem:[%s707] sm:%s4] %v705
    %s709 = smul.addr 4, 19
    %s710 = scalar_lea.vmem %s0, %s709
    %s711 = sshrl.u32 %s4, 1
    %s712 = sor.u32 %s4, %s711
    %s713 = sand.u32 %s712, 85
    %s714 = sshrl.u32 %s713, 1
    %s715 = sor.u32 %s713, %s714
    %s716 = sand.u32 51, %s715
    %s717 = sshrl.u32 %s716, 2
    %s718 = sor.u32 %s716, %s717
    %s719 = sand.u32 15, %s718
    %v720 = vld [vmem:[%s710] sm:%s719]
    %v721 = vunpack.c.l.bf16 %v720
    %v722 = vunpack.c.h.bf16 %v720
    %s723 = scalar_lea.vmem [#allocation1], 152
    %724 = vst [vmem:[%s723] sm:%s4] %v721
    %s725 = smul.addr 4, 18
    %s726 = scalar_lea.vmem %s0, %s725
    %s727 = sshrl.u32 %s4, 1
    %s728 = sor.u32 %s4, %s727
    %s729 = sand.u32 %s728, 85
    %s730 = sshrl.u32 %s729, 1
    %s731 = sor.u32 %s729, %s730
    %s732 = sand.u32 51, %s731
    %s733 = sshrl.u32 %s732, 2
    %s734 = sor.u32 %s732, %s733
    %s735 = sand.u32 15, %s734
    %v736 = vld [vmem:[%s726] sm:%s735]
    %v737 = vunpack.c.l.bf16 %v736
    %v738 = vunpack.c.h.bf16 %v736
    %s739 = scalar_lea.vmem [#allocation1], 144
    %740 = vst [vmem:[%s739] sm:%s4] %v737
    %s741 = smul.addr 4, 17
    %s742 = scalar_lea.vmem %s0, %s741
    %s743 = sshrl.u32 %s4, 1
    %s744 = sor.u32 %s4, %s743
    %s745 = sand.u32 %s744, 85
    %s746 = sshrl.u32 %s745, 1
    %s747 = sor.u32 %s745, %s746
    %s748 = sand.u32 51, %s747
    %s749 = sshrl.u32 %s748, 2
    %s750 = sor.u32 %s748, %s749
    %s751 = sand.u32 15, %s750
    %v752 = vld [vmem:[%s742] sm:%s751]
    %v753 = vunpack.c.l.bf16 %v752
    %v754 = vunpack.c.h.bf16 %v752
    %s755 = scalar_lea.vmem [#allocation1], 136
    %756 = vst [vmem:[%s755] sm:%s4] %v753
    %s757 = smul.addr 4, 16
    %s758 = scalar_lea.vmem %s0, %s757
    %s759 = sshrl.u32 %s4, 1
    %s760 = sor.u32 %s4, %s759
    %s761 = sand.u32 %s760, 85
    %s762 = sshrl.u32 %s761, 1
    %s763 = sor.u32 %s761, %s762
    %s764 = sand.u32 51, %s763
    %s765 = sshrl.u32 %s764, 2
    %s766 = sor.u32 %s764, %s765
    %s767 = sand.u32 15, %s766
    %v768 = vld [vmem:[%s758] sm:%s767]
    %v769 = vunpack.c.l.bf16 %v768
    %v770 = vunpack.c.h.bf16 %v768
    %s771 = scalar_lea.vmem [#allocation1], 128
    %772 = vst [vmem:[%s771] sm:%s4] %v769
    %s773 = smul.addr 4, 15
    %s774 = scalar_lea.vmem %s0, %s773
    %s775 = sshrl.u32 %s4, 1
    %s776 = sor.u32 %s4, %s775
    %s777 = sand.u32 %s776, 85
    %s778 = sshrl.u32 %s777, 1
    %s779 = sor.u32 %s777, %s778
    %s780 = sand.u32 51, %s779
    %s781 = sshrl.u32 %s780, 2
    %s782 = sor.u32 %s780, %s781
    %s783 = sand.u32 15, %s782
    %v784 = vld [vmem:[%s774] sm:%s783]
    %v785 = vunpack.c.l.bf16 %v784
    %v786 = vunpack.c.h.bf16 %v784
    %s787 = scalar_lea.vmem [#allocation1], 120
    %788 = vst [vmem:[%s787] sm:%s4] %v785
    %s789 = smul.addr 4, 14
    %s790 = scalar_lea.vmem %s0, %s789
    %s791 = sshrl.u32 %s4, 1
    %s792 = sor.u32 %s4, %s791
    %s793 = sand.u32 %s792, 85
    %s794 = sshrl.u32 %s793, 1
    %s795 = sor.u32 %s793, %s794
    %s796 = sand.u32 51, %s795
    %s797 = sshrl.u32 %s796, 2
    %s798 = sor.u32 %s796, %s797
    %s799 = sand.u32 15, %s798
    %v800 = vld [vmem:[%s790] sm:%s799]
    %v801 = vunpack.c.l.bf16 %v800
    %v802 = vunpack.c.h.bf16 %v800
    %s803 = scalar_lea.vmem [#allocation1], 112
    %804 = vst [vmem:[%s803] sm:%s4] %v801
    %s805 = smul.addr 4, 13
    %s806 = scalar_lea.vmem %s0, %s805
    %s807 = sshrl.u32 %s4, 1
    %s808 = sor.u32 %s4, %s807
    %s809 = sand.u32 %s808, 85
    %s810 = sshrl.u32 %s809, 1
    %s811 = sor.u32 %s809, %s810
    %s812 = sand.u32 51, %s811
    %s813 = sshrl.u32 %s812, 2
    %s814 = sor.u32 %s812, %s813
    %s815 = sand.u32 15, %s814
    %v816 = vld [vmem:[%s806] sm:%s815]
    %v817 = vunpack.c.l.bf16 %v816
    %v818 = vunpack.c.h.bf16 %v816
    %s819 = scalar_lea.vmem [#allocation1], 104
    %820 = vst [vmem:[%s819] sm:%s4] %v817
    %s821 = smul.addr 4, 12
    %s822 = scalar_lea.vmem %s0, %s821
    %s823 = sshrl.u32 %s4, 1
    %s824 = sor.u32 %s4, %s823
    %s825 = sand.u32 %s824, 85
    %s826 = sshrl.u32 %s825, 1
    %s827 = sor.u32 %s825, %s826
    %s828 = sand.u32 51, %s827
    %s829 = sshrl.u32 %s828, 2
    %s830 = sor.u32 %s828, %s829
    %s831 = sand.u32 15, %s830
    %v832 = vld [vmem:[%s822] sm:%s831]
    %v833 = vunpack.c.l.bf16 %v832
    %v834 = vunpack.c.h.bf16 %v832
    %s835 = scalar_lea.vmem [#allocation1], 96
    %836 = vst [vmem:[%s835] sm:%s4] %v833
    %s837 = smul.addr 4, 11
    %s838 = scalar_lea.vmem %s0, %s837
    %s839 = sshrl.u32 %s4, 1
    %s840 = sor.u32 %s4, %s839
    %s841 = sand.u32 %s840, 85
    %s842 = sshrl.u32 %s841, 1
    %s843 = sor.u32 %s841, %s842
    %s844 = sand.u32 51, %s843
    %s845 = sshrl.u32 %s844, 2
    %s846 = sor.u32 %s844, %s845
    %s847 = sand.u32 15, %s846
    %v848 = vld [vmem:[%s838] sm:%s847]
    %v849 = vunpack.c.l.bf16 %v848
    %v850 = vunpack.c.h.bf16 %v848
    %s851 = scalar_lea.vmem [#allocation1], 88
    %852 = vst [vmem:[%s851] sm:%s4] %v849
    %s853 = smul.addr 4, 10
    %s854 = scalar_lea.vmem %s0, %s853
    %s855 = sshrl.u32 %s4, 1
    %s856 = sor.u32 %s4, %s855
    %s857 = sand.u32 %s856, 85
    %s858 = sshrl.u32 %s857, 1
    %s859 = sor.u32 %s857, %s858
    %s860 = sand.u32 51, %s859
    %s861 = sshrl.u32 %s860, 2
    %s862 = sor.u32 %s860, %s861
    %s863 = sand.u32 15, %s862
    %v864 = vld [vmem:[%s854] sm:%s863]
    %v865 = vunpack.c.l.bf16 %v864
    %v866 = vunpack.c.h.bf16 %v864
    %s867 = scalar_lea.vmem [#allocation1], 80
    %868 = vst [vmem:[%s867] sm:%s4] %v865
    %s869 = smul.addr 4, 9
    %s870 = scalar_lea.vmem %s0, %s869
    %s871 = sshrl.u32 %s4, 1
    %s872 = sor.u32 %s4, %s871
    %s873 = sand.u32 %s872, 85
    %s874 = sshrl.u32 %s873, 1
    %s875 = sor.u32 %s873, %s874
    %s876 = sand.u32 51, %s875
    %s877 = sshrl.u32 %s876, 2
    %s878 = sor.u32 %s876, %s877
    %s879 = sand.u32 15, %s878
    %v880 = vld [vmem:[%s870] sm:%s879]
    %v881 = vunpack.c.l.bf16 %v880
    %v882 = vunpack.c.h.bf16 %v880
    %s883 = scalar_lea.vmem [#allocation1], 72
    %884 = vst [vmem:[%s883] sm:%s4] %v881
    %s885 = smul.addr 4, 8
    %s886 = scalar_lea.vmem %s0, %s885
    %s887 = sshrl.u32 %s4, 1
    %s888 = sor.u32 %s4, %s887
    %s889 = sand.u32 %s888, 85
    %s890 = sshrl.u32 %s889, 1
    %s891 = sor.u32 %s889, %s890
    %s892 = sand.u32 51, %s891
    %s893 = sshrl.u32 %s892, 2
    %s894 = sor.u32 %s892, %s893
    %s895 = sand.u32 15, %s894
    %v896 = vld [vmem:[%s886] sm:%s895]
    %v897 = vunpack.c.l.bf16 %v896
    %v898 = vunpack.c.h.bf16 %v896
    %s899 = scalar_lea.vmem [#allocation1], 64
    %900 = vst [vmem:[%s899] sm:%s4] %v897
    %s901 = smul.addr 4, 7
    %s902 = scalar_lea.vmem %s0, %s901
    %s903 = sshrl.u32 %s4, 1
    %s904 = sor.u32 %s4, %s903
    %s905 = sand.u32 %s904, 85
    %s906 = sshrl.u32 %s905, 1
    %s907 = sor.u32 %s905, %s906
    %s908 = sand.u32 51, %s907
    %s909 = sshrl.u32 %s908, 2
    %s910 = sor.u32 %s908, %s909
    %s911 = sand.u32 15, %s910
    %v912 = vld [vmem:[%s902] sm:%s911]
    %v913 = vunpack.c.l.bf16 %v912
    %v914 = vunpack.c.h.bf16 %v912
    %s915 = scalar_lea.vmem [#allocation1], 56
    %916 = vst [vmem:[%s915] sm:%s4] %v913
    %s917 = smul.addr 4, 6
    %s918 = scalar_lea.vmem %s0, %s917
    %s919 = sshrl.u32 %s4, 1
    %s920 = sor.u32 %s4, %s919
    %s921 = sand.u32 %s920, 85
    %s922 = sshrl.u32 %s921, 1
    %s923 = sor.u32 %s921, %s922
    %s924 = sand.u32 51, %s923
    %s925 = sshrl.u32 %s924, 2
    %s926 = sor.u32 %s924, %s925
    %s927 = sand.u32 15, %s926
    %v928 = vld [vmem:[%s918] sm:%s927]
    %v929 = vunpack.c.l.bf16 %v928
    %v930 = vunpack.c.h.bf16 %v928
    %s931 = scalar_lea.vmem [#allocation1], 48
    %932 = vst [vmem:[%s931] sm:%s4] %v929
    %s933 = smul.addr 4, 5
    %s934 = scalar_lea.vmem %s0, %s933
    %s935 = sshrl.u32 %s4, 1
    %s936 = sor.u32 %s4, %s935
    %s937 = sand.u32 %s936, 85
    %s938 = sshrl.u32 %s937, 1
    %s939 = sor.u32 %s937, %s938
    %s940 = sand.u32 51, %s939
    %s941 = sshrl.u32 %s940, 2
    %s942 = sor.u32 %s940, %s941
    %s943 = sand.u32 15, %s942
    %v944 = vld [vmem:[%s934] sm:%s943]
    %v945 = vunpack.c.l.bf16 %v944
    %v946 = vunpack.c.h.bf16 %v944
    %s947 = scalar_lea.vmem [#allocation1], 40
    %948 = vst [vmem:[%s947] sm:%s4] %v945
    %s949 = smul.addr 4, 4
    %s950 = scalar_lea.vmem %s0, %s949
    %s951 = sshrl.u32 %s4, 1
    %s952 = sor.u32 %s4, %s951
    %s953 = sand.u32 %s952, 85
    %s954 = sshrl.u32 %s953, 1
    %s955 = sor.u32 %s953, %s954
    %s956 = sand.u32 51, %s955
    %s957 = sshrl.u32 %s956, 2
    %s958 = sor.u32 %s956, %s957
    %s959 = sand.u32 15, %s958
    %v960 = vld [vmem:[%s950] sm:%s959]
    %v961 = vunpack.c.l.bf16 %v960
    %v962 = vunpack.c.h.bf16 %v960
    %s963 = scalar_lea.vmem [#allocation1], 32
    %964 = vst [vmem:[%s963] sm:%s4] %v961
    %s965 = smul.addr 4, 3
    %s966 = scalar_lea.vmem %s0, %s965
    %s967 = sshrl.u32 %s4, 1
    %s968 = sor.u32 %s4, %s967
    %s969 = sand.u32 %s968, 85
    %s970 = sshrl.u32 %s969, 1
    %s971 = sor.u32 %s969, %s970
    %s972 = sand.u32 51, %s971
    %s973 = sshrl.u32 %s972, 2
    %s974 = sor.u32 %s972, %s973
    %s975 = sand.u32 15, %s974
    %v976 = vld [vmem:[%s966] sm:%s975]
    %v977 = vunpack.c.l.bf16 %v976
    %v978 = vunpack.c.h.bf16 %v976
    %s979 = scalar_lea.vmem [#allocation1], 24
    %980 = vst [vmem:[%s979] sm:%s4] %v977
    %s981 = smul.addr 4, 2
    %s982 = scalar_lea.vmem %s0, %s981
    %s983 = sshrl.u32 %s4, 1
    %s984 = sor.u32 %s4, %s983
    %s985 = sand.u32 %s984, 85
    %s986 = sshrl.u32 %s985, 1
    %s987 = sor.u32 %s985, %s986
    %s988 = sand.u32 51, %s987
    %s989 = sshrl.u32 %s988, 2
    %s990 = sor.u32 %s988, %s989
    %s991 = sand.u32 15, %s990
    %v992 = vld [vmem:[%s982] sm:%s991]
    %v993 = vunpack.c.l.bf16 %v992
    %v994 = vunpack.c.h.bf16 %v992
    %s995 = scalar_lea.vmem [#allocation1], 16
    %996 = vst [vmem:[%s995] sm:%s4] %v993
    %s997 = scalar_lea.vmem %s0, 4
    %s998 = sshrl.u32 %s4, 1
    %s999 = sor.u32 %s4, %s998
    %s1000 = sand.u32 %s999, 85
    %s1001 = sshrl.u32 %s1000, 1
    %s1002 = sor.u32 %s1000, %s1001
    %s1003 = sand.u32 51, %s1002
    %s1004 = sshrl.u32 %s1003, 2
    %s1005 = sor.u32 %s1003, %s1004
    %s1006 = sand.u32 15, %s1005
    %v1007 = vld [vmem:[%s997] sm:%s1006]
    %v1008 = vunpack.c.l.bf16 %v1007
    %v1009 = vunpack.c.h.bf16 %v1007
    %s1010 = scalar_lea.vmem [#allocation1], 8
    %1011 = vst [vmem:[%s1010] sm:%s4] %v1008
    %s1012 = sshrl.u32 %s4, 1
    %s1013 = sor.u32 %s4, %s1012
    %s1014 = sand.u32 %s1013, 85
    %s1015 = sshrl.u32 %s1014, 1
    %s1016 = sor.u32 %s1014, %s1015
    %s1017 = sand.u32 51, %s1016
    %s1018 = sshrl.u32 %s1017, 2
    %s1019 = sor.u32 %s1017, %s1018
    %s1020 = sand.u32 15, %s1019
    %v1021 = vld [vmem:[%s0] sm:%s1020]
    %v1022 = vunpack.c.l.bf16 %v1021
    %v1023 = vunpack.c.h.bf16 %v1021
    %1024 = vst [vmem:[#allocation1] sm:%s4] %v1022
    %v1025 = vld [vmem:[#allocation1] ss:$2 sm:$0xff]
    %vm1026 = vcmask 523264
    %1027 = vst.msk [vmem:[#allocation0] sm:$0xff] %vm1026, %v1025
    %s1028 = scalar_lea.vmem [#allocation1], 16
    %v1029 = vld [vmem:[%s1028] ss:$2 sm:$0xff]
    %vm1030 = vcmask 523264
    %s1031 = scalar_lea.vmem [#allocation0], 8
    %1032 = vst.msk [vmem:[%s1031] sm:$0xff] %vm1030, %v1029
    %s1033 = scalar_lea.vmem [#allocation1], 32
    %v1034 = vld [vmem:[%s1033] ss:$2 sm:$0xff]
    %vm1035 = vcmask 523264
    %s1036 = scalar_lea.vmem [#allocation0], 16
    %1037 = vst.msk [vmem:[%s1036] sm:$0xff] %vm1035, %v1034
    %s1038 = scalar_lea.vmem [#allocation1], 48
    %v1039 = vld [vmem:[%s1038] ss:$2 sm:$0xff]
    %vm1040 = vcmask 523264
    %s1041 = scalar_lea.vmem [#allocation0], 24
    %1042 = vst.msk [vmem:[%s1041] sm:$0xff] %vm1040, %v1039
    %s1043 = scalar_lea.vmem [#allocation1], 64
    %v1044 = vld [vmem:[%s1043] ss:$2 sm:$0xff]
    %vm1045 = vcmask 523264
    %s1046 = scalar_lea.vmem [#allocation0], 32
    %1047 = vst.msk [vmem:[%s1046] sm:$0xff] %vm1045, %v1044
    %s1048 = scalar_lea.vmem [#allocation1], 80
    %v1049 = vld [vmem:[%s1048] ss:$2 sm:$0xff]
    %vm1050 = vcmask 523264
    %s1051 = scalar_lea.vmem [#allocation0], 40
    %1052 = vst.msk [vmem:[%s1051] sm:$0xff] %vm1050, %v1049
    %s1053 = scalar_lea.vmem [#allocation1], 96
    %v1054 = vld [vmem:[%s1053] ss:$2 sm:$0xff]
    %vm1055 = vcmask 523264
    %s1056 = scalar_lea.vmem [#allocation0], 48
    %1057 = vst.msk [vmem:[%s1056] sm:$0xff] %vm1055, %v1054
    %s1058 = scalar_lea.vmem [#allocation1], 112
    %v1059 = vld [vmem:[%s1058] ss:$2 sm:$0xff]
    %vm1060 = vcmask 523264
    %s1061 = scalar_lea.vmem [#allocation0], 56
    %1062 = vst.msk [vmem:[%s1061] sm:$0xff] %vm1060, %v1059
    %s1063 = scalar_lea.vmem [#allocation1], 128
    %v1064 = vld [vmem:[%s1063] ss:$2 sm:$0xff]
    %vm1065 = vcmask 523264
    %s1066 = scalar_lea.vmem [#allocation0], 64
    %1067 = vst.msk [vmem:[%s1066] sm:$0xff] %vm1065, %v1064
    %s1068 = scalar_lea.vmem [#allocation1], 144
    %v1069 = vld [vmem:[%s1068] ss:$2 sm:$0xff]
    %vm1070 = vcmask 523264
    %s1071 = scalar_lea.vmem [#allocation0], 72
    %1072 = vst.msk [vmem:[%s1071] sm:$0xff] %vm1070, %v1069
    %s1073 = scalar_lea.vmem [#allocation1], 160
    %v1074 = vld [vmem:[%s1073] ss:$2 sm:$0xff]
    %vm1075 = vcmask 523264
    %s1076 = scalar_lea.vmem [#allocation0], 80
    %1077 = vst.msk [vmem:[%s1076] sm:$0xff] %vm1075, %v1074
    %s1078 = scalar_lea.vmem [#allocation1], 176
    %v1079 = vld [vmem:[%s1078] ss:$2 sm:$0xff]
    %vm1080 = vcmask 523264
    %s1081 = scalar_lea.vmem [#allocation0], 88
    %1082 = vst.msk [vmem:[%s1081] sm:$0xff] %vm1080, %v1079
    %s1083 = scalar_lea.vmem [#allocation1], 192
    %v1084 = vld [vmem:[%s1083] ss:$2 sm:$0xff]
    %vm1085 = vcmask 523264
    %s1086 = scalar_lea.vmem [#allocation0], 96
    %1087 = vst.msk [vmem:[%s1086] sm:$0xff] %vm1085, %v1084
    %s1088 = scalar_lea.vmem [#allocation1], 208
    %v1089 = vld [vmem:[%s1088] ss:$2 sm:$0xff]
    %vm1090 = vcmask 523264
    %s1091 = scalar_lea.vmem [#allocation0], 104
    %1092 = vst.msk [vmem:[%s1091] sm:$0xff] %vm1090, %v1089
    %s1093 = scalar_lea.vmem [#allocation1], 224
    %v1094 = vld [vmem:[%s1093] ss:$2 sm:$0xff]
    %vm1095 = vcmask 523264
    %s1096 = scalar_lea.vmem [#allocation0], 112
    %1097 = vst.msk [vmem:[%s1096] sm:$0xff] %vm1095, %v1094
    %s1098 = scalar_lea.vmem [#allocation1], 240
    %v1099 = vld [vmem:[%s1098] ss:$2 sm:$0xff]
    %vm1100 = vcmask 523264
    %s1101 = scalar_lea.vmem [#allocation0], 120
    %1102 = vst.msk [vmem:[%s1101] sm:$0xff] %vm1100, %v1099
    %s1103 = scalar_lea.vmem [#allocation1], 256
    %v1104 = vld [vmem:[%s1103] ss:$2 sm:$0xff]
    %vm1105 = vcmask 523264
    %s1106 = scalar_lea.vmem [#allocation0], 128
    %1107 = vst.msk [vmem:[%s1106] sm:$0xff] %vm1105, %v1104
    %s1108 = scalar_lea.vmem [#allocation1], 272
    %v1109 = vld [vmem:[%s1108] ss:$2 sm:$0xff]
    %vm1110 = vcmask 523264
    %s1111 = scalar_lea.vmem [#allocation0], 136
    %1112 = vst.msk [vmem:[%s1111] sm:$0xff] %vm1110, %v1109
    %s1113 = scalar_lea.vmem [#allocation1], 288
    %v1114 = vld [vmem:[%s1113] ss:$2 sm:$0xff]
    %vm1115 = vcmask 523264
    %s1116 = scalar_lea.vmem [#allocation0], 144
    %1117 = vst.msk [vmem:[%s1116] sm:$0xff] %vm1115, %v1114
    %s1118 = scalar_lea.vmem [#allocation1], 304
    %v1119 = vld [vmem:[%s1118] ss:$2 sm:$0xff]
    %vm1120 = vcmask 523264
    %s1121 = scalar_lea.vmem [#allocation0], 152
    %1122 = vst.msk [vmem:[%s1121] sm:$0xff] %vm1120, %v1119
    %s1123 = scalar_lea.vmem [#allocation1], 320
    %v1124 = vld [vmem:[%s1123] ss:$2 sm:$0xff]
    %vm1125 = vcmask 523264
    %s1126 = scalar_lea.vmem [#allocation0], 160
    %1127 = vst.msk [vmem:[%s1126] sm:$0xff] %vm1125, %v1124
    %s1128 = scalar_lea.vmem [#allocation1], 336
    %v1129 = vld [vmem:[%s1128] ss:$2 sm:$0xff]
    %vm1130 = vcmask 523264
    %s1131 = scalar_lea.vmem [#allocation0], 168
    %1132 = vst.msk [vmem:[%s1131] sm:$0xff] %vm1130, %v1129
    %s1133 = scalar_lea.vmem [#allocation1], 352
    %v1134 = vld [vmem:[%s1133] ss:$2 sm:$0xff]
    %vm1135 = vcmask 523264
    %s1136 = scalar_lea.vmem [#allocation0], 176
    %1137 = vst.msk [vmem:[%s1136] sm:$0xff] %vm1135, %v1134
    %s1138 = scalar_lea.vmem [#allocation1], 368
    %v1139 = vld [vmem:[%s1138] ss:$2 sm:$0xff]
    %vm1140 = vcmask 523264
    %s1141 = scalar_lea.vmem [#allocation0], 184
    %1142 = vst.msk [vmem:[%s1141] sm:$0xff] %vm1140, %v1139
    %s1143 = scalar_lea.vmem [#allocation1], 384
    %v1144 = vld [vmem:[%s1143] ss:$2 sm:$0xff]
    %vm1145 = vcmask 523264
    %s1146 = scalar_lea.vmem [#allocation0], 192
    %1147 = vst.msk [vmem:[%s1146] sm:$0xff] %vm1145, %v1144
    %s1148 = scalar_lea.vmem [#allocation1], 400
    %v1149 = vld [vmem:[%s1148] ss:$2 sm:$0xff]
    %vm1150 = vcmask 523264
    %s1151 = scalar_lea.vmem [#allocation0], 200
    %1152 = vst.msk [vmem:[%s1151] sm:$0xff] %vm1150, %v1149
    %s1153 = scalar_lea.vmem [#allocation1], 416
    %v1154 = vld [vmem:[%s1153] ss:$2 sm:$0xff]
    %vm1155 = vcmask 523264
    %s1156 = scalar_lea.vmem [#allocation0], 208
    %1157 = vst.msk [vmem:[%s1156] sm:$0xff] %vm1155, %v1154
    %s1158 = scalar_lea.vmem [#allocation1], 432
    %v1159 = vld [vmem:[%s1158] ss:$2 sm:$0xff]
    %vm1160 = vcmask 523264
    %s1161 = scalar_lea.vmem [#allocation0], 216
    %1162 = vst.msk [vmem:[%s1161] sm:$0xff] %vm1160, %v1159
    %s1163 = scalar_lea.vmem [#allocation1], 448
    %v1164 = vld [vmem:[%s1163] ss:$2 sm:$0xff]
    %vm1165 = vcmask 523264
    %s1166 = scalar_lea.vmem [#allocation0], 224
    %1167 = vst.msk [vmem:[%s1166] sm:$0xff] %vm1165, %v1164
    %s1168 = scalar_lea.vmem [#allocation1], 464
    %v1169 = vld [vmem:[%s1168] ss:$2 sm:$0xff]
    %vm1170 = vcmask 523264
    %s1171 = scalar_lea.vmem [#allocation0], 232
    %1172 = vst.msk [vmem:[%s1171] sm:$0xff] %vm1170, %v1169
    %s1173 = scalar_lea.vmem [#allocation1], 480
    %v1174 = vld [vmem:[%s1173] ss:$2 sm:$0xff]
    %vm1175 = vcmask 523264
    %s1176 = scalar_lea.vmem [#allocation0], 240
    %1177 = vst.msk [vmem:[%s1176] sm:$0xff] %vm1175, %v1174
    %s1178 = scalar_lea.vmem [#allocation1], 496
    %v1179 = vld [vmem:[%s1178] ss:$2 sm:$0xff]
    %vm1180 = vcmask 523264
    %s1181 = scalar_lea.vmem [#allocation0], 248
    %1182 = vst.msk [vmem:[%s1181] sm:$0xff] %vm1180, %v1179
    %s1183 = scalar_lea.vmem [#allocation1], 1
    %v1184 = vld [vmem:[%s1183] ss:$2 sm:$0xff]
    %1185 = vrot.lane.b32.xlu0 %v1184, 64
    %v1186 = vpop.permute.xlu0 %1185
    %vm1187 = vcmask 1048064
    %1188 = vst.msk [vmem:[#allocation0] sm:$0xff] %vm1187, %v1186
    %s1189 = scalar_lea.vmem [#allocation1], 65
    %v1190 = vld [vmem:[%s1189] ss:$2 sm:$0xff]
    %1191 = vrot.lane.b32.xlu0 %v1190, 64
    %v1192 = vpop.permute.xlu0 %1191
    %vm1193 = vcmask 1048064
    %s1194 = scalar_lea.vmem [#allocation0], 32
    %1195 = vst.msk [vmem:[%s1194] sm:$0xff] %vm1193, %v1192
    %s1196 = scalar_lea.vmem [#allocation1], 129
    %v1197 = vld [vmem:[%s1196] ss:$2 sm:$0xff]
    %1198 = vrot.lane.b32.xlu0 %v1197, 64
    %v1199 = vpop.permute.xlu0 %1198
    %vm1200 = vcmask 1048064
    %s1201 = scalar_lea.vmem [#allocation0], 64
    %1202 = vst.msk [vmem:[%s1201] sm:$0xff] %vm1200, %v1199
    %s1203 = scalar_lea.vmem [#allocation1], 193
    %v1204 = vld [vmem:[%s1203] ss:$2 sm:$0xff]
    %1205 = vrot.lane.b32.xlu0 %v1204, 64
    %v1206 = vpop.permute.xlu0 %1205
    %vm1207 = vcmask 1048064
    %s1208 = scalar_lea.vmem [#allocation0], 96
    %1209 = vst.msk [vmem:[%s1208] sm:$0xff] %vm1207, %v1206
    %s1210 = scalar_lea.vmem [#allocation1], 257
    %v1211 = vld [vmem:[%s1210] ss:$2 sm:$0xff]
    %1212 = vrot.lane.b32.xlu0 %v1211, 64
    %v1213 = vpop.permute.xlu0 %1212
    %vm1214 = vcmask 1048064
    %s1215 = scalar_lea.vmem [#allocation0], 128
    %1216 = vst.msk [vmem:[%s1215] sm:$0xff] %vm1214, %v1213
    %s1217 = scalar_lea.vmem [#allocation1], 321
    %v1218 = vld [vmem:[%s1217] ss:$2 sm:$0xff]
    %1219 = vrot.lane.b32.xlu0 %v1218, 64
    %v1220 = vpop.permute.xlu0 %1219
    %vm1221 = vcmask 1048064
    %s1222 = scalar_lea.vmem [#allocation0], 160
    %1223 = vst.msk [vmem:[%s1222] sm:$0xff] %vm1221, %v1220
    %s1224 = scalar_lea.vmem [#allocation1], 385
    %v1225 = vld [vmem:[%s1224] ss:$2 sm:$0xff]
    %1226 = vrot.lane.b32.xlu0 %v1225, 64
    %v1227 = vpop.permute.xlu0 %1226
    %vm1228 = vcmask 1048064
    %s1229 = scalar_lea.vmem [#allocation0], 192
    %1230 = vst.msk [vmem:[%s1229] sm:$0xff] %vm1228, %v1227
    %s1231 = scalar_lea.vmem [#allocation1], 449
    %v1232 = vld [vmem:[%s1231] ss:$2 sm:$0xff]
    %1233 = vrot.lane.b32.xlu0 %v1232, 64
    %v1234 = vpop.permute.xlu0 %1233
    %vm1235 = vcmask 1048064
    %s1236 = scalar_lea.vmem [#allocation0], 224
    %1237 = vst.msk [vmem:[%s1236] sm:$0xff] %vm1235, %v1234
    %s1238 = scalar_lea.vmem [#allocation1], 17
    %v1239 = vld [vmem:[%s1238] ss:$2 sm:$0xff]
    %1240 = vrot.lane.b32.xlu0 %v1239, 64
    %v1241 = vpop.permute.xlu0 %1240
    %vm1242 = vcmask 1048064
    %s1243 = scalar_lea.vmem [#allocation0], 8
    %1244 = vst.msk [vmem:[%s1243] sm:$0xff] %vm1242, %v1241
    %s1245 = scalar_lea.vmem [#allocation1], 81
    %v1246 = vld [vmem:[%s1245] ss:$2 sm:$0xff]
    %1247 = vrot.lane.b32.xlu0 %v1246, 64
    %v1248 = vpop.permute.xlu0 %1247
    %vm1249 = vcmask 1048064
    %s1250 = scalar_lea.vmem [#allocation0], 40
    %1251 = vst.msk [vmem:[%s1250] sm:$0xff] %vm1249, %v1248
    %s1252 = scalar_lea.vmem [#allocation1], 145
    %v1253 = vld [vmem:[%s1252] ss:$2 sm:$0xff]
    %1254 = vrot.lane.b32.xlu0 %v1253, 64
    %v1255 = vpop.permute.xlu0 %1254
    %vm1256 = vcmask 1048064
    %s1257 = scalar_lea.vmem [#allocation0], 72
    %1258 = vst.msk [vmem:[%s1257] sm:$0xff] %vm1256, %v1255
    %s1259 = scalar_lea.vmem [#allocation1], 209
    %v1260 = vld [vmem:[%s1259] ss:$2 sm:$0xff]
    %1261 = vrot.lane.b32.xlu0 %v1260, 64
    %v1262 = vpop.permute.xlu0 %1261
    %vm1263 = vcmask 1048064
    %s1264 = scalar_lea.vmem [#allocation0], 104
    %1265 = vst.msk [vmem:[%s1264] sm:$0xff] %vm1263, %v1262
    %s1266 = scalar_lea.vmem [#allocation1], 273
    %v1267 = vld [vmem:[%s1266] ss:$2 sm:$0xff]
    %1268 = vrot.lane.b32.xlu0 %v1267, 64
    %v1269 = vpop.permute.xlu0 %1268
    %vm1270 = vcmask 1048064
    %s1271 = scalar_lea.vmem [#allocation0], 136
    %1272 = vst.msk [vmem:[%s1271] sm:$0xff] %vm1270, %v1269
    %s1273 = scalar_lea.vmem [#allocation1], 337
    %v1274 = vld [vmem:[%s1273] ss:$2 sm:$0xff]
    %1275 = vrot.lane.b32.xlu0 %v1274, 64
    %v1276 = vpop.permute.xlu0 %1275
    %vm1277 = vcmask 1048064
    %s1278 = scalar_lea.vmem [#allocation0], 168
    %1279 = vst.msk [vmem:[%s1278] sm:$0xff] %vm1277, %v1276
    %s1280 = scalar_lea.vmem [#allocation1], 401
    %v1281 = vld [vmem:[%s1280] ss:$2 sm:$0xff]
    %1282 = vrot.lane.b32.xlu0 %v1281, 64
    %v1283 = vpop.permute.xlu0 %1282
    %vm1284 = vcmask 1048064
    %s1285 = scalar_lea.vmem [#allocation0], 200
    %1286 = vst.msk [vmem:[%s1285] sm:$0xff] %vm1284, %v1283
    %s1287 = scalar_lea.vmem [#allocation1], 465
    %v1288 = vld [vmem:[%s1287] ss:$2 sm:$0xff]
    %1289 = vrot.lane.b32.xlu0 %v1288, 64
    %v1290 = vpop.permute.xlu0 %1289
    %vm1291 = vcmask 1048064
    %s1292 = scalar_lea.vmem [#allocation0], 232
    %1293 = vst.msk [vmem:[%s1292] sm:$0xff] %vm1291, %v1290
    %s1294 = scalar_lea.vmem [#allocation1], 33
    %v1295 = vld [vmem:[%s1294] ss:$2 sm:$0xff]
    %1296 = vrot.lane.b32.xlu0 %v1295, 64
    %v1297 = vpop.permute.xlu0 %1296
    %vm1298 = vcmask 1048064
    %s1299 = scalar_lea.vmem [#allocation0], 16
    %1300 = vst.msk [vmem:[%s1299] sm:$0xff] %vm1298, %v1297
    %s1301 = scalar_lea.vmem [#allocation1], 97
    %v1302 = vld [vmem:[%s1301] ss:$2 sm:$0xff]
    %1303 = vrot.lane.b32.xlu0 %v1302, 64
    %v1304 = vpop.permute.xlu0 %1303
    %vm1305 = vcmask 1048064
    %s1306 = scalar_lea.vmem [#allocation0], 48
    %1307 = vst.msk [vmem:[%s1306] sm:$0xff] %vm1305, %v1304
    %s1308 = scalar_lea.vmem [#allocation1], 161
    %v1309 = vld [vmem:[%s1308] ss:$2 sm:$0xff]
    %1310 = vrot.lane.b32.xlu0 %v1309, 64
    %v1311 = vpop.permute.xlu0 %1310
    %vm1312 = vcmask 1048064
    %s1313 = scalar_lea.vmem [#allocation0], 80
    %1314 = vst.msk [vmem:[%s1313] sm:$0xff] %vm1312, %v1311
    %s1315 = scalar_lea.vmem [#allocation1], 225
    %v1316 = vld [vmem:[%s1315] ss:$2 sm:$0xff]
    %1317 = vrot.lane.b32.xlu0 %v1316, 64
    %v1318 = vpop.permute.xlu0 %1317
    %vm1319 = vcmask 1048064
    %s1320 = scalar_lea.vmem [#allocation0], 112
    %1321 = vst.msk [vmem:[%s1320] sm:$0xff] %vm1319, %v1318
    %s1322 = scalar_lea.vmem [#allocation1], 289
    %v1323 = vld [vmem:[%s1322] ss:$2 sm:$0xff]
    %1324 = vrot.lane.b32.xlu0 %v1323, 64
    %v1325 = vpop.permute.xlu0 %1324
    %vm1326 = vcmask 1048064
    %s1327 = scalar_lea.vmem [#allocation0], 144
    %1328 = vst.msk [vmem:[%s1327] sm:$0xff] %vm1326, %v1325
    %s1329 = scalar_lea.vmem [#allocation1], 353
    %v1330 = vld [vmem:[%s1329] ss:$2 sm:$0xff]
    %1331 = vrot.lane.b32.xlu0 %v1330, 64
    %v1332 = vpop.permute.xlu0 %1331
    %vm1333 = vcmask 1048064
    %s1334 = scalar_lea.vmem [#allocation0], 176
    %1335 = vst.msk [vmem:[%s1334] sm:$0xff] %vm1333, %v1332
    %s1336 = scalar_lea.vmem [#allocation1], 417
    %v1337 = vld [vmem:[%s1336] ss:$2 sm:$0xff]
    %1338 = vrot.lane.b32.xlu0 %v1337, 64
    %v1339 = vpop.permute.xlu0 %1338
    %vm1340 = vcmask 1048064
    %s1341 = scalar_lea.vmem [#allocation0], 208
    %1342 = vst.msk [vmem:[%s1341] sm:$0xff] %vm1340, %v1339
    %s1343 = scalar_lea.vmem [#allocation1], 481
    %v1344 = vld [vmem:[%s1343] ss:$2 sm:$0xff]
    %1345 = vrot.lane.b32.xlu0 %v1344, 64
    %v1346 = vpop.permute.xlu0 %1345
    %vm1347 = vcmask 1048064
    %s1348 = scalar_lea.vmem [#allocation0], 240
    %1349 = vst.msk [vmem:[%s1348] sm:$0xff] %vm1347, %v1346
    %s1350 = scalar_lea.vmem [#allocation1], 49
    %v1351 = vld [vmem:[%s1350] ss:$2 sm:$0xff]
    %1352 = vrot.lane.b32.xlu0 %v1351, 64
    %v1353 = vpop.permute.xlu0 %1352
    %vm1354 = vcmask 1048064
    %s1355 = scalar_lea.vmem [#allocation0], 24
    %1356 = vst.msk [vmem:[%s1355] sm:$0xff] %vm1354, %v1353
    %s1357 = scalar_lea.vmem [#allocation1], 113
    %v1358 = vld [vmem:[%s1357] ss:$2 sm:$0xff]
    %1359 = vrot.lane.b32.xlu0 %v1358, 64
    %v1360 = vpop.permute.xlu0 %1359
    %vm1361 = vcmask 1048064
    %s1362 = scalar_lea.vmem [#allocation0], 56
    %1363 = vst.msk [vmem:[%s1362] sm:$0xff] %vm1361, %v1360
    %s1364 = scalar_lea.vmem [#allocation1], 177
    %v1365 = vld [vmem:[%s1364] ss:$2 sm:$0xff]
    %1366 = vrot.lane.b32.xlu0 %v1365, 64
    %v1367 = vpop.permute.xlu0 %1366
    %vm1368 = vcmask 1048064
    %s1369 = scalar_lea.vmem [#allocation0], 88
    %1370 = vst.msk [vmem:[%s1369] sm:$0xff] %vm1368, %v1367
    %s1371 = scalar_lea.vmem [#allocation1], 241
    %v1372 = vld [vmem:[%s1371] ss:$2 sm:$0xff]
    %1373 = vrot.lane.b32.xlu0 %v1372, 64
    %v1374 = vpop.permute.xlu0 %1373
    %vm1375 = vcmask 1048064
    %s1376 = scalar_lea.vmem [#allocation0], 120
    %1377 = vst.msk [vmem:[%s1376] sm:$0xff] %vm1375, %v1374
    %s1378 = scalar_lea.vmem [#allocation1], 305
    %v1379 = vld [vmem:[%s1378] ss:$2 sm:$0xff]
    %1380 = vrot.lane.b32.xlu0 %v1379, 64
    %v1381 = vpop.permute.xlu0 %1380
    %vm1382 = vcmask 1048064
    %s1383 = scalar_lea.vmem [#allocation0], 152
    %1384 = vst.msk [vmem:[%s1383] sm:$0xff] %vm1382, %v1381
    %s1385 = scalar_lea.vmem [#allocation1], 369
    %v1386 = vld [vmem:[%s1385] ss:$2 sm:$0xff]
    %1387 = vrot.lane.b32.xlu0 %v1386, 64
    %v1388 = vpop.permute.xlu0 %1387
    %vm1389 = vcmask 1048064
    %s1390 = scalar_lea.vmem [#allocation0], 184
    %1391 = vst.msk [vmem:[%s1390] sm:$0xff] %vm1389, %v1388
    %s1392 = scalar_lea.vmem [#allocation1], 433
    %v1393 = vld [vmem:[%s1392] ss:$2 sm:$0xff]
    %1394 = vrot.lane.b32.xlu0 %v1393, 64
    %v1395 = vpop.permute.xlu0 %1394
    %vm1396 = vcmask 1048064
    %s1397 = scalar_lea.vmem [#allocation0], 216
    %1398 = vst.msk [vmem:[%s1397] sm:$0xff] %vm1396, %v1395
    %s1399 = scalar_lea.vmem [#allocation1], 497
    %v1400 = vld [vmem:[%s1399] ss:$2 sm:$0xff]
    %1401 = vrot.lane.b32.xlu0 %v1400, 64
    %v1402 = vpop.permute.xlu0 %1401
    %vm1403 = vcmask 1048064
    %s1404 = scalar_lea.vmem [#allocation0], 248
    %1405 = vst.msk [vmem:[%s1404] sm:$0xff] %vm1403, %v1402
    %s1407 = smul.u32 4, 2
    %s1408 = sshllo.u32 0, %s1407
    %s1409 = sshrl.u32 %s1407, 1
    %v1410 = vld [vmem:[#allocation0] sm:%s1408]
    %v1411 = vpack.c.bf16 0.0, %v1410
    %s1412 = sshllo.u32 0, %s1409
    %1413 = vst [vmem:[%s1] sm:%s1412] %v1411
    %s1414 = scalar_lea.vmem [#allocation0], 8
    %v1415 = vld [vmem:[%s1414] sm:%s1408]
    %v1416 = vpack.c.bf16 0.0, %v1415
    %s1417 = sshllo.u32 0, %s1409
    %s1418 = scalar_lea.vmem %s1, 4
    %1419 = vst [vmem:[%s1418] sm:%s1417] %v1416
    %s1420 = scalar_lea.vmem [#allocation0], 16
    %v1421 = vld [vmem:[%s1420] sm:%s1408]
    %v1422 = vpack.c.bf16 0.0, %v1421
    %s1423 = sshllo.u32 0, %s1409
    %s1424 = smul.addr 4, 2
    %s1425 = scalar_lea.vmem %s1, %s1424
    %1426 = vst [vmem:[%s1425] sm:%s1423] %v1422
    %s1427 = scalar_lea.vmem [#allocation0], 24
    %v1428 = vld [vmem:[%s1427] sm:%s1408]
    %v1429 = vpack.c.bf16 0.0, %v1428
    %s1430 = sshllo.u32 0, %s1409
    %s1431 = smul.addr 4, 3
    %s1432 = scalar_lea.vmem %s1, %s1431
    %1433 = vst [vmem:[%s1432] sm:%s1430] %v1429
    %s1434 = scalar_lea.vmem [#allocation0], 32
    %v1435 = vld [vmem:[%s1434] sm:%s1408]
    %v1436 = vpack.c.bf16 0.0, %v1435
    %s1437 = sshllo.u32 0, %s1409
    %s1438 = smul.addr 4, 4
    %s1439 = scalar_lea.vmem %s1, %s1438
    %1440 = vst [vmem:[%s1439] sm:%s1437] %v1436
    %s1441 = scalar_lea.vmem [#allocation0], 40
    %v1442 = vld [vmem:[%s1441] sm:%s1408]
    %v1443 = vpack.c.bf16 0.0, %v1442
    %s1444 = sshllo.u32 0, %s1409
    %s1445 = smul.addr 4, 5
    %s1446 = scalar_lea.vmem %s1, %s1445
    %1447 = vst [vmem:[%s1446] sm:%s1444] %v1443
    %s1448 = scalar_lea.vmem [#allocation0], 48
    %v1449 = vld [vmem:[%s1448] sm:%s1408]
    %v1450 = vpack.c.bf16 0.0, %v1449
    %s1451 = sshllo.u32 0, %s1409
    %s1452 = smul.addr 4, 6
    %s1453 = scalar_lea.vmem %s1, %s1452
    %1454 = vst [vmem:[%s1453] sm:%s1451] %v1450
    %s1455 = scalar_lea.vmem [#allocation0], 56
    %v1456 = vld [vmem:[%s1455] sm:%s1408]
    %v1457 = vpack.c.bf16 0.0, %v1456
    %s1458 = sshllo.u32 0, %s1409
    %s1459 = smul.addr 4, 7
    %s1460 = scalar_lea.vmem %s1, %s1459
    %1461 = vst [vmem:[%s1460] sm:%s1458] %v1457
    %s1462 = scalar_lea.vmem [#allocation0], 64
    %v1463 = vld [vmem:[%s1462] sm:%s1408]
    %v1464 = vpack.c.bf16 0.0, %v1463
    %s1465 = sshllo.u32 0, %s1409
    %s1466 = smul.addr 4, 8
    %s1467 = scalar_lea.vmem %s1, %s1466
    %1468 = vst [vmem:[%s1467] sm:%s1465] %v1464
    %s1469 = scalar_lea.vmem [#allocation0], 72
    %v1470 = vld [vmem:[%s1469] sm:%s1408]
    %v1471 = vpack.c.bf16 0.0, %v1470
    %s1472 = sshllo.u32 0, %s1409
    %s1473 = smul.addr 4, 9
    %s1474 = scalar_lea.vmem %s1, %s1473
    %1475 = vst [vmem:[%s1474] sm:%s1472] %v1471
    %s1476 = scalar_lea.vmem [#allocation0], 80
    %v1477 = vld [vmem:[%s1476] sm:%s1408]
    %v1478 = vpack.c.bf16 0.0, %v1477
    %s1479 = sshllo.u32 0, %s1409
    %s1480 = smul.addr 4, 10
    %s1481 = scalar_lea.vmem %s1, %s1480
    %1482 = vst [vmem:[%s1481] sm:%s1479] %v1478
    %s1483 = scalar_lea.vmem [#allocation0], 88
    %v1484 = vld [vmem:[%s1483] sm:%s1408]
    %v1485 = vpack.c.bf16 0.0, %v1484
    %s1486 = sshllo.u32 0, %s1409
    %s1487 = smul.addr 4, 11
    %s1488 = scalar_lea.vmem %s1, %s1487
    %1489 = vst [vmem:[%s1488] sm:%s1486] %v1485
    %s1490 = scalar_lea.vmem [#allocation0], 96
    %v1491 = vld [vmem:[%s1490] sm:%s1408]
    %v1492 = vpack.c.bf16 0.0, %v1491
    %s1493 = sshllo.u32 0, %s1409
    %s1494 = smul.addr 4, 12
    %s1495 = scalar_lea.vmem %s1, %s1494
    %1496 = vst [vmem:[%s1495] sm:%s1493] %v1492
    %s1497 = scalar_lea.vmem [#allocation0], 104
    %v1498 = vld [vmem:[%s1497] sm:%s1408]
    %v1499 = vpack.c.bf16 0.0, %v1498
    %s1500 = sshllo.u32 0, %s1409
    %s1501 = smul.addr 4, 13
    %s1502 = scalar_lea.vmem %s1, %s1501
    %1503 = vst [vmem:[%s1502] sm:%s1500] %v1499
    %s1504 = scalar_lea.vmem [#allocation0], 112
    %v1505 = vld [vmem:[%s1504] sm:%s1408]
    %v1506 = vpack.c.bf16 0.0, %v1505
    %s1507 = sshllo.u32 0, %s1409
    %s1508 = smul.addr 4, 14
    %s1509 = scalar_lea.vmem %s1, %s1508
    %1510 = vst [vmem:[%s1509] sm:%s1507] %v1506
    %s1511 = scalar_lea.vmem [#allocation0], 120
    %v1512 = vld [vmem:[%s1511] sm:%s1408]
    %v1513 = vpack.c.bf16 0.0, %v1512
    %s1514 = sshllo.u32 0, %s1409
    %s1515 = smul.addr 4, 15
    %s1516 = scalar_lea.vmem %s1, %s1515
    %1517 = vst [vmem:[%s1516] sm:%s1514] %v1513
    %s1518 = scalar_lea.vmem [#allocation0], 128
    %v1519 = vld [vmem:[%s1518] sm:%s1408]
    %v1520 = vpack.c.bf16 0.0, %v1519
    %s1521 = sshllo.u32 0, %s1409
    %s1522 = smul.addr 4, 16
    %s1523 = scalar_lea.vmem %s1, %s1522
    %1524 = vst [vmem:[%s1523] sm:%s1521] %v1520
    %s1525 = scalar_lea.vmem [#allocation0], 136
    %v1526 = vld [vmem:[%s1525] sm:%s1408]
    %v1527 = vpack.c.bf16 0.0, %v1526
    %s1528 = sshllo.u32 0, %s1409
    %s1529 = smul.addr 4, 17
    %s1530 = scalar_lea.vmem %s1, %s1529
    %1531 = vst [vmem:[%s1530] sm:%s1528] %v1527
    %s1532 = scalar_lea.vmem [#allocation0], 144
    %v1533 = vld [vmem:[%s1532] sm:%s1408]
    %v1534 = vpack.c.bf16 0.0, %v1533
    %s1535 = sshllo.u32 0, %s1409
    %s1536 = smul.addr 4, 18
    %s1537 = scalar_lea.vmem %s1, %s1536
    %1538 = vst [vmem:[%s1537] sm:%s1535] %v1534
    %s1539 = scalar_lea.vmem [#allocation0], 152
    %v1540 = vld [vmem:[%s1539] sm:%s1408]
    %v1541 = vpack.c.bf16 0.0, %v1540
    %s1542 = sshllo.u32 0, %s1409
    %s1543 = smul.addr 4, 19
    %s1544 = scalar_lea.vmem %s1, %s1543
    %1545 = vst [vmem:[%s1544] sm:%s1542] %v1541
    %s1546 = scalar_lea.vmem [#allocation0], 160
    %v1547 = vld [vmem:[%s1546] sm:%s1408]
    %v1548 = vpack.c.bf16 0.0, %v1547
    %s1549 = sshllo.u32 0, %s1409
    %s1550 = smul.addr 4, 20
    %s1551 = scalar_lea.vmem %s1, %s1550
    %1552 = vst [vmem:[%s1551] sm:%s1549] %v1548
    %s1553 = scalar_lea.vmem [#allocation0], 168
    %v1554 = vld [vmem:[%s1553] sm:%s1408]
    %v1555 = vpack.c.bf16 0.0, %v1554
    %s1556 = sshllo.u32 0, %s1409
    %s1557 = smul.addr 4, 21
    %s1558 = scalar_lea.vmem %s1, %s1557
    %1559 = vst [vmem:[%s1558] sm:%s1556] %v1555
    %s1560 = scalar_lea.vmem [#allocation0], 176
    %v1561 = vld [vmem:[%s1560] sm:%s1408]
    %v1562 = vpack.c.bf16 0.0, %v1561
    %s1563 = sshllo.u32 0, %s1409
    %s1564 = smul.addr 4, 22
    %s1565 = scalar_lea.vmem %s1, %s1564
    %1566 = vst [vmem:[%s1565] sm:%s1563] %v1562
    %s1567 = scalar_lea.vmem [#allocation0], 184
    %v1568 = vld [vmem:[%s1567] sm:%s1408]
    %v1569 = vpack.c.bf16 0.0, %v1568
    %s1570 = sshllo.u32 0, %s1409
    %s1571 = smul.addr 4, 23
    %s1572 = scalar_lea.vmem %s1, %s1571
    %1573 = vst [vmem:[%s1572] sm:%s1570] %v1569
    %s1574 = scalar_lea.vmem [#allocation0], 192
    %v1575 = vld [vmem:[%s1574] sm:%s1408]
    %v1576 = vpack.c.bf16 0.0, %v1575
    %s1577 = sshllo.u32 0, %s1409
    %s1578 = smul.addr 4, 24
    %s1579 = scalar_lea.vmem %s1, %s1578
    %1580 = vst [vmem:[%s1579] sm:%s1577] %v1576
    %s1581 = scalar_lea.vmem [#allocation0], 200
    %v1582 = vld [vmem:[%s1581] sm:%s1408]
    %v1583 = vpack.c.bf16 0.0, %v1582
    %s1584 = sshllo.u32 0, %s1409
    %s1585 = smul.addr 4, 25
    %s1586 = scalar_lea.vmem %s1, %s1585
    %1587 = vst [vmem:[%s1586] sm:%s1584] %v1583
    %s1588 = scalar_lea.vmem [#allocation0], 208
    %v1589 = vld [vmem:[%s1588] sm:%s1408]
    %v1590 = vpack.c.bf16 0.0, %v1589
    %s1591 = sshllo.u32 0, %s1409
    %s1592 = smul.addr 4, 26
    %s1593 = scalar_lea.vmem %s1, %s1592
    %1594 = vst [vmem:[%s1593] sm:%s1591] %v1590
    %s1595 = scalar_lea.vmem [#allocation0], 216
    %v1596 = vld [vmem:[%s1595] sm:%s1408]
    %v1597 = vpack.c.bf16 0.0, %v1596
    %s1598 = sshllo.u32 0, %s1409
    %s1599 = smul.addr 4, 27
    %s1600 = scalar_lea.vmem %s1, %s1599
    %1601 = vst [vmem:[%s1600] sm:%s1598] %v1597
    %s1602 = scalar_lea.vmem [#allocation0], 224
    %v1603 = vld [vmem:[%s1602] sm:%s1408]
    %v1604 = vpack.c.bf16 0.0, %v1603
    %s1605 = sshllo.u32 0, %s1409
    %s1606 = smul.addr 4, 28
    %s1607 = scalar_lea.vmem %s1, %s1606
    %1608 = vst [vmem:[%s1607] sm:%s1605] %v1604
    %s1609 = scalar_lea.vmem [#allocation0], 232
    %v1610 = vld [vmem:[%s1609] sm:%s1408]
    %v1611 = vpack.c.bf16 0.0, %v1610
    %s1612 = sshllo.u32 0, %s1409
    %s1613 = smul.addr 4, 29
    %s1614 = scalar_lea.vmem %s1, %s1613
    %1615 = vst [vmem:[%s1614] sm:%s1612] %v1611
    %s1616 = scalar_lea.vmem [#allocation0], 240
    %v1617 = vld [vmem:[%s1616] sm:%s1408]
    %v1618 = vpack.c.bf16 0.0, %v1617
    %s1619 = sshllo.u32 0, %s1409
    %s1620 = smul.addr 4, 30
    %s1621 = scalar_lea.vmem %s1, %s1620
    %1622 = vst [vmem:[%s1621] sm:%s1619] %v1618
    %s1623 = scalar_lea.vmem [#allocation0], 248
    %v1624 = vld [vmem:[%s1623] sm:%s1408]
    %v1625 = vpack.c.bf16 0.0, %v1624
    %s1626 = sshllo.u32 0, %s1409
    %s1627 = smul.addr 4, 31
    %s1628 = scalar_lea.vmem %s1, %s1627
    %1629 = vst [vmem:[%s1628] sm:%s1626] %v1625

</llo_original>
